<compile_context>
chip_gen: v5e
topology: v5e:2x2
jax: 0.10.0
libtpu: 0.0.40
codegen_flags: <defaults>
</compile_context>

<pallas_src>
import functools

import jax
import jax.numpy as jnp
from jax.experimental import pallas as pl
from jax.experimental.pallas import tpu as pltpu

# ---- model hyper-parameters (match the PyTorch __init__ defaults) ----
DIM = 8
HIS_LEN = 5
KIND_LEN = 10
HIS_ITEM_DIM = (1 + KIND_LEN) * DIM            # 88
HEAD_DIM = (5 + KIND_LEN) * DIM                # 120
ALL_DIM = HEAD_DIM + HIS_ITEM_DIM              # 208

# packed input-slab lane offsets (128-aligned tile starts for the matmul operands)
ITEM_OFF = 0
HEAD_OFF = 128
LABEL_OFF = 248
SLAB_LANES = 256

USER_NUM = 20
ITEM_NUM = 30
GENDER_NUM = 3
AGE_NUM = 10
OCC_NUM = 15
KIND_NUM = 12


# ----------------------------- Pallas kernel -----------------------------
def din_kernel(his_ref, slab_ref,
               aw1h_ref, aw1i_ref, aw2_ref,
               mw1h_ref, mw1p_ref, mw2_ref, mw3_ref, bias_ref,
               out_ref):
    h_len, bt, feat = his_ref.shape            # (HIS_LEN, block_b, 88)
    bht = h_len * bt

    # packed biases / tiny projection vectors (all f32)
    ab1 = bias_ref[0:1, 0:64]
    ab2 = bias_ref[1:2, 0:32]
    mb1 = bias_ref[2:3, 0:128]
    mb2 = bias_ref[3:4, 0:64]
    mb3 = bias_ref[4:5, 0:32]
    ab3 = bias_ref[5:6, 0:1]
    mb4 = bias_ref[5:6, 1:2]
    aw3v = bias_ref[6:7, 0:32]
    mw4v = bias_ref[7:8, 0:32]

    def mm(x, w_ref):
        # bf16 MXU operands, f32 accumulation (no-op cast for already-bf16 inputs)
        return jnp.dot(x.astype(jnp.bfloat16), w_ref[...],
                       preferred_element_type=jnp.float32)

    his3 = his_ref[...]                                    # (H, bt, 88) bf16
    his2 = his3.reshape(bht, feat)                         # free merge (bt % 8 == 0)
    item = slab_ref[:, ITEM_OFF:ITEM_OFF + HIS_ITEM_DIM]   # (bt, 88)  bf16
    head = slab_ref[:, HEAD_OFF:HEAD_OFF + HEAD_DIM]       # (bt, 120) bf16
    label = slab_ref[:, LABEL_OFF:LABEL_OFF + 1].astype(jnp.float32)   # (bt, 1)

    # ---- ActUnit layer 1 (concat [i1, i1-i2, i2] folded into two weight blocks) ----
    # [his, his-item, item] @ W1 == his @ (W1a+W1b) + item @ (W1c-W1b)
    t_his = mm(his2, aw1h_ref)                             # (bht, 64)
    t_item = mm(item, aw1i_ref)                            # (bt, 64)
    t_item_rep = jnp.broadcast_to(t_item[None], (h_len, bt, 64)).reshape(bht, 64)
    h1 = jnp.maximum(t_his + t_item_rep + ab1, 0.0)

    # ---- ActUnit layers 2 / 3 (32->1 as VPU multiply + lane reduce) ----
    h2 = jnp.maximum(mm(h1, aw2_ref) + ab2, 0.0)           # (bht, 32)
    act_out = jnp.sum(h2 * aw3v, axis=-1, keepdims=True) + ab3   # (bht, 1)

    # ActUnit returns i1 * mlp_out, then get_logit multiplies by his_feature again
    # (his^2 * mlp_out) -- matches the PyTorch reference exactly.  Upcast once to f32.
    hisf = his3.astype(jnp.float32)                        # (H, bt, 88)
    act3 = act_out.reshape(h_len, bt, 1)                   # free split (bt % 8 == 0)
    pooled = jnp.sum(hisf * hisf * act3, axis=0)           # (bt, 88)  sum-pool over history

    # ---- main MLP (the [head, pooled] concat folded into split mw1) ----
    m = jnp.maximum(mm(head, mw1h_ref) + mm(pooled, mw1p_ref) + mb1, 0.0)   # (bt, 128)
    m = jnp.maximum(mm(m, mw2_ref) + mb2, 0.0)                              # (bt, 64)
    m = jnp.maximum(mm(m, mw3_ref) + mb3, 0.0)                              # (bt, 32)
    raw = jnp.sum(m * mw4v, axis=-1, keepdims=True) + mb4                   # (bt, 1)

    # numerically stable sigmoid (f32)
    e = jnp.exp(-jnp.abs(raw))
    sig = jnp.where(raw >= 0.0, 1.0 / (1.0 + e), e / (1.0 + e))

    # per-example BCE with the same +1e-6 clamps as the reference; the sum / B
    # reduction is finished in the wrapper so the batch axis stays parallel.
    bce = -(label * jnp.log(sig + 1e-6) +
            (1.0 - label) * jnp.log(1.0 - sig + 1e-6))

    # one merged output stream: col 0 = logit, col 1 = per-example BCE
    out_ref[...] = jnp.concatenate([sig, bce], axis=1)     # (bt, 2)


# ----------------------------- wrapper -----------------------------------
def prepare_kernel_params(act_params, mlp_params):
    """Fold concat weights, cast matmul weights to bf16, pack biases."""
    aw1, ab1, aw2, ab2, aw3, ab3 = act_params
    mw1, mb1, mw2, mb2, mw3, mb3, mw4, mb4 = mlp_params
    f = HIS_ITEM_DIM

    aw1_his = (aw1[:f] + aw1[f:2 * f]).astype(jnp.bfloat16)       # (88, 64)
    aw1_item = (aw1[2 * f:] - aw1[f:2 * f]).astype(jnp.bfloat16)  # (88, 64)
    mw1_head = mw1[:HEAD_DIM].astype(jnp.bfloat16)                # (120, 128)
    mw1_pool = mw1[HEAD_DIM:].astype(jnp.bfloat16)                # (88, 128)

    bias_pack = jnp.zeros((8, 128), jnp.float32)
    bias_pack = bias_pack.at[0, :64].set(ab1.reshape(-1))
    bias_pack = bias_pack.at[1, :32].set(ab2.reshape(-1))
    bias_pack = bias_pack.at[2, :128].set(mb1.reshape(-1))
    bias_pack = bias_pack.at[3, :64].set(mb2.reshape(-1))
    bias_pack = bias_pack.at[4, :32].set(mb3.reshape(-1))
    bias_pack = bias_pack.at[5, 0].set(ab3[0, 0])
    bias_pack = bias_pack.at[5, 1].set(mb4[0, 0])
    bias_pack = bias_pack.at[6, :32].set(aw3.reshape(-1))
    bias_pack = bias_pack.at[7, :32].set(mw4.reshape(-1))

    return (aw1_his, aw1_item, aw2.astype(jnp.bfloat16),
            mw1_head, mw1_pool,
            mw2.astype(jnp.bfloat16), mw3.astype(jnp.bfloat16),
            bias_pack)


@functools.partial(jax.jit, static_argnames=("block_b",))
def din_forward(his_feature, item_feature_now, head, label, weights, *, block_b=256):
    """his_feature: (HIS_LEN, B, 88) f32 history-major; item: (B,88); head: (B,120)."""
    B = item_feature_now.shape[0]
    n_blocks = -(-B // block_b)               # ceil div
    B_pad = n_blocks * block_b

    # bf16 activation inputs (halves the dominant HBM stream); pack item/head/label
    # into one lane-padded slab so each grid step issues only 2 input DMAs.
    slab = jnp.zeros((B, SLAB_LANES), jnp.bfloat16)
    slab = slab.at[:, ITEM_OFF:ITEM_OFF + HIS_ITEM_DIM].set(
        item_feature_now.astype(jnp.bfloat16))
    slab = slab.at[:, HEAD_OFF:HEAD_OFF + HEAD_DIM].set(head.astype(jnp.bfloat16))
    slab = slab.at[:, LABEL_OFF:LABEL_OFF + 1].set(label.astype(jnp.bfloat16))

    his_bf16 = his_feature.astype(jnp.bfloat16)
    if B_pad != B:
        pad = B_pad - B
        his_bf16 = jnp.pad(his_bf16, ((0, 0), (0, pad), (0, 0)))
        slab = jnp.pad(slab, ((0, pad), (0, 0)))

    data_specs = [
        pl.BlockSpec((HIS_LEN, block_b, HIS_ITEM_DIM), lambda i: (0, i, 0)),
        pl.BlockSpec((block_b, SLAB_LANES), lambda i: (i, 0)),
    ]
    weight_specs = [pl.BlockSpec(w.shape, lambda i: (0, 0)) for w in weights]
    out_spec = pl.BlockSpec((block_b, 2), lambda i: (i, 0))

    out = pl.pallas_call(
        din_kernel,
        out_shape=jax.ShapeDtypeStruct((B_pad, 2), jnp.float32),
        grid=(n_blocks,),
        in_specs=data_specs + weight_specs,
        out_specs=out_spec,
        compiler_params=pltpu.CompilerParams(dimension_semantics=("parallel",)),
    )(his_bf16, slab, *weights)

    logit = out[:B, 0:1]
    loss = jnp.sum(out[:B, 1]) / B
    return logit, loss


# ---------------- parameter / data setup (deterministic) ----------------
def linear_params(key, fan_in, fan_out):
    k1, k2 = jax.random.split(key)
    bound = 1.0 / float(fan_in) ** 0.5
    w = jax.random.uniform(k1, (fan_in, fan_out), jnp.float32, -bound, bound)
    b = jax.random.uniform(k2, (1, fan_out), jnp.float32, -bound, bound)
    return w, b


def build_params(key):
    keys = jax.random.split(key, 16)
    emb = {
        "user": jax.random.normal(keys[0], (USER_NUM, DIM), jnp.float32),
        "item": jax.random.normal(keys[1], (ITEM_NUM, DIM), jnp.float32),
        "age": jax.random.normal(keys[2], (AGE_NUM, DIM), jnp.float32),
        "gender": jax.random.normal(keys[3], (GENDER_NUM, DIM), jnp.float32),
        "occ": jax.random.normal(keys[4], (OCC_NUM, DIM), jnp.float32),
        "kind": jax.random.normal(keys[5], (KIND_NUM, DIM), jnp.float32),
    }
    aw1, ab1 = linear_params(keys[6], 3 * HIS_ITEM_DIM, 64)
    aw2, ab2 = linear_params(keys[7], 64, 32)
    aw3, ab3 = linear_params(keys[8], 32, 1)
    act_params = (aw1, ab1, aw2, ab2, aw3, ab3)
    mw1, mb1 = linear_params(keys[9], ALL_DIM, 128)
    mw2, mb2 = linear_params(keys[10], 128, 64)
    mw3, mb3 = linear_params(keys[11], 64, 32)
    mw4, mb4 = linear_params(keys[12], 32, 1)
    mlp_params = (mw1, mb1, mw2, mb2, mw3, mb3, mw4, mb4)
    return emb, act_params, mlp_params


def build_features(emb, data):
    """Embedding gathers + zero-id masking + feature assembly (plain-JAX glue)."""
    b = data["userid"].shape[0]
    user_w = emb["user"][data["userid"]]          # (b, 1, DIM)
    item_w = emb["item"][data["itemid"]]          # (b, 1, DIM)
    age_w = emb["age"][data["user_age"]]          # (b, 1, DIM)
    gender_w = emb["gender"][data["gender"]]      # (b, 1, DIM)
    occ_w = emb["occ"][data["user_occupation"]]   # (b, 1, DIM)

    kind_ids = data["item_kind"]                  # (b, KIND_LEN)
    kind_w = emb["kind"][kind_ids] * (kind_ids != 0)[..., None].astype(jnp.float32)

    his_feats = []
    for i in range(HIS_LEN):
        his_id = data["item_id_his"][:, i:i + 1]                # (b, 1)
        his_kind = data["item_kind_his"][:, i]                  # (b, KIND_LEN)
        his_item_w = emb["item"][his_id]                        # (b, 1, DIM)
        his_kind_w = emb["kind"][his_kind] * (his_kind != 0)[..., None].astype(jnp.float32)
        id_kind = jnp.concatenate([his_item_w, his_kind_w], axis=1).reshape(b, HIS_ITEM_DIM)
        his_feats.append(id_kind)
    # history-major layout for the kernel: (HIS_LEN, b, HIS_ITEM_DIM)
    his_feature = jnp.stack(his_feats, axis=0)

    item_feature_now = jnp.concatenate([item_w, kind_w], axis=1).reshape(b, HIS_ITEM_DIM)
    head = jnp.concatenate([user_w, item_w, age_w, gender_w, occ_w, kind_w],
                           axis=1).reshape(b, HEAD_DIM)
    return (his_feature.astype(jnp.float32),
            item_feature_now.astype(jnp.float32),
            head.astype(jnp.float32))


def din_reference(his_hbf, item_feature_now, head, label, act_params, mlp_params):
    """Pure-JAX f32 reference of the PyTorch forward (loose self-check)."""
    aw1, ab1, aw2, ab2, aw3, ab3 = act_params
    mw1, mb1, mw2, mb2, mw3, mb3, mw4, mb4 = mlp_params
    B = head.shape[0]
    his_feature = jnp.transpose(his_hbf, (1, 0, 2))            # (B, H, F)
    i2 = jnp.broadcast_to(item_feature_now[:, None, :], his_feature.shape)
    i_in = jnp.concatenate([his_feature, his_feature - i2, i2], axis=-1)
    h = jnp.maximum(i_in @ aw1 + ab1, 0.0)
    h = jnp.maximum(h @ aw2 + ab2, 0.0)
    act_out = h @ aw3 + ab3
    his_scaled = his_feature * (his_feature * act_out)
    pooled = jnp.sum(his_scaled, axis=1)
    all_feat = jnp.concatenate([head, pooled], axis=-1)
    m = jnp.maximum(all_feat @ mw1 + mb1, 0.0)
    m = jnp.maximum(m @ mw2 + mb2, 0.0)
    m = jnp.maximum(m @ mw3 + mb3, 0.0)
    raw = m @ mw4 + mb4
    logit = jax.nn.sigmoid(raw)
    bce = -(label * jnp.log(logit + 1e-6) + (1.0 - label) * jnp.log(1.0 - logit + 1e-6))
    return logit, jnp.sum(bce) / B


if __name__ == "__main__":
    B = 512
    BLOCK_B = 256
    key = jax.random.PRNGKey(0)
    pkey, dkey = jax.random.split(key)
    emb, act_params, mlp_params = build_params(pkey)

    dkeys = jax.random.split(dkey, 9)
    data = {
        "userid": jax.random.randint(dkeys[0], (B, 1), 0, USER_NUM),
        "itemid": jax.random.randint(dkeys[1], (B, 1), 0, ITEM_NUM),
        "user_age": jax.random.randint(dkeys[2], (B, 1), 0, AGE_NUM),
        "gender": jax.random.randint(dkeys[3], (B, 1), 0, GENDER_NUM),
        "user_occupation": jax.random.randint(dkeys[4], (B, 1), 0, OCC_NUM),
        "item_kind": jax.random.randint(dkeys[5], (B, KIND_LEN), 0, KIND_NUM),
        "item_id_his": jax.random.randint(dkeys[6], (B, HIS_LEN), 0, ITEM_NUM),
        "item_kind_his": jax.random.randint(dkeys[7], (B, HIS_LEN, KIND_LEN), 0, KIND_NUM),
        "label": jax.random.bernoulli(dkeys[8], 0.5, (B, 1)).astype(jnp.float32),
    }

    his_feature, item_feature_now, head = build_features(emb, data)
    weights = prepare_kernel_params(act_params, mlp_params)

    logit, loss = din_forward(his_feature, item_feature_now, head, data["label"],
                              weights, block_b=BLOCK_B)
    logit = jax.block_until_ready(logit)
    loss = jax.block_until_ready(loss)

    assert logit.shape == (B, 1)
    assert bool(jnp.all(jnp.isfinite(logit))) and bool(jnp.isfinite(loss))

    # loose self-check against the pure-JAX f32 reference (kernel uses bf16 inputs/MXU)
    ref_logit, ref_loss = din_reference(his_feature, item_feature_now, head,
                                        data["label"], act_params, mlp_params)
    assert bool(jnp.max(jnp.abs(logit - ref_logit)) < 0.12)
    assert bool(jnp.abs(loss - ref_loss) < 0.12 * jnp.maximum(1.0, jnp.abs(ref_loss)))

    # TODO(synk): roc_auc_score (sklearn AUC metric) has no Pallas/TPU equivalent; omitted.
    print("KERNEL_OK")
</pallas_src>

<mosaic_0001>
module attributes {stable_mosaic.version = 11 : i64} {
  func.func @din_kernel(%arg0: i32, %arg1: memref<5x256x88xbf16, #tpu.memory_space<vmem>>, %arg2: memref<256x256xbf16, #tpu.memory_space<vmem>>, %arg3: memref<88x64xbf16, #tpu.memory_space<vmem>>, %arg4: memref<88x64xbf16, #tpu.memory_space<vmem>>, %arg5: memref<64x32xbf16, #tpu.memory_space<vmem>>, %arg6: memref<120x128xbf16, #tpu.memory_space<vmem>>, %arg7: memref<88x128xbf16, #tpu.memory_space<vmem>>, %arg8: memref<128x64xbf16, #tpu.memory_space<vmem>>, %arg9: memref<64x32xbf16, #tpu.memory_space<vmem>>, %arg10: memref<8x128xf32, #tpu.memory_space<vmem>>, %arg11: memref<256x2xf32, #tpu.memory_space<vmem>>) attributes {dimension_semantics = [#tpu.dimension_semantics<parallel>], iteration_bounds = array<i64: 2>, scalar_prefetch = 0 : i64, scratch_operands = 0 : i64, tpu.core_type = #tpu.core_type<tc>, window_params = [{transform_indices = @transform_0, window_bounds = array<i64: 5, 256, 88>}, {transform_indices = @transform_1, window_bounds = array<i64: 256, 256>}, {pipeline_mode = #tpu.pipeline_mode<synchronous>, transform_indices = @transform_2, window_bounds = array<i64: 88, 64>}, {pipeline_mode = #tpu.pipeline_mode<synchronous>, transform_indices = @transform_3, window_bounds = array<i64: 88, 64>}, {pipeline_mode = #tpu.pipeline_mode<synchronous>, transform_indices = @transform_4, window_bounds = array<i64: 64, 32>}, {pipeline_mode = #tpu.pipeline_mode<synchronous>, transform_indices = @transform_5, window_bounds = array<i64: 120, 128>}, {pipeline_mode = #tpu.pipeline_mode<synchronous>, transform_indices = @transform_6, window_bounds = array<i64: 88, 128>}, {pipeline_mode = #tpu.pipeline_mode<synchronous>, transform_indices = @transform_7, window_bounds = array<i64: 128, 64>}, {pipeline_mode = #tpu.pipeline_mode<synchronous>, transform_indices = @transform_8, window_bounds = array<i64: 64, 32>}, {pipeline_mode = #tpu.pipeline_mode<synchronous>, transform_indices = @transform_9, window_bounds = array<i64: 8, 128>}, {transform_indices = @transform_10, window_bounds = array<i64: 256, 2>}]} {
    %c0 = arith.constant 0 : index
    %c0_0 = arith.constant 0 : index
    %0 = vector.load %arg10[%c0, %c0_0] : memref<8x128xf32, #tpu.memory_space<vmem>>, vector<1x64xf32>
    %c1 = arith.constant 1 : index
    %c0_1 = arith.constant 0 : index
    %1 = vector.load %arg10[%c1, %c0_1] : memref<8x128xf32, #tpu.memory_space<vmem>>, vector<1x32xf32>
    %c2 = arith.constant 2 : index
    %c0_2 = arith.constant 0 : index
    %2 = vector.load %arg10[%c2, %c0_2] : memref<8x128xf32, #tpu.memory_space<vmem>>, vector<1x128xf32>
    %c3 = arith.constant 3 : index
    %c0_3 = arith.constant 0 : index
    %3 = vector.load %arg10[%c3, %c0_3] : memref<8x128xf32, #tpu.memory_space<vmem>>, vector<1x64xf32>
    %c4 = arith.constant 4 : index
    %c0_4 = arith.constant 0 : index
    %4 = vector.load %arg10[%c4, %c0_4] : memref<8x128xf32, #tpu.memory_space<vmem>>, vector<1x32xf32>
    %c5 = arith.constant 5 : index
    %c0_5 = arith.constant 0 : index
    %5 = vector.load %arg10[%c5, %c0_5] : memref<8x128xf32, #tpu.memory_space<vmem>>, vector<1x1xf32>
    %c5_6 = arith.constant 5 : index
    %c1_7 = arith.constant 1 : index
    %6 = vector.load %arg10[%c5_6, %c1_7] : memref<8x128xf32, #tpu.memory_space<vmem>>, vector<1x1xf32>
    %c6 = arith.constant 6 : index
    %c0_8 = arith.constant 0 : index
    %7 = vector.load %arg10[%c6, %c0_8] : memref<8x128xf32, #tpu.memory_space<vmem>>, vector<1x32xf32>
    %c7 = arith.constant 7 : index
    %c0_9 = arith.constant 0 : index
    %8 = vector.load %arg10[%c7, %c0_9] : memref<8x128xf32, #tpu.memory_space<vmem>>, vector<1x32xf32>
    %c0_10 = arith.constant 0 : index
    %c0_11 = arith.constant 0 : index
    %c0_12 = arith.constant 0 : index
    %9 = vector.load %arg1[%c0_10, %c0_11, %c0_12] : memref<5x256x88xbf16, #tpu.memory_space<vmem>>, vector<5x256x88xbf16>
    %10 = vector.shape_cast %9 : vector<5x256x88xbf16> to vector<1280x88xbf16>
    %c0_13 = arith.constant 0 : index
    %c0_14 = arith.constant 0 : index
    %11 = vector.load %arg2[%c0_13, %c0_14] : memref<256x256xbf16, #tpu.memory_space<vmem>>, vector<256x88xbf16>
    %c0_15 = arith.constant 0 : index
    %c128 = arith.constant 128 : index
    %12 = vector.load %arg2[%c0_15, %c128] : memref<256x256xbf16, #tpu.memory_space<vmem>>, vector<256x120xbf16>
    %c0_16 = arith.constant 0 : index
    %c248 = arith.constant 248 : index
    %13 = vector.load %arg2[%c0_16, %c248] : memref<256x256xbf16, #tpu.memory_space<vmem>>, vector<256x1xbf16>
    %14 = arith.extf %13 : vector<256x1xbf16> to vector<256x1xf32>
    %c0_17 = arith.constant 0 : index
    %c0_18 = arith.constant 0 : index
    %15 = vector.load %arg3[%c0_17, %c0_18] : memref<88x64xbf16, #tpu.memory_space<vmem>>, vector<88x64xbf16>
    %cst = arith.constant dense<0.000000e+00> : vector<1280x64xf32>
    %16 = tpu.matmul %10, %15, %cst {dimension_numbers = #tpu.dot_dimension_numbers<[1], [0], [0], [1], [0, 0, 1, 1], [], []>} : vector<1280x88xbf16>, vector<88x64xbf16>, vector<1280x64xf32> -> vector<1280x64xf32>
    %c0_19 = arith.constant 0 : index
    %c0_20 = arith.constant 0 : index
    %17 = vector.load %arg4[%c0_19, %c0_20] : memref<88x64xbf16, #tpu.memory_space<vmem>>, vector<88x64xbf16>
    %cst_21 = arith.constant dense<0.000000e+00> : vector<256x64xf32>
    %18 = tpu.matmul %11, %17, %cst_21 {dimension_numbers = #tpu.dot_dimension_numbers<[1], [0], [0], [1], [0, 0, 1, 1], [], []>} : vector<256x88xbf16>, vector<88x64xbf16>, vector<256x64xf32> -> vector<256x64xf32>
    %19 = vector.shape_cast %18 : vector<256x64xf32> to vector<1x256x64xf32>
    %20 = vector.shape_cast %19 : vector<1x256x64xf32> to vector<1x256x64xf32>
    %21 = vector.broadcast %20 : vector<1x256x64xf32> to vector<5x256x64xf32>
    %22 = vector.shape_cast %21 : vector<5x256x64xf32> to vector<1280x64xf32>
    %23 = arith.addf %16, %22 : vector<1280x64xf32>
    %24 = vector.broadcast %0 : vector<1x64xf32> to vector<1280x64xf32>
    %25 = arith.addf %23, %24 : vector<1280x64xf32>
    %cst_22 = arith.constant 0.000000e+00 : f32
    %26 = vector.broadcast %cst_22 : f32 to vector<1280x64xf32>
    %27 = arith.maximumf %25, %26 : vector<1280x64xf32>
    %28 = arith.truncf %27 : vector<1280x64xf32> to vector<1280x64xbf16>
    %c0_23 = arith.constant 0 : index
    %c0_24 = arith.constant 0 : index
    %29 = vector.load %arg5[%c0_23, %c0_24] : memref<64x32xbf16, #tpu.memory_space<vmem>>, vector<64x32xbf16>
    %cst_25 = arith.constant dense<0.000000e+00> : vector<1280x32xf32>
    %30 = tpu.matmul %28, %29, %cst_25 {dimension_numbers = #tpu.dot_dimension_numbers<[1], [0], [0], [1], [0, 0, 1, 1], [], []>} : vector<1280x64xbf16>, vector<64x32xbf16>, vector<1280x32xf32> -> vector<1280x32xf32>
    %31 = vector.broadcast %1 : vector<1x32xf32> to vector<1280x32xf32>
    %32 = arith.addf %30, %31 : vector<1280x32xf32>
    %cst_26 = arith.constant 0.000000e+00 : f32
    %33 = vector.broadcast %cst_26 : f32 to vector<1280x32xf32>
    %34 = arith.maximumf %32, %33 : vector<1280x32xf32>
    %35 = vector.broadcast %7 : vector<1x32xf32> to vector<1280x32xf32>
    %36 = arith.mulf %34, %35 : vector<1280x32xf32>
    %cst_27 = arith.constant dense<0.000000e+00> : vector<1280xf32>
    %37 = vector.multi_reduction <add>, %36, %cst_27 [1] : vector<1280x32xf32> to vector<1280xf32>
    %38 = vector.shape_cast %37 : vector<1280xf32> to vector<1280x1xf32>
    %39 = vector.broadcast %5 : vector<1x1xf32> to vector<1280x1xf32>
    %40 = arith.addf %38, %39 : vector<1280x1xf32>
    %41 = arith.extf %9 : vector<5x256x88xbf16> to vector<5x256x88xf32>
    %42 = vector.shape_cast %40 : vector<1280x1xf32> to vector<5x256x1xf32>
    %43 = arith.mulf %41, %41 : vector<5x256x88xf32>
    %44 = vector.broadcast %42 : vector<5x256x1xf32> to vector<5x256x88xf32>
    %45 = arith.mulf %43, %44 : vector<5x256x88xf32>
    %cst_28 = arith.constant dense<0.000000e+00> : vector<256x88xf32>
    %46 = vector.multi_reduction <add>, %45, %cst_28 [0] : vector<5x256x88xf32> to vector<256x88xf32>
    %c0_29 = arith.constant 0 : index
    %c0_30 = arith.constant 0 : index
    %47 = vector.load %arg6[%c0_29, %c0_30] : memref<120x128xbf16, #tpu.memory_space<vmem>>, vector<120x128xbf16>
    %cst_31 = arith.constant dense<0.000000e+00> : vector<256x128xf32>
    %48 = tpu.matmul %12, %47, %cst_31 {dimension_numbers = #tpu.dot_dimension_numbers<[1], [0], [0], [1], [0, 0, 1, 1], [], []>} : vector<256x120xbf16>, vector<120x128xbf16>, vector<256x128xf32> -> vector<256x128xf32>
    %49 = arith.truncf %46 : vector<256x88xf32> to vector<256x88xbf16>
    %c0_32 = arith.constant 0 : index
    %c0_33 = arith.constant 0 : index
    %50 = vector.load %arg7[%c0_32, %c0_33] : memref<88x128xbf16, #tpu.memory_space<vmem>>, vector<88x128xbf16>
    %cst_34 = arith.constant dense<0.000000e+00> : vector<256x128xf32>
    %51 = tpu.matmul %49, %50, %cst_34 {dimension_numbers = #tpu.dot_dimension_numbers<[1], [0], [0], [1], [0, 0, 1, 1], [], []>} : vector<256x88xbf16>, vector<88x128xbf16>, vector<256x128xf32> -> vector<256x128xf32>
    %52 = arith.addf %48, %51 : vector<256x128xf32>
    %53 = vector.broadcast %2 : vector<1x128xf32> to vector<256x128xf32>
    %54 = arith.addf %52, %53 : vector<256x128xf32>
    %cst_35 = arith.constant 0.000000e+00 : f32
    %55 = vector.broadcast %cst_35 : f32 to vector<256x128xf32>
    %56 = arith.maximumf %54, %55 : vector<256x128xf32>
    %57 = arith.truncf %56 : vector<256x128xf32> to vector<256x128xbf16>
    %c0_36 = arith.constant 0 : index
    %c0_37 = arith.constant 0 : index
    %58 = vector.load %arg8[%c0_36, %c0_37] : memref<128x64xbf16, #tpu.memory_space<vmem>>, vector<128x64xbf16>
    %cst_38 = arith.constant dense<0.000000e+00> : vector<256x64xf32>
    %59 = tpu.matmul %57, %58, %cst_38 {dimension_numbers = #tpu.dot_dimension_numbers<[1], [0], [0], [1], [0, 0, 1, 1], [], []>} : vector<256x128xbf16>, vector<128x64xbf16>, vector<256x64xf32> -> vector<256x64xf32>
    %60 = vector.broadcast %3 : vector<1x64xf32> to vector<256x64xf32>
    %61 = arith.addf %59, %60 : vector<256x64xf32>
    %cst_39 = arith.constant 0.000000e+00 : f32
    %62 = vector.broadcast %cst_39 : f32 to vector<256x64xf32>
    %63 = arith.maximumf %61, %62 : vector<256x64xf32>
    %64 = arith.truncf %63 : vector<256x64xf32> to vector<256x64xbf16>
    %c0_40 = arith.constant 0 : index
    %c0_41 = arith.constant 0 : index
    %65 = vector.load %arg9[%c0_40, %c0_41] : memref<64x32xbf16, #tpu.memory_space<vmem>>, vector<64x32xbf16>
    %cst_42 = arith.constant dense<0.000000e+00> : vector<256x32xf32>
    %66 = tpu.matmul %64, %65, %cst_42 {dimension_numbers = #tpu.dot_dimension_numbers<[1], [0], [0], [1], [0, 0, 1, 1], [], []>} : vector<256x64xbf16>, vector<64x32xbf16>, vector<256x32xf32> -> vector<256x32xf32>
    %67 = vector.broadcast %4 : vector<1x32xf32> to vector<256x32xf32>
    %68 = arith.addf %66, %67 : vector<256x32xf32>
    %cst_43 = arith.constant 0.000000e+00 : f32
    %69 = vector.broadcast %cst_43 : f32 to vector<256x32xf32>
    %70 = arith.maximumf %68, %69 : vector<256x32xf32>
    %71 = vector.broadcast %8 : vector<1x32xf32> to vector<256x32xf32>
    %72 = arith.mulf %70, %71 : vector<256x32xf32>
    %cst_44 = arith.constant dense<0.000000e+00> : vector<256xf32>
    %73 = vector.multi_reduction <add>, %72, %cst_44 [1] : vector<256x32xf32> to vector<256xf32>
    %74 = vector.shape_cast %73 : vector<256xf32> to vector<256x1xf32>
    %75 = vector.broadcast %6 : vector<1x1xf32> to vector<256x1xf32>
    %76 = arith.addf %74, %75 : vector<256x1xf32>
    %77 = math.absf %76 : vector<256x1xf32>
    %cst_45 = arith.constant 0.000000e+00 : f32
    %78 = vector.broadcast %cst_45 : f32 to vector<256x1xf32>
    %79 = arith.subf %78, %77 : vector<256x1xf32>
    %80 = math.exp %79 : vector<256x1xf32>
    %cst_46 = arith.constant 0.000000e+00 : f32
    %81 = vector.broadcast %cst_46 : f32 to vector<256x1xf32>
    %82 = arith.cmpf oge, %76, %81 : vector<256x1xf32>
    %cst_47 = arith.constant 1.000000e+00 : f32
    %83 = vector.broadcast %cst_47 : f32 to vector<256x1xf32>
    %84 = arith.addf %83, %80 : vector<256x1xf32>
    %cst_48 = arith.constant 1.000000e+00 : f32
    %85 = vector.broadcast %cst_48 : f32 to vector<256x1xf32>
    %86 = arith.divf %85, %84 : vector<256x1xf32>
    %cst_49 = arith.constant 1.000000e+00 : f32
    %87 = vector.broadcast %cst_49 : f32 to vector<256x1xf32>
    %88 = arith.addf %87, %80 : vector<256x1xf32>
    %89 = arith.divf %80, %88 : vector<256x1xf32>
    %90 = arith.select %82, %86, %89 : vector<256x1xi1>, vector<256x1xf32>
    %cst_50 = arith.constant 9.99999997E-7 : f32
    %91 = vector.broadcast %cst_50 : f32 to vector<256x1xf32>
    %92 = arith.addf %90, %91 : vector<256x1xf32>
    %93 = math.log %92 : vector<256x1xf32>
    %94 = arith.mulf %14, %93 : vector<256x1xf32>
    %cst_51 = arith.constant 1.000000e+00 : f32
    %95 = vector.broadcast %cst_51 : f32 to vector<256x1xf32>
    %96 = arith.subf %95, %14 : vector<256x1xf32>
    %cst_52 = arith.constant 1.000000e+00 : f32
    %97 = vector.broadcast %cst_52 : f32 to vector<256x1xf32>
    %98 = arith.subf %97, %90 : vector<256x1xf32>
    %cst_53 = arith.constant 9.99999997E-7 : f32
    %99 = vector.broadcast %cst_53 : f32 to vector<256x1xf32>
    %100 = arith.addf %98, %99 : vector<256x1xf32>
    %101 = math.log %100 : vector<256x1xf32>
    %102 = arith.mulf %96, %101 : vector<256x1xf32>
    %103 = arith.addf %94, %102 : vector<256x1xf32>
    %cst_54 = arith.constant 0.000000e+00 : f32
    %104 = vector.broadcast %cst_54 : f32 to vector<256x1xf32>
    %105 = arith.subf %104, %103 : vector<256x1xf32>
    %106 = tpu.concatenate %90, %105 in 1 : vector<256x1xf32>, vector<256x1xf32> -> vector<256x2xf32>
    %c0_55 = arith.constant 0 : index
    %c0_56 = arith.constant 0 : index
    %107 = vector.load %arg11[%c0_55, %c0_56] : memref<256x2xf32, #tpu.memory_space<vmem>>, vector<256x2xf32>
    tpu.vector_store %arg11[%c0_55, %c0_56], %106 {strides = array<i32>} : memref<256x2xf32, #tpu.memory_space<vmem>>, vector<256x2xf32>,
    return
  }
  func.func @transform_0(%arg0: i32) -> (i32, i32, i32) {
    %c0_i32 = arith.constant 0 : i32
    %c0_i32_0 = arith.constant 0 : i32
    %c0_i32_1 = arith.constant 0 : i32
    return %c0_i32, %arg0, %c0_i32_0 : i32, i32, i32
  }
  func.func @transform_1(%arg0: i32) -> (i32, i32) {
    %c0_i32 = arith.constant 0 : i32
    %c0_i32_0 = arith.constant 0 : i32
    return %arg0, %c0_i32 : i32, i32
  }
  func.func @transform_2(%arg0: i32) -> (i32, i32) {
    %c0_i32 = arith.constant 0 : i32
    %c0_i32_0 = arith.constant 0 : i32
    %c0_i32_1 = arith.constant 0 : i32
    return %c0_i32, %c0_i32_0 : i32, i32
  }
  func.func @transform_3(%arg0: i32) -> (i32, i32) {
    %c0_i32 = arith.constant 0 : i32
    %c0_i32_0 = arith.constant 0 : i32
    %c0_i32_1 = arith.constant 0 : i32
    return %c0_i32, %c0_i32_0 : i32, i32
  }
  func.func @transform_4(%arg0: i32) -> (i32, i32) {
    %c0_i32 = arith.constant 0 : i32
    %c0_i32_0 = arith.constant 0 : i32
    %c0_i32_1 = arith.constant 0 : i32
    return %c0_i32, %c0_i32_0 : i32, i32
  }
  func.func @transform_5(%arg0: i32) -> (i32, i32) {
    %c0_i32 = arith.constant 0 : i32
    %c0_i32_0 = arith.constant 0 : i32
    %c0_i32_1 = arith.constant 0 : i32
    return %c0_i32, %c0_i32_0 : i32, i32
  }
  func.func @transform_6(%arg0: i32) -> (i32, i32) {
    %c0_i32 = arith.constant 0 : i32
    %c0_i32_0 = arith.constant 0 : i32
    %c0_i32_1 = arith.constant 0 : i32
    return %c0_i32, %c0_i32_0 : i32, i32
  }
  func.func @transform_7(%arg0: i32) -> (i32, i32) {
    %c0_i32 = arith.constant 0 : i32
    %c0_i32_0 = arith.constant 0 : i32
    %c0_i32_1 = arith.constant 0 : i32
    return %c0_i32, %c0_i32_0 : i32, i32
  }
  func.func @transform_8(%arg0: i32) -> (i32, i32) {
    %c0_i32 = arith.constant 0 : i32
    %c0_i32_0 = arith.constant 0 : i32
    %c0_i32_1 = arith.constant 0 : i32
    return %c0_i32, %c0_i32_0 : i32, i32
  }
  func.func @transform_9(%arg0: i32) -> (i32, i32) {
    %c0_i32 = arith.constant 0 : i32
    %c0_i32_0 = arith.constant 0 : i32
    %c0_i32_1 = arith.constant 0 : i32
    return %c0_i32, %c0_i32_0 : i32, i32
  }
  func.func @transform_10(%arg0: i32) -> (i32, i32) {
    %c0_i32 = arith.constant 0 : i32
    %c0_i32_0 = arith.constant 0 : i32
    return %arg0, %c0_i32 : i32, i32
  }
}

</mosaic_0001>

<llo_original>
// kernel: din_forward.1
$region0: #{din_forward.1}
  #allocation0 [shape = 'u32[]', space=smem, size = 0x4, offset = 0x4, fixed_abs, tag = 'smem constant byte address 0x4 - core index']
  #allocation1 [shape = 'u32[72,128]{1,0:T(1,128)}', space=vmem, size = 0x9000, scoped, tag = 'internal scratch']
  %s0 = inlined_call_operand.vmem [shape: bf16[5,512,88], index: 0, kind: input, shape index: {}]
  %s1 = inlined_call_operand.vmem [shape: bf16[512,256], index: 1, kind: input, shape index: {}]
  %s2 = inlined_call_operand.vmem [shape: bf16[88,64], index: 2, kind: input, shape index: {}]
  %s3 = inlined_call_operand.vmem [shape: bf16[88,64], index: 3, kind: input, shape index: {}]
  %s4 = inlined_call_operand.vmem [shape: bf16[64,32], index: 4, kind: input, shape index: {}]
  %s5 = inlined_call_operand.vmem [shape: bf16[120,128], index: 5, kind: input, shape index: {}]
  %s6 = inlined_call_operand.vmem [shape: bf16[88,128], index: 6, kind: input, shape index: {}]
  %s7 = inlined_call_operand.vmem [shape: bf16[128,64], index: 7, kind: input, shape index: {}]
  %s8 = inlined_call_operand.vmem [shape: bf16[64,32], index: 8, kind: input, shape index: {}]
  %s9 = inlined_call_operand.vmem [shape: f32[8,128], index: 9, kind: input, shape index: {}]
  %s10 = inlined_call_operand.vmem [shape: f32[512,2], index: 10, kind: output, shape index: {}]
  %s11 = sld [smem:[#allocation0]]
  $region114: #{din_forward.1} parent=0
    _
  %s13 = ssub.s32 1, %s11
  %s14 = scalar_select 0, %s13, %s11
  $region1: #{din_forward.1} parent=0
    #allocation2 [shape = 'u8[655360]{0}', space=vmem, size = 0xa0000, scoped, tag = 'input window, operand 0']
    loop: start=0, step=1, limit=4
    $region2: #{din_forward.1} parent=1 // loop_pre_header
      _
    $region3: #{din_forward.1} parent=1 // loop_header
      %s16 = sphi 0, %s20
      %p17 = scmp.ge.s32.totalorder %s16, 4
      %s26 = sphi 0, %s28
      %s29 = sphi 0, %s26
      %s30 = sphi 0, %s29
      %s46 = sphi 0, %s30
      %s52 = sphi 0, %s54
      %s55 = sphi 0, %s52
      %s56 = sphi 0, %s55
      %s72 = sphi 0, %s56
      %s76 = sphi 0, %s76
      %s78 = sphi 0, %s76
      %s79 = sphi 0, %s78
      %s93 = sphi 0, %s79
      %s97 = sphi 0, %s97
      %s99 = sphi 0, %s97
      %s100 = sphi 0, %s99
      %s114 = sphi 0, %s100
      %s118 = sphi 0, %s118
      %s120 = sphi 0, %s118
      %s121 = sphi 0, %s120
      %s135 = sphi 0, %s121
      %s139 = sphi 0, %s139
      %s141 = sphi 0, %s139
      %s142 = sphi 0, %s141
      %s156 = sphi 0, %s142
      %s160 = sphi 0, %s160
      %s162 = sphi 0, %s160
      %s163 = sphi 0, %s162
      %s177 = sphi 0, %s163
      %s181 = sphi 0, %s181
      %s183 = sphi 0, %s181
      %s184 = sphi 0, %s183
      %s198 = sphi 0, %s184
      %s202 = sphi 0, %s202
      %s204 = sphi 0, %s202
      %s205 = sphi 0, %s204
      %s219 = sphi 0, %s205
      %s223 = sphi 0, %s223
      %s225 = sphi 0, %s223
      %s226 = sphi 0, %s225
      %s240 = sphi 0, %s226
      %s246 = sphi 0, %s248
      %s249 = sphi 0, %s246
      %s250 = sphi 0, %s249
      %s266 = sphi 0, %s250
    $region4: #{din_forward.1} parent=1 // loop_header_branch
      %19 = sbr.rel (%p17) target = $region8
    $region5: #{din_forward.1} parent=1 // loop_body
      %s21 = ssub.s32 %s16, 1
      %s22 = ssub.s32 %s16, 2
      %s23 = sadd.s32 %s16, 1
      %s24 = ssub.s32 %s16, %s23
      %p25 = scmp.eq.s32.totalorder %s24, 0
      %s27 = sadd.s32 %s26, 1
      %s28 = scalar_select %p25, %s26, %s27
      %p31 = pneg %p25
      %p32 = scmp.eq.s32.totalorder %s16, 1
      %p33 = por %p31, %p32
      %p34 = scmp.ne.s32.totalorder %s26, %s29
      %p35 = scmp.eq.s32.totalorder %s16, 0
      %p36 = por %p34, %p35
      %p37 = scmp.ne.s32.totalorder %s26, %s29
      %p38 = scmp.eq.s32.totalorder %s21, 1
      %p39 = por %p37, %p38
      %p40 = scmp.ne.s32.totalorder %s29, %s30
      %p41 = scmp.eq.s32.totalorder %s21, 0
      %p42 = por %p40, %p41
      %p43 = scmp.ne.s32.totalorder %s29, %s30
      %p44 = scmp.eq.s32.totalorder %s22, 1
      %p45 = por %p43, %p44
      %p47 = scmp.ne.s32.totalorder %s30, %s46
      %p48 = scmp.eq.s32.totalorder %s22, 0
      %p49 = por %p47, %p48
      %s50 = ssub.s32 %s16, %s23
      %p51 = scmp.eq.s32.totalorder %s50, 0
      %s53 = sadd.s32 %s52, 1
      %s54 = scalar_select %p51, %s52, %s53
      %p57 = pneg %p51
      %p58 = scmp.eq.s32.totalorder %s16, 1
      %p59 = por %p57, %p58
      %p60 = scmp.ne.s32.totalorder %s52, %s55
      %p61 = scmp.eq.s32.totalorder %s16, 0
      %p62 = por %p60, %p61
      %p63 = scmp.ne.s32.totalorder %s52, %s55
      %p64 = scmp.eq.s32.totalorder %s21, 1
      %p65 = por %p63, %p64
      %p66 = scmp.ne.s32.totalorder %s55, %s56
      %p67 = scmp.eq.s32.totalorder %s21, 0
      %p68 = por %p66, %p67
      %p69 = scmp.ne.s32.totalorder %s55, %s56
      %p70 = scmp.eq.s32.totalorder %s22, 1
      %p71 = por %p69, %p70
      %p73 = scmp.ne.s32.totalorder %s56, %s72
      %p74 = scmp.eq.s32.totalorder %s22, 0
      %p75 = por %p73, %p74
      %s77 = sadd.s32 %s76, 1
      %p80 = scmp.eq.s32.totalorder %s16, 1
      %p81 = scmp.ne.s32.totalorder %s76, %s78
      %p82 = scmp.eq.s32.totalorder %s16, 0
      %p83 = por %p81, %p82
      %p84 = scmp.ne.s32.totalorder %s76, %s78
      %p85 = scmp.eq.s32.totalorder %s21, 1
      %p86 = por %p84, %p85
      %p87 = scmp.ne.s32.totalorder %s78, %s79
      %p88 = scmp.eq.s32.totalorder %s21, 0
      %p89 = por %p87, %p88
      %p90 = scmp.ne.s32.totalorder %s78, %s79
      %p91 = scmp.eq.s32.totalorder %s22, 1
      %p92 = por %p90, %p91
      %p94 = scmp.ne.s32.totalorder %s79, %s93
      %p95 = scmp.eq.s32.totalorder %s22, 0
      %p96 = por %p94, %p95
      %s98 = sadd.s32 %s97, 1
      %p101 = scmp.eq.s32.totalorder %s16, 1
      %p102 = scmp.ne.s32.totalorder %s97, %s99
      %p103 = scmp.eq.s32.totalorder %s16, 0
      %p104 = por %p102, %p103
      %p105 = scmp.ne.s32.totalorder %s97, %s99
      %p106 = scmp.eq.s32.totalorder %s21, 1
      %p107 = por %p105, %p106
      %p108 = scmp.ne.s32.totalorder %s99, %s100
      %p109 = scmp.eq.s32.totalorder %s21, 0
      %p110 = por %p108, %p109
      %p111 = scmp.ne.s32.totalorder %s99, %s100
      %p112 = scmp.eq.s32.totalorder %s22, 1
      %p113 = por %p111, %p112
      %p115 = scmp.ne.s32.totalorder %s100, %s114
      %p116 = scmp.eq.s32.totalorder %s22, 0
      %p117 = por %p115, %p116
      %s119 = sadd.s32 %s118, 1
      %p122 = scmp.eq.s32.totalorder %s16, 1
      %p123 = scmp.ne.s32.totalorder %s118, %s120
      %p124 = scmp.eq.s32.totalorder %s16, 0
      %p125 = por %p123, %p124
      %p126 = scmp.ne.s32.totalorder %s118, %s120
      %p127 = scmp.eq.s32.totalorder %s21, 1
      %p128 = por %p126, %p127
      %p129 = scmp.ne.s32.totalorder %s120, %s121
      %p130 = scmp.eq.s32.totalorder %s21, 0
      %p131 = por %p129, %p130
      %p132 = scmp.ne.s32.totalorder %s120, %s121
      %p133 = scmp.eq.s32.totalorder %s22, 1
      %p134 = por %p132, %p133
      %p136 = scmp.ne.s32.totalorder %s121, %s135
      %p137 = scmp.eq.s32.totalorder %s22, 0
      %p138 = por %p136, %p137
      %s140 = sadd.s32 %s139, 1
      %p143 = scmp.eq.s32.totalorder %s16, 1
      %p144 = scmp.ne.s32.totalorder %s139, %s141
      %p145 = scmp.eq.s32.totalorder %s16, 0
      %p146 = por %p144, %p145
      %p147 = scmp.ne.s32.totalorder %s139, %s141
      %p148 = scmp.eq.s32.totalorder %s21, 1
      %p149 = por %p147, %p148
      %p150 = scmp.ne.s32.totalorder %s141, %s142
      %p151 = scmp.eq.s32.totalorder %s21, 0
      %p152 = por %p150, %p151
      %p153 = scmp.ne.s32.totalorder %s141, %s142
      %p154 = scmp.eq.s32.totalorder %s22, 1
      %p155 = por %p153, %p154
      %p157 = scmp.ne.s32.totalorder %s142, %s156
      %p158 = scmp.eq.s32.totalorder %s22, 0
      %p159 = por %p157, %p158
      %s161 = sadd.s32 %s160, 1
      %p164 = scmp.eq.s32.totalorder %s16, 1
      %p165 = scmp.ne.s32.totalorder %s160, %s162
      %p166 = scmp.eq.s32.totalorder %s16, 0
      %p167 = por %p165, %p166
      %p168 = scmp.ne.s32.totalorder %s160, %s162
      %p169 = scmp.eq.s32.totalorder %s21, 1
      %p170 = por %p168, %p169
      %p171 = scmp.ne.s32.totalorder %s162, %s163
      %p172 = scmp.eq.s32.totalorder %s21, 0
      %p173 = por %p171, %p172
      %p174 = scmp.ne.s32.totalorder %s162, %s163
      %p175 = scmp.eq.s32.totalorder %s22, 1
      %p176 = por %p174, %p175
      %p178 = scmp.ne.s32.totalorder %s163, %s177
      %p179 = scmp.eq.s32.totalorder %s22, 0
      %p180 = por %p178, %p179
      %s182 = sadd.s32 %s181, 1
      %p185 = scmp.eq.s32.totalorder %s16, 1
      %p186 = scmp.ne.s32.totalorder %s181, %s183
      %p187 = scmp.eq.s32.totalorder %s16, 0
      %p188 = por %p186, %p187
      %p189 = scmp.ne.s32.totalorder %s181, %s183
      %p190 = scmp.eq.s32.totalorder %s21, 1
      %p191 = por %p189, %p190
      %p192 = scmp.ne.s32.totalorder %s183, %s184
      %p193 = scmp.eq.s32.totalorder %s21, 0
      %p194 = por %p192, %p193
      %p195 = scmp.ne.s32.totalorder %s183, %s184
      %p196 = scmp.eq.s32.totalorder %s22, 1
      %p197 = por %p195, %p196
      %p199 = scmp.ne.s32.totalorder %s184, %s198
      %p200 = scmp.eq.s32.totalorder %s22, 0
      %p201 = por %p199, %p200
      %s203 = sadd.s32 %s202, 1
      %p206 = scmp.eq.s32.totalorder %s16, 1
      %p207 = scmp.ne.s32.totalorder %s202, %s204
      %p208 = scmp.eq.s32.totalorder %s16, 0
      %p209 = por %p207, %p208
      %p210 = scmp.ne.s32.totalorder %s202, %s204
      %p211 = scmp.eq.s32.totalorder %s21, 1
      %p212 = por %p210, %p211
      %p213 = scmp.ne.s32.totalorder %s204, %s205
      %p214 = scmp.eq.s32.totalorder %s21, 0
      %p215 = por %p213, %p214
      %p216 = scmp.ne.s32.totalorder %s204, %s205
      %p217 = scmp.eq.s32.totalorder %s22, 1
      %p218 = por %p216, %p217
      %p220 = scmp.ne.s32.totalorder %s205, %s219
      %p221 = scmp.eq.s32.totalorder %s22, 0
      %p222 = por %p220, %p221
      %s224 = sadd.s32 %s223, 1
      %p227 = scmp.eq.s32.totalorder %s16, 1
      %p228 = scmp.ne.s32.totalorder %s223, %s225
      %p229 = scmp.eq.s32.totalorder %s16, 0
      %p230 = por %p228, %p229
      %p231 = scmp.ne.s32.totalorder %s223, %s225
      %p232 = scmp.eq.s32.totalorder %s21, 1
      %p233 = por %p231, %p232
      %p234 = scmp.ne.s32.totalorder %s225, %s226
      %p235 = scmp.eq.s32.totalorder %s21, 0
      %p236 = por %p234, %p235
      %p237 = scmp.ne.s32.totalorder %s225, %s226
      %p238 = scmp.eq.s32.totalorder %s22, 1
      %p239 = por %p237, %p238
      %p241 = scmp.ne.s32.totalorder %s226, %s240
      %p242 = scmp.eq.s32.totalorder %s22, 0
      %p243 = por %p241, %p242
      %s244 = ssub.s32 %s16, %s23
      %p245 = scmp.eq.s32.totalorder %s244, 0
      %s247 = sadd.s32 %s246, 1
      %s248 = scalar_select %p245, %s246, %s247
      %p251 = pneg %p245
      %p252 = scmp.eq.s32.totalorder %s16, 1
      %p253 = por %p251, %p252
      %p254 = scmp.ne.s32.totalorder %s246, %s249
      %p255 = scmp.eq.s32.totalorder %s16, 0
      %p256 = por %p254, %p255
      %p257 = scmp.ne.s32.totalorder %s246, %s249
      %p258 = scmp.eq.s32.totalorder %s21, 1
      %p259 = por %p257, %p258
      %p260 = scmp.ne.s32.totalorder %s249, %s250
      %p261 = scmp.eq.s32.totalorder %s21, 0
      %p262 = por %p260, %p261
      %p263 = scmp.ne.s32.totalorder %s249, %s250
      %p264 = scmp.eq.s32.totalorder %s22, 1
      %p265 = por %p263, %p264
      %p267 = scmp.ne.s32.totalorder %s250, %s266
      %p268 = scmp.eq.s32.totalorder %s22, 0
      %p269 = por %p267, %p268
      %p270 = scmp.le.s32.totalorder 1, %s16
      %p271 = scmp.lt.s32.totalorder %s16, 3
      %p272 = pnand %p270, %p271
      %p273 = pneg %p272
      // Predicated region
      $region9: #{din_forward.1} parent=5 // pred_check
        _
      $region10: #{din_forward.1} parent=5 // pred_check_branch
        %275 = sbr.rel (%p272) target = $region12
      $region11: #{din_forward.1} parent=5 // pred_region
        %s276 = ssub.s32 %s16, 1
        // Predicated region
        $region13: #{din_forward.1} parent=11 // pred_check
          %p277 = pneg %p89
        $region14: #{din_forward.1} parent=11 // pred_check_branch
          %279 = sbr.rel (%p277) target = $region16
        $region15: #{din_forward.1} parent=11 // pred_region
          _
        $region16: #{din_forward.1} parent=11 // pred_fallthru
          _
        // Predicated region
        $region17: #{din_forward.1} parent=11 // pred_check
          %p280 = pneg %p110
        $region18: #{din_forward.1} parent=11 // pred_check_branch
          %282 = sbr.rel (%p280) target = $region20
        $region19: #{din_forward.1} parent=11 // pred_region
          _
        $region20: #{din_forward.1} parent=11 // pred_fallthru
          _
        // Predicated region
        $region21: #{din_forward.1} parent=11 // pred_check
          %p283 = pneg %p131
        $region22: #{din_forward.1} parent=11 // pred_check_branch
          %285 = sbr.rel (%p283) target = $region24
        $region23: #{din_forward.1} parent=11 // pred_region
          _
        $region24: #{din_forward.1} parent=11 // pred_fallthru
          _
        // Predicated region
        $region25: #{din_forward.1} parent=11 // pred_check
          %p286 = pneg %p152
        $region26: #{din_forward.1} parent=11 // pred_check_branch
          %288 = sbr.rel (%p286) target = $region28
        $region27: #{din_forward.1} parent=11 // pred_region
          _
        $region28: #{din_forward.1} parent=11 // pred_fallthru
          _
        // Predicated region
        $region29: #{din_forward.1} parent=11 // pred_check
          %p289 = pneg %p173
        $region30: #{din_forward.1} parent=11 // pred_check_branch
          %291 = sbr.rel (%p289) target = $region32
        $region31: #{din_forward.1} parent=11 // pred_region
          _
        $region32: #{din_forward.1} parent=11 // pred_fallthru
          _
        // Predicated region
        $region33: #{din_forward.1} parent=11 // pred_check
          %p292 = pneg %p194
        $region34: #{din_forward.1} parent=11 // pred_check_branch
          %294 = sbr.rel (%p292) target = $region36
        $region35: #{din_forward.1} parent=11 // pred_region
          _
        $region36: #{din_forward.1} parent=11 // pred_fallthru
          _
        // Predicated region
        $region37: #{din_forward.1} parent=11 // pred_check
          %p295 = pneg %p215
        $region38: #{din_forward.1} parent=11 // pred_check_branch
          %297 = sbr.rel (%p295) target = $region40
        $region39: #{din_forward.1} parent=11 // pred_region
          _
        $region40: #{din_forward.1} parent=11 // pred_fallthru
          _
        // Predicated region
        $region41: #{din_forward.1} parent=11 // pred_check
          %p298 = pneg %p236
        $region42: #{din_forward.1} parent=11 // pred_check_branch
          %300 = sbr.rel (%p298) target = $region44
        $region43: #{din_forward.1} parent=11 // pred_region
          _
        $region44: #{din_forward.1} parent=11 // pred_fallthru
          _
      $region12: #{din_forward.1} parent=5 // pred_fallthru
        _
      %p301 = scmp.lt.s32.totalorder %s16, 2
      // Predicated region
      $region45: #{din_forward.1} parent=5 // pred_check
        %p302 = pneg %p301
      $region46: #{din_forward.1} parent=5 // pred_check_branch
        %304 = sbr.rel (%p302) target = $region48
      $region47: #{din_forward.1} parent=5 // pred_region
        // Predicated region
        $region49: #{din_forward.1} parent=47 // pred_check
          %p305 = pneg %p36
        $region50: #{din_forward.1} parent=47 // pred_check_branch
          %307 = sbr.rel (%p305) target = $region52
        $region51: #{din_forward.1} parent=47 // pred_region
          %s308 = sand.u32 %s26, 1
          %s309 = sand.u32 %s26, 1
          %s310 = smul.addr %s309, 640
          %s311 = scalar_lea.vmem [#allocation2], %s310
          %s312 = smul.u32 32, %s16
          %s313 = smul.addr %s312, 4
          %s314 = scalar_lea.vmem %s0, %s313
          // Predicated region
          $region53: #{din_forward.1} parent=51 // pred_check
            _
          $region54: #{din_forward.1} parent=51 // pred_check_branch
            %316 = sbr.rel (0) target = $region56
          $region55: #{din_forward.1} parent=51 // pred_region
            // Predicated region
            $region57: #{din_forward.1} parent=55 // pred_check
              _
            $region58: #{din_forward.1} parent=55 // pred_check_branch
              %318 = sbr.rel target = $region60
            $region59: #{din_forward.1} parent=55 // pred_region
              // Predicated region
              $region72: #{din_forward.1} parent=59 // pred_check
                _
              $region73: #{din_forward.1} parent=59 // pred_check_branch
                %652 = sbr.rel (0) target = $region75
              $region74: #{din_forward.1} parent=59 // pred_region
                loop: start=0, step=1, limit=1
                $region76: #{din_forward.1} parent=74 // loop_pre_header
                  _
                $region77: #{din_forward.1} parent=74 // loop_header
                  %s654 = sphi 0, %s658
                  %p655 = scmp.ge.s32.totalorder %s654, 1
                  %s659 = sphi %s314, %s314
                  %s660 = sphi %s311, %s311
                $region78: #{din_forward.1} parent=74 // loop_header_branch
                  %657 = sbr.rel (%p655) target = $region82
                $region79: #{din_forward.1} parent=74 // loop_body
                  _
                $region80: #{din_forward.1} parent=74 // loop_footer
                  %s658 = sadd.s32 1, %s654
                $region81: #{din_forward.1} parent=74 // loop_footer_branch
                  %653 = sbr.rel target = $region77
                $region82: #{din_forward.1} parent=74 // loop_exit
                  _
                %s662 = ssub.s32 16, 1
                loop: start=0, step=1, limit=1
                $region83: #{din_forward.1} parent=74 // loop_pre_header
                  _
                $region84: #{din_forward.1} parent=74 // loop_header
                  %s664 = sphi 0, %s668
                  %p665 = scmp.ge.s32.totalorder %s664, 1
                  %s669 = sphi %s314, %s314
                  %s670 = sphi %s311, %s311
                $region85: #{din_forward.1} parent=74 // loop_header_branch
                  %667 = sbr.rel (%p665) target = $region89
                $region86: #{din_forward.1} parent=74 // loop_body
                  %v671 = vld [vmem:[%s669] sm:%s662]
                  %672 = vst [vmem:[%s670] sm:%s662] %v671
                  %v673 = vld [vmem:[%s669 + $0x4] sm:%s662]
                  %674 = vst [vmem:[%s670 + $0x4] sm:%s662] %v673
                  %v675 = vld [vmem:[%s669 + $0x8] sm:%s662]
                  %676 = vst [vmem:[%s670 + $0x8] sm:%s662] %v675
                  %v677 = vld [vmem:[%s669 + $0xc] sm:%s662]
                  %678 = vst [vmem:[%s670 + $0xc] sm:%s662] %v677
                  %v679 = vld [vmem:[%s669 + $0x10] sm:%s662]
                  %680 = vst [vmem:[%s670 + $0x10] sm:%s662] %v679
                  %v681 = vld [vmem:[%s669 + $0x14] sm:%s662]
                  %682 = vst [vmem:[%s670 + $0x14] sm:%s662] %v681
                  %v683 = vld [vmem:[%s669 + $0x18] sm:%s662]
                  %684 = vst [vmem:[%s670 + $0x18] sm:%s662] %v683
                  %v685 = vld [vmem:[%s669 + $0x1c] sm:%s662]
                  %686 = vst [vmem:[%s670 + $0x1c] sm:%s662] %v685
                  %v687 = vld [vmem:[%s669 + $0x20] sm:%s662]
                  %688 = vst [vmem:[%s670 + $0x20] sm:%s662] %v687
                  %v689 = vld [vmem:[%s669 + $0x24] sm:%s662]
                  %690 = vst [vmem:[%s670 + $0x24] sm:%s662] %v689
                  %v691 = vld [vmem:[%s669 + $0x28] sm:%s662]
                  %692 = vst [vmem:[%s670 + $0x28] sm:%s662] %v691
                  %v693 = vld [vmem:[%s669 + $0x2c] sm:%s662]
                  %694 = vst [vmem:[%s670 + $0x2c] sm:%s662] %v693
                  %v695 = vld [vmem:[%s669 + $0x30] sm:%s662]
                  %696 = vst [vmem:[%s670 + $0x30] sm:%s662] %v695
                  %v697 = vld [vmem:[%s669 + $0x34] sm:%s662]
                  %698 = vst [vmem:[%s670 + $0x34] sm:%s662] %v697
                  %v699 = vld [vmem:[%s669 + $0x38] sm:%s662]
                  %700 = vst [vmem:[%s670 + $0x38] sm:%s662] %v699
                  %v701 = vld [vmem:[%s669 + $0x3c] sm:%s662]
                  %702 = vst [vmem:[%s670 + $0x3c] sm:%s662] %v701
                  %v703 = vld [vmem:[%s669 + $0x40] sm:%s662]
                  %704 = vst [vmem:[%s670 + $0x40] sm:%s662] %v703
                  %v705 = vld [vmem:[%s669 + $0x44] sm:%s662]
                  %706 = vst [vmem:[%s670 + $0x44] sm:%s662] %v705
                  %v707 = vld [vmem:[%s669 + $0x48] sm:%s662]
                  %708 = vst [vmem:[%s670 + $0x48] sm:%s662] %v707
                  %v709 = vld [vmem:[%s669 + $0x4c] sm:%s662]
                  %710 = vst [vmem:[%s670 + $0x4c] sm:%s662] %v709
                  %v711 = vld [vmem:[%s669 + $0x50] sm:%s662]
                  %712 = vst [vmem:[%s670 + $0x50] sm:%s662] %v711
                  %v713 = vld [vmem:[%s669 + $0x54] sm:%s662]
                  %714 = vst [vmem:[%s670 + $0x54] sm:%s662] %v713
                  %v715 = vld [vmem:[%s669 + $0x58] sm:%s662]
                  %716 = vst [vmem:[%s670 + $0x58] sm:%s662] %v715
                  %v717 = vld [vmem:[%s669 + $0x5c] sm:%s662]
                  %718 = vst [vmem:[%s670 + $0x5c] sm:%s662] %v717
                  %v719 = vld [vmem:[%s669 + $0x60] sm:%s662]
                  %720 = vst [vmem:[%s670 + $0x60] sm:%s662] %v719
                  %v721 = vld [vmem:[%s669 + $0x64] sm:%s662]
                  %722 = vst [vmem:[%s670 + $0x64] sm:%s662] %v721
                  %v723 = vld [vmem:[%s669 + $0x68] sm:%s662]
                  %724 = vst [vmem:[%s670 + $0x68] sm:%s662] %v723
                  %v725 = vld [vmem:[%s669 + $0x6c] sm:%s662]
                  %726 = vst [vmem:[%s670 + $0x6c] sm:%s662] %v725
                  %v727 = vld [vmem:[%s669 + $0x70] sm:%s662]
                  %728 = vst [vmem:[%s670 + $0x70] sm:%s662] %v727
                  %v729 = vld [vmem:[%s669 + $0x74] sm:%s662]
                  %730 = vst [vmem:[%s670 + $0x74] sm:%s662] %v729
                  %v731 = vld [vmem:[%s669 + $0x78] sm:%s662]
                  %732 = vst [vmem:[%s670 + $0x78] sm:%s662] %v731
                  %v733 = vld [vmem:[%s669 + $0x7c] sm:%s662]
                  %734 = vst [vmem:[%s670 + $0x7c] sm:%s662] %v733
                  %v735 = vld [vmem:[%s669 + $0x100] sm:%s662]
                  %736 = vst [vmem:[%s670 + $0x80] sm:%s662] %v735
                  %v737 = vld [vmem:[%s669 + $0x104] sm:%s662]
                  %738 = vst [vmem:[%s670 + $0x84] sm:%s662] %v737
                  %v739 = vld [vmem:[%s669 + $0x108] sm:%s662]
                  %740 = vst [vmem:[%s670 + $0x88] sm:%s662] %v739
                  %v741 = vld [vmem:[%s669 + $0x10c] sm:%s662]
                  %742 = vst [vmem:[%s670 + $0x8c] sm:%s662] %v741
                  %v743 = vld [vmem:[%s669 + $0x110] sm:%s662]
                  %744 = vst [vmem:[%s670 + $0x90] sm:%s662] %v743
                  %v745 = vld [vmem:[%s669 + $0x114] sm:%s662]
                  %746 = vst [vmem:[%s670 + $0x94] sm:%s662] %v745
                  %v747 = vld [vmem:[%s669 + $0x118] sm:%s662]
                  %748 = vst [vmem:[%s670 + $0x98] sm:%s662] %v747
                  %v749 = vld [vmem:[%s669 + $0x11c] sm:%s662]
                  %750 = vst [vmem:[%s670 + $0x9c] sm:%s662] %v749
                  %v751 = vld [vmem:[%s669 + $0x120] sm:%s662]
                  %752 = vst [vmem:[%s670 + $0xa0] sm:%s662] %v751
                  %v753 = vld [vmem:[%s669 + $0x124] sm:%s662]
                  %754 = vst [vmem:[%s670 + $0xa4] sm:%s662] %v753
                  %v755 = vld [vmem:[%s669 + $0x128] sm:%s662]
                  %756 = vst [vmem:[%s670 + $0xa8] sm:%s662] %v755
                  %v757 = vld [vmem:[%s669 + $0x12c] sm:%s662]
                  %758 = vst [vmem:[%s670 + $0xac] sm:%s662] %v757
                  %v759 = vld [vmem:[%s669 + $0x130] sm:%s662]
                  %760 = vst [vmem:[%s670 + $0xb0] sm:%s662] %v759
                  %v761 = vld [vmem:[%s669 + $0x134] sm:%s662]
                  %762 = vst [vmem:[%s670 + $0xb4] sm:%s662] %v761
                  %v763 = vld [vmem:[%s669 + $0x138] sm:%s662]
                  %764 = vst [vmem:[%s670 + $0xb8] sm:%s662] %v763
                  %v765 = vld [vmem:[%s669 + $0x13c] sm:%s662]
                  %766 = vst [vmem:[%s670 + $0xbc] sm:%s662] %v765
                  %v767 = vld [vmem:[%s669 + $0x140] sm:%s662]
                  %768 = vst [vmem:[%s670 + $0xc0] sm:%s662] %v767
                  %v769 = vld [vmem:[%s669 + $0x144] sm:%s662]
                  %770 = vst [vmem:[%s670 + $0xc4] sm:%s662] %v769
                  %v771 = vld [vmem:[%s669 + $0x148] sm:%s662]
                  %772 = vst [vmem:[%s670 + $0xc8] sm:%s662] %v771
                  %v773 = vld [vmem:[%s669 + $0x14c] sm:%s662]
                  %774 = vst [vmem:[%s670 + $0xcc] sm:%s662] %v773
                  %v775 = vld [vmem:[%s669 + $0x150] sm:%s662]
                  %776 = vst [vmem:[%s670 + $0xd0] sm:%s662] %v775
                  %v777 = vld [vmem:[%s669 + $0x154] sm:%s662]
                  %778 = vst [vmem:[%s670 + $0xd4] sm:%s662] %v777
                  %v779 = vld [vmem:[%s669 + $0x158] sm:%s662]
                  %780 = vst [vmem:[%s670 + $0xd8] sm:%s662] %v779
                  %v781 = vld [vmem:[%s669 + $0x15c] sm:%s662]
                  %782 = vst [vmem:[%s670 + $0xdc] sm:%s662] %v781
                  %v783 = vld [vmem:[%s669 + $0x160] sm:%s662]
                  %784 = vst [vmem:[%s670 + $0xe0] sm:%s662] %v783
                  %v785 = vld [vmem:[%s669 + $0x164] sm:%s662]
                  %786 = vst [vmem:[%s670 + $0xe4] sm:%s662] %v785
                  %v787 = vld [vmem:[%s669 + $0x168] sm:%s662]
                  %788 = vst [vmem:[%s670 + $0xe8] sm:%s662] %v787
                  %v789 = vld [vmem:[%s669 + $0x16c] sm:%s662]
                  %790 = vst [vmem:[%s670 + $0xec] sm:%s662] %v789
                  %v791 = vld [vmem:[%s669 + $0x170] sm:%s662]
                  %792 = vst [vmem:[%s670 + $0xf0] sm:%s662] %v791
                  %v793 = vld [vmem:[%s669 + $0x174] sm:%s662]
                  %794 = vst [vmem:[%s670 + $0xf4] sm:%s662] %v793
                  %v795 = vld [vmem:[%s669 + $0x178] sm:%s662]
                  %796 = vst [vmem:[%s670 + $0xf8] sm:%s662] %v795
                  %v797 = vld [vmem:[%s669 + $0x17c] sm:%s662]
                  %798 = vst [vmem:[%s670 + $0xfc] sm:%s662] %v797
                  %v799 = vld [vmem:[%s669 + $0x200] sm:%s662]
                  %800 = vst [vmem:[%s670 + $0x100] sm:%s662] %v799
                  %v801 = vld [vmem:[%s669 + $0x204] sm:%s662]
                  %802 = vst [vmem:[%s670 + $0x104] sm:%s662] %v801
                  %v803 = vld [vmem:[%s669 + $0x208] sm:%s662]
                  %804 = vst [vmem:[%s670 + $0x108] sm:%s662] %v803
                  %v805 = vld [vmem:[%s669 + $0x20c] sm:%s662]
                  %806 = vst [vmem:[%s670 + $0x10c] sm:%s662] %v805
                  %v807 = vld [vmem:[%s669 + $0x210] sm:%s662]
                  %808 = vst [vmem:[%s670 + $0x110] sm:%s662] %v807
                  %v809 = vld [vmem:[%s669 + $0x214] sm:%s662]
                  %810 = vst [vmem:[%s670 + $0x114] sm:%s662] %v809
                  %v811 = vld [vmem:[%s669 + $0x218] sm:%s662]
                  %812 = vst [vmem:[%s670 + $0x118] sm:%s662] %v811
                  %v813 = vld [vmem:[%s669 + $0x21c] sm:%s662]
                  %814 = vst [vmem:[%s670 + $0x11c] sm:%s662] %v813
                  %v815 = vld [vmem:[%s669 + $0x220] sm:%s662]
                  %816 = vst [vmem:[%s670 + $0x120] sm:%s662] %v815
                  %v817 = vld [vmem:[%s669 + $0x224] sm:%s662]
                  %818 = vst [vmem:[%s670 + $0x124] sm:%s662] %v817
                  %v819 = vld [vmem:[%s669 + $0x228] sm:%s662]
                  %820 = vst [vmem:[%s670 + $0x128] sm:%s662] %v819
                  %v821 = vld [vmem:[%s669 + $0x22c] sm:%s662]
                  %822 = vst [vmem:[%s670 + $0x12c] sm:%s662] %v821
                  %v823 = vld [vmem:[%s669 + $0x230] sm:%s662]
                  %824 = vst [vmem:[%s670 + $0x130] sm:%s662] %v823
                  %v825 = vld [vmem:[%s669 + $0x234] sm:%s662]
                  %826 = vst [vmem:[%s670 + $0x134] sm:%s662] %v825
                  %v827 = vld [vmem:[%s669 + $0x238] sm:%s662]
                  %828 = vst [vmem:[%s670 + $0x138] sm:%s662] %v827
                  %v829 = vld [vmem:[%s669 + $0x23c] sm:%s662]
                  %830 = vst [vmem:[%s670 + $0x13c] sm:%s662] %v829
                  %v831 = vld [vmem:[%s669 + $0x240] sm:%s662]
                  %832 = vst [vmem:[%s670 + $0x140] sm:%s662] %v831
                  %v833 = vld [vmem:[%s669 + $0x244] sm:%s662]
                  %834 = vst [vmem:[%s670 + $0x144] sm:%s662] %v833
                  %v835 = vld [vmem:[%s669 + $0x248] sm:%s662]
                  %836 = vst [vmem:[%s670 + $0x148] sm:%s662] %v835
                  %v837 = vld [vmem:[%s669 + $0x24c] sm:%s662]
                  %838 = vst [vmem:[%s670 + $0x14c] sm:%s662] %v837
                  %v839 = vld [vmem:[%s669 + $0x250] sm:%s662]
                  %840 = vst [vmem:[%s670 + $0x150] sm:%s662] %v839
                  %v841 = vld [vmem:[%s669 + $0x254] sm:%s662]
                  %842 = vst [vmem:[%s670 + $0x154] sm:%s662] %v841
                  %v843 = vld [vmem:[%s669 + $0x258] sm:%s662]
                  %844 = vst [vmem:[%s670 + $0x158] sm:%s662] %v843
                  %v845 = vld [vmem:[%s669 + $0x25c] sm:%s662]
                  %846 = vst [vmem:[%s670 + $0x15c] sm:%s662] %v845
                  %v847 = vld [vmem:[%s669 + $0x260] sm:%s662]
                  %848 = vst [vmem:[%s670 + $0x160] sm:%s662] %v847
                  %v849 = vld [vmem:[%s669 + $0x264] sm:%s662]
                  %850 = vst [vmem:[%s670 + $0x164] sm:%s662] %v849
                  %v851 = vld [vmem:[%s669 + $0x268] sm:%s662]
                  %852 = vst [vmem:[%s670 + $0x168] sm:%s662] %v851
                  %v853 = vld [vmem:[%s669 + $0x26c] sm:%s662]
                  %854 = vst [vmem:[%s670 + $0x16c] sm:%s662] %v853
                  %v855 = vld [vmem:[%s669 + $0x270] sm:%s662]
                  %856 = vst [vmem:[%s670 + $0x170] sm:%s662] %v855
                  %v857 = vld [vmem:[%s669 + $0x274] sm:%s662]
                  %858 = vst [vmem:[%s670 + $0x174] sm:%s662] %v857
                  %v859 = vld [vmem:[%s669 + $0x278] sm:%s662]
                  %860 = vst [vmem:[%s670 + $0x178] sm:%s662] %v859
                  %v861 = vld [vmem:[%s669 + $0x27c] sm:%s662]
                  %862 = vst [vmem:[%s670 + $0x17c] sm:%s662] %v861
                  %v863 = vld [vmem:[%s669 + $0x300] sm:%s662]
                  %864 = vst [vmem:[%s670 + $0x180] sm:%s662] %v863
                  %v865 = vld [vmem:[%s669 + $0x304] sm:%s662]
                  %866 = vst [vmem:[%s670 + $0x184] sm:%s662] %v865
                  %v867 = vld [vmem:[%s669 + $0x308] sm:%s662]
                  %868 = vst [vmem:[%s670 + $0x188] sm:%s662] %v867
                  %v869 = vld [vmem:[%s669 + $0x30c] sm:%s662]
                  %870 = vst [vmem:[%s670 + $0x18c] sm:%s662] %v869
                  %v871 = vld [vmem:[%s669 + $0x310] sm:%s662]
                  %872 = vst [vmem:[%s670 + $0x190] sm:%s662] %v871
                  %v873 = vld [vmem:[%s669 + $0x314] sm:%s662]
                  %874 = vst [vmem:[%s670 + $0x194] sm:%s662] %v873
                  %v875 = vld [vmem:[%s669 + $0x318] sm:%s662]
                  %876 = vst [vmem:[%s670 + $0x198] sm:%s662] %v875
                  %v877 = vld [vmem:[%s669 + $0x31c] sm:%s662]
                  %878 = vst [vmem:[%s670 + $0x19c] sm:%s662] %v877
                  %v879 = vld [vmem:[%s669 + $0x320] sm:%s662]
                  %880 = vst [vmem:[%s670 + $0x1a0] sm:%s662] %v879
                  %v881 = vld [vmem:[%s669 + $0x324] sm:%s662]
                  %882 = vst [vmem:[%s670 + $0x1a4] sm:%s662] %v881
                  %v883 = vld [vmem:[%s669 + $0x328] sm:%s662]
                  %884 = vst [vmem:[%s670 + $0x1a8] sm:%s662] %v883
                  %v885 = vld [vmem:[%s669 + $0x32c] sm:%s662]
                  %886 = vst [vmem:[%s670 + $0x1ac] sm:%s662] %v885
                  %v887 = vld [vmem:[%s669 + $0x330] sm:%s662]
                  %888 = vst [vmem:[%s670 + $0x1b0] sm:%s662] %v887
                  %v889 = vld [vmem:[%s669 + $0x334] sm:%s662]
                  %890 = vst [vmem:[%s670 + $0x1b4] sm:%s662] %v889
                  %v891 = vld [vmem:[%s669 + $0x338] sm:%s662]
                  %892 = vst [vmem:[%s670 + $0x1b8] sm:%s662] %v891
                  %v893 = vld [vmem:[%s669 + $0x33c] sm:%s662]
                  %894 = vst [vmem:[%s670 + $0x1bc] sm:%s662] %v893
                  %v895 = vld [vmem:[%s669 + $0x340] sm:%s662]
                  %896 = vst [vmem:[%s670 + $0x1c0] sm:%s662] %v895
                  %v897 = vld [vmem:[%s669 + $0x344] sm:%s662]
                  %898 = vst [vmem:[%s670 + $0x1c4] sm:%s662] %v897
                  %v899 = vld [vmem:[%s669 + $0x348] sm:%s662]
                  %900 = vst [vmem:[%s670 + $0x1c8] sm:%s662] %v899
                  %v901 = vld [vmem:[%s669 + $0x34c] sm:%s662]
                  %902 = vst [vmem:[%s670 + $0x1cc] sm:%s662] %v901
                  %v903 = vld [vmem:[%s669 + $0x350] sm:%s662]
                  %904 = vst [vmem:[%s670 + $0x1d0] sm:%s662] %v903
                  %v905 = vld [vmem:[%s669 + $0x354] sm:%s662]
                  %906 = vst [vmem:[%s670 + $0x1d4] sm:%s662] %v905
                  %v907 = vld [vmem:[%s669 + $0x358] sm:%s662]
                  %908 = vst [vmem:[%s670 + $0x1d8] sm:%s662] %v907
                  %v909 = vld [vmem:[%s669 + $0x35c] sm:%s662]
                  %910 = vst [vmem:[%s670 + $0x1dc] sm:%s662] %v909
                  %v911 = vld [vmem:[%s669 + $0x360] sm:%s662]
                  %912 = vst [vmem:[%s670 + $0x1e0] sm:%s662] %v911
                  %v913 = vld [vmem:[%s669 + $0x364] sm:%s662]
                  %914 = vst [vmem:[%s670 + $0x1e4] sm:%s662] %v913
                  %v915 = vld [vmem:[%s669 + $0x368] sm:%s662]
                  %916 = vst [vmem:[%s670 + $0x1e8] sm:%s662] %v915
                  %v917 = vld [vmem:[%s669 + $0x36c] sm:%s662]
                  %918 = vst [vmem:[%s670 + $0x1ec] sm:%s662] %v917
                  %v919 = vld [vmem:[%s669 + $0x370] sm:%s662]
                  %920 = vst [vmem:[%s670 + $0x1f0] sm:%s662] %v919
                  %v921 = vld [vmem:[%s669 + $0x374] sm:%s662]
                  %922 = vst [vmem:[%s670 + $0x1f4] sm:%s662] %v921
                  %v923 = vld [vmem:[%s669 + $0x378] sm:%s662]
                  %924 = vst [vmem:[%s670 + $0x1f8] sm:%s662] %v923
                  %v925 = vld [vmem:[%s669 + $0x37c] sm:%s662]
                  %926 = vst [vmem:[%s670 + $0x1fc] sm:%s662] %v925
                  %v927 = vld [vmem:[%s669 + $0x400] sm:%s662]
                  %928 = vst [vmem:[%s670 + $0x200] sm:%s662] %v927
                  %v929 = vld [vmem:[%s669 + $0x404] sm:%s662]
                  %930 = vst [vmem:[%s670 + $0x204] sm:%s662] %v929
                  %v931 = vld [vmem:[%s669 + $0x408] sm:%s662]
                  %932 = vst [vmem:[%s670 + $0x208] sm:%s662] %v931
                  %v933 = vld [vmem:[%s669 + $0x40c] sm:%s662]
                  %934 = vst [vmem:[%s670 + $0x20c] sm:%s662] %v933
                  %v935 = vld [vmem:[%s669 + $0x410] sm:%s662]
                  %936 = vst [vmem:[%s670 + $0x210] sm:%s662] %v935
                  %v937 = vld [vmem:[%s669 + $0x414] sm:%s662]
                  %938 = vst [vmem:[%s670 + $0x214] sm:%s662] %v937
                  %v939 = vld [vmem:[%s669 + $0x418] sm:%s662]
                  %940 = vst [vmem:[%s670 + $0x218] sm:%s662] %v939
                  %v941 = vld [vmem:[%s669 + $0x41c] sm:%s662]
                  %942 = vst [vmem:[%s670 + $0x21c] sm:%s662] %v941
                  %v943 = vld [vmem:[%s669 + $0x420] sm:%s662]
                  %944 = vst [vmem:[%s670 + $0x220] sm:%s662] %v943
                  %v945 = vld [vmem:[%s669 + $0x424] sm:%s662]
                  %946 = vst [vmem:[%s670 + $0x224] sm:%s662] %v945
                  %v947 = vld [vmem:[%s669 + $0x428] sm:%s662]
                  %948 = vst [vmem:[%s670 + $0x228] sm:%s662] %v947
                  %v949 = vld [vmem:[%s669 + $0x42c] sm:%s662]
                  %950 = vst [vmem:[%s670 + $0x22c] sm:%s662] %v949
                  %v951 = vld [vmem:[%s669 + $0x430] sm:%s662]
                  %952 = vst [vmem:[%s670 + $0x230] sm:%s662] %v951
                  %v953 = vld [vmem:[%s669 + $0x434] sm:%s662]
                  %954 = vst [vmem:[%s670 + $0x234] sm:%s662] %v953
                  %v955 = vld [vmem:[%s669 + $0x438] sm:%s662]
                  %956 = vst [vmem:[%s670 + $0x238] sm:%s662] %v955
                  %v957 = vld [vmem:[%s669 + $0x43c] sm:%s662]
                  %958 = vst [vmem:[%s670 + $0x23c] sm:%s662] %v957
                  %v959 = vld [vmem:[%s669 + $0x440] sm:%s662]
                  %960 = vst [vmem:[%s670 + $0x240] sm:%s662] %v959
                  %v961 = vld [vmem:[%s669 + $0x444] sm:%s662]
                  %962 = vst [vmem:[%s670 + $0x244] sm:%s662] %v961
                  %v963 = vld [vmem:[%s669 + $0x448] sm:%s662]
                  %964 = vst [vmem:[%s670 + $0x248] sm:%s662] %v963
                  %v965 = vld [vmem:[%s669 + $0x44c] sm:%s662]
                  %966 = vst [vmem:[%s670 + $0x24c] sm:%s662] %v965
                  %v967 = vld [vmem:[%s669 + $0x450] sm:%s662]
                  %968 = vst [vmem:[%s670 + $0x250] sm:%s662] %v967
                  %v969 = vld [vmem:[%s669 + $0x454] sm:%s662]
                  %970 = vst [vmem:[%s670 + $0x254] sm:%s662] %v969
                  %v971 = vld [vmem:[%s669 + $0x458] sm:%s662]
                  %972 = vst [vmem:[%s670 + $0x258] sm:%s662] %v971
                  %v973 = vld [vmem:[%s669 + $0x45c] sm:%s662]
                  %974 = vst [vmem:[%s670 + $0x25c] sm:%s662] %v973
                  %v975 = vld [vmem:[%s669 + $0x460] sm:%s662]
                  %976 = vst [vmem:[%s670 + $0x260] sm:%s662] %v975
                  %v977 = vld [vmem:[%s669 + $0x464] sm:%s662]
                  %978 = vst [vmem:[%s670 + $0x264] sm:%s662] %v977
                  %v979 = vld [vmem:[%s669 + $0x468] sm:%s662]
                  %980 = vst [vmem:[%s670 + $0x268] sm:%s662] %v979
                  %v981 = vld [vmem:[%s669 + $0x46c] sm:%s662]
                  %982 = vst [vmem:[%s670 + $0x26c] sm:%s662] %v981
                  %v983 = vld [vmem:[%s669 + $0x470] sm:%s662]
                  %984 = vst [vmem:[%s670 + $0x270] sm:%s662] %v983
                  %v985 = vld [vmem:[%s669 + $0x474] sm:%s662]
                  %986 = vst [vmem:[%s670 + $0x274] sm:%s662] %v985
                  %v987 = vld [vmem:[%s669 + $0x478] sm:%s662]
                  %988 = vst [vmem:[%s670 + $0x278] sm:%s662] %v987
                  %v989 = vld [vmem:[%s669 + $0x47c] sm:%s662]
                  %990 = vst [vmem:[%s670 + $0x27c] sm:%s662] %v989
                $region87: #{din_forward.1} parent=74 // loop_footer
                  %s668 = sadd.s32 1, %s664
                $region88: #{din_forward.1} parent=74 // loop_footer_branch
                  %663 = sbr.rel target = $region84
                $region89: #{din_forward.1} parent=74 // loop_exit
                  _
              $region75: #{din_forward.1} parent=59 // pred_fallthru
                _
            $region60: #{din_forward.1} parent=55 // pred_fallthru
              _
            // Predicated region
            $region61: #{din_forward.1} parent=55 // pred_check
              _
            $region62: #{din_forward.1} parent=55 // pred_check_branch
              %320 = sbr.rel (0) target = $region64
            $region63: #{din_forward.1} parent=55 // pred_region
              %s322 = ssub.s32 16, 1
              loop: start=0, step=1, limit=1
              $region65: #{din_forward.1} parent=63 // loop_pre_header
                _
              $region66: #{din_forward.1} parent=63 // loop_header
                %s324 = sphi 0, %s328
                %p325 = scmp.ge.s32.totalorder %s324, 1
                %s329 = sphi %s314, %s314
                %s330 = sphi %s311, %s311
              $region67: #{din_forward.1} parent=63 // loop_header_branch
                %327 = sbr.rel (%p325) target = $region71
              $region68: #{din_forward.1} parent=63 // loop_body
                %v331 = vld [vmem:[%s329] sm:%s322]
                %332 = vst [vmem:[%s330] sm:%s322] %v331
                %v333 = vld [vmem:[%s329 + $0x4] sm:%s322]
                %334 = vst [vmem:[%s330 + $0x4] sm:%s322] %v333
                %v335 = vld [vmem:[%s329 + $0x8] sm:%s322]
                %336 = vst [vmem:[%s330 + $0x8] sm:%s322] %v335
                %v337 = vld [vmem:[%s329 + $0xc] sm:%s322]
                %338 = vst [vmem:[%s330 + $0xc] sm:%s322] %v337
                %v339 = vld [vmem:[%s329 + $0x10] sm:%s322]
                %340 = vst [vmem:[%s330 + $0x10] sm:%s322] %v339
                %v341 = vld [vmem:[%s329 + $0x14] sm:%s322]
                %342 = vst [vmem:[%s330 + $0x14] sm:%s322] %v341
                %v343 = vld [vmem:[%s329 + $0x18] sm:%s322]
                %344 = vst [vmem:[%s330 + $0x18] sm:%s322] %v343
                %v345 = vld [vmem:[%s329 + $0x1c] sm:%s322]
                %346 = vst [vmem:[%s330 + $0x1c] sm:%s322] %v345
                %v347 = vld [vmem:[%s329 + $0x20] sm:%s322]
                %348 = vst [vmem:[%s330 + $0x20] sm:%s322] %v347
                %v349 = vld [vmem:[%s329 + $0x24] sm:%s322]
                %350 = vst [vmem:[%s330 + $0x24] sm:%s322] %v349
                %v351 = vld [vmem:[%s329 + $0x28] sm:%s322]
                %352 = vst [vmem:[%s330 + $0x28] sm:%s322] %v351
                %v353 = vld [vmem:[%s329 + $0x2c] sm:%s322]
                %354 = vst [vmem:[%s330 + $0x2c] sm:%s322] %v353
                %v355 = vld [vmem:[%s329 + $0x30] sm:%s322]
                %356 = vst [vmem:[%s330 + $0x30] sm:%s322] %v355
                %v357 = vld [vmem:[%s329 + $0x34] sm:%s322]
                %358 = vst [vmem:[%s330 + $0x34] sm:%s322] %v357
                %v359 = vld [vmem:[%s329 + $0x38] sm:%s322]
                %360 = vst [vmem:[%s330 + $0x38] sm:%s322] %v359
                %v361 = vld [vmem:[%s329 + $0x3c] sm:%s322]
                %362 = vst [vmem:[%s330 + $0x3c] sm:%s322] %v361
                %v363 = vld [vmem:[%s329 + $0x40] sm:%s322]
                %364 = vst [vmem:[%s330 + $0x40] sm:%s322] %v363
                %v365 = vld [vmem:[%s329 + $0x44] sm:%s322]
                %366 = vst [vmem:[%s330 + $0x44] sm:%s322] %v365
                %v367 = vld [vmem:[%s329 + $0x48] sm:%s322]
                %368 = vst [vmem:[%s330 + $0x48] sm:%s322] %v367
                %v369 = vld [vmem:[%s329 + $0x4c] sm:%s322]
                %370 = vst [vmem:[%s330 + $0x4c] sm:%s322] %v369
                %v371 = vld [vmem:[%s329 + $0x50] sm:%s322]
                %372 = vst [vmem:[%s330 + $0x50] sm:%s322] %v371
                %v373 = vld [vmem:[%s329 + $0x54] sm:%s322]
                %374 = vst [vmem:[%s330 + $0x54] sm:%s322] %v373
                %v375 = vld [vmem:[%s329 + $0x58] sm:%s322]
                %376 = vst [vmem:[%s330 + $0x58] sm:%s322] %v375
                %v377 = vld [vmem:[%s329 + $0x5c] sm:%s322]
                %378 = vst [vmem:[%s330 + $0x5c] sm:%s322] %v377
                %v379 = vld [vmem:[%s329 + $0x60] sm:%s322]
                %380 = vst [vmem:[%s330 + $0x60] sm:%s322] %v379
                %v381 = vld [vmem:[%s329 + $0x64] sm:%s322]
                %382 = vst [vmem:[%s330 + $0x64] sm:%s322] %v381
                %v383 = vld [vmem:[%s329 + $0x68] sm:%s322]
                %384 = vst [vmem:[%s330 + $0x68] sm:%s322] %v383
                %v385 = vld [vmem:[%s329 + $0x6c] sm:%s322]
                %386 = vst [vmem:[%s330 + $0x6c] sm:%s322] %v385
                %v387 = vld [vmem:[%s329 + $0x70] sm:%s322]
                %388 = vst [vmem:[%s330 + $0x70] sm:%s322] %v387
                %v389 = vld [vmem:[%s329 + $0x74] sm:%s322]
                %390 = vst [vmem:[%s330 + $0x74] sm:%s322] %v389
                %v391 = vld [vmem:[%s329 + $0x78] sm:%s322]
                %392 = vst [vmem:[%s330 + $0x78] sm:%s322] %v391
                %v393 = vld [vmem:[%s329 + $0x7c] sm:%s322]
                %394 = vst [vmem:[%s330 + $0x7c] sm:%s322] %v393
                %v395 = vld [vmem:[%s329 + $0x100] sm:%s322]
                %396 = vst [vmem:[%s330 + $0x80] sm:%s322] %v395
                %v397 = vld [vmem:[%s329 + $0x104] sm:%s322]
                %398 = vst [vmem:[%s330 + $0x84] sm:%s322] %v397
                %v399 = vld [vmem:[%s329 + $0x108] sm:%s322]
                %400 = vst [vmem:[%s330 + $0x88] sm:%s322] %v399
                %v401 = vld [vmem:[%s329 + $0x10c] sm:%s322]
                %402 = vst [vmem:[%s330 + $0x8c] sm:%s322] %v401
                %v403 = vld [vmem:[%s329 + $0x110] sm:%s322]
                %404 = vst [vmem:[%s330 + $0x90] sm:%s322] %v403
                %v405 = vld [vmem:[%s329 + $0x114] sm:%s322]
                %406 = vst [vmem:[%s330 + $0x94] sm:%s322] %v405
                %v407 = vld [vmem:[%s329 + $0x118] sm:%s322]
                %408 = vst [vmem:[%s330 + $0x98] sm:%s322] %v407
                %v409 = vld [vmem:[%s329 + $0x11c] sm:%s322]
                %410 = vst [vmem:[%s330 + $0x9c] sm:%s322] %v409
                %v411 = vld [vmem:[%s329 + $0x120] sm:%s322]
                %412 = vst [vmem:[%s330 + $0xa0] sm:%s322] %v411
                %v413 = vld [vmem:[%s329 + $0x124] sm:%s322]
                %414 = vst [vmem:[%s330 + $0xa4] sm:%s322] %v413
                %v415 = vld [vmem:[%s329 + $0x128] sm:%s322]
                %416 = vst [vmem:[%s330 + $0xa8] sm:%s322] %v415
                %v417 = vld [vmem:[%s329 + $0x12c] sm:%s322]
                %418 = vst [vmem:[%s330 + $0xac] sm:%s322] %v417
                %v419 = vld [vmem:[%s329 + $0x130] sm:%s322]
                %420 = vst [vmem:[%s330 + $0xb0] sm:%s322] %v419
                %v421 = vld [vmem:[%s329 + $0x134] sm:%s322]
                %422 = vst [vmem:[%s330 + $0xb4] sm:%s322] %v421
                %v423 = vld [vmem:[%s329 + $0x138] sm:%s322]
                %424 = vst [vmem:[%s330 + $0xb8] sm:%s322] %v423
                %v425 = vld [vmem:[%s329 + $0x13c] sm:%s322]
                %426 = vst [vmem:[%s330 + $0xbc] sm:%s322] %v425
                %v427 = vld [vmem:[%s329 + $0x140] sm:%s322]
                %428 = vst [vmem:[%s330 + $0xc0] sm:%s322] %v427
                %v429 = vld [vmem:[%s329 + $0x144] sm:%s322]
                %430 = vst [vmem:[%s330 + $0xc4] sm:%s322] %v429
                %v431 = vld [vmem:[%s329 + $0x148] sm:%s322]
                %432 = vst [vmem:[%s330 + $0xc8] sm:%s322] %v431
                %v433 = vld [vmem:[%s329 + $0x14c] sm:%s322]
                %434 = vst [vmem:[%s330 + $0xcc] sm:%s322] %v433
                %v435 = vld [vmem:[%s329 + $0x150] sm:%s322]
                %436 = vst [vmem:[%s330 + $0xd0] sm:%s322] %v435
                %v437 = vld [vmem:[%s329 + $0x154] sm:%s322]
                %438 = vst [vmem:[%s330 + $0xd4] sm:%s322] %v437
                %v439 = vld [vmem:[%s329 + $0x158] sm:%s322]
                %440 = vst [vmem:[%s330 + $0xd8] sm:%s322] %v439
                %v441 = vld [vmem:[%s329 + $0x15c] sm:%s322]
                %442 = vst [vmem:[%s330 + $0xdc] sm:%s322] %v441
                %v443 = vld [vmem:[%s329 + $0x160] sm:%s322]
                %444 = vst [vmem:[%s330 + $0xe0] sm:%s322] %v443
                %v445 = vld [vmem:[%s329 + $0x164] sm:%s322]
                %446 = vst [vmem:[%s330 + $0xe4] sm:%s322] %v445
                %v447 = vld [vmem:[%s329 + $0x168] sm:%s322]
                %448 = vst [vmem:[%s330 + $0xe8] sm:%s322] %v447
                %v449 = vld [vmem:[%s329 + $0x16c] sm:%s322]
                %450 = vst [vmem:[%s330 + $0xec] sm:%s322] %v449
                %v451 = vld [vmem:[%s329 + $0x170] sm:%s322]
                %452 = vst [vmem:[%s330 + $0xf0] sm:%s322] %v451
                %v453 = vld [vmem:[%s329 + $0x174] sm:%s322]
                %454 = vst [vmem:[%s330 + $0xf4] sm:%s322] %v453
                %v455 = vld [vmem:[%s329 + $0x178] sm:%s322]
                %456 = vst [vmem:[%s330 + $0xf8] sm:%s322] %v455
                %v457 = vld [vmem:[%s329 + $0x17c] sm:%s322]
                %458 = vst [vmem:[%s330 + $0xfc] sm:%s322] %v457
                %v459 = vld [vmem:[%s329 + $0x200] sm:%s322]
                %460 = vst [vmem:[%s330 + $0x100] sm:%s322] %v459
                %v461 = vld [vmem:[%s329 + $0x204] sm:%s322]
                %462 = vst [vmem:[%s330 + $0x104] sm:%s322] %v461
                %v463 = vld [vmem:[%s329 + $0x208] sm:%s322]
                %464 = vst [vmem:[%s330 + $0x108] sm:%s322] %v463
                %v465 = vld [vmem:[%s329 + $0x20c] sm:%s322]
                %466 = vst [vmem:[%s330 + $0x10c] sm:%s322] %v465
                %v467 = vld [vmem:[%s329 + $0x210] sm:%s322]
                %468 = vst [vmem:[%s330 + $0x110] sm:%s322] %v467
                %v469 = vld [vmem:[%s329 + $0x214] sm:%s322]
                %470 = vst [vmem:[%s330 + $0x114] sm:%s322] %v469
                %v471 = vld [vmem:[%s329 + $0x218] sm:%s322]
                %472 = vst [vmem:[%s330 + $0x118] sm:%s322] %v471
                %v473 = vld [vmem:[%s329 + $0x21c] sm:%s322]
                %474 = vst [vmem:[%s330 + $0x11c] sm:%s322] %v473
                %v475 = vld [vmem:[%s329 + $0x220] sm:%s322]
                %476 = vst [vmem:[%s330 + $0x120] sm:%s322] %v475
                %v477 = vld [vmem:[%s329 + $0x224] sm:%s322]
                %478 = vst [vmem:[%s330 + $0x124] sm:%s322] %v477
                %v479 = vld [vmem:[%s329 + $0x228] sm:%s322]
                %480 = vst [vmem:[%s330 + $0x128] sm:%s322] %v479
                %v481 = vld [vmem:[%s329 + $0x22c] sm:%s322]
                %482 = vst [vmem:[%s330 + $0x12c] sm:%s322] %v481
                %v483 = vld [vmem:[%s329 + $0x230] sm:%s322]
                %484 = vst [vmem:[%s330 + $0x130] sm:%s322] %v483
                %v485 = vld [vmem:[%s329 + $0x234] sm:%s322]
                %486 = vst [vmem:[%s330 + $0x134] sm:%s322] %v485
                %v487 = vld [vmem:[%s329 + $0x238] sm:%s322]
                %488 = vst [vmem:[%s330 + $0x138] sm:%s322] %v487
                %v489 = vld [vmem:[%s329 + $0x23c] sm:%s322]
                %490 = vst [vmem:[%s330 + $0x13c] sm:%s322] %v489
                %v491 = vld [vmem:[%s329 + $0x240] sm:%s322]
                %492 = vst [vmem:[%s330 + $0x140] sm:%s322] %v491
                %v493 = vld [vmem:[%s329 + $0x244] sm:%s322]
                %494 = vst [vmem:[%s330 + $0x144] sm:%s322] %v493
                %v495 = vld [vmem:[%s329 + $0x248] sm:%s322]
                %496 = vst [vmem:[%s330 + $0x148] sm:%s322] %v495
                %v497 = vld [vmem:[%s329 + $0x24c] sm:%s322]
                %498 = vst [vmem:[%s330 + $0x14c] sm:%s322] %v497
                %v499 = vld [vmem:[%s329 + $0x250] sm:%s322]
                %500 = vst [vmem:[%s330 + $0x150] sm:%s322] %v499
                %v501 = vld [vmem:[%s329 + $0x254] sm:%s322]
                %502 = vst [vmem:[%s330 + $0x154] sm:%s322] %v501
                %v503 = vld [vmem:[%s329 + $0x258] sm:%s322]
                %504 = vst [vmem:[%s330 + $0x158] sm:%s322] %v503
                %v505 = vld [vmem:[%s329 + $0x25c] sm:%s322]
                %506 = vst [vmem:[%s330 + $0x15c] sm:%s322] %v505
                %v507 = vld [vmem:[%s329 + $0x260] sm:%s322]
                %508 = vst [vmem:[%s330 + $0x160] sm:%s322] %v507
                %v509 = vld [vmem:[%s329 + $0x264] sm:%s322]
                %510 = vst [vmem:[%s330 + $0x164] sm:%s322] %v509
                %v511 = vld [vmem:[%s329 + $0x268] sm:%s322]
                %512 = vst [vmem:[%s330 + $0x168] sm:%s322] %v511
                %v513 = vld [vmem:[%s329 + $0x26c] sm:%s322]
                %514 = vst [vmem:[%s330 + $0x16c] sm:%s322] %v513
                %v515 = vld [vmem:[%s329 + $0x270] sm:%s322]
                %516 = vst [vmem:[%s330 + $0x170] sm:%s322] %v515
                %v517 = vld [vmem:[%s329 + $0x274] sm:%s322]
                %518 = vst [vmem:[%s330 + $0x174] sm:%s322] %v517
                %v519 = vld [vmem:[%s329 + $0x278] sm:%s322]
                %520 = vst [vmem:[%s330 + $0x178] sm:%s322] %v519
                %v521 = vld [vmem:[%s329 + $0x27c] sm:%s322]
                %522 = vst [vmem:[%s330 + $0x17c] sm:%s322] %v521
                %v523 = vld [vmem:[%s329 + $0x300] sm:%s322]
                %524 = vst [vmem:[%s330 + $0x180] sm:%s322] %v523
                %v525 = vld [vmem:[%s329 + $0x304] sm:%s322]
                %526 = vst [vmem:[%s330 + $0x184] sm:%s322] %v525
                %v527 = vld [vmem:[%s329 + $0x308] sm:%s322]
                %528 = vst [vmem:[%s330 + $0x188] sm:%s322] %v527
                %v529 = vld [vmem:[%s329 + $0x30c] sm:%s322]
                %530 = vst [vmem:[%s330 + $0x18c] sm:%s322] %v529
                %v531 = vld [vmem:[%s329 + $0x310] sm:%s322]
                %532 = vst [vmem:[%s330 + $0x190] sm:%s322] %v531
                %v533 = vld [vmem:[%s329 + $0x314] sm:%s322]
                %534 = vst [vmem:[%s330 + $0x194] sm:%s322] %v533
                %v535 = vld [vmem:[%s329 + $0x318] sm:%s322]
                %536 = vst [vmem:[%s330 + $0x198] sm:%s322] %v535
                %v537 = vld [vmem:[%s329 + $0x31c] sm:%s322]
                %538 = vst [vmem:[%s330 + $0x19c] sm:%s322] %v537
                %v539 = vld [vmem:[%s329 + $0x320] sm:%s322]
                %540 = vst [vmem:[%s330 + $0x1a0] sm:%s322] %v539
                %v541 = vld [vmem:[%s329 + $0x324] sm:%s322]
                %542 = vst [vmem:[%s330 + $0x1a4] sm:%s322] %v541
                %v543 = vld [vmem:[%s329 + $0x328] sm:%s322]
                %544 = vst [vmem:[%s330 + $0x1a8] sm:%s322] %v543
                %v545 = vld [vmem:[%s329 + $0x32c] sm:%s322]
                %546 = vst [vmem:[%s330 + $0x1ac] sm:%s322] %v545
                %v547 = vld [vmem:[%s329 + $0x330] sm:%s322]
                %548 = vst [vmem:[%s330 + $0x1b0] sm:%s322] %v547
                %v549 = vld [vmem:[%s329 + $0x334] sm:%s322]
                %550 = vst [vmem:[%s330 + $0x1b4] sm:%s322] %v549
                %v551 = vld [vmem:[%s329 + $0x338] sm:%s322]
                %552 = vst [vmem:[%s330 + $0x1b8] sm:%s322] %v551
                %v553 = vld [vmem:[%s329 + $0x33c] sm:%s322]
                %554 = vst [vmem:[%s330 + $0x1bc] sm:%s322] %v553
                %v555 = vld [vmem:[%s329 + $0x340] sm:%s322]
                %556 = vst [vmem:[%s330 + $0x1c0] sm:%s322] %v555
                %v557 = vld [vmem:[%s329 + $0x344] sm:%s322]
                %558 = vst [vmem:[%s330 + $0x1c4] sm:%s322] %v557
                %v559 = vld [vmem:[%s329 + $0x348] sm:%s322]
                %560 = vst [vmem:[%s330 + $0x1c8] sm:%s322] %v559
                %v561 = vld [vmem:[%s329 + $0x34c] sm:%s322]
                %562 = vst [vmem:[%s330 + $0x1cc] sm:%s322] %v561
                %v563 = vld [vmem:[%s329 + $0x350] sm:%s322]
                %564 = vst [vmem:[%s330 + $0x1d0] sm:%s322] %v563
                %v565 = vld [vmem:[%s329 + $0x354] sm:%s322]
                %566 = vst [vmem:[%s330 + $0x1d4] sm:%s322] %v565
                %v567 = vld [vmem:[%s329 + $0x358] sm:%s322]
                %568 = vst [vmem:[%s330 + $0x1d8] sm:%s322] %v567
                %v569 = vld [vmem:[%s329 + $0x35c] sm:%s322]
                %570 = vst [vmem:[%s330 + $0x1dc] sm:%s322] %v569
                %v571 = vld [vmem:[%s329 + $0x360] sm:%s322]
                %572 = vst [vmem:[%s330 + $0x1e0] sm:%s322] %v571
                %v573 = vld [vmem:[%s329 + $0x364] sm:%s322]
                %574 = vst [vmem:[%s330 + $0x1e4] sm:%s322] %v573
                %v575 = vld [vmem:[%s329 + $0x368] sm:%s322]
                %576 = vst [vmem:[%s330 + $0x1e8] sm:%s322] %v575
                %v577 = vld [vmem:[%s329 + $0x36c] sm:%s322]
                %578 = vst [vmem:[%s330 + $0x1ec] sm:%s322] %v577
                %v579 = vld [vmem:[%s329 + $0x370] sm:%s322]
                %580 = vst [vmem:[%s330 + $0x1f0] sm:%s322] %v579
                %v581 = vld [vmem:[%s329 + $0x374] sm:%s322]
                %582 = vst [vmem:[%s330 + $0x1f4] sm:%s322] %v581
                %v583 = vld [vmem:[%s329 + $0x378] sm:%s322]
                %584 = vst [vmem:[%s330 + $0x1f8] sm:%s322] %v583
                %v585 = vld [vmem:[%s329 + $0x37c] sm:%s322]
                %586 = vst [vmem:[%s330 + $0x1fc] sm:%s322] %v585
                %v587 = vld [vmem:[%s329 + $0x400] sm:%s322]
                %588 = vst [vmem:[%s330 + $0x200] sm:%s322] %v587
                %v589 = vld [vmem:[%s329 + $0x404] sm:%s322]
                %590 = vst [vmem:[%s330 + $0x204] sm:%s322] %v589
                %v591 = vld [vmem:[%s329 + $0x408] sm:%s322]
                %592 = vst [vmem:[%s330 + $0x208] sm:%s322] %v591
                %v593 = vld [vmem:[%s329 + $0x40c] sm:%s322]
                %594 = vst [vmem:[%s330 + $0x20c] sm:%s322] %v593
                %v595 = vld [vmem:[%s329 + $0x410] sm:%s322]
                %596 = vst [vmem:[%s330 + $0x210] sm:%s322] %v595
                %v597 = vld [vmem:[%s329 + $0x414] sm:%s322]
                %598 = vst [vmem:[%s330 + $0x214] sm:%s322] %v597
                %v599 = vld [vmem:[%s329 + $0x418] sm:%s322]
                %600 = vst [vmem:[%s330 + $0x218] sm:%s322] %v599
                %v601 = vld [vmem:[%s329 + $0x41c] sm:%s322]
                %602 = vst [vmem:[%s330 + $0x21c] sm:%s322] %v601
                %v603 = vld [vmem:[%s329 + $0x420] sm:%s322]
                %604 = vst [vmem:[%s330 + $0x220] sm:%s322] %v603
                %v605 = vld [vmem:[%s329 + $0x424] sm:%s322]
                %606 = vst [vmem:[%s330 + $0x224] sm:%s322] %v605
                %v607 = vld [vmem:[%s329 + $0x428] sm:%s322]
                %608 = vst [vmem:[%s330 + $0x228] sm:%s322] %v607
                %v609 = vld [vmem:[%s329 + $0x42c] sm:%s322]
                %610 = vst [vmem:[%s330 + $0x22c] sm:%s322] %v609
                %v611 = vld [vmem:[%s329 + $0x430] sm:%s322]
                %612 = vst [vmem:[%s330 + $0x230] sm:%s322] %v611
                %v613 = vld [vmem:[%s329 + $0x434] sm:%s322]
                %614 = vst [vmem:[%s330 + $0x234] sm:%s322] %v613
                %v615 = vld [vmem:[%s329 + $0x438] sm:%s322]
                %616 = vst [vmem:[%s330 + $0x238] sm:%s322] %v615
                %v617 = vld [vmem:[%s329 + $0x43c] sm:%s322]
                %618 = vst [vmem:[%s330 + $0x23c] sm:%s322] %v617
                %v619 = vld [vmem:[%s329 + $0x440] sm:%s322]
                %620 = vst [vmem:[%s330 + $0x240] sm:%s322] %v619
                %v621 = vld [vmem:[%s329 + $0x444] sm:%s322]
                %622 = vst [vmem:[%s330 + $0x244] sm:%s322] %v621
                %v623 = vld [vmem:[%s329 + $0x448] sm:%s322]
                %624 = vst [vmem:[%s330 + $0x248] sm:%s322] %v623
                %v625 = vld [vmem:[%s329 + $0x44c] sm:%s322]
                %626 = vst [vmem:[%s330 + $0x24c] sm:%s322] %v625
                %v627 = vld [vmem:[%s329 + $0x450] sm:%s322]
                %628 = vst [vmem:[%s330 + $0x250] sm:%s322] %v627
                %v629 = vld [vmem:[%s329 + $0x454] sm:%s322]
                %630 = vst [vmem:[%s330 + $0x254] sm:%s322] %v629
                %v631 = vld [vmem:[%s329 + $0x458] sm:%s322]
                %632 = vst [vmem:[%s330 + $0x258] sm:%s322] %v631
                %v633 = vld [vmem:[%s329 + $0x45c] sm:%s322]
                %634 = vst [vmem:[%s330 + $0x25c] sm:%s322] %v633
                %v635 = vld [vmem:[%s329 + $0x460] sm:%s322]
                %636 = vst [vmem:[%s330 + $0x260] sm:%s322] %v635
                %v637 = vld [vmem:[%s329 + $0x464] sm:%s322]
                %638 = vst [vmem:[%s330 + $0x264] sm:%s322] %v637
                %v639 = vld [vmem:[%s329 + $0x468] sm:%s322]
                %640 = vst [vmem:[%s330 + $0x268] sm:%s322] %v639
                %v641 = vld [vmem:[%s329 + $0x46c] sm:%s322]
                %642 = vst [vmem:[%s330 + $0x26c] sm:%s322] %v641
                %v643 = vld [vmem:[%s329 + $0x470] sm:%s322]
                %644 = vst [vmem:[%s330 + $0x270] sm:%s322] %v643
                %v645 = vld [vmem:[%s329 + $0x474] sm:%s322]
                %646 = vst [vmem:[%s330 + $0x274] sm:%s322] %v645
                %v647 = vld [vmem:[%s329 + $0x478] sm:%s322]
                %648 = vst [vmem:[%s330 + $0x278] sm:%s322] %v647
                %v649 = vld [vmem:[%s329 + $0x47c] sm:%s322]
                %650 = vst [vmem:[%s330 + $0x27c] sm:%s322] %v649
              $region69: #{din_forward.1} parent=63 // loop_footer
                %s328 = sadd.s32 1, %s324
              $region70: #{din_forward.1} parent=63 // loop_footer_branch
                %323 = sbr.rel target = $region66
              $region71: #{din_forward.1} parent=63 // loop_exit
                _
            $region64: #{din_forward.1} parent=55 // pred_fallthru
              _
          $region56: #{din_forward.1} parent=51 // pred_fallthru
            _
          %991 = vnop
        $region52: #{din_forward.1} parent=47 // pred_fallthru
          _
        // Predicated region
        $region90: #{din_forward.1} parent=47 // pred_check
          %p992 = pneg %p62
        $region91: #{din_forward.1} parent=47 // pred_check_branch
          %994 = sbr.rel (%p992) target = $region93
        $region92: #{din_forward.1} parent=47 // pred_region
          %s995 = smul.u32 32, %s16
          %p996 = scmp.lt.s32.totalorder %s995, 63
          %s997 = scalar_select %p996, %s995, 63
          %s998 = smul.addr %s997, 2
          %s999 = smul.addr %s998, 4
          %s1000 = scalar_lea.vmem %s1, %s999
          %s1001 = smul.u32 32, %s16
        $region93: #{din_forward.1} parent=47 // pred_fallthru
          _
      $region48: #{din_forward.1} parent=5 // pred_fallthru
        _
      %p1002 = scmp.le.s32.totalorder 1, %s16
      %p1003 = scmp.lt.s32.totalorder %s16, 3
      %p1004 = pnand %p1002, %p1003
      %p1005 = pneg %p1004
      // Predicated region
      $region94: #{din_forward.1} parent=5 // pred_check
        _
      $region95: #{din_forward.1} parent=5 // pred_check_branch
        %1007 = sbr.rel (%p1004) target = $region97
      $region96: #{din_forward.1} parent=5 // pred_region
        %s1008 = ssub.s32 %s16, 1
        %s1009 = sand.u32 %s29, 1
        %s1010 = sand.u32 %s29, 1
        %s1011 = smul.addr %s1010, 640
        %s1012 = scalar_lea.vmem [#allocation2], %s1011
        // Predicated region
        $region98: #{din_forward.1} parent=96 // pred_check
          %p1013 = pneg %p42
        $region99: #{din_forward.1} parent=96 // pred_check_branch
          %1015 = sbr.rel (%p1013) target = $region101
        $region100: #{din_forward.1} parent=96 // pred_region
          _
        $region101: #{din_forward.1} parent=96 // pred_fallthru
          _
        %s1016 = sand.u32 %s29, 1
        %s1017 = sand.u32 %s29, 1
        %s1018 = smul.addr %s1017, 640
        %s1019 = scalar_lea.vmem [#allocation2], %s1018
        %p1020 = pneg %p42
        %p1021 = pneg %p39
        %s1022 = smul.u32 32, %s21
        %p1023 = scmp.lt.s32.totalorder %s1022, 63
        %s1024 = scalar_select %p1023, %s1022, 63
        %s1025 = smul.addr %s1024, 2
        %s1026 = smul.addr %s1025, 4
        %s1027 = scalar_lea.vmem %s1, %s1026
        %p1028 = pneg %p68
        %p1029 = pneg %p65
        %p1030 = pneg %p89
        %p1031 = pneg %p86
        %p1032 = pneg %p110
        %p1033 = pneg %p107
        %p1034 = pneg %p131
        %p1035 = pneg %p128
        %p1036 = pneg %p152
        %p1037 = pneg %p149
        %p1038 = pneg %p173
        %p1039 = pneg %p170
        %p1040 = pneg %p194
        %p1041 = pneg %p191
        %p1042 = pneg %p215
        %p1043 = pneg %p212
        %p1044 = pneg %p236
        %p1045 = pneg %p233
        %p1046 = pneg %p262
        %p1047 = pneg %p259
        %s1048 = smul.u32 32, %s21
        %p1049 = scmp.lt.s32.totalorder %s1048, 63
        %s1050 = scalar_select %p1049, %s1048, 63
        %s1051 = smul.addr %s1050, 8
        %s1052 = scalar_lea.vmem %s10, %s1051
        %s1053 = smul.u32 32, %s21
        %s1054 = smul.u32 32, %s21
        %p1055 = scmp.lt.s32.totalorder %s1054, 63
        %s1056 = scalar_select %p1055, %s1054, 63
        %s1057 = smul.addr %s1056, 2
        %s1058 = smul.addr %s1057, 4
        %s1059 = scalar_lea.vmem %s1, %s1058
        %s1060 = smul.u32 32, %s21
        %s1061 = smul.u32 32, %s21
        %p1062 = scmp.lt.s32.totalorder %s1061, 63
        %s1063 = scalar_select %p1062, %s1061, 63
        %s1064 = smul.addr %s1063, 8
        %s1065 = scalar_lea.vmem %s10, %s1064
        %s1066 = smul.u32 32, %s21
        %v1068 = vld [vmem:[%s9] sm:$0x1]
        %v1069 = vld [vmem:[%s9 + $0x1] sm:$0x1]
        %v1070 = vld [vmem:[%s9 + $0x2] sm:$0x1]
        %v1071 = vld [vmem:[%s9 + $0x3] sm:$0x1]
        %v1072 = vld [vmem:[%s9 + $0x4] sm:$0x1]
        %v1073 = vld [vmem:[%s9 + $0x5] sm:$0x1]
        %v1074 = vld [vmem:[%s9 + $0x6] sm:$0x1]
        %v1075 = vld [vmem:[%s9 + $0x7] sm:$0x1]
        %v1076 = vld [vmem:[%s1012] sm:$0xf]
        %v1077 = vld [vmem:[%s1012 + $0x4] sm:$0xf]
        %v1078 = vld [vmem:[%s1012 + $0x8] sm:$0xf]
        %v1079 = vld [vmem:[%s1012 + $0xc] sm:$0xf]
        %v1080 = vld [vmem:[%s1012 + $0x10] sm:$0xf]
        %v1081 = vld [vmem:[%s1012 + $0x14] sm:$0xf]
        %v1082 = vld [vmem:[%s1012 + $0x18] sm:$0xf]
        %v1083 = vld [vmem:[%s1012 + $0x1c] sm:$0xf]
        %v1084 = vld [vmem:[%s1012 + $0x20] sm:$0xf]
        %v1085 = vld [vmem:[%s1012 + $0x24] sm:$0xf]
        %v1086 = vld [vmem:[%s1012 + $0x28] sm:$0xf]
        %v1087 = vld [vmem:[%s1012 + $0x2c] sm:$0xf]
        %v1088 = vld [vmem:[%s1012 + $0x30] sm:$0xf]
        %v1089 = vld [vmem:[%s1012 + $0x34] sm:$0xf]
        %v1090 = vld [vmem:[%s1012 + $0x38] sm:$0xf]
        %v1091 = vld [vmem:[%s1012 + $0x3c] sm:$0xf]
        %v1092 = vld [vmem:[%s1012 + $0x40] sm:$0xf]
        %v1093 = vld [vmem:[%s1012 + $0x44] sm:$0xf]
        %v1094 = vld [vmem:[%s1012 + $0x48] sm:$0xf]
        %v1095 = vld [vmem:[%s1012 + $0x4c] sm:$0xf]
        %v1096 = vld [vmem:[%s1012 + $0x50] sm:$0xf]
        %v1097 = vld [vmem:[%s1012 + $0x54] sm:$0xf]
        %v1098 = vld [vmem:[%s1012 + $0x58] sm:$0xf]
        %v1099 = vld [vmem:[%s1012 + $0x5c] sm:$0xf]
        %v1100 = vld [vmem:[%s1012 + $0x60] sm:$0xf]
        %v1101 = vld [vmem:[%s1012 + $0x64] sm:$0xf]
        %v1102 = vld [vmem:[%s1012 + $0x68] sm:$0xf]
        %v1103 = vld [vmem:[%s1012 + $0x6c] sm:$0xf]
        %v1104 = vld [vmem:[%s1012 + $0x70] sm:$0xf]
        %v1105 = vld [vmem:[%s1012 + $0x74] sm:$0xf]
        %v1106 = vld [vmem:[%s1012 + $0x78] sm:$0xf]
        %v1107 = vld [vmem:[%s1012 + $0x7c] sm:$0xf]
        %v1108 = vld [vmem:[%s1012 + $0x80] sm:$0xf]
        %v1109 = vld [vmem:[%s1012 + $0x84] sm:$0xf]
        %v1110 = vld [vmem:[%s1012 + $0x88] sm:$0xf]
        %v1111 = vld [vmem:[%s1012 + $0x8c] sm:$0xf]
        %v1112 = vld [vmem:[%s1012 + $0x90] sm:$0xf]
        %v1113 = vld [vmem:[%s1012 + $0x94] sm:$0xf]
        %v1114 = vld [vmem:[%s1012 + $0x98] sm:$0xf]
        %v1115 = vld [vmem:[%s1012 + $0x9c] sm:$0xf]
        %v1116 = vld [vmem:[%s1012 + $0xa0] sm:$0xf]
        %v1117 = vld [vmem:[%s1012 + $0xa4] sm:$0xf]
        %v1118 = vld [vmem:[%s1012 + $0xa8] sm:$0xf]
        %v1119 = vld [vmem:[%s1012 + $0xac] sm:$0xf]
        %v1120 = vld [vmem:[%s1012 + $0xb0] sm:$0xf]
        %v1121 = vld [vmem:[%s1012 + $0xb4] sm:$0xf]
        %v1122 = vld [vmem:[%s1012 + $0xb8] sm:$0xf]
        %v1123 = vld [vmem:[%s1012 + $0xbc] sm:$0xf]
        %v1124 = vld [vmem:[%s1012 + $0xc0] sm:$0xf]
        %v1125 = vld [vmem:[%s1012 + $0xc4] sm:$0xf]
        %v1126 = vld [vmem:[%s1012 + $0xc8] sm:$0xf]
        %v1127 = vld [vmem:[%s1012 + $0xcc] sm:$0xf]
        %v1128 = vld [vmem:[%s1012 + $0xd0] sm:$0xf]
        %v1129 = vld [vmem:[%s1012 + $0xd4] sm:$0xf]
        %v1130 = vld [vmem:[%s1012 + $0xd8] sm:$0xf]
        %v1131 = vld [vmem:[%s1012 + $0xdc] sm:$0xf]
        %v1132 = vld [vmem:[%s1012 + $0xe0] sm:$0xf]
        %v1133 = vld [vmem:[%s1012 + $0xe4] sm:$0xf]
        %v1134 = vld [vmem:[%s1012 + $0xe8] sm:$0xf]
        %v1135 = vld [vmem:[%s1012 + $0xec] sm:$0xf]
        %v1136 = vld [vmem:[%s1012 + $0xf0] sm:$0xf]
        %v1137 = vld [vmem:[%s1012 + $0xf4] sm:$0xf]
        %v1138 = vld [vmem:[%s1012 + $0xf8] sm:$0xf]
        %v1139 = vld [vmem:[%s1012 + $0xfc] sm:$0xf]
        %v1140 = vld [vmem:[%s1012 + $0x100] sm:$0xf]
        %v1141 = vld [vmem:[%s1012 + $0x104] sm:$0xf]
        %v1142 = vld [vmem:[%s1012 + $0x108] sm:$0xf]
        %v1143 = vld [vmem:[%s1012 + $0x10c] sm:$0xf]
        %v1144 = vld [vmem:[%s1012 + $0x110] sm:$0xf]
        %v1145 = vld [vmem:[%s1012 + $0x114] sm:$0xf]
        %v1146 = vld [vmem:[%s1012 + $0x118] sm:$0xf]
        %v1147 = vld [vmem:[%s1012 + $0x11c] sm:$0xf]
        %v1148 = vld [vmem:[%s1012 + $0x120] sm:$0xf]
        %v1149 = vld [vmem:[%s1012 + $0x124] sm:$0xf]
        %v1150 = vld [vmem:[%s1012 + $0x128] sm:$0xf]
        %v1151 = vld [vmem:[%s1012 + $0x12c] sm:$0xf]
        %v1152 = vld [vmem:[%s1012 + $0x130] sm:$0xf]
        %v1153 = vld [vmem:[%s1012 + $0x134] sm:$0xf]
        %v1154 = vld [vmem:[%s1012 + $0x138] sm:$0xf]
        %v1155 = vld [vmem:[%s1012 + $0x13c] sm:$0xf]
        %v1156 = vld [vmem:[%s1012 + $0x140] sm:$0xf]
        %v1157 = vld [vmem:[%s1012 + $0x144] sm:$0xf]
        %v1158 = vld [vmem:[%s1012 + $0x148] sm:$0xf]
        %v1159 = vld [vmem:[%s1012 + $0x14c] sm:$0xf]
        %v1160 = vld [vmem:[%s1012 + $0x150] sm:$0xf]
        %v1161 = vld [vmem:[%s1012 + $0x154] sm:$0xf]
        %v1162 = vld [vmem:[%s1012 + $0x158] sm:$0xf]
        %v1163 = vld [vmem:[%s1012 + $0x15c] sm:$0xf]
        %v1164 = vld [vmem:[%s1012 + $0x160] sm:$0xf]
        %v1165 = vld [vmem:[%s1012 + $0x164] sm:$0xf]
        %v1166 = vld [vmem:[%s1012 + $0x168] sm:$0xf]
        %v1167 = vld [vmem:[%s1012 + $0x16c] sm:$0xf]
        %v1168 = vld [vmem:[%s1012 + $0x170] sm:$0xf]
        %v1169 = vld [vmem:[%s1012 + $0x174] sm:$0xf]
        %v1170 = vld [vmem:[%s1012 + $0x178] sm:$0xf]
        %v1171 = vld [vmem:[%s1012 + $0x17c] sm:$0xf]
        %v1172 = vld [vmem:[%s1012 + $0x180] sm:$0xf]
        %v1173 = vld [vmem:[%s1012 + $0x184] sm:$0xf]
        %v1174 = vld [vmem:[%s1012 + $0x188] sm:$0xf]
        %v1175 = vld [vmem:[%s1012 + $0x18c] sm:$0xf]
        %v1176 = vld [vmem:[%s1012 + $0x190] sm:$0xf]
        %v1177 = vld [vmem:[%s1012 + $0x194] sm:$0xf]
        %v1178 = vld [vmem:[%s1012 + $0x198] sm:$0xf]
        %v1179 = vld [vmem:[%s1012 + $0x19c] sm:$0xf]
        %v1180 = vld [vmem:[%s1012 + $0x1a0] sm:$0xf]
        %v1181 = vld [vmem:[%s1012 + $0x1a4] sm:$0xf]
        %v1182 = vld [vmem:[%s1012 + $0x1a8] sm:$0xf]
        %v1183 = vld [vmem:[%s1012 + $0x1ac] sm:$0xf]
        %v1184 = vld [vmem:[%s1012 + $0x1b0] sm:$0xf]
        %v1185 = vld [vmem:[%s1012 + $0x1b4] sm:$0xf]
        %v1186 = vld [vmem:[%s1012 + $0x1b8] sm:$0xf]
        %v1187 = vld [vmem:[%s1012 + $0x1bc] sm:$0xf]
        %v1188 = vld [vmem:[%s1012 + $0x1c0] sm:$0xf]
        %v1189 = vld [vmem:[%s1012 + $0x1c4] sm:$0xf]
        %v1190 = vld [vmem:[%s1012 + $0x1c8] sm:$0xf]
        %v1191 = vld [vmem:[%s1012 + $0x1cc] sm:$0xf]
        %v1192 = vld [vmem:[%s1012 + $0x1d0] sm:$0xf]
        %v1193 = vld [vmem:[%s1012 + $0x1d4] sm:$0xf]
        %v1194 = vld [vmem:[%s1012 + $0x1d8] sm:$0xf]
        %v1195 = vld [vmem:[%s1012 + $0x1dc] sm:$0xf]
        %v1196 = vld [vmem:[%s1012 + $0x1e0] sm:$0xf]
        %v1197 = vld [vmem:[%s1012 + $0x1e4] sm:$0xf]
        %v1198 = vld [vmem:[%s1012 + $0x1e8] sm:$0xf]
        %v1199 = vld [vmem:[%s1012 + $0x1ec] sm:$0xf]
        %v1200 = vld [vmem:[%s1012 + $0x1f0] sm:$0xf]
        %v1201 = vld [vmem:[%s1012 + $0x1f4] sm:$0xf]
        %v1202 = vld [vmem:[%s1012 + $0x1f8] sm:$0xf]
        %v1203 = vld [vmem:[%s1012 + $0x1fc] sm:$0xf]
        %v1204 = vld [vmem:[%s1012 + $0x200] sm:$0xf]
        %v1205 = vld [vmem:[%s1012 + $0x204] sm:$0xf]
        %v1206 = vld [vmem:[%s1012 + $0x208] sm:$0xf]
        %v1207 = vld [vmem:[%s1012 + $0x20c] sm:$0xf]
        %v1208 = vld [vmem:[%s1012 + $0x210] sm:$0xf]
        %v1209 = vld [vmem:[%s1012 + $0x214] sm:$0xf]
        %v1210 = vld [vmem:[%s1012 + $0x218] sm:$0xf]
        %v1211 = vld [vmem:[%s1012 + $0x21c] sm:$0xf]
        %v1212 = vld [vmem:[%s1012 + $0x220] sm:$0xf]
        %v1213 = vld [vmem:[%s1012 + $0x224] sm:$0xf]
        %v1214 = vld [vmem:[%s1012 + $0x228] sm:$0xf]
        %v1215 = vld [vmem:[%s1012 + $0x22c] sm:$0xf]
        %v1216 = vld [vmem:[%s1012 + $0x230] sm:$0xf]
        %v1217 = vld [vmem:[%s1012 + $0x234] sm:$0xf]
        %v1218 = vld [vmem:[%s1012 + $0x238] sm:$0xf]
        %v1219 = vld [vmem:[%s1012 + $0x23c] sm:$0xf]
        %v1220 = vld [vmem:[%s1012 + $0x240] sm:$0xf]
        %v1221 = vld [vmem:[%s1012 + $0x244] sm:$0xf]
        %v1222 = vld [vmem:[%s1012 + $0x248] sm:$0xf]
        %v1223 = vld [vmem:[%s1012 + $0x24c] sm:$0xf]
        %v1224 = vld [vmem:[%s1012 + $0x250] sm:$0xf]
        %v1225 = vld [vmem:[%s1012 + $0x254] sm:$0xf]
        %v1226 = vld [vmem:[%s1012 + $0x258] sm:$0xf]
        %v1227 = vld [vmem:[%s1012 + $0x25c] sm:$0xf]
        %v1228 = vld [vmem:[%s1012 + $0x260] sm:$0xf]
        %v1229 = vld [vmem:[%s1012 + $0x264] sm:$0xf]
        %v1230 = vld [vmem:[%s1012 + $0x268] sm:$0xf]
        %v1231 = vld [vmem:[%s1012 + $0x26c] sm:$0xf]
        %v1232 = vld [vmem:[%s1012 + $0x270] sm:$0xf]
        %v1233 = vld [vmem:[%s1012 + $0x274] sm:$0xf]
        %v1234 = vld [vmem:[%s1012 + $0x278] sm:$0xf]
        %v1235 = vld [vmem:[%s1012 + $0x27c] sm:$0xf]
        %v1236 = vld [vmem:[%s1059] sm:$0xf]
        %v1237 = vld [vmem:[%s1059 + $0x8] sm:$0xf]
        %v1238 = vld [vmem:[%s1059 + $0x10] sm:$0xf]
        %v1239 = vld [vmem:[%s1059 + $0x18] sm:$0xf]
        %v1240 = vld [vmem:[%s1059 + $0x20] sm:$0xf]
        %v1241 = vld [vmem:[%s1059 + $0x28] sm:$0xf]
        %v1242 = vld [vmem:[%s1059 + $0x30] sm:$0xf]
        %v1243 = vld [vmem:[%s1059 + $0x38] sm:$0xf]
        %v1244 = vld [vmem:[%s1059 + $0x40] sm:$0xf]
        %v1245 = vld [vmem:[%s1059 + $0x48] sm:$0xf]
        %v1246 = vld [vmem:[%s1059 + $0x50] sm:$0xf]
        %v1247 = vld [vmem:[%s1059 + $0x58] sm:$0xf]
        %v1248 = vld [vmem:[%s1059 + $0x60] sm:$0xf]
        %v1249 = vld [vmem:[%s1059 + $0x68] sm:$0xf]
        %v1250 = vld [vmem:[%s1059 + $0x70] sm:$0xf]
        %v1251 = vld [vmem:[%s1059 + $0x78] sm:$0xf]
        %v1252 = vld [vmem:[%s1059 + $0x80] sm:$0xf]
        %v1253 = vld [vmem:[%s1059 + $0x88] sm:$0xf]
        %v1254 = vld [vmem:[%s1059 + $0x90] sm:$0xf]
        %v1255 = vld [vmem:[%s1059 + $0x98] sm:$0xf]
        %v1256 = vld [vmem:[%s1059 + $0xa0] sm:$0xf]
        %v1257 = vld [vmem:[%s1059 + $0xa8] sm:$0xf]
        %v1258 = vld [vmem:[%s1059 + $0xb0] sm:$0xf]
        %v1259 = vld [vmem:[%s1059 + $0xb8] sm:$0xf]
        %v1260 = vld [vmem:[%s1059 + $0xc0] sm:$0xf]
        %v1261 = vld [vmem:[%s1059 + $0xc8] sm:$0xf]
        %v1262 = vld [vmem:[%s1059 + $0xd0] sm:$0xf]
        %v1263 = vld [vmem:[%s1059 + $0xd8] sm:$0xf]
        %v1264 = vld [vmem:[%s1059 + $0xe0] sm:$0xf]
        %v1265 = vld [vmem:[%s1059 + $0xe8] sm:$0xf]
        %v1266 = vld [vmem:[%s1059 + $0xf0] sm:$0xf]
        %v1267 = vld [vmem:[%s1059 + $0xf8] sm:$0xf]
        %v1268 = vld [vmem:[%s1059 + $0x4] sm:$0xf]
        %v1269 = vld [vmem:[%s1059 + $0xc] sm:$0xf]
        %v1270 = vld [vmem:[%s1059 + $0x14] sm:$0xf]
        %v1271 = vld [vmem:[%s1059 + $0x1c] sm:$0xf]
        %v1272 = vld [vmem:[%s1059 + $0x24] sm:$0xf]
        %v1273 = vld [vmem:[%s1059 + $0x2c] sm:$0xf]
        %v1274 = vld [vmem:[%s1059 + $0x34] sm:$0xf]
        %v1275 = vld [vmem:[%s1059 + $0x3c] sm:$0xf]
        %v1276 = vld [vmem:[%s1059 + $0x44] sm:$0xf]
        %v1277 = vld [vmem:[%s1059 + $0x4c] sm:$0xf]
        %v1278 = vld [vmem:[%s1059 + $0x54] sm:$0xf]
        %v1279 = vld [vmem:[%s1059 + $0x5c] sm:$0xf]
        %v1280 = vld [vmem:[%s1059 + $0x64] sm:$0xf]
        %v1281 = vld [vmem:[%s1059 + $0x6c] sm:$0xf]
        %v1282 = vld [vmem:[%s1059 + $0x74] sm:$0xf]
        %v1283 = vld [vmem:[%s1059 + $0x7c] sm:$0xf]
        %v1284 = vld [vmem:[%s1059 + $0x84] sm:$0xf]
        %v1285 = vld [vmem:[%s1059 + $0x8c] sm:$0xf]
        %v1286 = vld [vmem:[%s1059 + $0x94] sm:$0xf]
        %v1287 = vld [vmem:[%s1059 + $0x9c] sm:$0xf]
        %v1288 = vld [vmem:[%s1059 + $0xa4] sm:$0xf]
        %v1289 = vld [vmem:[%s1059 + $0xac] sm:$0xf]
        %v1290 = vld [vmem:[%s1059 + $0xb4] sm:$0xf]
        %v1291 = vld [vmem:[%s1059 + $0xbc] sm:$0xf]
        %v1292 = vld [vmem:[%s1059 + $0xc4] sm:$0xf]
        %v1293 = vld [vmem:[%s1059 + $0xcc] sm:$0xf]
        %v1294 = vld [vmem:[%s1059 + $0xd4] sm:$0xf]
        %v1295 = vld [vmem:[%s1059 + $0xdc] sm:$0xf]
        %v1296 = vld [vmem:[%s1059 + $0xe4] sm:$0xf]
        %v1297 = vld [vmem:[%s1059 + $0xec] sm:$0xf]
        %v1298 = vld [vmem:[%s1059 + $0xf4] sm:$0xf]
        %v1299 = vld [vmem:[%s1059 + $0xfc] sm:$0xf]
        %v1300 = vunpack.c.l.bf16 %v1268
        %v1301 = vunpack.c.l.bf16 %v1269
        %v1302 = vunpack.c.l.bf16 %v1270
        %v1303 = vunpack.c.l.bf16 %v1271
        %v1304 = vunpack.c.l.bf16 %v1272
        %v1305 = vunpack.c.l.bf16 %v1273
        %v1306 = vunpack.c.l.bf16 %v1274
        %v1307 = vunpack.c.l.bf16 %v1275
        %v1308 = vunpack.c.l.bf16 %v1276
        %v1309 = vunpack.c.l.bf16 %v1277
        %v1310 = vunpack.c.l.bf16 %v1278
        %v1311 = vunpack.c.l.bf16 %v1279
        %v1312 = vunpack.c.l.bf16 %v1280
        %v1313 = vunpack.c.l.bf16 %v1281
        %v1314 = vunpack.c.l.bf16 %v1282
        %v1315 = vunpack.c.l.bf16 %v1283
        %v1316 = vunpack.c.l.bf16 %v1284
        %v1317 = vunpack.c.l.bf16 %v1285
        %v1318 = vunpack.c.l.bf16 %v1286
        %v1319 = vunpack.c.l.bf16 %v1287
        %v1320 = vunpack.c.l.bf16 %v1288
        %v1321 = vunpack.c.l.bf16 %v1289
        %v1322 = vunpack.c.l.bf16 %v1290
        %v1323 = vunpack.c.l.bf16 %v1291
        %v1324 = vunpack.c.l.bf16 %v1292
        %v1325 = vunpack.c.l.bf16 %v1293
        %v1326 = vunpack.c.l.bf16 %v1294
        %v1327 = vunpack.c.l.bf16 %v1295
        %v1328 = vunpack.c.l.bf16 %v1296
        %v1329 = vunpack.c.l.bf16 %v1297
        %v1330 = vunpack.c.l.bf16 %v1298
        %v1331 = vunpack.c.l.bf16 %v1299
        %v1332 = vld [vmem:[%s2] sm:$0xf]
        %v1333 = vld [vmem:[%s2 + $0x4] sm:$0xf]
        %v1334 = vld [vmem:[%s2 + $0x8] sm:$0xf]
        %v1335 = vld [vmem:[%s2 + $0xc] sm:$0xf]
        %v1336 = vld [vmem:[%s2 + $0x10] sm:$0xf]
        %v1337 = vld [vmem:[%s2 + $0x14] sm:$0xf]
        %v1338 = vld [vmem:[%s2 + $0x18] sm:$0xf]
        %v1339 = vld [vmem:[%s2 + $0x1c] sm:$0xf]
        %v1340 = vld [vmem:[%s2 + $0x20] sm:$0xf]
        %v1341 = vld [vmem:[%s2 + $0x24] sm:$0xf]
        %v1342 = vld [vmem:[%s2 + $0x28] sm:$0xf]
        %v1343 = vld [vmem:[%s3] sm:$0xf]
        %v1344 = vld [vmem:[%s3 + $0x4] sm:$0xf]
        %v1345 = vld [vmem:[%s3 + $0x8] sm:$0xf]
        %v1346 = vld [vmem:[%s3 + $0xc] sm:$0xf]
        %v1347 = vld [vmem:[%s3 + $0x10] sm:$0xf]
        %v1348 = vld [vmem:[%s3 + $0x14] sm:$0xf]
        %v1349 = vld [vmem:[%s3 + $0x18] sm:$0xf]
        %v1350 = vld [vmem:[%s3 + $0x1c] sm:$0xf]
        %v1351 = vld [vmem:[%s3 + $0x20] sm:$0xf]
        %v1352 = vld [vmem:[%s3 + $0x24] sm:$0xf]
        %v1353 = vld [vmem:[%s3 + $0x28] sm:$0xf]
        %v1386 = vunpack.c.l.b16 %v1236
        %v1387 = vunpack.c.l.b16 %v1237
        %v1388 = vunpack.c.l.b16 %v1238
        %v1389 = vunpack.c.l.b16 %v1239
        %v1390 = vunpack.c.l.b16 %v1240
        %v1391 = vunpack.c.l.b16 %v1241
        %v1392 = vunpack.c.l.b16 %v1242
        %v1393 = vunpack.c.l.b16 %v1243
        %v1394 = vunpack.c.l.b16 %v1244
        %v1395 = vunpack.c.l.b16 %v1245
        %v1396 = vunpack.c.l.b16 %v1246
        %v1397 = vunpack.c.l.b16 %v1247
        %v1398 = vunpack.c.l.b16 %v1248
        %v1399 = vunpack.c.l.b16 %v1249
        %v1400 = vunpack.c.l.b16 %v1250
        %v1401 = vunpack.c.l.b16 %v1251
        %v1402 = vunpack.c.l.b16 %v1252
        %v1403 = vunpack.c.l.b16 %v1253
        %v1404 = vunpack.c.l.b16 %v1254
        %v1405 = vunpack.c.l.b16 %v1255
        %v1406 = vunpack.c.l.b16 %v1256
        %v1407 = vunpack.c.l.b16 %v1257
        %v1408 = vunpack.c.l.b16 %v1258
        %v1409 = vunpack.c.l.b16 %v1259
        %v1410 = vunpack.c.l.b16 %v1260
        %v1411 = vunpack.c.l.b16 %v1261
        %v1412 = vunpack.c.l.b16 %v1262
        %v1413 = vunpack.c.l.b16 %v1263
        %v1414 = vunpack.c.l.b16 %v1264
        %v1415 = vunpack.c.l.b16 %v1265
        %v1416 = vunpack.c.l.b16 %v1266
        %v1417 = vunpack.c.l.b16 %v1267
        %v1418 = vpack.c.b16 %v1387, %v1386
        %v1419 = vpack.c.b16 %v1389, %v1388
        %v1420 = vpack.c.b16 %v1391, %v1390
        %v1421 = vpack.c.b16 %v1393, %v1392
        %v1422 = vpack.c.b16 %v1395, %v1394
        %v1423 = vpack.c.b16 %v1397, %v1396
        %v1424 = vpack.c.b16 %v1399, %v1398
        %v1425 = vpack.c.b16 %v1401, %v1400
        %v1426 = vpack.c.b16 %v1403, %v1402
        %v1427 = vpack.c.b16 %v1405, %v1404
        %v1428 = vpack.c.b16 %v1407, %v1406
        %v1429 = vpack.c.b16 %v1409, %v1408
        %v1430 = vpack.c.b16 %v1411, %v1410
        %v1431 = vpack.c.b16 %v1413, %v1412
        %v1432 = vpack.c.b16 %v1415, %v1414
        %v1433 = vpack.c.b16 %v1417, %v1416
        %v1445 = vunpack.c.l.b16 %v1343
        %v1446 = vunpack.c.l.b16 %v1344
        %v1447 = vunpack.c.l.b16 %v1345
        %v1448 = vunpack.c.l.b16 %v1346
        %v1449 = vunpack.c.l.b16 %v1347
        %v1450 = vunpack.c.l.b16 %v1348
        %v1451 = vunpack.c.l.b16 %v1349
        %v1452 = vunpack.c.l.b16 %v1350
        %v1453 = vunpack.c.l.b16 %v1351
        %v1454 = vunpack.c.l.b16 %v1352
        %v1455 = vunpack.c.l.b16 %v1353
        %v1456 = vpack.c.b16 %v1446, %v1445
        %v1457 = vpack.c.b16 %v1448, %v1447
        %v1458 = vpack.c.b16 %v1450, %v1449
        %v1459 = vpack.c.b16 %v1452, %v1451
        %v1460 = vpack.c.b16 %v1454, %v1453
        %v1461 = vpack.c.b16 %v1455, %v1455
        %vm1467 = vcmask 719872
        %v1469 = vsel %vm1467, %v1418, 0
        %v1472 = vsel %vm1467, %v1419, 0
        %v1475 = vsel %vm1467, %v1420, 0
        %v1478 = vsel %vm1467, %v1421, 0
        %v1481 = vsel %vm1467, %v1422, 0
        %v1484 = vsel %vm1467, %v1423, 0
        %v1487 = vsel %vm1467, %v1424, 0
        %v1490 = vsel %vm1467, %v1425, 0
        %v1493 = vsel %vm1467, %v1426, 0
        %v1496 = vsel %vm1467, %v1427, 0
        %v1499 = vsel %vm1467, %v1428, 0
        %v1502 = vsel %vm1467, %v1429, 0
        %v1505 = vsel %vm1467, %v1430, 0
        %v1508 = vsel %vm1467, %v1431, 0
        %v1511 = vsel %vm1467, %v1432, 0
        %v1514 = vsel %vm1467, %v1433, 0
        %vm1516 = vcmask 1043456
        %v1518 = vsel %vm1516, %v1461, 0
        %1520 = vmatpush.bf16.msra.mxu0 0
        %1521 = vmatpush.bf16.msra.mxu0 0
        %1522 = vmatpush.bf16.msra.mxu0 %v1518
        %1523 = vmatpush.bf16.msra.mxu0 %v1460
        %1524 = vmatpush.bf16.msra.mxu0 %v1459
        %1525 = vmatpush.bf16.msra.mxu0 %v1458
        %1526 = vmatpush.bf16.msra.mxu0 %v1457
        %1527 = vmatpush.bf16.msra.mxu0 %v1456
        %1528 = vmatmul.bf16.gmra.mxu0 %v1469
        %v1529 = vpop.f32.mrf.mxu0
        %v1530 = vadd.f32 0.0, %v1529
        %v1531 = vpop.f32.mrf.mxu0
        %v1532 = vadd.f32 0.0, %v1531
        %1533 = vmatmul.bf16.gmra.mxu0 %v1472
        %v1534 = vpop.f32.mrf.mxu0
        %v1535 = vadd.f32 0.0, %v1534
        %v1536 = vpop.f32.mrf.mxu0
        %v1537 = vadd.f32 0.0, %v1536
        %1538 = vmatmul.bf16.gmra.mxu0 %v1475
        %v1539 = vpop.f32.mrf.mxu0
        %v1540 = vadd.f32 0.0, %v1539
        %v1541 = vpop.f32.mrf.mxu0
        %v1542 = vadd.f32 0.0, %v1541
        %1543 = vmatmul.bf16.gmra.mxu0 %v1478
        %v1544 = vpop.f32.mrf.mxu0
        %v1545 = vadd.f32 0.0, %v1544
        %v1546 = vpop.f32.mrf.mxu0
        %v1547 = vadd.f32 0.0, %v1546
        %1548 = vmatmul.bf16.gmra.mxu0 %v1481
        %v1549 = vpop.f32.mrf.mxu0
        %v1550 = vadd.f32 0.0, %v1549
        %v1551 = vpop.f32.mrf.mxu0
        %v1552 = vadd.f32 0.0, %v1551
        %1553 = vmatmul.bf16.gmra.mxu0 %v1484
        %v1554 = vpop.f32.mrf.mxu0
        %v1555 = vadd.f32 0.0, %v1554
        %v1556 = vpop.f32.mrf.mxu0
        %v1557 = vadd.f32 0.0, %v1556
        %1558 = vmatmul.bf16.gmra.mxu0 %v1487
        %v1559 = vpop.f32.mrf.mxu0
        %v1560 = vadd.f32 0.0, %v1559
        %v1561 = vpop.f32.mrf.mxu0
        %v1562 = vadd.f32 0.0, %v1561
        %1563 = vmatmul.bf16.gmra.mxu0 %v1490
        %v1564 = vpop.f32.mrf.mxu0
        %v1565 = vadd.f32 0.0, %v1564
        %v1566 = vpop.f32.mrf.mxu0
        %v1567 = vadd.f32 0.0, %v1566
        %1568 = vmatmul.bf16.gmra.mxu0 %v1493
        %v1569 = vpop.f32.mrf.mxu0
        %v1570 = vadd.f32 0.0, %v1569
        %v1571 = vpop.f32.mrf.mxu0
        %v1572 = vadd.f32 0.0, %v1571
        %1573 = vmatmul.bf16.gmra.mxu0 %v1496
        %v1574 = vpop.f32.mrf.mxu0
        %v1575 = vadd.f32 0.0, %v1574
        %v1576 = vpop.f32.mrf.mxu0
        %v1577 = vadd.f32 0.0, %v1576
        %1578 = vmatmul.bf16.gmra.mxu0 %v1499
        %v1579 = vpop.f32.mrf.mxu0
        %v1580 = vadd.f32 0.0, %v1579
        %v1581 = vpop.f32.mrf.mxu0
        %v1582 = vadd.f32 0.0, %v1581
        %1583 = vmatmul.bf16.gmra.mxu0 %v1502
        %v1584 = vpop.f32.mrf.mxu0
        %v1585 = vadd.f32 0.0, %v1584
        %v1586 = vpop.f32.mrf.mxu0
        %v1587 = vadd.f32 0.0, %v1586
        %1588 = vmatmul.bf16.gmra.mxu0 %v1505
        %v1589 = vpop.f32.mrf.mxu0
        %v1590 = vadd.f32 0.0, %v1589
        %v1591 = vpop.f32.mrf.mxu0
        %v1592 = vadd.f32 0.0, %v1591
        %1593 = vmatmul.bf16.gmra.mxu0 %v1508
        %v1594 = vpop.f32.mrf.mxu0
        %v1595 = vadd.f32 0.0, %v1594
        %v1596 = vpop.f32.mrf.mxu0
        %v1597 = vadd.f32 0.0, %v1596
        %1598 = vmatmul.bf16.gmra.mxu0 %v1511
        %v1599 = vpop.f32.mrf.mxu0
        %v1600 = vadd.f32 0.0, %v1599
        %v1601 = vpop.f32.mrf.mxu0
        %v1602 = vadd.f32 0.0, %v1601
        %1603 = vmatmul.bf16.gmra.mxu0 %v1514
        %v1604 = vpop.f32.mrf.mxu0
        %v1605 = vadd.f32 0.0, %v1604
        %v1606 = vpop.f32.mrf.mxu0
        %v1607 = vadd.f32 0.0, %v1606
        %1608 = vdwg.mxu0
        %v1769 = vunpack.c.l.b16 %v1076
        %v1770 = vunpack.c.l.b16 %v1077
        %v1771 = vunpack.c.l.b16 %v1078
        %v1772 = vunpack.c.l.b16 %v1079
        %v1773 = vunpack.c.l.b16 %v1080
        %v1774 = vunpack.c.l.b16 %v1081
        %v1775 = vunpack.c.l.b16 %v1082
        %v1776 = vunpack.c.l.b16 %v1083
        %v1777 = vunpack.c.l.b16 %v1084
        %v1778 = vunpack.c.l.b16 %v1085
        %v1779 = vunpack.c.l.b16 %v1086
        %v1780 = vunpack.c.l.b16 %v1087
        %v1781 = vunpack.c.l.b16 %v1088
        %v1782 = vunpack.c.l.b16 %v1089
        %v1783 = vunpack.c.l.b16 %v1090
        %v1784 = vunpack.c.l.b16 %v1091
        %v1785 = vunpack.c.l.b16 %v1092
        %v1786 = vunpack.c.l.b16 %v1093
        %v1787 = vunpack.c.l.b16 %v1094
        %v1788 = vunpack.c.l.b16 %v1095
        %v1789 = vunpack.c.l.b16 %v1096
        %v1790 = vunpack.c.l.b16 %v1097
        %v1791 = vunpack.c.l.b16 %v1098
        %v1792 = vunpack.c.l.b16 %v1099
        %v1793 = vunpack.c.l.b16 %v1100
        %v1794 = vunpack.c.l.b16 %v1101
        %v1795 = vunpack.c.l.b16 %v1102
        %v1796 = vunpack.c.l.b16 %v1103
        %v1797 = vunpack.c.l.b16 %v1104
        %v1798 = vunpack.c.l.b16 %v1105
        %v1799 = vunpack.c.l.b16 %v1106
        %v1800 = vunpack.c.l.b16 %v1107
        %v1801 = vunpack.c.l.b16 %v1108
        %v1802 = vunpack.c.l.b16 %v1109
        %v1803 = vunpack.c.l.b16 %v1110
        %v1804 = vunpack.c.l.b16 %v1111
        %v1805 = vunpack.c.l.b16 %v1112
        %v1806 = vunpack.c.l.b16 %v1113
        %v1807 = vunpack.c.l.b16 %v1114
        %v1808 = vunpack.c.l.b16 %v1115
        %v1809 = vunpack.c.l.b16 %v1116
        %v1810 = vunpack.c.l.b16 %v1117
        %v1811 = vunpack.c.l.b16 %v1118
        %v1812 = vunpack.c.l.b16 %v1119
        %v1813 = vunpack.c.l.b16 %v1120
        %v1814 = vunpack.c.l.b16 %v1121
        %v1815 = vunpack.c.l.b16 %v1122
        %v1816 = vunpack.c.l.b16 %v1123
        %v1817 = vunpack.c.l.b16 %v1124
        %v1818 = vunpack.c.l.b16 %v1125
        %v1819 = vunpack.c.l.b16 %v1126
        %v1820 = vunpack.c.l.b16 %v1127
        %v1821 = vunpack.c.l.b16 %v1128
        %v1822 = vunpack.c.l.b16 %v1129
        %v1823 = vunpack.c.l.b16 %v1130
        %v1824 = vunpack.c.l.b16 %v1131
        %v1825 = vunpack.c.l.b16 %v1132
        %v1826 = vunpack.c.l.b16 %v1133
        %v1827 = vunpack.c.l.b16 %v1134
        %v1828 = vunpack.c.l.b16 %v1135
        %v1829 = vunpack.c.l.b16 %v1136
        %v1830 = vunpack.c.l.b16 %v1137
        %v1831 = vunpack.c.l.b16 %v1138
        %v1832 = vunpack.c.l.b16 %v1139
        %v1833 = vunpack.c.l.b16 %v1140
        %v1834 = vunpack.c.l.b16 %v1141
        %v1835 = vunpack.c.l.b16 %v1142
        %v1836 = vunpack.c.l.b16 %v1143
        %v1837 = vunpack.c.l.b16 %v1144
        %v1838 = vunpack.c.l.b16 %v1145
        %v1839 = vunpack.c.l.b16 %v1146
        %v1840 = vunpack.c.l.b16 %v1147
        %v1841 = vunpack.c.l.b16 %v1148
        %v1842 = vunpack.c.l.b16 %v1149
        %v1843 = vunpack.c.l.b16 %v1150
        %v1844 = vunpack.c.l.b16 %v1151
        %v1845 = vunpack.c.l.b16 %v1152
        %v1846 = vunpack.c.l.b16 %v1153
        %v1847 = vunpack.c.l.b16 %v1154
        %v1848 = vunpack.c.l.b16 %v1155
        %v1849 = vunpack.c.l.b16 %v1156
        %v1850 = vunpack.c.l.b16 %v1157
        %v1851 = vunpack.c.l.b16 %v1158
        %v1852 = vunpack.c.l.b16 %v1159
        %v1853 = vunpack.c.l.b16 %v1160
        %v1854 = vunpack.c.l.b16 %v1161
        %v1855 = vunpack.c.l.b16 %v1162
        %v1856 = vunpack.c.l.b16 %v1163
        %v1857 = vunpack.c.l.b16 %v1164
        %v1858 = vunpack.c.l.b16 %v1165
        %v1859 = vunpack.c.l.b16 %v1166
        %v1860 = vunpack.c.l.b16 %v1167
        %v1861 = vunpack.c.l.b16 %v1168
        %v1862 = vunpack.c.l.b16 %v1169
        %v1863 = vunpack.c.l.b16 %v1170
        %v1864 = vunpack.c.l.b16 %v1171
        %v1865 = vunpack.c.l.b16 %v1172
        %v1866 = vunpack.c.l.b16 %v1173
        %v1867 = vunpack.c.l.b16 %v1174
        %v1868 = vunpack.c.l.b16 %v1175
        %v1869 = vunpack.c.l.b16 %v1176
        %v1870 = vunpack.c.l.b16 %v1177
        %v1871 = vunpack.c.l.b16 %v1178
        %v1872 = vunpack.c.l.b16 %v1179
        %v1873 = vunpack.c.l.b16 %v1180
        %v1874 = vunpack.c.l.b16 %v1181
        %v1875 = vunpack.c.l.b16 %v1182
        %v1876 = vunpack.c.l.b16 %v1183
        %v1877 = vunpack.c.l.b16 %v1184
        %v1878 = vunpack.c.l.b16 %v1185
        %v1879 = vunpack.c.l.b16 %v1186
        %v1880 = vunpack.c.l.b16 %v1187
        %v1881 = vunpack.c.l.b16 %v1188
        %v1882 = vunpack.c.l.b16 %v1189
        %v1883 = vunpack.c.l.b16 %v1190
        %v1884 = vunpack.c.l.b16 %v1191
        %v1885 = vunpack.c.l.b16 %v1192
        %v1886 = vunpack.c.l.b16 %v1193
        %v1887 = vunpack.c.l.b16 %v1194
        %v1888 = vunpack.c.l.b16 %v1195
        %v1889 = vunpack.c.l.b16 %v1196
        %v1890 = vunpack.c.l.b16 %v1197
        %v1891 = vunpack.c.l.b16 %v1198
        %v1892 = vunpack.c.l.b16 %v1199
        %v1893 = vunpack.c.l.b16 %v1200
        %v1894 = vunpack.c.l.b16 %v1201
        %v1895 = vunpack.c.l.b16 %v1202
        %v1896 = vunpack.c.l.b16 %v1203
        %v1897 = vunpack.c.l.b16 %v1204
        %v1898 = vunpack.c.l.b16 %v1205
        %v1899 = vunpack.c.l.b16 %v1206
        %v1900 = vunpack.c.l.b16 %v1207
        %v1901 = vunpack.c.l.b16 %v1208
        %v1902 = vunpack.c.l.b16 %v1209
        %v1903 = vunpack.c.l.b16 %v1210
        %v1904 = vunpack.c.l.b16 %v1211
        %v1905 = vunpack.c.l.b16 %v1212
        %v1906 = vunpack.c.l.b16 %v1213
        %v1907 = vunpack.c.l.b16 %v1214
        %v1908 = vunpack.c.l.b16 %v1215
        %v1909 = vunpack.c.l.b16 %v1216
        %v1910 = vunpack.c.l.b16 %v1217
        %v1911 = vunpack.c.l.b16 %v1218
        %v1912 = vunpack.c.l.b16 %v1219
        %v1913 = vunpack.c.l.b16 %v1220
        %v1914 = vunpack.c.l.b16 %v1221
        %v1915 = vunpack.c.l.b16 %v1222
        %v1916 = vunpack.c.l.b16 %v1223
        %v1917 = vunpack.c.l.b16 %v1224
        %v1918 = vunpack.c.l.b16 %v1225
        %v1919 = vunpack.c.l.b16 %v1226
        %v1920 = vunpack.c.l.b16 %v1227
        %v1921 = vunpack.c.l.b16 %v1228
        %v1922 = vunpack.c.l.b16 %v1229
        %v1923 = vunpack.c.l.b16 %v1230
        %v1924 = vunpack.c.l.b16 %v1231
        %v1925 = vunpack.c.l.b16 %v1232
        %v1926 = vunpack.c.l.b16 %v1233
        %v1927 = vunpack.c.l.b16 %v1234
        %v1928 = vunpack.c.l.b16 %v1235
        %v1929 = vpack.c.b16 %v1770, %v1769
        %v1930 = vpack.c.b16 %v1772, %v1771
        %v1931 = vpack.c.b16 %v1774, %v1773
        %v1932 = vpack.c.b16 %v1776, %v1775
        %v1933 = vpack.c.b16 %v1778, %v1777
        %v1934 = vpack.c.b16 %v1780, %v1779
        %v1935 = vpack.c.b16 %v1782, %v1781
        %v1936 = vpack.c.b16 %v1784, %v1783
        %v1937 = vpack.c.b16 %v1786, %v1785
        %v1938 = vpack.c.b16 %v1788, %v1787
        %v1939 = vpack.c.b16 %v1790, %v1789
        %v1940 = vpack.c.b16 %v1792, %v1791
        %v1941 = vpack.c.b16 %v1794, %v1793
        %v1942 = vpack.c.b16 %v1796, %v1795
        %v1943 = vpack.c.b16 %v1798, %v1797
        %v1944 = vpack.c.b16 %v1800, %v1799
        %v1945 = vpack.c.b16 %v1802, %v1801
        %v1946 = vpack.c.b16 %v1804, %v1803
        %v1947 = vpack.c.b16 %v1806, %v1805
        %v1948 = vpack.c.b16 %v1808, %v1807
        %v1949 = vpack.c.b16 %v1810, %v1809
        %v1950 = vpack.c.b16 %v1812, %v1811
        %v1951 = vpack.c.b16 %v1814, %v1813
        %v1952 = vpack.c.b16 %v1816, %v1815
        %v1953 = vpack.c.b16 %v1818, %v1817
        %v1954 = vpack.c.b16 %v1820, %v1819
        %v1955 = vpack.c.b16 %v1822, %v1821
        %v1956 = vpack.c.b16 %v1824, %v1823
        %v1957 = vpack.c.b16 %v1826, %v1825
        %v1958 = vpack.c.b16 %v1828, %v1827
        %v1959 = vpack.c.b16 %v1830, %v1829
        %v1960 = vpack.c.b16 %v1832, %v1831
        %v1961 = vpack.c.b16 %v1834, %v1833
        %v1962 = vpack.c.b16 %v1836, %v1835
        %v1963 = vpack.c.b16 %v1838, %v1837
        %v1964 = vpack.c.b16 %v1840, %v1839
        %v1965 = vpack.c.b16 %v1842, %v1841
        %v1966 = vpack.c.b16 %v1844, %v1843
        %v1967 = vpack.c.b16 %v1846, %v1845
        %v1968 = vpack.c.b16 %v1848, %v1847
        %v1969 = vpack.c.b16 %v1850, %v1849
        %v1970 = vpack.c.b16 %v1852, %v1851
        %v1971 = vpack.c.b16 %v1854, %v1853
        %v1972 = vpack.c.b16 %v1856, %v1855
        %v1973 = vpack.c.b16 %v1858, %v1857
        %v1974 = vpack.c.b16 %v1860, %v1859
        %v1975 = vpack.c.b16 %v1862, %v1861
        %v1976 = vpack.c.b16 %v1864, %v1863
        %v1977 = vpack.c.b16 %v1866, %v1865
        %v1978 = vpack.c.b16 %v1868, %v1867
        %v1979 = vpack.c.b16 %v1870, %v1869
        %v1980 = vpack.c.b16 %v1872, %v1871
        %v1981 = vpack.c.b16 %v1874, %v1873
        %v1982 = vpack.c.b16 %v1876, %v1875
        %v1983 = vpack.c.b16 %v1878, %v1877
        %v1984 = vpack.c.b16 %v1880, %v1879
        %v1985 = vpack.c.b16 %v1882, %v1881
        %v1986 = vpack.c.b16 %v1884, %v1883
        %v1987 = vpack.c.b16 %v1886, %v1885
        %v1988 = vpack.c.b16 %v1888, %v1887
        %v1989 = vpack.c.b16 %v1890, %v1889
        %v1990 = vpack.c.b16 %v1892, %v1891
        %v1991 = vpack.c.b16 %v1894, %v1893
        %v1992 = vpack.c.b16 %v1896, %v1895
        %v1993 = vpack.c.b16 %v1898, %v1897
        %v1994 = vpack.c.b16 %v1900, %v1899
        %v1995 = vpack.c.b16 %v1902, %v1901
        %v1996 = vpack.c.b16 %v1904, %v1903
        %v1997 = vpack.c.b16 %v1906, %v1905
        %v1998 = vpack.c.b16 %v1908, %v1907
        %v1999 = vpack.c.b16 %v1910, %v1909
        %v2000 = vpack.c.b16 %v1912, %v1911
        %v2001 = vpack.c.b16 %v1914, %v1913
        %v2002 = vpack.c.b16 %v1916, %v1915
        %v2003 = vpack.c.b16 %v1918, %v1917
        %v2004 = vpack.c.b16 %v1920, %v1919
        %v2005 = vpack.c.b16 %v1922, %v1921
        %v2006 = vpack.c.b16 %v1924, %v1923
        %v2007 = vpack.c.b16 %v1926, %v1925
        %v2008 = vpack.c.b16 %v1928, %v1927
        %v2020 = vunpack.c.l.b16 %v1332
        %v2021 = vunpack.c.l.b16 %v1333
        %v2022 = vunpack.c.l.b16 %v1334
        %v2023 = vunpack.c.l.b16 %v1335
        %v2024 = vunpack.c.l.b16 %v1336
        %v2025 = vunpack.c.l.b16 %v1337
        %v2026 = vunpack.c.l.b16 %v1338
        %v2027 = vunpack.c.l.b16 %v1339
        %v2028 = vunpack.c.l.b16 %v1340
        %v2029 = vunpack.c.l.b16 %v1341
        %v2030 = vunpack.c.l.b16 %v1342
        %v2031 = vpack.c.b16 %v2021, %v2020
        %v2032 = vpack.c.b16 %v2023, %v2022
        %v2033 = vpack.c.b16 %v2025, %v2024
        %v2034 = vpack.c.b16 %v2027, %v2026
        %v2035 = vpack.c.b16 %v2029, %v2028
        %v2036 = vpack.c.b16 %v2030, %v2030
        %v2043 = vsel %vm1467, %v1929, 0
        %v2046 = vsel %vm1467, %v1930, 0
        %v2049 = vsel %vm1467, %v1931, 0
        %v2052 = vsel %vm1467, %v1932, 0
        %v2055 = vsel %vm1467, %v1933, 0
        %v2058 = vsel %vm1467, %v1934, 0
        %v2061 = vsel %vm1467, %v1935, 0
        %v2064 = vsel %vm1467, %v1936, 0
        %v2067 = vsel %vm1467, %v1937, 0
        %v2070 = vsel %vm1467, %v1938, 0
        %v2073 = vsel %vm1467, %v1939, 0
        %v2076 = vsel %vm1467, %v1940, 0
        %v2079 = vsel %vm1467, %v1941, 0
        %v2082 = vsel %vm1467, %v1942, 0
        %v2085 = vsel %vm1467, %v1943, 0
        %v2088 = vsel %vm1467, %v1944, 0
        %v2091 = vsel %vm1467, %v1945, 0
        %v2094 = vsel %vm1467, %v1946, 0
        %v2097 = vsel %vm1467, %v1947, 0
        %v2100 = vsel %vm1467, %v1948, 0
        %v2103 = vsel %vm1467, %v1949, 0
        %v2106 = vsel %vm1467, %v1950, 0
        %v2109 = vsel %vm1467, %v1951, 0
        %v2112 = vsel %vm1467, %v1952, 0
        %v2115 = vsel %vm1467, %v1953, 0
        %v2118 = vsel %vm1467, %v1954, 0
        %v2121 = vsel %vm1467, %v1955, 0
        %v2124 = vsel %vm1467, %v1956, 0
        %v2127 = vsel %vm1467, %v1957, 0
        %v2130 = vsel %vm1467, %v1958, 0
        %v2133 = vsel %vm1467, %v1959, 0
        %v2136 = vsel %vm1467, %v1960, 0
        %v2139 = vsel %vm1467, %v1961, 0
        %v2142 = vsel %vm1467, %v1962, 0
        %v2145 = vsel %vm1467, %v1963, 0
        %v2148 = vsel %vm1467, %v1964, 0
        %v2151 = vsel %vm1467, %v1965, 0
        %v2154 = vsel %vm1467, %v1966, 0
        %v2157 = vsel %vm1467, %v1967, 0
        %v2160 = vsel %vm1467, %v1968, 0
        %v2163 = vsel %vm1467, %v1969, 0
        %v2166 = vsel %vm1467, %v1970, 0
        %v2169 = vsel %vm1467, %v1971, 0
        %v2172 = vsel %vm1467, %v1972, 0
        %v2175 = vsel %vm1467, %v1973, 0
        %v2178 = vsel %vm1467, %v1974, 0
        %v2181 = vsel %vm1467, %v1975, 0
        %v2184 = vsel %vm1467, %v1976, 0
        %v2187 = vsel %vm1467, %v1977, 0
        %v2190 = vsel %vm1467, %v1978, 0
        %v2193 = vsel %vm1467, %v1979, 0
        %v2196 = vsel %vm1467, %v1980, 0
        %v2199 = vsel %vm1467, %v1981, 0
        %v2202 = vsel %vm1467, %v1982, 0
        %v2205 = vsel %vm1467, %v1983, 0
        %v2208 = vsel %vm1467, %v1984, 0
        %v2211 = vsel %vm1467, %v1985, 0
        %v2214 = vsel %vm1467, %v1986, 0
        %v2217 = vsel %vm1467, %v1987, 0
        %v2220 = vsel %vm1467, %v1988, 0
        %v2223 = vsel %vm1467, %v1989, 0
        %v2226 = vsel %vm1467, %v1990, 0
        %v2229 = vsel %vm1467, %v1991, 0
        %v2232 = vsel %vm1467, %v1992, 0
        %v2235 = vsel %vm1467, %v1993, 0
        %v2238 = vsel %vm1467, %v1994, 0
        %v2241 = vsel %vm1467, %v1995, 0
        %v2244 = vsel %vm1467, %v1996, 0
        %v2247 = vsel %vm1467, %v1997, 0
        %v2250 = vsel %vm1467, %v1998, 0
        %v2253 = vsel %vm1467, %v1999, 0
        %v2256 = vsel %vm1467, %v2000, 0
        %v2259 = vsel %vm1467, %v2001, 0
        %v2262 = vsel %vm1467, %v2002, 0
        %v2265 = vsel %vm1467, %v2003, 0
        %v2268 = vsel %vm1467, %v2004, 0
        %v2271 = vsel %vm1467, %v2005, 0
        %v2274 = vsel %vm1467, %v2006, 0
        %v2277 = vsel %vm1467, %v2007, 0
        %v2280 = vsel %vm1467, %v2008, 0
        %v2283 = vsel %vm1516, %v2036, 0
        %2285 = vmatpush.bf16.msra.mxu0 0
        %2286 = vmatpush.bf16.msra.mxu0 0
        %2287 = vmatpush.bf16.msra.mxu0 %v2283
        %2288 = vmatpush.bf16.msra.mxu0 %v2035
        %2289 = vmatpush.bf16.msra.mxu0 %v2034
        %2290 = vmatpush.bf16.msra.mxu0 %v2033
        %2291 = vmatpush.bf16.msra.mxu0 %v2032
        %2292 = vmatpush.bf16.msra.mxu0 %v2031
        %2293 = vmatmul.bf16.gmra.mxu0 %v2043
        %v2294 = vpop.f32.mrf.mxu0
        %v2295 = vadd.f32 %v1530, %v2294
        %v2296 = vpop.f32.mrf.mxu0
        %v2297 = vadd.f32 %v1532, %v2296
        %2298 = vmatmul.bf16.gmra.mxu0 %v2046
        %v2299 = vpop.f32.mrf.mxu0
        %v2300 = vadd.f32 %v1535, %v2299
        %v2301 = vpop.f32.mrf.mxu0
        %v2302 = vadd.f32 %v1537, %v2301
        %2303 = vmatmul.bf16.gmra.mxu0 %v2049
        %v2304 = vpop.f32.mrf.mxu0
        %v2305 = vadd.f32 %v1540, %v2304
        %v2306 = vpop.f32.mrf.mxu0
        %v2307 = vadd.f32 %v1542, %v2306
        %2308 = vmatmul.bf16.gmra.mxu0 %v2052
        %v2309 = vpop.f32.mrf.mxu0
        %v2310 = vadd.f32 %v1545, %v2309
        %v2311 = vpop.f32.mrf.mxu0
        %v2312 = vadd.f32 %v1547, %v2311
        %2313 = vmatmul.bf16.gmra.mxu0 %v2055
        %v2314 = vpop.f32.mrf.mxu0
        %v2315 = vadd.f32 %v1550, %v2314
        %v2316 = vpop.f32.mrf.mxu0
        %v2317 = vadd.f32 %v1552, %v2316
        %2318 = vmatmul.bf16.gmra.mxu0 %v2058
        %v2319 = vpop.f32.mrf.mxu0
        %v2320 = vadd.f32 %v1555, %v2319
        %v2321 = vpop.f32.mrf.mxu0
        %v2322 = vadd.f32 %v1557, %v2321
        %2323 = vmatmul.bf16.gmra.mxu0 %v2061
        %v2324 = vpop.f32.mrf.mxu0
        %v2325 = vadd.f32 %v1560, %v2324
        %v2326 = vpop.f32.mrf.mxu0
        %v2327 = vadd.f32 %v1562, %v2326
        %2328 = vmatmul.bf16.gmra.mxu0 %v2064
        %v2329 = vpop.f32.mrf.mxu0
        %v2330 = vadd.f32 %v1565, %v2329
        %v2331 = vpop.f32.mrf.mxu0
        %v2332 = vadd.f32 %v1567, %v2331
        %2333 = vmatmul.bf16.gmra.mxu0 %v2067
        %v2334 = vpop.f32.mrf.mxu0
        %v2335 = vadd.f32 %v1570, %v2334
        %v2336 = vpop.f32.mrf.mxu0
        %v2337 = vadd.f32 %v1572, %v2336
        %2338 = vmatmul.bf16.gmra.mxu0 %v2070
        %v2339 = vpop.f32.mrf.mxu0
        %v2340 = vadd.f32 %v1575, %v2339
        %v2341 = vpop.f32.mrf.mxu0
        %v2342 = vadd.f32 %v1577, %v2341
        %2343 = vmatmul.bf16.gmra.mxu0 %v2073
        %v2344 = vpop.f32.mrf.mxu0
        %v2345 = vadd.f32 %v1580, %v2344
        %v2346 = vpop.f32.mrf.mxu0
        %v2347 = vadd.f32 %v1582, %v2346
        %2348 = vmatmul.bf16.gmra.mxu0 %v2076
        %v2349 = vpop.f32.mrf.mxu0
        %v2350 = vadd.f32 %v1585, %v2349
        %v2351 = vpop.f32.mrf.mxu0
        %v2352 = vadd.f32 %v1587, %v2351
        %2353 = vmatmul.bf16.gmra.mxu0 %v2079
        %v2354 = vpop.f32.mrf.mxu0
        %v2355 = vadd.f32 %v1590, %v2354
        %v2356 = vpop.f32.mrf.mxu0
        %v2357 = vadd.f32 %v1592, %v2356
        %2358 = vmatmul.bf16.gmra.mxu0 %v2082
        %v2359 = vpop.f32.mrf.mxu0
        %v2360 = vadd.f32 %v1595, %v2359
        %v2361 = vpop.f32.mrf.mxu0
        %v2362 = vadd.f32 %v1597, %v2361
        %2363 = vmatmul.bf16.gmra.mxu0 %v2085
        %v2364 = vpop.f32.mrf.mxu0
        %v2365 = vadd.f32 %v1600, %v2364
        %v2366 = vpop.f32.mrf.mxu0
        %v2367 = vadd.f32 %v1602, %v2366
        %2368 = vmatmul.bf16.gmra.mxu0 %v2088
        %v2369 = vpop.f32.mrf.mxu0
        %v2370 = vadd.f32 %v1605, %v2369
        %v2371 = vpop.f32.mrf.mxu0
        %v2372 = vadd.f32 %v1607, %v2371
        %2373 = vmatmul.bf16.gmra.mxu0 %v2091
        %v2374 = vpop.f32.mrf.mxu0
        %v2375 = vadd.f32 %v1530, %v2374
        %v2376 = vpop.f32.mrf.mxu0
        %v2377 = vadd.f32 %v1532, %v2376
        %2378 = vmatmul.bf16.gmra.mxu0 %v2094
        %v2379 = vpop.f32.mrf.mxu0
        %v2380 = vadd.f32 %v1535, %v2379
        %v2381 = vpop.f32.mrf.mxu0
        %v2382 = vadd.f32 %v1537, %v2381
        %2383 = vmatmul.bf16.gmra.mxu0 %v2097
        %v2384 = vpop.f32.mrf.mxu0
        %v2385 = vadd.f32 %v1540, %v2384
        %v2386 = vpop.f32.mrf.mxu0
        %v2387 = vadd.f32 %v1542, %v2386
        %2388 = vmatmul.bf16.gmra.mxu0 %v2100
        %v2389 = vpop.f32.mrf.mxu0
        %v2390 = vadd.f32 %v1545, %v2389
        %v2391 = vpop.f32.mrf.mxu0
        %v2392 = vadd.f32 %v1547, %v2391
        %2393 = vmatmul.bf16.gmra.mxu0 %v2103
        %v2394 = vpop.f32.mrf.mxu0
        %v2395 = vadd.f32 %v1550, %v2394
        %v2396 = vpop.f32.mrf.mxu0
        %v2397 = vadd.f32 %v1552, %v2396
        %2398 = vmatmul.bf16.gmra.mxu0 %v2106
        %v2399 = vpop.f32.mrf.mxu0
        %v2400 = vadd.f32 %v1555, %v2399
        %v2401 = vpop.f32.mrf.mxu0
        %v2402 = vadd.f32 %v1557, %v2401
        %2403 = vmatmul.bf16.gmra.mxu0 %v2109
        %v2404 = vpop.f32.mrf.mxu0
        %v2405 = vadd.f32 %v1560, %v2404
        %v2406 = vpop.f32.mrf.mxu0
        %v2407 = vadd.f32 %v1562, %v2406
        %2408 = vmatmul.bf16.gmra.mxu0 %v2112
        %v2409 = vpop.f32.mrf.mxu0
        %v2410 = vadd.f32 %v1565, %v2409
        %v2411 = vpop.f32.mrf.mxu0
        %v2412 = vadd.f32 %v1567, %v2411
        %2413 = vmatmul.bf16.gmra.mxu0 %v2115
        %v2414 = vpop.f32.mrf.mxu0
        %v2415 = vadd.f32 %v1570, %v2414
        %v2416 = vpop.f32.mrf.mxu0
        %v2417 = vadd.f32 %v1572, %v2416
        %2418 = vmatmul.bf16.gmra.mxu0 %v2118
        %v2419 = vpop.f32.mrf.mxu0
        %v2420 = vadd.f32 %v1575, %v2419
        %v2421 = vpop.f32.mrf.mxu0
        %v2422 = vadd.f32 %v1577, %v2421
        %2423 = vmatmul.bf16.gmra.mxu0 %v2121
        %v2424 = vpop.f32.mrf.mxu0
        %v2425 = vadd.f32 %v1580, %v2424
        %v2426 = vpop.f32.mrf.mxu0
        %v2427 = vadd.f32 %v1582, %v2426
        %2428 = vmatmul.bf16.gmra.mxu0 %v2124
        %v2429 = vpop.f32.mrf.mxu0
        %v2430 = vadd.f32 %v1585, %v2429
        %v2431 = vpop.f32.mrf.mxu0
        %v2432 = vadd.f32 %v1587, %v2431
        %2433 = vmatmul.bf16.gmra.mxu0 %v2127
        %v2434 = vpop.f32.mrf.mxu0
        %v2435 = vadd.f32 %v1590, %v2434
        %v2436 = vpop.f32.mrf.mxu0
        %v2437 = vadd.f32 %v1592, %v2436
        %2438 = vmatmul.bf16.gmra.mxu0 %v2130
        %v2439 = vpop.f32.mrf.mxu0
        %v2440 = vadd.f32 %v1595, %v2439
        %v2441 = vpop.f32.mrf.mxu0
        %v2442 = vadd.f32 %v1597, %v2441
        %2443 = vmatmul.bf16.gmra.mxu0 %v2133
        %v2444 = vpop.f32.mrf.mxu0
        %v2445 = vadd.f32 %v1600, %v2444
        %v2446 = vpop.f32.mrf.mxu0
        %v2447 = vadd.f32 %v1602, %v2446
        %2448 = vmatmul.bf16.gmra.mxu0 %v2136
        %v2449 = vpop.f32.mrf.mxu0
        %v2450 = vadd.f32 %v1605, %v2449
        %v2451 = vpop.f32.mrf.mxu0
        %v2452 = vadd.f32 %v1607, %v2451
        %2453 = vmatmul.bf16.gmra.mxu0 %v2139
        %v2454 = vpop.f32.mrf.mxu0
        %v2455 = vadd.f32 %v1530, %v2454
        %v2456 = vpop.f32.mrf.mxu0
        %v2457 = vadd.f32 %v1532, %v2456
        %2458 = vmatmul.bf16.gmra.mxu0 %v2142
        %v2459 = vpop.f32.mrf.mxu0
        %v2460 = vadd.f32 %v1535, %v2459
        %v2461 = vpop.f32.mrf.mxu0
        %v2462 = vadd.f32 %v1537, %v2461
        %2463 = vmatmul.bf16.gmra.mxu0 %v2145
        %v2464 = vpop.f32.mrf.mxu0
        %v2465 = vadd.f32 %v1540, %v2464
        %v2466 = vpop.f32.mrf.mxu0
        %v2467 = vadd.f32 %v1542, %v2466
        %2468 = vmatmul.bf16.gmra.mxu0 %v2148
        %v2469 = vpop.f32.mrf.mxu0
        %v2470 = vadd.f32 %v1545, %v2469
        %v2471 = vpop.f32.mrf.mxu0
        %v2472 = vadd.f32 %v1547, %v2471
        %2473 = vmatmul.bf16.gmra.mxu0 %v2151
        %v2474 = vpop.f32.mrf.mxu0
        %v2475 = vadd.f32 %v1550, %v2474
        %v2476 = vpop.f32.mrf.mxu0
        %v2477 = vadd.f32 %v1552, %v2476
        %2478 = vmatmul.bf16.gmra.mxu0 %v2154
        %v2479 = vpop.f32.mrf.mxu0
        %v2480 = vadd.f32 %v1555, %v2479
        %v2481 = vpop.f32.mrf.mxu0
        %v2482 = vadd.f32 %v1557, %v2481
        %2483 = vmatmul.bf16.gmra.mxu0 %v2157
        %v2484 = vpop.f32.mrf.mxu0
        %v2485 = vadd.f32 %v1560, %v2484
        %v2486 = vpop.f32.mrf.mxu0
        %v2487 = vadd.f32 %v1562, %v2486
        %2488 = vmatmul.bf16.gmra.mxu0 %v2160
        %v2489 = vpop.f32.mrf.mxu0
        %v2490 = vadd.f32 %v1565, %v2489
        %v2491 = vpop.f32.mrf.mxu0
        %v2492 = vadd.f32 %v1567, %v2491
        %2493 = vmatmul.bf16.gmra.mxu0 %v2163
        %v2494 = vpop.f32.mrf.mxu0
        %v2495 = vadd.f32 %v1570, %v2494
        %v2496 = vpop.f32.mrf.mxu0
        %v2497 = vadd.f32 %v1572, %v2496
        %2498 = vmatmul.bf16.gmra.mxu0 %v2166
        %v2499 = vpop.f32.mrf.mxu0
        %v2500 = vadd.f32 %v1575, %v2499
        %v2501 = vpop.f32.mrf.mxu0
        %v2502 = vadd.f32 %v1577, %v2501
        %2503 = vmatmul.bf16.gmra.mxu0 %v2169
        %v2504 = vpop.f32.mrf.mxu0
        %v2505 = vadd.f32 %v1580, %v2504
        %v2506 = vpop.f32.mrf.mxu0
        %v2507 = vadd.f32 %v1582, %v2506
        %2508 = vmatmul.bf16.gmra.mxu0 %v2172
        %v2509 = vpop.f32.mrf.mxu0
        %v2510 = vadd.f32 %v1585, %v2509
        %v2511 = vpop.f32.mrf.mxu0
        %v2512 = vadd.f32 %v1587, %v2511
        %2513 = vmatmul.bf16.gmra.mxu0 %v2175
        %v2514 = vpop.f32.mrf.mxu0
        %v2515 = vadd.f32 %v1590, %v2514
        %v2516 = vpop.f32.mrf.mxu0
        %v2517 = vadd.f32 %v1592, %v2516
        %2518 = vmatmul.bf16.gmra.mxu0 %v2178
        %v2519 = vpop.f32.mrf.mxu0
        %v2520 = vadd.f32 %v1595, %v2519
        %v2521 = vpop.f32.mrf.mxu0
        %v2522 = vadd.f32 %v1597, %v2521
        %2523 = vmatmul.bf16.gmra.mxu0 %v2181
        %v2524 = vpop.f32.mrf.mxu0
        %v2525 = vadd.f32 %v1600, %v2524
        %v2526 = vpop.f32.mrf.mxu0
        %v2527 = vadd.f32 %v1602, %v2526
        %2528 = vmatmul.bf16.gmra.mxu0 %v2184
        %v2529 = vpop.f32.mrf.mxu0
        %v2530 = vadd.f32 %v1605, %v2529
        %v2531 = vpop.f32.mrf.mxu0
        %v2532 = vadd.f32 %v1607, %v2531
        %2533 = vmatmul.bf16.gmra.mxu0 %v2187
        %v2534 = vpop.f32.mrf.mxu0
        %v2535 = vadd.f32 %v1530, %v2534
        %v2536 = vpop.f32.mrf.mxu0
        %v2537 = vadd.f32 %v1532, %v2536
        %2538 = vmatmul.bf16.gmra.mxu0 %v2190
        %v2539 = vpop.f32.mrf.mxu0
        %v2540 = vadd.f32 %v1535, %v2539
        %v2541 = vpop.f32.mrf.mxu0
        %v2542 = vadd.f32 %v1537, %v2541
        %2543 = vmatmul.bf16.gmra.mxu0 %v2193
        %v2544 = vpop.f32.mrf.mxu0
        %v2545 = vadd.f32 %v1540, %v2544
        %v2546 = vpop.f32.mrf.mxu0
        %v2547 = vadd.f32 %v1542, %v2546
        %2548 = vmatmul.bf16.gmra.mxu0 %v2196
        %v2549 = vpop.f32.mrf.mxu0
        %v2550 = vadd.f32 %v1545, %v2549
        %v2551 = vpop.f32.mrf.mxu0
        %v2552 = vadd.f32 %v1547, %v2551
        %2553 = vmatmul.bf16.gmra.mxu0 %v2199
        %v2554 = vpop.f32.mrf.mxu0
        %v2555 = vadd.f32 %v1550, %v2554
        %v2556 = vpop.f32.mrf.mxu0
        %v2557 = vadd.f32 %v1552, %v2556
        %2558 = vmatmul.bf16.gmra.mxu0 %v2202
        %v2559 = vpop.f32.mrf.mxu0
        %v2560 = vadd.f32 %v1555, %v2559
        %v2561 = vpop.f32.mrf.mxu0
        %v2562 = vadd.f32 %v1557, %v2561
        %2563 = vmatmul.bf16.gmra.mxu0 %v2205
        %v2564 = vpop.f32.mrf.mxu0
        %v2565 = vadd.f32 %v1560, %v2564
        %v2566 = vpop.f32.mrf.mxu0
        %v2567 = vadd.f32 %v1562, %v2566
        %2568 = vmatmul.bf16.gmra.mxu0 %v2208
        %v2569 = vpop.f32.mrf.mxu0
        %v2570 = vadd.f32 %v1565, %v2569
        %v2571 = vpop.f32.mrf.mxu0
        %v2572 = vadd.f32 %v1567, %v2571
        %2573 = vmatmul.bf16.gmra.mxu0 %v2211
        %v2574 = vpop.f32.mrf.mxu0
        %v2575 = vadd.f32 %v1570, %v2574
        %v2576 = vpop.f32.mrf.mxu0
        %v2577 = vadd.f32 %v1572, %v2576
        %2578 = vmatmul.bf16.gmra.mxu0 %v2214
        %v2579 = vpop.f32.mrf.mxu0
        %v2580 = vadd.f32 %v1575, %v2579
        %v2581 = vpop.f32.mrf.mxu0
        %v2582 = vadd.f32 %v1577, %v2581
        %2583 = vmatmul.bf16.gmra.mxu0 %v2217
        %v2584 = vpop.f32.mrf.mxu0
        %v2585 = vadd.f32 %v1580, %v2584
        %v2586 = vpop.f32.mrf.mxu0
        %v2587 = vadd.f32 %v1582, %v2586
        %2588 = vmatmul.bf16.gmra.mxu0 %v2220
        %v2589 = vpop.f32.mrf.mxu0
        %v2590 = vadd.f32 %v1585, %v2589
        %v2591 = vpop.f32.mrf.mxu0
        %v2592 = vadd.f32 %v1587, %v2591
        %2593 = vmatmul.bf16.gmra.mxu0 %v2223
        %v2594 = vpop.f32.mrf.mxu0
        %v2595 = vadd.f32 %v1590, %v2594
        %v2596 = vpop.f32.mrf.mxu0
        %v2597 = vadd.f32 %v1592, %v2596
        %2598 = vmatmul.bf16.gmra.mxu0 %v2226
        %v2599 = vpop.f32.mrf.mxu0
        %v2600 = vadd.f32 %v1595, %v2599
        %v2601 = vpop.f32.mrf.mxu0
        %v2602 = vadd.f32 %v1597, %v2601
        %2603 = vmatmul.bf16.gmra.mxu0 %v2229
        %v2604 = vpop.f32.mrf.mxu0
        %v2605 = vadd.f32 %v1600, %v2604
        %v2606 = vpop.f32.mrf.mxu0
        %v2607 = vadd.f32 %v1602, %v2606
        %2608 = vmatmul.bf16.gmra.mxu0 %v2232
        %v2609 = vpop.f32.mrf.mxu0
        %v2610 = vadd.f32 %v1605, %v2609
        %v2611 = vpop.f32.mrf.mxu0
        %v2612 = vadd.f32 %v1607, %v2611
        %2613 = vmatmul.bf16.gmra.mxu0 %v2235
        %v2614 = vpop.f32.mrf.mxu0
        %v2615 = vadd.f32 %v1530, %v2614
        %v2616 = vpop.f32.mrf.mxu0
        %v2617 = vadd.f32 %v1532, %v2616
        %2618 = vmatmul.bf16.gmra.mxu0 %v2238
        %v2619 = vpop.f32.mrf.mxu0
        %v2620 = vadd.f32 %v1535, %v2619
        %v2621 = vpop.f32.mrf.mxu0
        %v2622 = vadd.f32 %v1537, %v2621
        %2623 = vmatmul.bf16.gmra.mxu0 %v2241
        %v2624 = vpop.f32.mrf.mxu0
        %v2625 = vadd.f32 %v1540, %v2624
        %v2626 = vpop.f32.mrf.mxu0
        %v2627 = vadd.f32 %v1542, %v2626
        %2628 = vmatmul.bf16.gmra.mxu0 %v2244
        %v2629 = vpop.f32.mrf.mxu0
        %v2630 = vadd.f32 %v1545, %v2629
        %v2631 = vpop.f32.mrf.mxu0
        %v2632 = vadd.f32 %v1547, %v2631
        %2633 = vmatmul.bf16.gmra.mxu0 %v2247
        %v2634 = vpop.f32.mrf.mxu0
        %v2635 = vadd.f32 %v1550, %v2634
        %v2636 = vpop.f32.mrf.mxu0
        %v2637 = vadd.f32 %v1552, %v2636
        %2638 = vmatmul.bf16.gmra.mxu0 %v2250
        %v2639 = vpop.f32.mrf.mxu0
        %v2640 = vadd.f32 %v1555, %v2639
        %v2641 = vpop.f32.mrf.mxu0
        %v2642 = vadd.f32 %v1557, %v2641
        %2643 = vmatmul.bf16.gmra.mxu0 %v2253
        %v2644 = vpop.f32.mrf.mxu0
        %v2645 = vadd.f32 %v1560, %v2644
        %v2646 = vpop.f32.mrf.mxu0
        %v2647 = vadd.f32 %v1562, %v2646
        %2648 = vmatmul.bf16.gmra.mxu0 %v2256
        %v2649 = vpop.f32.mrf.mxu0
        %v2650 = vadd.f32 %v1565, %v2649
        %v2651 = vpop.f32.mrf.mxu0
        %v2652 = vadd.f32 %v1567, %v2651
        %2653 = vmatmul.bf16.gmra.mxu0 %v2259
        %v2654 = vpop.f32.mrf.mxu0
        %v2655 = vadd.f32 %v1570, %v2654
        %v2656 = vpop.f32.mrf.mxu0
        %v2657 = vadd.f32 %v1572, %v2656
        %2658 = vmatmul.bf16.gmra.mxu0 %v2262
        %v2659 = vpop.f32.mrf.mxu0
        %v2660 = vadd.f32 %v1575, %v2659
        %v2661 = vpop.f32.mrf.mxu0
        %v2662 = vadd.f32 %v1577, %v2661
        %2663 = vmatmul.bf16.gmra.mxu0 %v2265
        %v2664 = vpop.f32.mrf.mxu0
        %v2665 = vadd.f32 %v1580, %v2664
        %v2666 = vpop.f32.mrf.mxu0
        %v2667 = vadd.f32 %v1582, %v2666
        %2668 = vmatmul.bf16.gmra.mxu0 %v2268
        %v2669 = vpop.f32.mrf.mxu0
        %v2670 = vadd.f32 %v1585, %v2669
        %v2671 = vpop.f32.mrf.mxu0
        %v2672 = vadd.f32 %v1587, %v2671
        %2673 = vmatmul.bf16.gmra.mxu0 %v2271
        %v2674 = vpop.f32.mrf.mxu0
        %v2675 = vadd.f32 %v1590, %v2674
        %v2676 = vpop.f32.mrf.mxu0
        %v2677 = vadd.f32 %v1592, %v2676
        %2678 = vmatmul.bf16.gmra.mxu0 %v2274
        %v2679 = vpop.f32.mrf.mxu0
        %v2680 = vadd.f32 %v1595, %v2679
        %v2681 = vpop.f32.mrf.mxu0
        %v2682 = vadd.f32 %v1597, %v2681
        %2683 = vmatmul.bf16.gmra.mxu0 %v2277
        %v2684 = vpop.f32.mrf.mxu0
        %v2685 = vadd.f32 %v1600, %v2684
        %v2686 = vpop.f32.mrf.mxu0
        %v2687 = vadd.f32 %v1602, %v2686
        %2688 = vmatmul.bf16.gmra.mxu0 %v2280
        %v2689 = vpop.f32.mrf.mxu0
        %v2690 = vadd.f32 %v1605, %v2689
        %v2691 = vpop.f32.mrf.mxu0
        %v2692 = vadd.f32 %v1607, %v2691
        %2693 = vdwg.mxu0
        %v2694 = vperm.slane %v1068, 0
        %v2695 = vadd.f32 %v2295, %v2694
        %v2696 = vadd.f32 %v2297, %v2694
        %v2697 = vadd.f32 %v2300, %v2694
        %v2698 = vadd.f32 %v2302, %v2694
        %v2699 = vadd.f32 %v2305, %v2694
        %v2700 = vadd.f32 %v2307, %v2694
        %v2701 = vadd.f32 %v2310, %v2694
        %v2702 = vadd.f32 %v2312, %v2694
        %v2703 = vadd.f32 %v2315, %v2694
        %v2704 = vadd.f32 %v2317, %v2694
        %v2705 = vadd.f32 %v2320, %v2694
        %v2706 = vadd.f32 %v2322, %v2694
        %v2707 = vadd.f32 %v2325, %v2694
        %v2708 = vadd.f32 %v2327, %v2694
        %v2709 = vadd.f32 %v2330, %v2694
        %v2710 = vadd.f32 %v2332, %v2694
        %v2711 = vadd.f32 %v2335, %v2694
        %v2712 = vadd.f32 %v2337, %v2694
        %v2713 = vadd.f32 %v2340, %v2694
        %v2714 = vadd.f32 %v2342, %v2694
        %v2715 = vadd.f32 %v2345, %v2694
        %v2716 = vadd.f32 %v2347, %v2694
        %v2717 = vadd.f32 %v2350, %v2694
        %v2718 = vadd.f32 %v2352, %v2694
        %v2719 = vadd.f32 %v2355, %v2694
        %v2720 = vadd.f32 %v2357, %v2694
        %v2721 = vadd.f32 %v2360, %v2694
        %v2722 = vadd.f32 %v2362, %v2694
        %v2723 = vadd.f32 %v2365, %v2694
        %v2724 = vadd.f32 %v2367, %v2694
        %v2725 = vadd.f32 %v2370, %v2694
        %v2726 = vadd.f32 %v2372, %v2694
        %v2727 = vadd.f32 %v2375, %v2694
        %v2728 = vadd.f32 %v2377, %v2694
        %v2729 = vadd.f32 %v2380, %v2694
        %v2730 = vadd.f32 %v2382, %v2694
        %v2731 = vadd.f32 %v2385, %v2694
        %v2732 = vadd.f32 %v2387, %v2694
        %v2733 = vadd.f32 %v2390, %v2694
        %v2734 = vadd.f32 %v2392, %v2694
        %v2735 = vadd.f32 %v2395, %v2694
        %v2736 = vadd.f32 %v2397, %v2694
        %v2737 = vadd.f32 %v2400, %v2694
        %v2738 = vadd.f32 %v2402, %v2694
        %v2739 = vadd.f32 %v2405, %v2694
        %v2740 = vadd.f32 %v2407, %v2694
        %v2741 = vadd.f32 %v2410, %v2694
        %v2742 = vadd.f32 %v2412, %v2694
        %v2743 = vadd.f32 %v2415, %v2694
        %v2744 = vadd.f32 %v2417, %v2694
        %v2745 = vadd.f32 %v2420, %v2694
        %v2746 = vadd.f32 %v2422, %v2694
        %v2747 = vadd.f32 %v2425, %v2694
        %v2748 = vadd.f32 %v2427, %v2694
        %v2749 = vadd.f32 %v2430, %v2694
        %v2750 = vadd.f32 %v2432, %v2694
        %v2751 = vadd.f32 %v2435, %v2694
        %v2752 = vadd.f32 %v2437, %v2694
        %v2753 = vadd.f32 %v2440, %v2694
        %v2754 = vadd.f32 %v2442, %v2694
        %v2755 = vadd.f32 %v2445, %v2694
        %v2756 = vadd.f32 %v2447, %v2694
        %v2757 = vadd.f32 %v2450, %v2694
        %v2758 = vadd.f32 %v2452, %v2694
        %v2759 = vadd.f32 %v2455, %v2694
        %v2760 = vadd.f32 %v2457, %v2694
        %v2761 = vadd.f32 %v2460, %v2694
        %v2762 = vadd.f32 %v2462, %v2694
        %v2763 = vadd.f32 %v2465, %v2694
        %v2764 = vadd.f32 %v2467, %v2694
        %v2765 = vadd.f32 %v2470, %v2694
        %v2766 = vadd.f32 %v2472, %v2694
        %v2767 = vadd.f32 %v2475, %v2694
        %v2768 = vadd.f32 %v2477, %v2694
        %v2769 = vadd.f32 %v2480, %v2694
        %v2770 = vadd.f32 %v2482, %v2694
        %v2771 = vadd.f32 %v2485, %v2694
        %v2772 = vadd.f32 %v2487, %v2694
        %v2773 = vadd.f32 %v2490, %v2694
        %v2774 = vadd.f32 %v2492, %v2694
        %v2775 = vadd.f32 %v2495, %v2694
        %v2776 = vadd.f32 %v2497, %v2694
        %v2777 = vadd.f32 %v2500, %v2694
        %v2778 = vadd.f32 %v2502, %v2694
        %v2779 = vadd.f32 %v2505, %v2694
        %v2780 = vadd.f32 %v2507, %v2694
        %v2781 = vadd.f32 %v2510, %v2694
        %v2782 = vadd.f32 %v2512, %v2694
        %v2783 = vadd.f32 %v2515, %v2694
        %v2784 = vadd.f32 %v2517, %v2694
        %v2785 = vadd.f32 %v2520, %v2694
        %v2786 = vadd.f32 %v2522, %v2694
        %v2787 = vadd.f32 %v2525, %v2694
        %v2788 = vadd.f32 %v2527, %v2694
        %v2789 = vadd.f32 %v2530, %v2694
        %v2790 = vadd.f32 %v2532, %v2694
        %v2791 = vadd.f32 %v2535, %v2694
        %v2792 = vadd.f32 %v2537, %v2694
        %v2793 = vadd.f32 %v2540, %v2694
        %v2794 = vadd.f32 %v2542, %v2694
        %v2795 = vadd.f32 %v2545, %v2694
        %v2796 = vadd.f32 %v2547, %v2694
        %v2797 = vadd.f32 %v2550, %v2694
        %v2798 = vadd.f32 %v2552, %v2694
        %v2799 = vadd.f32 %v2555, %v2694
        %v2800 = vadd.f32 %v2557, %v2694
        %v2801 = vadd.f32 %v2560, %v2694
        %v2802 = vadd.f32 %v2562, %v2694
        %v2803 = vadd.f32 %v2565, %v2694
        %v2804 = vadd.f32 %v2567, %v2694
        %v2805 = vadd.f32 %v2570, %v2694
        %v2806 = vadd.f32 %v2572, %v2694
        %v2807 = vadd.f32 %v2575, %v2694
        %v2808 = vadd.f32 %v2577, %v2694
        %v2809 = vadd.f32 %v2580, %v2694
        %v2810 = vadd.f32 %v2582, %v2694
        %v2811 = vadd.f32 %v2585, %v2694
        %v2812 = vadd.f32 %v2587, %v2694
        %v2813 = vadd.f32 %v2590, %v2694
        %v2814 = vadd.f32 %v2592, %v2694
        %v2815 = vadd.f32 %v2595, %v2694
        %v2816 = vadd.f32 %v2597, %v2694
        %v2817 = vadd.f32 %v2600, %v2694
        %v2818 = vadd.f32 %v2602, %v2694
        %v2819 = vadd.f32 %v2605, %v2694
        %v2820 = vadd.f32 %v2607, %v2694
        %v2821 = vadd.f32 %v2610, %v2694
        %v2822 = vadd.f32 %v2612, %v2694
        %v2823 = vadd.f32 %v2615, %v2694
        %v2824 = vadd.f32 %v2617, %v2694
        %v2825 = vadd.f32 %v2620, %v2694
        %v2826 = vadd.f32 %v2622, %v2694
        %v2827 = vadd.f32 %v2625, %v2694
        %v2828 = vadd.f32 %v2627, %v2694
        %v2829 = vadd.f32 %v2630, %v2694
        %v2830 = vadd.f32 %v2632, %v2694
        %v2831 = vadd.f32 %v2635, %v2694
        %v2832 = vadd.f32 %v2637, %v2694
        %v2833 = vadd.f32 %v2640, %v2694
        %v2834 = vadd.f32 %v2642, %v2694
        %v2835 = vadd.f32 %v2645, %v2694
        %v2836 = vadd.f32 %v2647, %v2694
        %v2837 = vadd.f32 %v2650, %v2694
        %v2838 = vadd.f32 %v2652, %v2694
        %v2839 = vadd.f32 %v2655, %v2694
        %v2840 = vadd.f32 %v2657, %v2694
        %v2841 = vadd.f32 %v2660, %v2694
        %v2842 = vadd.f32 %v2662, %v2694
        %v2843 = vadd.f32 %v2665, %v2694
        %v2844 = vadd.f32 %v2667, %v2694
        %v2845 = vadd.f32 %v2670, %v2694
        %v2846 = vadd.f32 %v2672, %v2694
        %v2847 = vadd.f32 %v2675, %v2694
        %v2848 = vadd.f32 %v2677, %v2694
        %v2849 = vadd.f32 %v2680, %v2694
        %v2850 = vadd.f32 %v2682, %v2694
        %v2851 = vadd.f32 %v2685, %v2694
        %v2852 = vadd.f32 %v2687, %v2694
        %v2853 = vadd.f32 %v2690, %v2694
        %v2854 = vadd.f32 %v2692, %v2694
        %v2855 = vmax.f32 %v2695, 0.0
        %v2856 = vmax.f32 %v2696, 0.0
        %v2857 = vmax.f32 %v2697, 0.0
        %v2858 = vmax.f32 %v2698, 0.0
        %v2859 = vmax.f32 %v2699, 0.0
        %v2860 = vmax.f32 %v2700, 0.0
        %v2861 = vmax.f32 %v2701, 0.0
        %v2862 = vmax.f32 %v2702, 0.0
        %v2863 = vmax.f32 %v2703, 0.0
        %v2864 = vmax.f32 %v2704, 0.0
        %v2865 = vmax.f32 %v2705, 0.0
        %v2866 = vmax.f32 %v2706, 0.0
        %v2867 = vmax.f32 %v2707, 0.0
        %v2868 = vmax.f32 %v2708, 0.0
        %v2869 = vmax.f32 %v2709, 0.0
        %v2870 = vmax.f32 %v2710, 0.0
        %v2871 = vmax.f32 %v2711, 0.0
        %v2872 = vmax.f32 %v2712, 0.0
        %v2873 = vmax.f32 %v2713, 0.0
        %v2874 = vmax.f32 %v2714, 0.0
        %v2875 = vmax.f32 %v2715, 0.0
        %v2876 = vmax.f32 %v2716, 0.0
        %v2877 = vmax.f32 %v2717, 0.0
        %v2878 = vmax.f32 %v2718, 0.0
        %v2879 = vmax.f32 %v2719, 0.0
        %v2880 = vmax.f32 %v2720, 0.0
        %v2881 = vmax.f32 %v2721, 0.0
        %v2882 = vmax.f32 %v2722, 0.0
        %v2883 = vmax.f32 %v2723, 0.0
        %v2884 = vmax.f32 %v2724, 0.0
        %v2885 = vmax.f32 %v2725, 0.0
        %v2886 = vmax.f32 %v2726, 0.0
        %v2887 = vmax.f32 %v2727, 0.0
        %v2888 = vmax.f32 %v2728, 0.0
        %v2889 = vmax.f32 %v2729, 0.0
        %v2890 = vmax.f32 %v2730, 0.0
        %v2891 = vmax.f32 %v2731, 0.0
        %v2892 = vmax.f32 %v2732, 0.0
        %v2893 = vmax.f32 %v2733, 0.0
        %v2894 = vmax.f32 %v2734, 0.0
        %v2895 = vmax.f32 %v2735, 0.0
        %v2896 = vmax.f32 %v2736, 0.0
        %v2897 = vmax.f32 %v2737, 0.0
        %v2898 = vmax.f32 %v2738, 0.0
        %v2899 = vmax.f32 %v2739, 0.0
        %v2900 = vmax.f32 %v2740, 0.0
        %v2901 = vmax.f32 %v2741, 0.0
        %v2902 = vmax.f32 %v2742, 0.0
        %v2903 = vmax.f32 %v2743, 0.0
        %v2904 = vmax.f32 %v2744, 0.0
        %v2905 = vmax.f32 %v2745, 0.0
        %v2906 = vmax.f32 %v2746, 0.0
        %v2907 = vmax.f32 %v2747, 0.0
        %v2908 = vmax.f32 %v2748, 0.0
        %v2909 = vmax.f32 %v2749, 0.0
        %v2910 = vmax.f32 %v2750, 0.0
        %v2911 = vmax.f32 %v2751, 0.0
        %v2912 = vmax.f32 %v2752, 0.0
        %v2913 = vmax.f32 %v2753, 0.0
        %v2914 = vmax.f32 %v2754, 0.0
        %v2915 = vmax.f32 %v2755, 0.0
        %v2916 = vmax.f32 %v2756, 0.0
        %v2917 = vmax.f32 %v2757, 0.0
        %v2918 = vmax.f32 %v2758, 0.0
        %v2919 = vmax.f32 %v2759, 0.0
        %v2920 = vmax.f32 %v2760, 0.0
        %v2921 = vmax.f32 %v2761, 0.0
        %v2922 = vmax.f32 %v2762, 0.0
        %v2923 = vmax.f32 %v2763, 0.0
        %v2924 = vmax.f32 %v2764, 0.0
        %v2925 = vmax.f32 %v2765, 0.0
        %v2926 = vmax.f32 %v2766, 0.0
        %v2927 = vmax.f32 %v2767, 0.0
        %v2928 = vmax.f32 %v2768, 0.0
        %v2929 = vmax.f32 %v2769, 0.0
        %v2930 = vmax.f32 %v2770, 0.0
        %v2931 = vmax.f32 %v2771, 0.0
        %v2932 = vmax.f32 %v2772, 0.0
        %v2933 = vmax.f32 %v2773, 0.0
        %v2934 = vmax.f32 %v2774, 0.0
        %v2935 = vmax.f32 %v2775, 0.0
        %v2936 = vmax.f32 %v2776, 0.0
        %v2937 = vmax.f32 %v2777, 0.0
        %v2938 = vmax.f32 %v2778, 0.0
        %v2939 = vmax.f32 %v2779, 0.0
        %v2940 = vmax.f32 %v2780, 0.0
        %v2941 = vmax.f32 %v2781, 0.0
        %v2942 = vmax.f32 %v2782, 0.0
        %v2943 = vmax.f32 %v2783, 0.0
        %v2944 = vmax.f32 %v2784, 0.0
        %v2945 = vmax.f32 %v2785, 0.0
        %v2946 = vmax.f32 %v2786, 0.0
        %v2947 = vmax.f32 %v2787, 0.0
        %v2948 = vmax.f32 %v2788, 0.0
        %v2949 = vmax.f32 %v2789, 0.0
        %v2950 = vmax.f32 %v2790, 0.0
        %v2951 = vmax.f32 %v2791, 0.0
        %v2952 = vmax.f32 %v2792, 0.0
        %v2953 = vmax.f32 %v2793, 0.0
        %v2954 = vmax.f32 %v2794, 0.0
        %v2955 = vmax.f32 %v2795, 0.0
        %v2956 = vmax.f32 %v2796, 0.0
        %v2957 = vmax.f32 %v2797, 0.0
        %v2958 = vmax.f32 %v2798, 0.0
        %v2959 = vmax.f32 %v2799, 0.0
        %v2960 = vmax.f32 %v2800, 0.0
        %v2961 = vmax.f32 %v2801, 0.0
        %v2962 = vmax.f32 %v2802, 0.0
        %v2963 = vmax.f32 %v2803, 0.0
        %v2964 = vmax.f32 %v2804, 0.0
        %v2965 = vmax.f32 %v2805, 0.0
        %v2966 = vmax.f32 %v2806, 0.0
        %v2967 = vmax.f32 %v2807, 0.0
        %v2968 = vmax.f32 %v2808, 0.0
        %v2969 = vmax.f32 %v2809, 0.0
        %v2970 = vmax.f32 %v2810, 0.0
        %v2971 = vmax.f32 %v2811, 0.0
        %v2972 = vmax.f32 %v2812, 0.0
        %v2973 = vmax.f32 %v2813, 0.0
        %v2974 = vmax.f32 %v2814, 0.0
        %v2975 = vmax.f32 %v2815, 0.0
        %v2976 = vmax.f32 %v2816, 0.0
        %v2977 = vmax.f32 %v2817, 0.0
        %v2978 = vmax.f32 %v2818, 0.0
        %v2979 = vmax.f32 %v2819, 0.0
        %v2980 = vmax.f32 %v2820, 0.0
        %v2981 = vmax.f32 %v2821, 0.0
        %v2982 = vmax.f32 %v2822, 0.0
        %v2983 = vmax.f32 %v2823, 0.0
        %v2984 = vmax.f32 %v2824, 0.0
        %v2985 = vmax.f32 %v2825, 0.0
        %v2986 = vmax.f32 %v2826, 0.0
        %v2987 = vmax.f32 %v2827, 0.0
        %v2988 = vmax.f32 %v2828, 0.0
        %v2989 = vmax.f32 %v2829, 0.0
        %v2990 = vmax.f32 %v2830, 0.0
        %v2991 = vmax.f32 %v2831, 0.0
        %v2992 = vmax.f32 %v2832, 0.0
        %v2993 = vmax.f32 %v2833, 0.0
        %v2994 = vmax.f32 %v2834, 0.0
        %v2995 = vmax.f32 %v2835, 0.0
        %v2996 = vmax.f32 %v2836, 0.0
        %v2997 = vmax.f32 %v2837, 0.0
        %v2998 = vmax.f32 %v2838, 0.0
        %v2999 = vmax.f32 %v2839, 0.0
        %v3000 = vmax.f32 %v2840, 0.0
        %v3001 = vmax.f32 %v2841, 0.0
        %v3002 = vmax.f32 %v2842, 0.0
        %v3003 = vmax.f32 %v2843, 0.0
        %v3004 = vmax.f32 %v2844, 0.0
        %v3005 = vmax.f32 %v2845, 0.0
        %v3006 = vmax.f32 %v2846, 0.0
        %v3007 = vmax.f32 %v2847, 0.0
        %v3008 = vmax.f32 %v2848, 0.0
        %v3009 = vmax.f32 %v2849, 0.0
        %v3010 = vmax.f32 %v2850, 0.0
        %v3011 = vmax.f32 %v2851, 0.0
        %v3012 = vmax.f32 %v2852, 0.0
        %v3013 = vmax.f32 %v2853, 0.0
        %v3014 = vmax.f32 %v2854, 0.0
        %v3015 = vpack.c.bf16 %v2856, %v2855
        %v3016 = vpack.c.bf16 %v2858, %v2857
        %v3017 = vpack.c.bf16 %v2860, %v2859
        %v3018 = vpack.c.bf16 %v2862, %v2861
        %v3019 = vpack.c.bf16 %v2864, %v2863
        %v3020 = vpack.c.bf16 %v2866, %v2865
        %v3021 = vpack.c.bf16 %v2868, %v2867
        %v3022 = vpack.c.bf16 %v2870, %v2869
        %v3023 = vpack.c.bf16 %v2872, %v2871
        %v3024 = vpack.c.bf16 %v2874, %v2873
        %v3025 = vpack.c.bf16 %v2876, %v2875
        %v3026 = vpack.c.bf16 %v2878, %v2877
        %v3027 = vpack.c.bf16 %v2880, %v2879
        %v3028 = vpack.c.bf16 %v2882, %v2881
        %v3029 = vpack.c.bf16 %v2884, %v2883
        %v3030 = vpack.c.bf16 %v2886, %v2885
        %v3031 = vpack.c.bf16 %v2888, %v2887
        %v3032 = vpack.c.bf16 %v2890, %v2889
        %v3033 = vpack.c.bf16 %v2892, %v2891
        %v3034 = vpack.c.bf16 %v2894, %v2893
        %v3035 = vpack.c.bf16 %v2896, %v2895
        %v3036 = vpack.c.bf16 %v2898, %v2897
        %v3037 = vpack.c.bf16 %v2900, %v2899
        %v3038 = vpack.c.bf16 %v2902, %v2901
        %v3039 = vpack.c.bf16 %v2904, %v2903
        %v3040 = vpack.c.bf16 %v2906, %v2905
        %v3041 = vpack.c.bf16 %v2908, %v2907
        %v3042 = vpack.c.bf16 %v2910, %v2909
        %v3043 = vpack.c.bf16 %v2912, %v2911
        %v3044 = vpack.c.bf16 %v2914, %v2913
        %v3045 = vpack.c.bf16 %v2916, %v2915
        %v3046 = vpack.c.bf16 %v2918, %v2917
        %v3047 = vpack.c.bf16 %v2920, %v2919
        %v3048 = vpack.c.bf16 %v2922, %v2921
        %v3049 = vpack.c.bf16 %v2924, %v2923
        %v3050 = vpack.c.bf16 %v2926, %v2925
        %v3051 = vpack.c.bf16 %v2928, %v2927
        %v3052 = vpack.c.bf16 %v2930, %v2929
        %v3053 = vpack.c.bf16 %v2932, %v2931
        %v3054 = vpack.c.bf16 %v2934, %v2933
        %v3055 = vpack.c.bf16 %v2936, %v2935
        %v3056 = vpack.c.bf16 %v2938, %v2937
        %v3057 = vpack.c.bf16 %v2940, %v2939
        %v3058 = vpack.c.bf16 %v2942, %v2941
        %v3059 = vpack.c.bf16 %v2944, %v2943
        %v3060 = vpack.c.bf16 %v2946, %v2945
        %v3061 = vpack.c.bf16 %v2948, %v2947
        %v3062 = vpack.c.bf16 %v2950, %v2949
        %v3063 = vpack.c.bf16 %v2952, %v2951
        %v3064 = vpack.c.bf16 %v2954, %v2953
        %v3065 = vpack.c.bf16 %v2956, %v2955
        %v3066 = vpack.c.bf16 %v2958, %v2957
        %v3067 = vpack.c.bf16 %v2960, %v2959
        %v3068 = vpack.c.bf16 %v2962, %v2961
        %v3069 = vpack.c.bf16 %v2964, %v2963
        %v3070 = vpack.c.bf16 %v2966, %v2965
        %v3071 = vpack.c.bf16 %v2968, %v2967
        %v3072 = vpack.c.bf16 %v2970, %v2969
        %v3073 = vpack.c.bf16 %v2972, %v2971
        %v3074 = vpack.c.bf16 %v2974, %v2973
        %v3075 = vpack.c.bf16 %v2976, %v2975
        %v3076 = vpack.c.bf16 %v2978, %v2977
        %v3077 = vpack.c.bf16 %v2980, %v2979
        %v3078 = vpack.c.bf16 %v2982, %v2981
        %v3079 = vpack.c.bf16 %v2984, %v2983
        %v3080 = vpack.c.bf16 %v2986, %v2985
        %v3081 = vpack.c.bf16 %v2988, %v2987
        %v3082 = vpack.c.bf16 %v2990, %v2989
        %v3083 = vpack.c.bf16 %v2992, %v2991
        %v3084 = vpack.c.bf16 %v2994, %v2993
        %v3085 = vpack.c.bf16 %v2996, %v2995
        %v3086 = vpack.c.bf16 %v2998, %v2997
        %v3087 = vpack.c.bf16 %v3000, %v2999
        %v3088 = vpack.c.bf16 %v3002, %v3001
        %v3089 = vpack.c.bf16 %v3004, %v3003
        %v3090 = vpack.c.bf16 %v3006, %v3005
        %v3091 = vpack.c.bf16 %v3008, %v3007
        %v3092 = vpack.c.bf16 %v3010, %v3009
        %v3093 = vpack.c.bf16 %v3012, %v3011
        %v3094 = vpack.c.bf16 %v3014, %v3013
        %v3095 = vld [vmem:[%s4] sm:$0xf]
        %v3096 = vld [vmem:[%s4 + $0x4] sm:$0xf]
        %v3097 = vld [vmem:[%s4 + $0x8] sm:$0xf]
        %v3098 = vld [vmem:[%s4 + $0xc] sm:$0xf]
        %v3099 = vld [vmem:[%s4 + $0x10] sm:$0xf]
        %v3100 = vld [vmem:[%s4 + $0x14] sm:$0xf]
        %v3101 = vld [vmem:[%s4 + $0x18] sm:$0xf]
        %v3102 = vld [vmem:[%s4 + $0x1c] sm:$0xf]
        %v3103 = vperm.slane %v1069, 0
        %v3112 = vunpack.c.l.b16 %v3095
        %v3113 = vunpack.c.l.b16 %v3096
        %v3114 = vunpack.c.l.b16 %v3097
        %v3115 = vunpack.c.l.b16 %v3098
        %v3116 = vunpack.c.l.b16 %v3099
        %v3117 = vunpack.c.l.b16 %v3100
        %v3118 = vunpack.c.l.b16 %v3101
        %v3119 = vunpack.c.l.b16 %v3102
        %v3120 = vpack.c.b16 %v3113, %v3112
        %v3121 = vpack.c.b16 %v3115, %v3114
        %v3122 = vpack.c.b16 %v3117, %v3116
        %v3123 = vpack.c.b16 %v3119, %v3118
        %vm3128 = vcmask 523264
        %v3130 = vsel %vm3128, %v3015, 0
        %v3133 = vsel %vm3128, %v3016, 0
        %v3136 = vsel %vm3128, %v3017, 0
        %v3139 = vsel %vm3128, %v3018, 0
        %v3142 = vsel %vm3128, %v3019, 0
        %v3145 = vsel %vm3128, %v3020, 0
        %v3148 = vsel %vm3128, %v3021, 0
        %v3151 = vsel %vm3128, %v3022, 0
        %v3154 = vsel %vm3128, %v3023, 0
        %v3157 = vsel %vm3128, %v3024, 0
        %v3160 = vsel %vm3128, %v3025, 0
        %v3163 = vsel %vm3128, %v3026, 0
        %v3166 = vsel %vm3128, %v3027, 0
        %v3169 = vsel %vm3128, %v3028, 0
        %v3172 = vsel %vm3128, %v3029, 0
        %v3175 = vsel %vm3128, %v3030, 0
        %v3178 = vsel %vm3128, %v3031, 0
        %v3181 = vsel %vm3128, %v3032, 0
        %v3184 = vsel %vm3128, %v3033, 0
        %v3187 = vsel %vm3128, %v3034, 0
        %v3190 = vsel %vm3128, %v3035, 0
        %v3193 = vsel %vm3128, %v3036, 0
        %v3196 = vsel %vm3128, %v3037, 0
        %v3199 = vsel %vm3128, %v3038, 0
        %v3202 = vsel %vm3128, %v3039, 0
        %v3205 = vsel %vm3128, %v3040, 0
        %v3208 = vsel %vm3128, %v3041, 0
        %v3211 = vsel %vm3128, %v3042, 0
        %v3214 = vsel %vm3128, %v3043, 0
        %v3217 = vsel %vm3128, %v3044, 0
        %v3220 = vsel %vm3128, %v3045, 0
        %v3223 = vsel %vm3128, %v3046, 0
        %v3226 = vsel %vm3128, %v3047, 0
        %v3229 = vsel %vm3128, %v3048, 0
        %v3232 = vsel %vm3128, %v3049, 0
        %v3235 = vsel %vm3128, %v3050, 0
        %v3238 = vsel %vm3128, %v3051, 0
        %v3241 = vsel %vm3128, %v3052, 0
        %v3244 = vsel %vm3128, %v3053, 0
        %v3247 = vsel %vm3128, %v3054, 0
        %v3250 = vsel %vm3128, %v3055, 0
        %v3253 = vsel %vm3128, %v3056, 0
        %v3256 = vsel %vm3128, %v3057, 0
        %v3259 = vsel %vm3128, %v3058, 0
        %v3262 = vsel %vm3128, %v3059, 0
        %v3265 = vsel %vm3128, %v3060, 0
        %v3268 = vsel %vm3128, %v3061, 0
        %v3271 = vsel %vm3128, %v3062, 0
        %v3274 = vsel %vm3128, %v3063, 0
        %v3277 = vsel %vm3128, %v3064, 0
        %v3280 = vsel %vm3128, %v3065, 0
        %v3283 = vsel %vm3128, %v3066, 0
        %v3286 = vsel %vm3128, %v3067, 0
        %v3289 = vsel %vm3128, %v3068, 0
        %v3292 = vsel %vm3128, %v3069, 0
        %v3295 = vsel %vm3128, %v3070, 0
        %v3298 = vsel %vm3128, %v3071, 0
        %v3301 = vsel %vm3128, %v3072, 0
        %v3304 = vsel %vm3128, %v3073, 0
        %v3307 = vsel %vm3128, %v3074, 0
        %v3310 = vsel %vm3128, %v3075, 0
        %v3313 = vsel %vm3128, %v3076, 0
        %v3316 = vsel %vm3128, %v3077, 0
        %v3319 = vsel %vm3128, %v3078, 0
        %v3322 = vsel %vm3128, %v3079, 0
        %v3325 = vsel %vm3128, %v3080, 0
        %v3328 = vsel %vm3128, %v3081, 0
        %v3331 = vsel %vm3128, %v3082, 0
        %v3334 = vsel %vm3128, %v3083, 0
        %v3337 = vsel %vm3128, %v3084, 0
        %v3340 = vsel %vm3128, %v3085, 0
        %v3343 = vsel %vm3128, %v3086, 0
        %v3346 = vsel %vm3128, %v3087, 0
        %v3349 = vsel %vm3128, %v3088, 0
        %v3352 = vsel %vm3128, %v3089, 0
        %v3355 = vsel %vm3128, %v3090, 0
        %v3358 = vsel %vm3128, %v3091, 0
        %v3361 = vsel %vm3128, %v3092, 0
        %v3364 = vsel %vm3128, %v3093, 0
        %v3367 = vsel %vm3128, %v3094, 0
        %3369 = vmatpush.bf16.msra.mxu0 0
        %3370 = vmatpush.bf16.msra.mxu0 0
        %3371 = vmatpush.bf16.msra.mxu0 0
        %3372 = vmatpush.bf16.msra.mxu0 0
        %3373 = vmatpush.bf16.msra.mxu0 %v3123
        %3374 = vmatpush.bf16.msra.mxu0 %v3122
        %3375 = vmatpush.bf16.msra.mxu0 %v3121
        %3376 = vmatpush.bf16.msra.mxu0 %v3120
        %3377 = vmatmul.bf16.gmra.mxu0 %v3130
        %v3378 = vpop.f32.mrf.mxu0
        %v3379 = vadd.f32 %v3103, %v3378
        %v3380 = vpop.f32.mrf.mxu0
        %v3381 = vadd.f32 %v3103, %v3380
        %3382 = vmatmul.bf16.gmra.mxu0 %v3133
        %v3383 = vpop.f32.mrf.mxu0
        %v3384 = vadd.f32 %v3103, %v3383
        %v3385 = vpop.f32.mrf.mxu0
        %v3386 = vadd.f32 %v3103, %v3385
        %3387 = vmatmul.bf16.gmra.mxu0 %v3136
        %v3388 = vpop.f32.mrf.mxu0
        %v3389 = vadd.f32 %v3103, %v3388
        %v3390 = vpop.f32.mrf.mxu0
        %v3391 = vadd.f32 %v3103, %v3390
        %3392 = vmatmul.bf16.gmra.mxu0 %v3139
        %v3393 = vpop.f32.mrf.mxu0
        %v3394 = vadd.f32 %v3103, %v3393
        %v3395 = vpop.f32.mrf.mxu0
        %v3396 = vadd.f32 %v3103, %v3395
        %3397 = vmatmul.bf16.gmra.mxu0 %v3142
        %v3398 = vpop.f32.mrf.mxu0
        %v3399 = vadd.f32 %v3103, %v3398
        %v3400 = vpop.f32.mrf.mxu0
        %v3401 = vadd.f32 %v3103, %v3400
        %3402 = vmatmul.bf16.gmra.mxu0 %v3145
        %v3403 = vpop.f32.mrf.mxu0
        %v3404 = vadd.f32 %v3103, %v3403
        %v3405 = vpop.f32.mrf.mxu0
        %v3406 = vadd.f32 %v3103, %v3405
        %3407 = vmatmul.bf16.gmra.mxu0 %v3148
        %v3408 = vpop.f32.mrf.mxu0
        %v3409 = vadd.f32 %v3103, %v3408
        %v3410 = vpop.f32.mrf.mxu0
        %v3411 = vadd.f32 %v3103, %v3410
        %3412 = vmatmul.bf16.gmra.mxu0 %v3151
        %v3413 = vpop.f32.mrf.mxu0
        %v3414 = vadd.f32 %v3103, %v3413
        %v3415 = vpop.f32.mrf.mxu0
        %v3416 = vadd.f32 %v3103, %v3415
        %3417 = vmatmul.bf16.gmra.mxu0 %v3154
        %v3418 = vpop.f32.mrf.mxu0
        %v3419 = vadd.f32 %v3103, %v3418
        %v3420 = vpop.f32.mrf.mxu0
        %v3421 = vadd.f32 %v3103, %v3420
        %3422 = vmatmul.bf16.gmra.mxu0 %v3157
        %v3423 = vpop.f32.mrf.mxu0
        %v3424 = vadd.f32 %v3103, %v3423
        %v3425 = vpop.f32.mrf.mxu0
        %v3426 = vadd.f32 %v3103, %v3425
        %3427 = vmatmul.bf16.gmra.mxu0 %v3160
        %v3428 = vpop.f32.mrf.mxu0
        %v3429 = vadd.f32 %v3103, %v3428
        %v3430 = vpop.f32.mrf.mxu0
        %v3431 = vadd.f32 %v3103, %v3430
        %3432 = vmatmul.bf16.gmra.mxu0 %v3163
        %v3433 = vpop.f32.mrf.mxu0
        %v3434 = vadd.f32 %v3103, %v3433
        %v3435 = vpop.f32.mrf.mxu0
        %v3436 = vadd.f32 %v3103, %v3435
        %3437 = vmatmul.bf16.gmra.mxu0 %v3166
        %v3438 = vpop.f32.mrf.mxu0
        %v3439 = vadd.f32 %v3103, %v3438
        %v3440 = vpop.f32.mrf.mxu0
        %v3441 = vadd.f32 %v3103, %v3440
        %3442 = vmatmul.bf16.gmra.mxu0 %v3169
        %v3443 = vpop.f32.mrf.mxu0
        %v3444 = vadd.f32 %v3103, %v3443
        %v3445 = vpop.f32.mrf.mxu0
        %v3446 = vadd.f32 %v3103, %v3445
        %3447 = vmatmul.bf16.gmra.mxu0 %v3172
        %v3448 = vpop.f32.mrf.mxu0
        %v3449 = vadd.f32 %v3103, %v3448
        %v3450 = vpop.f32.mrf.mxu0
        %v3451 = vadd.f32 %v3103, %v3450
        %3452 = vmatmul.bf16.gmra.mxu0 %v3175
        %v3453 = vpop.f32.mrf.mxu0
        %v3454 = vadd.f32 %v3103, %v3453
        %v3455 = vpop.f32.mrf.mxu0
        %v3456 = vadd.f32 %v3103, %v3455
        %3457 = vmatmul.bf16.gmra.mxu0 %v3178
        %v3458 = vpop.f32.mrf.mxu0
        %v3459 = vadd.f32 %v3103, %v3458
        %v3460 = vpop.f32.mrf.mxu0
        %v3461 = vadd.f32 %v3103, %v3460
        %3462 = vmatmul.bf16.gmra.mxu0 %v3181
        %v3463 = vpop.f32.mrf.mxu0
        %v3464 = vadd.f32 %v3103, %v3463
        %v3465 = vpop.f32.mrf.mxu0
        %v3466 = vadd.f32 %v3103, %v3465
        %3467 = vmatmul.bf16.gmra.mxu0 %v3184
        %v3468 = vpop.f32.mrf.mxu0
        %v3469 = vadd.f32 %v3103, %v3468
        %v3470 = vpop.f32.mrf.mxu0
        %v3471 = vadd.f32 %v3103, %v3470
        %3472 = vmatmul.bf16.gmra.mxu0 %v3187
        %v3473 = vpop.f32.mrf.mxu0
        %v3474 = vadd.f32 %v3103, %v3473
        %v3475 = vpop.f32.mrf.mxu0
        %v3476 = vadd.f32 %v3103, %v3475
        %3477 = vmatmul.bf16.gmra.mxu0 %v3190
        %v3478 = vpop.f32.mrf.mxu0
        %v3479 = vadd.f32 %v3103, %v3478
        %v3480 = vpop.f32.mrf.mxu0
        %v3481 = vadd.f32 %v3103, %v3480
        %3482 = vmatmul.bf16.gmra.mxu0 %v3193
        %v3483 = vpop.f32.mrf.mxu0
        %v3484 = vadd.f32 %v3103, %v3483
        %v3485 = vpop.f32.mrf.mxu0
        %v3486 = vadd.f32 %v3103, %v3485
        %3487 = vmatmul.bf16.gmra.mxu0 %v3196
        %v3488 = vpop.f32.mrf.mxu0
        %v3489 = vadd.f32 %v3103, %v3488
        %v3490 = vpop.f32.mrf.mxu0
        %v3491 = vadd.f32 %v3103, %v3490
        %3492 = vmatmul.bf16.gmra.mxu0 %v3199
        %v3493 = vpop.f32.mrf.mxu0
        %v3494 = vadd.f32 %v3103, %v3493
        %v3495 = vpop.f32.mrf.mxu0
        %v3496 = vadd.f32 %v3103, %v3495
        %3497 = vmatmul.bf16.gmra.mxu0 %v3202
        %v3498 = vpop.f32.mrf.mxu0
        %v3499 = vadd.f32 %v3103, %v3498
        %v3500 = vpop.f32.mrf.mxu0
        %v3501 = vadd.f32 %v3103, %v3500
        %3502 = vmatmul.bf16.gmra.mxu0 %v3205
        %v3503 = vpop.f32.mrf.mxu0
        %v3504 = vadd.f32 %v3103, %v3503
        %v3505 = vpop.f32.mrf.mxu0
        %v3506 = vadd.f32 %v3103, %v3505
        %3507 = vmatmul.bf16.gmra.mxu0 %v3208
        %v3508 = vpop.f32.mrf.mxu0
        %v3509 = vadd.f32 %v3103, %v3508
        %v3510 = vpop.f32.mrf.mxu0
        %v3511 = vadd.f32 %v3103, %v3510
        %3512 = vmatmul.bf16.gmra.mxu0 %v3211
        %v3513 = vpop.f32.mrf.mxu0
        %v3514 = vadd.f32 %v3103, %v3513
        %v3515 = vpop.f32.mrf.mxu0
        %v3516 = vadd.f32 %v3103, %v3515
        %3517 = vmatmul.bf16.gmra.mxu0 %v3214
        %v3518 = vpop.f32.mrf.mxu0
        %v3519 = vadd.f32 %v3103, %v3518
        %v3520 = vpop.f32.mrf.mxu0
        %v3521 = vadd.f32 %v3103, %v3520
        %3522 = vmatmul.bf16.gmra.mxu0 %v3217
        %v3523 = vpop.f32.mrf.mxu0
        %v3524 = vadd.f32 %v3103, %v3523
        %v3525 = vpop.f32.mrf.mxu0
        %v3526 = vadd.f32 %v3103, %v3525
        %3527 = vmatmul.bf16.gmra.mxu0 %v3220
        %v3528 = vpop.f32.mrf.mxu0
        %v3529 = vadd.f32 %v3103, %v3528
        %v3530 = vpop.f32.mrf.mxu0
        %v3531 = vadd.f32 %v3103, %v3530
        %3532 = vmatmul.bf16.gmra.mxu0 %v3223
        %v3533 = vpop.f32.mrf.mxu0
        %v3534 = vadd.f32 %v3103, %v3533
        %v3535 = vpop.f32.mrf.mxu0
        %v3536 = vadd.f32 %v3103, %v3535
        %3537 = vmatmul.bf16.gmra.mxu0 %v3226
        %v3538 = vpop.f32.mrf.mxu0
        %v3539 = vadd.f32 %v3103, %v3538
        %v3540 = vpop.f32.mrf.mxu0
        %v3541 = vadd.f32 %v3103, %v3540
        %3542 = vmatmul.bf16.gmra.mxu0 %v3229
        %v3543 = vpop.f32.mrf.mxu0
        %v3544 = vadd.f32 %v3103, %v3543
        %v3545 = vpop.f32.mrf.mxu0
        %v3546 = vadd.f32 %v3103, %v3545
        %3547 = vmatmul.bf16.gmra.mxu0 %v3232
        %v3548 = vpop.f32.mrf.mxu0
        %v3549 = vadd.f32 %v3103, %v3548
        %v3550 = vpop.f32.mrf.mxu0
        %v3551 = vadd.f32 %v3103, %v3550
        %3552 = vmatmul.bf16.gmra.mxu0 %v3235
        %v3553 = vpop.f32.mrf.mxu0
        %v3554 = vadd.f32 %v3103, %v3553
        %v3555 = vpop.f32.mrf.mxu0
        %v3556 = vadd.f32 %v3103, %v3555
        %3557 = vmatmul.bf16.gmra.mxu0 %v3238
        %v3558 = vpop.f32.mrf.mxu0
        %v3559 = vadd.f32 %v3103, %v3558
        %v3560 = vpop.f32.mrf.mxu0
        %v3561 = vadd.f32 %v3103, %v3560
        %3562 = vmatmul.bf16.gmra.mxu0 %v3241
        %v3563 = vpop.f32.mrf.mxu0
        %v3564 = vadd.f32 %v3103, %v3563
        %v3565 = vpop.f32.mrf.mxu0
        %v3566 = vadd.f32 %v3103, %v3565
        %3567 = vmatmul.bf16.gmra.mxu0 %v3244
        %v3568 = vpop.f32.mrf.mxu0
        %v3569 = vadd.f32 %v3103, %v3568
        %v3570 = vpop.f32.mrf.mxu0
        %v3571 = vadd.f32 %v3103, %v3570
        %3572 = vmatmul.bf16.gmra.mxu0 %v3247
        %v3573 = vpop.f32.mrf.mxu0
        %v3574 = vadd.f32 %v3103, %v3573
        %v3575 = vpop.f32.mrf.mxu0
        %v3576 = vadd.f32 %v3103, %v3575
        %3577 = vmatmul.bf16.gmra.mxu0 %v3250
        %v3578 = vpop.f32.mrf.mxu0
        %v3579 = vadd.f32 %v3103, %v3578
        %v3580 = vpop.f32.mrf.mxu0
        %v3581 = vadd.f32 %v3103, %v3580
        %3582 = vmatmul.bf16.gmra.mxu0 %v3253
        %v3583 = vpop.f32.mrf.mxu0
        %v3584 = vadd.f32 %v3103, %v3583
        %v3585 = vpop.f32.mrf.mxu0
        %v3586 = vadd.f32 %v3103, %v3585
        %3587 = vmatmul.bf16.gmra.mxu0 %v3256
        %v3588 = vpop.f32.mrf.mxu0
        %v3589 = vadd.f32 %v3103, %v3588
        %v3590 = vpop.f32.mrf.mxu0
        %v3591 = vadd.f32 %v3103, %v3590
        %3592 = vmatmul.bf16.gmra.mxu0 %v3259
        %v3593 = vpop.f32.mrf.mxu0
        %v3594 = vadd.f32 %v3103, %v3593
        %v3595 = vpop.f32.mrf.mxu0
        %v3596 = vadd.f32 %v3103, %v3595
        %3597 = vmatmul.bf16.gmra.mxu0 %v3262
        %v3598 = vpop.f32.mrf.mxu0
        %v3599 = vadd.f32 %v3103, %v3598
        %v3600 = vpop.f32.mrf.mxu0
        %v3601 = vadd.f32 %v3103, %v3600
        %3602 = vmatmul.bf16.gmra.mxu0 %v3265
        %v3603 = vpop.f32.mrf.mxu0
        %v3604 = vadd.f32 %v3103, %v3603
        %v3605 = vpop.f32.mrf.mxu0
        %v3606 = vadd.f32 %v3103, %v3605
        %3607 = vmatmul.bf16.gmra.mxu0 %v3268
        %v3608 = vpop.f32.mrf.mxu0
        %v3609 = vadd.f32 %v3103, %v3608
        %v3610 = vpop.f32.mrf.mxu0
        %v3611 = vadd.f32 %v3103, %v3610
        %3612 = vmatmul.bf16.gmra.mxu0 %v3271
        %v3613 = vpop.f32.mrf.mxu0
        %v3614 = vadd.f32 %v3103, %v3613
        %v3615 = vpop.f32.mrf.mxu0
        %v3616 = vadd.f32 %v3103, %v3615
        %3617 = vmatmul.bf16.gmra.mxu0 %v3274
        %v3618 = vpop.f32.mrf.mxu0
        %v3619 = vadd.f32 %v3103, %v3618
        %v3620 = vpop.f32.mrf.mxu0
        %v3621 = vadd.f32 %v3103, %v3620
        %3622 = vmatmul.bf16.gmra.mxu0 %v3277
        %v3623 = vpop.f32.mrf.mxu0
        %v3624 = vadd.f32 %v3103, %v3623
        %v3625 = vpop.f32.mrf.mxu0
        %v3626 = vadd.f32 %v3103, %v3625
        %3627 = vmatmul.bf16.gmra.mxu0 %v3280
        %v3628 = vpop.f32.mrf.mxu0
        %v3629 = vadd.f32 %v3103, %v3628
        %v3630 = vpop.f32.mrf.mxu0
        %v3631 = vadd.f32 %v3103, %v3630
        %3632 = vmatmul.bf16.gmra.mxu0 %v3283
        %v3633 = vpop.f32.mrf.mxu0
        %v3634 = vadd.f32 %v3103, %v3633
        %v3635 = vpop.f32.mrf.mxu0
        %v3636 = vadd.f32 %v3103, %v3635
        %3637 = vmatmul.bf16.gmra.mxu0 %v3286
        %v3638 = vpop.f32.mrf.mxu0
        %v3639 = vadd.f32 %v3103, %v3638
        %v3640 = vpop.f32.mrf.mxu0
        %v3641 = vadd.f32 %v3103, %v3640
        %3642 = vmatmul.bf16.gmra.mxu0 %v3289
        %v3643 = vpop.f32.mrf.mxu0
        %v3644 = vadd.f32 %v3103, %v3643
        %v3645 = vpop.f32.mrf.mxu0
        %v3646 = vadd.f32 %v3103, %v3645
        %3647 = vmatmul.bf16.gmra.mxu0 %v3292
        %v3648 = vpop.f32.mrf.mxu0
        %v3649 = vadd.f32 %v3103, %v3648
        %v3650 = vpop.f32.mrf.mxu0
        %v3651 = vadd.f32 %v3103, %v3650
        %3652 = vmatmul.bf16.gmra.mxu0 %v3295
        %v3653 = vpop.f32.mrf.mxu0
        %v3654 = vadd.f32 %v3103, %v3653
        %v3655 = vpop.f32.mrf.mxu0
        %v3656 = vadd.f32 %v3103, %v3655
        %3657 = vmatmul.bf16.gmra.mxu0 %v3298
        %v3658 = vpop.f32.mrf.mxu0
        %v3659 = vadd.f32 %v3103, %v3658
        %v3660 = vpop.f32.mrf.mxu0
        %v3661 = vadd.f32 %v3103, %v3660
        %3662 = vmatmul.bf16.gmra.mxu0 %v3301
        %v3663 = vpop.f32.mrf.mxu0
        %v3664 = vadd.f32 %v3103, %v3663
        %v3665 = vpop.f32.mrf.mxu0
        %v3666 = vadd.f32 %v3103, %v3665
        %3667 = vmatmul.bf16.gmra.mxu0 %v3304
        %v3668 = vpop.f32.mrf.mxu0
        %v3669 = vadd.f32 %v3103, %v3668
        %v3670 = vpop.f32.mrf.mxu0
        %v3671 = vadd.f32 %v3103, %v3670
        %3672 = vmatmul.bf16.gmra.mxu0 %v3307
        %v3673 = vpop.f32.mrf.mxu0
        %v3674 = vadd.f32 %v3103, %v3673
        %v3675 = vpop.f32.mrf.mxu0
        %v3676 = vadd.f32 %v3103, %v3675
        %3677 = vmatmul.bf16.gmra.mxu0 %v3310
        %v3678 = vpop.f32.mrf.mxu0
        %v3679 = vadd.f32 %v3103, %v3678
        %v3680 = vpop.f32.mrf.mxu0
        %v3681 = vadd.f32 %v3103, %v3680
        %3682 = vmatmul.bf16.gmra.mxu0 %v3313
        %v3683 = vpop.f32.mrf.mxu0
        %v3684 = vadd.f32 %v3103, %v3683
        %v3685 = vpop.f32.mrf.mxu0
        %v3686 = vadd.f32 %v3103, %v3685
        %3687 = vmatmul.bf16.gmra.mxu0 %v3316
        %v3688 = vpop.f32.mrf.mxu0
        %v3689 = vadd.f32 %v3103, %v3688
        %v3690 = vpop.f32.mrf.mxu0
        %v3691 = vadd.f32 %v3103, %v3690
        %3692 = vmatmul.bf16.gmra.mxu0 %v3319
        %v3693 = vpop.f32.mrf.mxu0
        %v3694 = vadd.f32 %v3103, %v3693
        %v3695 = vpop.f32.mrf.mxu0
        %v3696 = vadd.f32 %v3103, %v3695
        %3697 = vmatmul.bf16.gmra.mxu0 %v3322
        %v3698 = vpop.f32.mrf.mxu0
        %v3699 = vadd.f32 %v3103, %v3698
        %v3700 = vpop.f32.mrf.mxu0
        %v3701 = vadd.f32 %v3103, %v3700
        %3702 = vmatmul.bf16.gmra.mxu0 %v3325
        %v3703 = vpop.f32.mrf.mxu0
        %v3704 = vadd.f32 %v3103, %v3703
        %v3705 = vpop.f32.mrf.mxu0
        %v3706 = vadd.f32 %v3103, %v3705
        %3707 = vmatmul.bf16.gmra.mxu0 %v3328
        %v3708 = vpop.f32.mrf.mxu0
        %v3709 = vadd.f32 %v3103, %v3708
        %v3710 = vpop.f32.mrf.mxu0
        %v3711 = vadd.f32 %v3103, %v3710
        %3712 = vmatmul.bf16.gmra.mxu0 %v3331
        %v3713 = vpop.f32.mrf.mxu0
        %v3714 = vadd.f32 %v3103, %v3713
        %v3715 = vpop.f32.mrf.mxu0
        %v3716 = vadd.f32 %v3103, %v3715
        %3717 = vmatmul.bf16.gmra.mxu0 %v3334
        %v3718 = vpop.f32.mrf.mxu0
        %v3719 = vadd.f32 %v3103, %v3718
        %v3720 = vpop.f32.mrf.mxu0
        %v3721 = vadd.f32 %v3103, %v3720
        %3722 = vmatmul.bf16.gmra.mxu0 %v3337
        %v3723 = vpop.f32.mrf.mxu0
        %v3724 = vadd.f32 %v3103, %v3723
        %v3725 = vpop.f32.mrf.mxu0
        %v3726 = vadd.f32 %v3103, %v3725
        %3727 = vmatmul.bf16.gmra.mxu0 %v3340
        %v3728 = vpop.f32.mrf.mxu0
        %v3729 = vadd.f32 %v3103, %v3728
        %v3730 = vpop.f32.mrf.mxu0
        %v3731 = vadd.f32 %v3103, %v3730
        %3732 = vmatmul.bf16.gmra.mxu0 %v3343
        %v3733 = vpop.f32.mrf.mxu0
        %v3734 = vadd.f32 %v3103, %v3733
        %v3735 = vpop.f32.mrf.mxu0
        %v3736 = vadd.f32 %v3103, %v3735
        %3737 = vmatmul.bf16.gmra.mxu0 %v3346
        %v3738 = vpop.f32.mrf.mxu0
        %v3739 = vadd.f32 %v3103, %v3738
        %v3740 = vpop.f32.mrf.mxu0
        %v3741 = vadd.f32 %v3103, %v3740
        %3742 = vmatmul.bf16.gmra.mxu0 %v3349
        %v3743 = vpop.f32.mrf.mxu0
        %v3744 = vadd.f32 %v3103, %v3743
        %v3745 = vpop.f32.mrf.mxu0
        %v3746 = vadd.f32 %v3103, %v3745
        %3747 = vmatmul.bf16.gmra.mxu0 %v3352
        %v3748 = vpop.f32.mrf.mxu0
        %v3749 = vadd.f32 %v3103, %v3748
        %v3750 = vpop.f32.mrf.mxu0
        %v3751 = vadd.f32 %v3103, %v3750
        %3752 = vmatmul.bf16.gmra.mxu0 %v3355
        %v3753 = vpop.f32.mrf.mxu0
        %v3754 = vadd.f32 %v3103, %v3753
        %v3755 = vpop.f32.mrf.mxu0
        %v3756 = vadd.f32 %v3103, %v3755
        %3757 = vmatmul.bf16.gmra.mxu0 %v3358
        %v3758 = vpop.f32.mrf.mxu0
        %v3759 = vadd.f32 %v3103, %v3758
        %v3760 = vpop.f32.mrf.mxu0
        %v3761 = vadd.f32 %v3103, %v3760
        %3762 = vmatmul.bf16.gmra.mxu0 %v3361
        %v3763 = vpop.f32.mrf.mxu0
        %v3764 = vadd.f32 %v3103, %v3763
        %v3765 = vpop.f32.mrf.mxu0
        %v3766 = vadd.f32 %v3103, %v3765
        %3767 = vmatmul.bf16.gmra.mxu0 %v3364
        %v3768 = vpop.f32.mrf.mxu0
        %v3769 = vadd.f32 %v3103, %v3768
        %v3770 = vpop.f32.mrf.mxu0
        %v3771 = vadd.f32 %v3103, %v3770
        %3772 = vmatmul.bf16.gmra.mxu0 %v3367
        %v3773 = vpop.f32.mrf.mxu0
        %v3774 = vadd.f32 %v3103, %v3773
        %v3775 = vpop.f32.mrf.mxu0
        %v3776 = vadd.f32 %v3103, %v3775
        %3777 = vdwg.mxu0
        %v3778 = vmax.f32 %v3379, 0.0
        %v3779 = vmax.f32 %v3381, 0.0
        %v3780 = vmax.f32 %v3384, 0.0
        %v3781 = vmax.f32 %v3386, 0.0
        %v3782 = vmax.f32 %v3389, 0.0
        %v3783 = vmax.f32 %v3391, 0.0
        %v3784 = vmax.f32 %v3394, 0.0
        %v3785 = vmax.f32 %v3396, 0.0
        %v3786 = vmax.f32 %v3399, 0.0
        %v3787 = vmax.f32 %v3401, 0.0
        %v3788 = vmax.f32 %v3404, 0.0
        %v3789 = vmax.f32 %v3406, 0.0
        %v3790 = vmax.f32 %v3409, 0.0
        %v3791 = vmax.f32 %v3411, 0.0
        %v3792 = vmax.f32 %v3414, 0.0
        %v3793 = vmax.f32 %v3416, 0.0
        %v3794 = vmax.f32 %v3419, 0.0
        %v3795 = vmax.f32 %v3421, 0.0
        %v3796 = vmax.f32 %v3424, 0.0
        %v3797 = vmax.f32 %v3426, 0.0
        %v3798 = vmax.f32 %v3429, 0.0
        %v3799 = vmax.f32 %v3431, 0.0
        %v3800 = vmax.f32 %v3434, 0.0
        %v3801 = vmax.f32 %v3436, 0.0
        %v3802 = vmax.f32 %v3439, 0.0
        %v3803 = vmax.f32 %v3441, 0.0
        %v3804 = vmax.f32 %v3444, 0.0
        %v3805 = vmax.f32 %v3446, 0.0
        %v3806 = vmax.f32 %v3449, 0.0
        %v3807 = vmax.f32 %v3451, 0.0
        %v3808 = vmax.f32 %v3454, 0.0
        %v3809 = vmax.f32 %v3456, 0.0
        %v3810 = vmax.f32 %v3459, 0.0
        %v3811 = vmax.f32 %v3461, 0.0
        %v3812 = vmax.f32 %v3464, 0.0
        %v3813 = vmax.f32 %v3466, 0.0
        %v3814 = vmax.f32 %v3469, 0.0
        %v3815 = vmax.f32 %v3471, 0.0
        %v3816 = vmax.f32 %v3474, 0.0
        %v3817 = vmax.f32 %v3476, 0.0
        %v3818 = vmax.f32 %v3479, 0.0
        %v3819 = vmax.f32 %v3481, 0.0
        %v3820 = vmax.f32 %v3484, 0.0
        %v3821 = vmax.f32 %v3486, 0.0
        %v3822 = vmax.f32 %v3489, 0.0
        %v3823 = vmax.f32 %v3491, 0.0
        %v3824 = vmax.f32 %v3494, 0.0
        %v3825 = vmax.f32 %v3496, 0.0
        %v3826 = vmax.f32 %v3499, 0.0
        %v3827 = vmax.f32 %v3501, 0.0
        %v3828 = vmax.f32 %v3504, 0.0
        %v3829 = vmax.f32 %v3506, 0.0
        %v3830 = vmax.f32 %v3509, 0.0
        %v3831 = vmax.f32 %v3511, 0.0
        %v3832 = vmax.f32 %v3514, 0.0
        %v3833 = vmax.f32 %v3516, 0.0
        %v3834 = vmax.f32 %v3519, 0.0
        %v3835 = vmax.f32 %v3521, 0.0
        %v3836 = vmax.f32 %v3524, 0.0
        %v3837 = vmax.f32 %v3526, 0.0
        %v3838 = vmax.f32 %v3529, 0.0
        %v3839 = vmax.f32 %v3531, 0.0
        %v3840 = vmax.f32 %v3534, 0.0
        %v3841 = vmax.f32 %v3536, 0.0
        %v3842 = vmax.f32 %v3539, 0.0
        %v3843 = vmax.f32 %v3541, 0.0
        %v3844 = vmax.f32 %v3544, 0.0
        %v3845 = vmax.f32 %v3546, 0.0
        %v3846 = vmax.f32 %v3549, 0.0
        %v3847 = vmax.f32 %v3551, 0.0
        %v3848 = vmax.f32 %v3554, 0.0
        %v3849 = vmax.f32 %v3556, 0.0
        %v3850 = vmax.f32 %v3559, 0.0
        %v3851 = vmax.f32 %v3561, 0.0
        %v3852 = vmax.f32 %v3564, 0.0
        %v3853 = vmax.f32 %v3566, 0.0
        %v3854 = vmax.f32 %v3569, 0.0
        %v3855 = vmax.f32 %v3571, 0.0
        %v3856 = vmax.f32 %v3574, 0.0
        %v3857 = vmax.f32 %v3576, 0.0
        %v3858 = vmax.f32 %v3579, 0.0
        %v3859 = vmax.f32 %v3581, 0.0
        %v3860 = vmax.f32 %v3584, 0.0
        %v3861 = vmax.f32 %v3586, 0.0
        %v3862 = vmax.f32 %v3589, 0.0
        %v3863 = vmax.f32 %v3591, 0.0
        %v3864 = vmax.f32 %v3594, 0.0
        %v3865 = vmax.f32 %v3596, 0.0
        %v3866 = vmax.f32 %v3599, 0.0
        %v3867 = vmax.f32 %v3601, 0.0
        %v3868 = vmax.f32 %v3604, 0.0
        %v3869 = vmax.f32 %v3606, 0.0
        %v3870 = vmax.f32 %v3609, 0.0
        %v3871 = vmax.f32 %v3611, 0.0
        %v3872 = vmax.f32 %v3614, 0.0
        %v3873 = vmax.f32 %v3616, 0.0
        %v3874 = vmax.f32 %v3619, 0.0
        %v3875 = vmax.f32 %v3621, 0.0
        %v3876 = vmax.f32 %v3624, 0.0
        %v3877 = vmax.f32 %v3626, 0.0
        %v3878 = vmax.f32 %v3629, 0.0
        %v3879 = vmax.f32 %v3631, 0.0
        %v3880 = vmax.f32 %v3634, 0.0
        %v3881 = vmax.f32 %v3636, 0.0
        %v3882 = vmax.f32 %v3639, 0.0
        %v3883 = vmax.f32 %v3641, 0.0
        %v3884 = vmax.f32 %v3644, 0.0
        %v3885 = vmax.f32 %v3646, 0.0
        %v3886 = vmax.f32 %v3649, 0.0
        %v3887 = vmax.f32 %v3651, 0.0
        %v3888 = vmax.f32 %v3654, 0.0
        %v3889 = vmax.f32 %v3656, 0.0
        %v3890 = vmax.f32 %v3659, 0.0
        %v3891 = vmax.f32 %v3661, 0.0
        %v3892 = vmax.f32 %v3664, 0.0
        %v3893 = vmax.f32 %v3666, 0.0
        %v3894 = vmax.f32 %v3669, 0.0
        %v3895 = vmax.f32 %v3671, 0.0
        %v3896 = vmax.f32 %v3674, 0.0
        %v3897 = vmax.f32 %v3676, 0.0
        %v3898 = vmax.f32 %v3679, 0.0
        %v3899 = vmax.f32 %v3681, 0.0
        %v3900 = vmax.f32 %v3684, 0.0
        %v3901 = vmax.f32 %v3686, 0.0
        %v3902 = vmax.f32 %v3689, 0.0
        %v3903 = vmax.f32 %v3691, 0.0
        %v3904 = vmax.f32 %v3694, 0.0
        %v3905 = vmax.f32 %v3696, 0.0
        %v3906 = vmax.f32 %v3699, 0.0
        %v3907 = vmax.f32 %v3701, 0.0
        %v3908 = vmax.f32 %v3704, 0.0
        %v3909 = vmax.f32 %v3706, 0.0
        %v3910 = vmax.f32 %v3709, 0.0
        %v3911 = vmax.f32 %v3711, 0.0
        %v3912 = vmax.f32 %v3714, 0.0
        %v3913 = vmax.f32 %v3716, 0.0
        %v3914 = vmax.f32 %v3719, 0.0
        %v3915 = vmax.f32 %v3721, 0.0
        %v3916 = vmax.f32 %v3724, 0.0
        %v3917 = vmax.f32 %v3726, 0.0
        %v3918 = vmax.f32 %v3729, 0.0
        %v3919 = vmax.f32 %v3731, 0.0
        %v3920 = vmax.f32 %v3734, 0.0
        %v3921 = vmax.f32 %v3736, 0.0
        %v3922 = vmax.f32 %v3739, 0.0
        %v3923 = vmax.f32 %v3741, 0.0
        %v3924 = vmax.f32 %v3744, 0.0
        %v3925 = vmax.f32 %v3746, 0.0
        %v3926 = vmax.f32 %v3749, 0.0
        %v3927 = vmax.f32 %v3751, 0.0
        %v3928 = vmax.f32 %v3754, 0.0
        %v3929 = vmax.f32 %v3756, 0.0
        %v3930 = vmax.f32 %v3759, 0.0
        %v3931 = vmax.f32 %v3761, 0.0
        %v3932 = vmax.f32 %v3764, 0.0
        %v3933 = vmax.f32 %v3766, 0.0
        %v3934 = vmax.f32 %v3769, 0.0
        %v3935 = vmax.f32 %v3771, 0.0
        %v3936 = vmax.f32 %v3774, 0.0
        %v3937 = vmax.f32 %v3776, 0.0
        %v3938 = vperm.slane %v1074, 0
        %v3939 = vmul.f32 %v3778, %v3938
        %v3940 = vmul.f32 %v3779, %v3938
        %v3941 = vmul.f32 %v3780, %v3938
        %v3942 = vmul.f32 %v3781, %v3938
        %v3943 = vmul.f32 %v3782, %v3938
        %v3944 = vmul.f32 %v3783, %v3938
        %v3945 = vmul.f32 %v3784, %v3938
        %v3946 = vmul.f32 %v3785, %v3938
        %v3947 = vmul.f32 %v3786, %v3938
        %v3948 = vmul.f32 %v3787, %v3938
        %v3949 = vmul.f32 %v3788, %v3938
        %v3950 = vmul.f32 %v3789, %v3938
        %v3951 = vmul.f32 %v3790, %v3938
        %v3952 = vmul.f32 %v3791, %v3938
        %v3953 = vmul.f32 %v3792, %v3938
        %v3954 = vmul.f32 %v3793, %v3938
        %v3955 = vmul.f32 %v3794, %v3938
        %v3956 = vmul.f32 %v3795, %v3938
        %v3957 = vmul.f32 %v3796, %v3938
        %v3958 = vmul.f32 %v3797, %v3938
        %v3959 = vmul.f32 %v3798, %v3938
        %v3960 = vmul.f32 %v3799, %v3938
        %v3961 = vmul.f32 %v3800, %v3938
        %v3962 = vmul.f32 %v3801, %v3938
        %v3963 = vmul.f32 %v3802, %v3938
        %v3964 = vmul.f32 %v3803, %v3938
        %v3965 = vmul.f32 %v3804, %v3938
        %v3966 = vmul.f32 %v3805, %v3938
        %v3967 = vmul.f32 %v3806, %v3938
        %v3968 = vmul.f32 %v3807, %v3938
        %v3969 = vmul.f32 %v3808, %v3938
        %v3970 = vmul.f32 %v3809, %v3938
        %v3971 = vmul.f32 %v3810, %v3938
        %v3972 = vmul.f32 %v3811, %v3938
        %v3973 = vmul.f32 %v3812, %v3938
        %v3974 = vmul.f32 %v3813, %v3938
        %v3975 = vmul.f32 %v3814, %v3938
        %v3976 = vmul.f32 %v3815, %v3938
        %v3977 = vmul.f32 %v3816, %v3938
        %v3978 = vmul.f32 %v3817, %v3938
        %v3979 = vmul.f32 %v3818, %v3938
        %v3980 = vmul.f32 %v3819, %v3938
        %v3981 = vmul.f32 %v3820, %v3938
        %v3982 = vmul.f32 %v3821, %v3938
        %v3983 = vmul.f32 %v3822, %v3938
        %v3984 = vmul.f32 %v3823, %v3938
        %v3985 = vmul.f32 %v3824, %v3938
        %v3986 = vmul.f32 %v3825, %v3938
        %v3987 = vmul.f32 %v3826, %v3938
        %v3988 = vmul.f32 %v3827, %v3938
        %v3989 = vmul.f32 %v3828, %v3938
        %v3990 = vmul.f32 %v3829, %v3938
        %v3991 = vmul.f32 %v3830, %v3938
        %v3992 = vmul.f32 %v3831, %v3938
        %v3993 = vmul.f32 %v3832, %v3938
        %v3994 = vmul.f32 %v3833, %v3938
        %v3995 = vmul.f32 %v3834, %v3938
        %v3996 = vmul.f32 %v3835, %v3938
        %v3997 = vmul.f32 %v3836, %v3938
        %v3998 = vmul.f32 %v3837, %v3938
        %v3999 = vmul.f32 %v3838, %v3938
        %v4000 = vmul.f32 %v3839, %v3938
        %v4001 = vmul.f32 %v3840, %v3938
        %v4002 = vmul.f32 %v3841, %v3938
        %v4003 = vmul.f32 %v3842, %v3938
        %v4004 = vmul.f32 %v3843, %v3938
        %v4005 = vmul.f32 %v3844, %v3938
        %v4006 = vmul.f32 %v3845, %v3938
        %v4007 = vmul.f32 %v3846, %v3938
        %v4008 = vmul.f32 %v3847, %v3938
        %v4009 = vmul.f32 %v3848, %v3938
        %v4010 = vmul.f32 %v3849, %v3938
        %v4011 = vmul.f32 %v3850, %v3938
        %v4012 = vmul.f32 %v3851, %v3938
        %v4013 = vmul.f32 %v3852, %v3938
        %v4014 = vmul.f32 %v3853, %v3938
        %v4015 = vmul.f32 %v3854, %v3938
        %v4016 = vmul.f32 %v3855, %v3938
        %v4017 = vmul.f32 %v3856, %v3938
        %v4018 = vmul.f32 %v3857, %v3938
        %v4019 = vmul.f32 %v3858, %v3938
        %v4020 = vmul.f32 %v3859, %v3938
        %v4021 = vmul.f32 %v3860, %v3938
        %v4022 = vmul.f32 %v3861, %v3938
        %v4023 = vmul.f32 %v3862, %v3938
        %v4024 = vmul.f32 %v3863, %v3938
        %v4025 = vmul.f32 %v3864, %v3938
        %v4026 = vmul.f32 %v3865, %v3938
        %v4027 = vmul.f32 %v3866, %v3938
        %v4028 = vmul.f32 %v3867, %v3938
        %v4029 = vmul.f32 %v3868, %v3938
        %v4030 = vmul.f32 %v3869, %v3938
        %v4031 = vmul.f32 %v3870, %v3938
        %v4032 = vmul.f32 %v3871, %v3938
        %v4033 = vmul.f32 %v3872, %v3938
        %v4034 = vmul.f32 %v3873, %v3938
        %v4035 = vmul.f32 %v3874, %v3938
        %v4036 = vmul.f32 %v3875, %v3938
        %v4037 = vmul.f32 %v3876, %v3938
        %v4038 = vmul.f32 %v3877, %v3938
        %v4039 = vmul.f32 %v3878, %v3938
        %v4040 = vmul.f32 %v3879, %v3938
        %v4041 = vmul.f32 %v3880, %v3938
        %v4042 = vmul.f32 %v3881, %v3938
        %v4043 = vmul.f32 %v3882, %v3938
        %v4044 = vmul.f32 %v3883, %v3938
        %v4045 = vmul.f32 %v3884, %v3938
        %v4046 = vmul.f32 %v3885, %v3938
        %v4047 = vmul.f32 %v3886, %v3938
        %v4048 = vmul.f32 %v3887, %v3938
        %v4049 = vmul.f32 %v3888, %v3938
        %v4050 = vmul.f32 %v3889, %v3938
        %v4051 = vmul.f32 %v3890, %v3938
        %v4052 = vmul.f32 %v3891, %v3938
        %v4053 = vmul.f32 %v3892, %v3938
        %v4054 = vmul.f32 %v3893, %v3938
        %v4055 = vmul.f32 %v3894, %v3938
        %v4056 = vmul.f32 %v3895, %v3938
        %v4057 = vmul.f32 %v3896, %v3938
        %v4058 = vmul.f32 %v3897, %v3938
        %v4059 = vmul.f32 %v3898, %v3938
        %v4060 = vmul.f32 %v3899, %v3938
        %v4061 = vmul.f32 %v3900, %v3938
        %v4062 = vmul.f32 %v3901, %v3938
        %v4063 = vmul.f32 %v3902, %v3938
        %v4064 = vmul.f32 %v3903, %v3938
        %v4065 = vmul.f32 %v3904, %v3938
        %v4066 = vmul.f32 %v3905, %v3938
        %v4067 = vmul.f32 %v3906, %v3938
        %v4068 = vmul.f32 %v3907, %v3938
        %v4069 = vmul.f32 %v3908, %v3938
        %v4070 = vmul.f32 %v3909, %v3938
        %v4071 = vmul.f32 %v3910, %v3938
        %v4072 = vmul.f32 %v3911, %v3938
        %v4073 = vmul.f32 %v3912, %v3938
        %v4074 = vmul.f32 %v3913, %v3938
        %v4075 = vmul.f32 %v3914, %v3938
        %v4076 = vmul.f32 %v3915, %v3938
        %v4077 = vmul.f32 %v3916, %v3938
        %v4078 = vmul.f32 %v3917, %v3938
        %v4079 = vmul.f32 %v3918, %v3938
        %v4080 = vmul.f32 %v3919, %v3938
        %v4081 = vmul.f32 %v3920, %v3938
        %v4082 = vmul.f32 %v3921, %v3938
        %v4083 = vmul.f32 %v3922, %v3938
        %v4084 = vmul.f32 %v3923, %v3938
        %v4085 = vmul.f32 %v3924, %v3938
        %v4086 = vmul.f32 %v3925, %v3938
        %v4087 = vmul.f32 %v3926, %v3938
        %v4088 = vmul.f32 %v3927, %v3938
        %v4089 = vmul.f32 %v3928, %v3938
        %v4090 = vmul.f32 %v3929, %v3938
        %v4091 = vmul.f32 %v3930, %v3938
        %v4092 = vmul.f32 %v3931, %v3938
        %v4093 = vmul.f32 %v3932, %v3938
        %v4094 = vmul.f32 %v3933, %v3938
        %v4095 = vmul.f32 %v3934, %v3938
        %v4096 = vmul.f32 %v3935, %v3938
        %v4097 = vmul.f32 %v3936, %v3938
        %v4098 = vmul.f32 %v3937, %v3938
        %vm4099 = vcmask 261120
        %v4100 = vsel %vm4099, %v3939, 0.0
        %4101 = vadd.xlane.f32.xlu0 %v4100
        %v4102 = vpop.xlane.xlu0 %4101
        %v4103 = vsel %vm4099, %v3940, 0.0
        %4104 = vadd.xlane.f32.xlu0 %v4103
        %v4105 = vpop.xlane.xlu0 %4104
        %v4106 = vsel %vm4099, %v3941, 0.0
        %4107 = vadd.xlane.f32.xlu0 %v4106
        %v4108 = vpop.xlane.xlu0 %4107
        %v4109 = vsel %vm4099, %v3942, 0.0
        %4110 = vadd.xlane.f32.xlu0 %v4109
        %v4111 = vpop.xlane.xlu0 %4110
        %v4112 = vsel %vm4099, %v3943, 0.0
        %4113 = vadd.xlane.f32.xlu0 %v4112
        %v4114 = vpop.xlane.xlu0 %4113
        %v4115 = vsel %vm4099, %v3944, 0.0
        %4116 = vadd.xlane.f32.xlu0 %v4115
        %v4117 = vpop.xlane.xlu0 %4116
        %v4118 = vsel %vm4099, %v3945, 0.0
        %4119 = vadd.xlane.f32.xlu0 %v4118
        %v4120 = vpop.xlane.xlu0 %4119
        %v4121 = vsel %vm4099, %v3946, 0.0
        %4122 = vadd.xlane.f32.xlu0 %v4121
        %v4123 = vpop.xlane.xlu0 %4122
        %v4124 = vsel %vm4099, %v3947, 0.0
        %4125 = vadd.xlane.f32.xlu0 %v4124
        %v4126 = vpop.xlane.xlu0 %4125
        %v4127 = vsel %vm4099, %v3948, 0.0
        %4128 = vadd.xlane.f32.xlu0 %v4127
        %v4129 = vpop.xlane.xlu0 %4128
        %v4130 = vsel %vm4099, %v3949, 0.0
        %4131 = vadd.xlane.f32.xlu0 %v4130
        %v4132 = vpop.xlane.xlu0 %4131
        %v4133 = vsel %vm4099, %v3950, 0.0
        %4134 = vadd.xlane.f32.xlu0 %v4133
        %v4135 = vpop.xlane.xlu0 %4134
        %v4136 = vsel %vm4099, %v3951, 0.0
        %4137 = vadd.xlane.f32.xlu0 %v4136
        %v4138 = vpop.xlane.xlu0 %4137
        %v4139 = vsel %vm4099, %v3952, 0.0
        %4140 = vadd.xlane.f32.xlu0 %v4139
        %v4141 = vpop.xlane.xlu0 %4140
        %v4142 = vsel %vm4099, %v3953, 0.0
        %4143 = vadd.xlane.f32.xlu0 %v4142
        %v4144 = vpop.xlane.xlu0 %4143
        %v4145 = vsel %vm4099, %v3954, 0.0
        %4146 = vadd.xlane.f32.xlu0 %v4145
        %v4147 = vpop.xlane.xlu0 %4146
        %v4148 = vsel %vm4099, %v3955, 0.0
        %4149 = vadd.xlane.f32.xlu0 %v4148
        %v4150 = vpop.xlane.xlu0 %4149
        %v4151 = vsel %vm4099, %v3956, 0.0
        %4152 = vadd.xlane.f32.xlu0 %v4151
        %v4153 = vpop.xlane.xlu0 %4152
        %v4154 = vsel %vm4099, %v3957, 0.0
        %4155 = vadd.xlane.f32.xlu0 %v4154
        %v4156 = vpop.xlane.xlu0 %4155
        %v4157 = vsel %vm4099, %v3958, 0.0
        %4158 = vadd.xlane.f32.xlu0 %v4157
        %v4159 = vpop.xlane.xlu0 %4158
        %v4160 = vsel %vm4099, %v3959, 0.0
        %4161 = vadd.xlane.f32.xlu0 %v4160
        %v4162 = vpop.xlane.xlu0 %4161
        %v4163 = vsel %vm4099, %v3960, 0.0
        %4164 = vadd.xlane.f32.xlu0 %v4163
        %v4165 = vpop.xlane.xlu0 %4164
        %v4166 = vsel %vm4099, %v3961, 0.0
        %4167 = vadd.xlane.f32.xlu0 %v4166
        %v4168 = vpop.xlane.xlu0 %4167
        %v4169 = vsel %vm4099, %v3962, 0.0
        %4170 = vadd.xlane.f32.xlu0 %v4169
        %v4171 = vpop.xlane.xlu0 %4170
        %v4172 = vsel %vm4099, %v3963, 0.0
        %4173 = vadd.xlane.f32.xlu0 %v4172
        %v4174 = vpop.xlane.xlu0 %4173
        %v4175 = vsel %vm4099, %v3964, 0.0
        %4176 = vadd.xlane.f32.xlu0 %v4175
        %v4177 = vpop.xlane.xlu0 %4176
        %v4178 = vsel %vm4099, %v3965, 0.0
        %4179 = vadd.xlane.f32.xlu0 %v4178
        %v4180 = vpop.xlane.xlu0 %4179
        %v4181 = vsel %vm4099, %v3966, 0.0
        %4182 = vadd.xlane.f32.xlu0 %v4181
        %v4183 = vpop.xlane.xlu0 %4182
        %v4184 = vsel %vm4099, %v3967, 0.0
        %4185 = vadd.xlane.f32.xlu0 %v4184
        %v4186 = vpop.xlane.xlu0 %4185
        %v4187 = vsel %vm4099, %v3968, 0.0
        %4188 = vadd.xlane.f32.xlu0 %v4187
        %v4189 = vpop.xlane.xlu0 %4188
        %v4190 = vsel %vm4099, %v3969, 0.0
        %4191 = vadd.xlane.f32.xlu0 %v4190
        %v4192 = vpop.xlane.xlu0 %4191
        %v4193 = vsel %vm4099, %v3970, 0.0
        %4194 = vadd.xlane.f32.xlu0 %v4193
        %v4195 = vpop.xlane.xlu0 %4194
        %v4196 = vsel %vm4099, %v3971, 0.0
        %4197 = vadd.xlane.f32.xlu0 %v4196
        %v4198 = vpop.xlane.xlu0 %4197
        %v4199 = vsel %vm4099, %v3972, 0.0
        %4200 = vadd.xlane.f32.xlu0 %v4199
        %v4201 = vpop.xlane.xlu0 %4200
        %v4202 = vsel %vm4099, %v3973, 0.0
        %4203 = vadd.xlane.f32.xlu0 %v4202
        %v4204 = vpop.xlane.xlu0 %4203
        %v4205 = vsel %vm4099, %v3974, 0.0
        %4206 = vadd.xlane.f32.xlu0 %v4205
        %v4207 = vpop.xlane.xlu0 %4206
        %v4208 = vsel %vm4099, %v3975, 0.0
        %4209 = vadd.xlane.f32.xlu0 %v4208
        %v4210 = vpop.xlane.xlu0 %4209
        %v4211 = vsel %vm4099, %v3976, 0.0
        %4212 = vadd.xlane.f32.xlu0 %v4211
        %v4213 = vpop.xlane.xlu0 %4212
        %v4214 = vsel %vm4099, %v3977, 0.0
        %4215 = vadd.xlane.f32.xlu0 %v4214
        %v4216 = vpop.xlane.xlu0 %4215
        %v4217 = vsel %vm4099, %v3978, 0.0
        %4218 = vadd.xlane.f32.xlu0 %v4217
        %v4219 = vpop.xlane.xlu0 %4218
        %v4220 = vsel %vm4099, %v3979, 0.0
        %4221 = vadd.xlane.f32.xlu0 %v4220
        %v4222 = vpop.xlane.xlu0 %4221
        %v4223 = vsel %vm4099, %v3980, 0.0
        %4224 = vadd.xlane.f32.xlu0 %v4223
        %v4225 = vpop.xlane.xlu0 %4224
        %v4226 = vsel %vm4099, %v3981, 0.0
        %4227 = vadd.xlane.f32.xlu0 %v4226
        %v4228 = vpop.xlane.xlu0 %4227
        %v4229 = vsel %vm4099, %v3982, 0.0
        %4230 = vadd.xlane.f32.xlu0 %v4229
        %v4231 = vpop.xlane.xlu0 %4230
        %v4232 = vsel %vm4099, %v3983, 0.0
        %4233 = vadd.xlane.f32.xlu0 %v4232
        %v4234 = vpop.xlane.xlu0 %4233
        %v4235 = vsel %vm4099, %v3984, 0.0
        %4236 = vadd.xlane.f32.xlu0 %v4235
        %v4237 = vpop.xlane.xlu0 %4236
        %v4238 = vsel %vm4099, %v3985, 0.0
        %4239 = vadd.xlane.f32.xlu0 %v4238
        %v4240 = vpop.xlane.xlu0 %4239
        %v4241 = vsel %vm4099, %v3986, 0.0
        %4242 = vadd.xlane.f32.xlu0 %v4241
        %v4243 = vpop.xlane.xlu0 %4242
        %v4244 = vsel %vm4099, %v3987, 0.0
        %4245 = vadd.xlane.f32.xlu0 %v4244
        %v4246 = vpop.xlane.xlu0 %4245
        %v4247 = vsel %vm4099, %v3988, 0.0
        %4248 = vadd.xlane.f32.xlu0 %v4247
        %v4249 = vpop.xlane.xlu0 %4248
        %v4250 = vsel %vm4099, %v3989, 0.0
        %4251 = vadd.xlane.f32.xlu0 %v4250
        %v4252 = vpop.xlane.xlu0 %4251
        %v4253 = vsel %vm4099, %v3990, 0.0
        %4254 = vadd.xlane.f32.xlu0 %v4253
        %v4255 = vpop.xlane.xlu0 %4254
        %v4256 = vsel %vm4099, %v3991, 0.0
        %4257 = vadd.xlane.f32.xlu0 %v4256
        %v4258 = vpop.xlane.xlu0 %4257
        %v4259 = vsel %vm4099, %v3992, 0.0
        %4260 = vadd.xlane.f32.xlu0 %v4259
        %v4261 = vpop.xlane.xlu0 %4260
        %v4262 = vsel %vm4099, %v3993, 0.0
        %4263 = vadd.xlane.f32.xlu0 %v4262
        %v4264 = vpop.xlane.xlu0 %4263
        %v4265 = vsel %vm4099, %v3994, 0.0
        %4266 = vadd.xlane.f32.xlu0 %v4265
        %v4267 = vpop.xlane.xlu0 %4266
        %v4268 = vsel %vm4099, %v3995, 0.0
        %4269 = vadd.xlane.f32.xlu0 %v4268
        %v4270 = vpop.xlane.xlu0 %4269
        %v4271 = vsel %vm4099, %v3996, 0.0
        %4272 = vadd.xlane.f32.xlu0 %v4271
        %v4273 = vpop.xlane.xlu0 %4272
        %v4274 = vsel %vm4099, %v3997, 0.0
        %4275 = vadd.xlane.f32.xlu0 %v4274
        %v4276 = vpop.xlane.xlu0 %4275
        %v4277 = vsel %vm4099, %v3998, 0.0
        %4278 = vadd.xlane.f32.xlu0 %v4277
        %v4279 = vpop.xlane.xlu0 %4278
        %v4280 = vsel %vm4099, %v3999, 0.0
        %4281 = vadd.xlane.f32.xlu0 %v4280
        %v4282 = vpop.xlane.xlu0 %4281
        %v4283 = vsel %vm4099, %v4000, 0.0
        %4284 = vadd.xlane.f32.xlu0 %v4283
        %v4285 = vpop.xlane.xlu0 %4284
        %v4286 = vsel %vm4099, %v4001, 0.0
        %4287 = vadd.xlane.f32.xlu0 %v4286
        %v4288 = vpop.xlane.xlu0 %4287
        %v4289 = vsel %vm4099, %v4002, 0.0
        %4290 = vadd.xlane.f32.xlu0 %v4289
        %v4291 = vpop.xlane.xlu0 %4290
        %v4292 = vsel %vm4099, %v4003, 0.0
        %4293 = vadd.xlane.f32.xlu0 %v4292
        %v4294 = vpop.xlane.xlu0 %4293
        %v4295 = vsel %vm4099, %v4004, 0.0
        %4296 = vadd.xlane.f32.xlu0 %v4295
        %v4297 = vpop.xlane.xlu0 %4296
        %v4298 = vsel %vm4099, %v4005, 0.0
        %4299 = vadd.xlane.f32.xlu0 %v4298
        %v4300 = vpop.xlane.xlu0 %4299
        %v4301 = vsel %vm4099, %v4006, 0.0
        %4302 = vadd.xlane.f32.xlu0 %v4301
        %v4303 = vpop.xlane.xlu0 %4302
        %v4304 = vsel %vm4099, %v4007, 0.0
        %4305 = vadd.xlane.f32.xlu0 %v4304
        %v4306 = vpop.xlane.xlu0 %4305
        %v4307 = vsel %vm4099, %v4008, 0.0
        %4308 = vadd.xlane.f32.xlu0 %v4307
        %v4309 = vpop.xlane.xlu0 %4308
        %v4310 = vsel %vm4099, %v4009, 0.0
        %4311 = vadd.xlane.f32.xlu0 %v4310
        %v4312 = vpop.xlane.xlu0 %4311
        %v4313 = vsel %vm4099, %v4010, 0.0
        %4314 = vadd.xlane.f32.xlu0 %v4313
        %v4315 = vpop.xlane.xlu0 %4314
        %v4316 = vsel %vm4099, %v4011, 0.0
        %4317 = vadd.xlane.f32.xlu0 %v4316
        %v4318 = vpop.xlane.xlu0 %4317
        %v4319 = vsel %vm4099, %v4012, 0.0
        %4320 = vadd.xlane.f32.xlu0 %v4319
        %v4321 = vpop.xlane.xlu0 %4320
        %v4322 = vsel %vm4099, %v4013, 0.0
        %4323 = vadd.xlane.f32.xlu0 %v4322
        %v4324 = vpop.xlane.xlu0 %4323
        %v4325 = vsel %vm4099, %v4014, 0.0
        %4326 = vadd.xlane.f32.xlu0 %v4325
        %v4327 = vpop.xlane.xlu0 %4326
        %v4328 = vsel %vm4099, %v4015, 0.0
        %4329 = vadd.xlane.f32.xlu0 %v4328
        %v4330 = vpop.xlane.xlu0 %4329
        %v4331 = vsel %vm4099, %v4016, 0.0
        %4332 = vadd.xlane.f32.xlu0 %v4331
        %v4333 = vpop.xlane.xlu0 %4332
        %v4334 = vsel %vm4099, %v4017, 0.0
        %4335 = vadd.xlane.f32.xlu0 %v4334
        %v4336 = vpop.xlane.xlu0 %4335
        %v4337 = vsel %vm4099, %v4018, 0.0
        %4338 = vadd.xlane.f32.xlu0 %v4337
        %v4339 = vpop.xlane.xlu0 %4338
        %v4340 = vsel %vm4099, %v4019, 0.0
        %4341 = vadd.xlane.f32.xlu0 %v4340
        %v4342 = vpop.xlane.xlu0 %4341
        %v4343 = vsel %vm4099, %v4020, 0.0
        %4344 = vadd.xlane.f32.xlu0 %v4343
        %v4345 = vpop.xlane.xlu0 %4344
        %v4346 = vsel %vm4099, %v4021, 0.0
        %4347 = vadd.xlane.f32.xlu0 %v4346
        %v4348 = vpop.xlane.xlu0 %4347
        %v4349 = vsel %vm4099, %v4022, 0.0
        %4350 = vadd.xlane.f32.xlu0 %v4349
        %v4351 = vpop.xlane.xlu0 %4350
        %v4352 = vsel %vm4099, %v4023, 0.0
        %4353 = vadd.xlane.f32.xlu0 %v4352
        %v4354 = vpop.xlane.xlu0 %4353
        %v4355 = vsel %vm4099, %v4024, 0.0
        %4356 = vadd.xlane.f32.xlu0 %v4355
        %v4357 = vpop.xlane.xlu0 %4356
        %v4358 = vsel %vm4099, %v4025, 0.0
        %4359 = vadd.xlane.f32.xlu0 %v4358
        %v4360 = vpop.xlane.xlu0 %4359
        %v4361 = vsel %vm4099, %v4026, 0.0
        %4362 = vadd.xlane.f32.xlu0 %v4361
        %v4363 = vpop.xlane.xlu0 %4362
        %v4364 = vsel %vm4099, %v4027, 0.0
        %4365 = vadd.xlane.f32.xlu0 %v4364
        %v4366 = vpop.xlane.xlu0 %4365
        %v4367 = vsel %vm4099, %v4028, 0.0
        %4368 = vadd.xlane.f32.xlu0 %v4367
        %v4369 = vpop.xlane.xlu0 %4368
        %v4370 = vsel %vm4099, %v4029, 0.0
        %4371 = vadd.xlane.f32.xlu0 %v4370
        %v4372 = vpop.xlane.xlu0 %4371
        %v4373 = vsel %vm4099, %v4030, 0.0
        %4374 = vadd.xlane.f32.xlu0 %v4373
        %v4375 = vpop.xlane.xlu0 %4374
        %v4376 = vsel %vm4099, %v4031, 0.0
        %4377 = vadd.xlane.f32.xlu0 %v4376
        %v4378 = vpop.xlane.xlu0 %4377
        %v4379 = vsel %vm4099, %v4032, 0.0
        %4380 = vadd.xlane.f32.xlu0 %v4379
        %v4381 = vpop.xlane.xlu0 %4380
        %v4382 = vsel %vm4099, %v4033, 0.0
        %4383 = vadd.xlane.f32.xlu0 %v4382
        %v4384 = vpop.xlane.xlu0 %4383
        %v4385 = vsel %vm4099, %v4034, 0.0
        %4386 = vadd.xlane.f32.xlu0 %v4385
        %v4387 = vpop.xlane.xlu0 %4386
        %v4388 = vsel %vm4099, %v4035, 0.0
        %4389 = vadd.xlane.f32.xlu0 %v4388
        %v4390 = vpop.xlane.xlu0 %4389
        %v4391 = vsel %vm4099, %v4036, 0.0
        %4392 = vadd.xlane.f32.xlu0 %v4391
        %v4393 = vpop.xlane.xlu0 %4392
        %v4394 = vsel %vm4099, %v4037, 0.0
        %4395 = vadd.xlane.f32.xlu0 %v4394
        %v4396 = vpop.xlane.xlu0 %4395
        %v4397 = vsel %vm4099, %v4038, 0.0
        %4398 = vadd.xlane.f32.xlu0 %v4397
        %v4399 = vpop.xlane.xlu0 %4398
        %v4400 = vsel %vm4099, %v4039, 0.0
        %4401 = vadd.xlane.f32.xlu0 %v4400
        %v4402 = vpop.xlane.xlu0 %4401
        %v4403 = vsel %vm4099, %v4040, 0.0
        %4404 = vadd.xlane.f32.xlu0 %v4403
        %v4405 = vpop.xlane.xlu0 %4404
        %v4406 = vsel %vm4099, %v4041, 0.0
        %4407 = vadd.xlane.f32.xlu0 %v4406
        %v4408 = vpop.xlane.xlu0 %4407
        %v4409 = vsel %vm4099, %v4042, 0.0
        %4410 = vadd.xlane.f32.xlu0 %v4409
        %v4411 = vpop.xlane.xlu0 %4410
        %v4412 = vsel %vm4099, %v4043, 0.0
        %4413 = vadd.xlane.f32.xlu0 %v4412
        %v4414 = vpop.xlane.xlu0 %4413
        %v4415 = vsel %vm4099, %v4044, 0.0
        %4416 = vadd.xlane.f32.xlu0 %v4415
        %v4417 = vpop.xlane.xlu0 %4416
        %v4418 = vsel %vm4099, %v4045, 0.0
        %4419 = vadd.xlane.f32.xlu0 %v4418
        %v4420 = vpop.xlane.xlu0 %4419
        %v4421 = vsel %vm4099, %v4046, 0.0
        %4422 = vadd.xlane.f32.xlu0 %v4421
        %v4423 = vpop.xlane.xlu0 %4422
        %v4424 = vsel %vm4099, %v4047, 0.0
        %4425 = vadd.xlane.f32.xlu0 %v4424
        %v4426 = vpop.xlane.xlu0 %4425
        %v4427 = vsel %vm4099, %v4048, 0.0
        %4428 = vadd.xlane.f32.xlu0 %v4427
        %v4429 = vpop.xlane.xlu0 %4428
        %v4430 = vsel %vm4099, %v4049, 0.0
        %4431 = vadd.xlane.f32.xlu0 %v4430
        %v4432 = vpop.xlane.xlu0 %4431
        %v4433 = vsel %vm4099, %v4050, 0.0
        %4434 = vadd.xlane.f32.xlu0 %v4433
        %v4435 = vpop.xlane.xlu0 %4434
        %v4436 = vsel %vm4099, %v4051, 0.0
        %4437 = vadd.xlane.f32.xlu0 %v4436
        %v4438 = vpop.xlane.xlu0 %4437
        %v4439 = vsel %vm4099, %v4052, 0.0
        %4440 = vadd.xlane.f32.xlu0 %v4439
        %v4441 = vpop.xlane.xlu0 %4440
        %v4442 = vsel %vm4099, %v4053, 0.0
        %4443 = vadd.xlane.f32.xlu0 %v4442
        %v4444 = vpop.xlane.xlu0 %4443
        %v4445 = vsel %vm4099, %v4054, 0.0
        %4446 = vadd.xlane.f32.xlu0 %v4445
        %v4447 = vpop.xlane.xlu0 %4446
        %v4448 = vsel %vm4099, %v4055, 0.0
        %4449 = vadd.xlane.f32.xlu0 %v4448
        %v4450 = vpop.xlane.xlu0 %4449
        %v4451 = vsel %vm4099, %v4056, 0.0
        %4452 = vadd.xlane.f32.xlu0 %v4451
        %v4453 = vpop.xlane.xlu0 %4452
        %v4454 = vsel %vm4099, %v4057, 0.0
        %4455 = vadd.xlane.f32.xlu0 %v4454
        %v4456 = vpop.xlane.xlu0 %4455
        %v4457 = vsel %vm4099, %v4058, 0.0
        %4458 = vadd.xlane.f32.xlu0 %v4457
        %v4459 = vpop.xlane.xlu0 %4458
        %v4460 = vsel %vm4099, %v4059, 0.0
        %4461 = vadd.xlane.f32.xlu0 %v4460
        %v4462 = vpop.xlane.xlu0 %4461
        %v4463 = vsel %vm4099, %v4060, 0.0
        %4464 = vadd.xlane.f32.xlu0 %v4463
        %v4465 = vpop.xlane.xlu0 %4464
        %v4466 = vsel %vm4099, %v4061, 0.0
        %4467 = vadd.xlane.f32.xlu0 %v4466
        %v4468 = vpop.xlane.xlu0 %4467
        %v4469 = vsel %vm4099, %v4062, 0.0
        %4470 = vadd.xlane.f32.xlu0 %v4469
        %v4471 = vpop.xlane.xlu0 %4470
        %v4472 = vsel %vm4099, %v4063, 0.0
        %4473 = vadd.xlane.f32.xlu0 %v4472
        %v4474 = vpop.xlane.xlu0 %4473
        %v4475 = vsel %vm4099, %v4064, 0.0
        %4476 = vadd.xlane.f32.xlu0 %v4475
        %v4477 = vpop.xlane.xlu0 %4476
        %v4478 = vsel %vm4099, %v4065, 0.0
        %4479 = vadd.xlane.f32.xlu0 %v4478
        %v4480 = vpop.xlane.xlu0 %4479
        %v4481 = vsel %vm4099, %v4066, 0.0
        %4482 = vadd.xlane.f32.xlu0 %v4481
        %v4483 = vpop.xlane.xlu0 %4482
        %v4484 = vsel %vm4099, %v4067, 0.0
        %4485 = vadd.xlane.f32.xlu0 %v4484
        %v4486 = vpop.xlane.xlu0 %4485
        %v4487 = vsel %vm4099, %v4068, 0.0
        %4488 = vadd.xlane.f32.xlu0 %v4487
        %v4489 = vpop.xlane.xlu0 %4488
        %v4490 = vsel %vm4099, %v4069, 0.0
        %4491 = vadd.xlane.f32.xlu0 %v4490
        %v4492 = vpop.xlane.xlu0 %4491
        %v4493 = vsel %vm4099, %v4070, 0.0
        %4494 = vadd.xlane.f32.xlu0 %v4493
        %v4495 = vpop.xlane.xlu0 %4494
        %v4496 = vsel %vm4099, %v4071, 0.0
        %4497 = vadd.xlane.f32.xlu0 %v4496
        %v4498 = vpop.xlane.xlu0 %4497
        %v4499 = vsel %vm4099, %v4072, 0.0
        %4500 = vadd.xlane.f32.xlu0 %v4499
        %v4501 = vpop.xlane.xlu0 %4500
        %v4502 = vsel %vm4099, %v4073, 0.0
        %4503 = vadd.xlane.f32.xlu0 %v4502
        %v4504 = vpop.xlane.xlu0 %4503
        %v4505 = vsel %vm4099, %v4074, 0.0
        %4506 = vadd.xlane.f32.xlu0 %v4505
        %v4507 = vpop.xlane.xlu0 %4506
        %v4508 = vsel %vm4099, %v4075, 0.0
        %4509 = vadd.xlane.f32.xlu0 %v4508
        %v4510 = vpop.xlane.xlu0 %4509
        %v4511 = vsel %vm4099, %v4076, 0.0
        %4512 = vadd.xlane.f32.xlu0 %v4511
        %v4513 = vpop.xlane.xlu0 %4512
        %v4514 = vsel %vm4099, %v4077, 0.0
        %4515 = vadd.xlane.f32.xlu0 %v4514
        %v4516 = vpop.xlane.xlu0 %4515
        %v4517 = vsel %vm4099, %v4078, 0.0
        %4518 = vadd.xlane.f32.xlu0 %v4517
        %v4519 = vpop.xlane.xlu0 %4518
        %v4520 = vsel %vm4099, %v4079, 0.0
        %4521 = vadd.xlane.f32.xlu0 %v4520
        %v4522 = vpop.xlane.xlu0 %4521
        %v4523 = vsel %vm4099, %v4080, 0.0
        %4524 = vadd.xlane.f32.xlu0 %v4523
        %v4525 = vpop.xlane.xlu0 %4524
        %v4526 = vsel %vm4099, %v4081, 0.0
        %4527 = vadd.xlane.f32.xlu0 %v4526
        %v4528 = vpop.xlane.xlu0 %4527
        %v4529 = vsel %vm4099, %v4082, 0.0
        %4530 = vadd.xlane.f32.xlu0 %v4529
        %v4531 = vpop.xlane.xlu0 %4530
        %v4532 = vsel %vm4099, %v4083, 0.0
        %4533 = vadd.xlane.f32.xlu0 %v4532
        %v4534 = vpop.xlane.xlu0 %4533
        %v4535 = vsel %vm4099, %v4084, 0.0
        %4536 = vadd.xlane.f32.xlu0 %v4535
        %v4537 = vpop.xlane.xlu0 %4536
        %v4538 = vsel %vm4099, %v4085, 0.0
        %4539 = vadd.xlane.f32.xlu0 %v4538
        %v4540 = vpop.xlane.xlu0 %4539
        %v4541 = vsel %vm4099, %v4086, 0.0
        %4542 = vadd.xlane.f32.xlu0 %v4541
        %v4543 = vpop.xlane.xlu0 %4542
        %v4544 = vsel %vm4099, %v4087, 0.0
        %4545 = vadd.xlane.f32.xlu0 %v4544
        %v4546 = vpop.xlane.xlu0 %4545
        %v4547 = vsel %vm4099, %v4088, 0.0
        %4548 = vadd.xlane.f32.xlu0 %v4547
        %v4549 = vpop.xlane.xlu0 %4548
        %v4550 = vsel %vm4099, %v4089, 0.0
        %4551 = vadd.xlane.f32.xlu0 %v4550
        %v4552 = vpop.xlane.xlu0 %4551
        %v4553 = vsel %vm4099, %v4090, 0.0
        %4554 = vadd.xlane.f32.xlu0 %v4553
        %v4555 = vpop.xlane.xlu0 %4554
        %v4556 = vsel %vm4099, %v4091, 0.0
        %4557 = vadd.xlane.f32.xlu0 %v4556
        %v4558 = vpop.xlane.xlu0 %4557
        %v4559 = vsel %vm4099, %v4092, 0.0
        %4560 = vadd.xlane.f32.xlu0 %v4559
        %v4561 = vpop.xlane.xlu0 %4560
        %v4562 = vsel %vm4099, %v4093, 0.0
        %4563 = vadd.xlane.f32.xlu0 %v4562
        %v4564 = vpop.xlane.xlu0 %4563
        %v4565 = vsel %vm4099, %v4094, 0.0
        %4566 = vadd.xlane.f32.xlu0 %v4565
        %v4567 = vpop.xlane.xlu0 %4566
        %v4568 = vsel %vm4099, %v4095, 0.0
        %4569 = vadd.xlane.f32.xlu0 %v4568
        %v4570 = vpop.xlane.xlu0 %4569
        %v4571 = vsel %vm4099, %v4096, 0.0
        %4572 = vadd.xlane.f32.xlu0 %v4571
        %v4573 = vpop.xlane.xlu0 %4572
        %v4574 = vsel %vm4099, %v4097, 0.0
        %4575 = vadd.xlane.f32.xlu0 %v4574
        %v4576 = vpop.xlane.xlu0 %4575
        %v4577 = vsel %vm4099, %v4098, 0.0
        %4578 = vadd.xlane.f32.xlu0 %v4577
        %v4579 = vpop.xlane.xlu0 %4578
        %v4580 = vperm.slane %v1073, 0
        %v4581 = vadd.f32 %v4102, %v4580
        %v4582 = vadd.f32 %v4105, %v4580
        %v4583 = vadd.f32 %v4108, %v4580
        %v4584 = vadd.f32 %v4111, %v4580
        %v4585 = vadd.f32 %v4114, %v4580
        %v4586 = vadd.f32 %v4117, %v4580
        %v4587 = vadd.f32 %v4120, %v4580
        %v4588 = vadd.f32 %v4123, %v4580
        %v4589 = vadd.f32 %v4126, %v4580
        %v4590 = vadd.f32 %v4129, %v4580
        %v4591 = vadd.f32 %v4132, %v4580
        %v4592 = vadd.f32 %v4135, %v4580
        %v4593 = vadd.f32 %v4138, %v4580
        %v4594 = vadd.f32 %v4141, %v4580
        %v4595 = vadd.f32 %v4144, %v4580
        %v4596 = vadd.f32 %v4147, %v4580
        %v4597 = vadd.f32 %v4150, %v4580
        %v4598 = vadd.f32 %v4153, %v4580
        %v4599 = vadd.f32 %v4156, %v4580
        %v4600 = vadd.f32 %v4159, %v4580
        %v4601 = vadd.f32 %v4162, %v4580
        %v4602 = vadd.f32 %v4165, %v4580
        %v4603 = vadd.f32 %v4168, %v4580
        %v4604 = vadd.f32 %v4171, %v4580
        %v4605 = vadd.f32 %v4174, %v4580
        %v4606 = vadd.f32 %v4177, %v4580
        %v4607 = vadd.f32 %v4180, %v4580
        %v4608 = vadd.f32 %v4183, %v4580
        %v4609 = vadd.f32 %v4186, %v4580
        %v4610 = vadd.f32 %v4189, %v4580
        %v4611 = vadd.f32 %v4192, %v4580
        %v4612 = vadd.f32 %v4195, %v4580
        %v4613 = vadd.f32 %v4198, %v4580
        %v4614 = vadd.f32 %v4201, %v4580
        %v4615 = vadd.f32 %v4204, %v4580
        %v4616 = vadd.f32 %v4207, %v4580
        %v4617 = vadd.f32 %v4210, %v4580
        %v4618 = vadd.f32 %v4213, %v4580
        %v4619 = vadd.f32 %v4216, %v4580
        %v4620 = vadd.f32 %v4219, %v4580
        %v4621 = vadd.f32 %v4222, %v4580
        %v4622 = vadd.f32 %v4225, %v4580
        %v4623 = vadd.f32 %v4228, %v4580
        %v4624 = vadd.f32 %v4231, %v4580
        %v4625 = vadd.f32 %v4234, %v4580
        %v4626 = vadd.f32 %v4237, %v4580
        %v4627 = vadd.f32 %v4240, %v4580
        %v4628 = vadd.f32 %v4243, %v4580
        %v4629 = vadd.f32 %v4246, %v4580
        %v4630 = vadd.f32 %v4249, %v4580
        %v4631 = vadd.f32 %v4252, %v4580
        %v4632 = vadd.f32 %v4255, %v4580
        %v4633 = vadd.f32 %v4258, %v4580
        %v4634 = vadd.f32 %v4261, %v4580
        %v4635 = vadd.f32 %v4264, %v4580
        %v4636 = vadd.f32 %v4267, %v4580
        %v4637 = vadd.f32 %v4270, %v4580
        %v4638 = vadd.f32 %v4273, %v4580
        %v4639 = vadd.f32 %v4276, %v4580
        %v4640 = vadd.f32 %v4279, %v4580
        %v4641 = vadd.f32 %v4282, %v4580
        %v4642 = vadd.f32 %v4285, %v4580
        %v4643 = vadd.f32 %v4288, %v4580
        %v4644 = vadd.f32 %v4291, %v4580
        %v4645 = vadd.f32 %v4294, %v4580
        %v4646 = vadd.f32 %v4297, %v4580
        %v4647 = vadd.f32 %v4300, %v4580
        %v4648 = vadd.f32 %v4303, %v4580
        %v4649 = vadd.f32 %v4306, %v4580
        %v4650 = vadd.f32 %v4309, %v4580
        %v4651 = vadd.f32 %v4312, %v4580
        %v4652 = vadd.f32 %v4315, %v4580
        %v4653 = vadd.f32 %v4318, %v4580
        %v4654 = vadd.f32 %v4321, %v4580
        %v4655 = vadd.f32 %v4324, %v4580
        %v4656 = vadd.f32 %v4327, %v4580
        %v4657 = vadd.f32 %v4330, %v4580
        %v4658 = vadd.f32 %v4333, %v4580
        %v4659 = vadd.f32 %v4336, %v4580
        %v4660 = vadd.f32 %v4339, %v4580
        %v4661 = vadd.f32 %v4342, %v4580
        %v4662 = vadd.f32 %v4345, %v4580
        %v4663 = vadd.f32 %v4348, %v4580
        %v4664 = vadd.f32 %v4351, %v4580
        %v4665 = vadd.f32 %v4354, %v4580
        %v4666 = vadd.f32 %v4357, %v4580
        %v4667 = vadd.f32 %v4360, %v4580
        %v4668 = vadd.f32 %v4363, %v4580
        %v4669 = vadd.f32 %v4366, %v4580
        %v4670 = vadd.f32 %v4369, %v4580
        %v4671 = vadd.f32 %v4372, %v4580
        %v4672 = vadd.f32 %v4375, %v4580
        %v4673 = vadd.f32 %v4378, %v4580
        %v4674 = vadd.f32 %v4381, %v4580
        %v4675 = vadd.f32 %v4384, %v4580
        %v4676 = vadd.f32 %v4387, %v4580
        %v4677 = vadd.f32 %v4390, %v4580
        %v4678 = vadd.f32 %v4393, %v4580
        %v4679 = vadd.f32 %v4396, %v4580
        %v4680 = vadd.f32 %v4399, %v4580
        %v4681 = vadd.f32 %v4402, %v4580
        %v4682 = vadd.f32 %v4405, %v4580
        %v4683 = vadd.f32 %v4408, %v4580
        %v4684 = vadd.f32 %v4411, %v4580
        %v4685 = vadd.f32 %v4414, %v4580
        %v4686 = vadd.f32 %v4417, %v4580
        %v4687 = vadd.f32 %v4420, %v4580
        %v4688 = vadd.f32 %v4423, %v4580
        %v4689 = vadd.f32 %v4426, %v4580
        %v4690 = vadd.f32 %v4429, %v4580
        %v4691 = vadd.f32 %v4432, %v4580
        %v4692 = vadd.f32 %v4435, %v4580
        %v4693 = vadd.f32 %v4438, %v4580
        %v4694 = vadd.f32 %v4441, %v4580
        %v4695 = vadd.f32 %v4444, %v4580
        %v4696 = vadd.f32 %v4447, %v4580
        %v4697 = vadd.f32 %v4450, %v4580
        %v4698 = vadd.f32 %v4453, %v4580
        %v4699 = vadd.f32 %v4456, %v4580
        %v4700 = vadd.f32 %v4459, %v4580
        %v4701 = vadd.f32 %v4462, %v4580
        %v4702 = vadd.f32 %v4465, %v4580
        %v4703 = vadd.f32 %v4468, %v4580
        %v4704 = vadd.f32 %v4471, %v4580
        %v4705 = vadd.f32 %v4474, %v4580
        %v4706 = vadd.f32 %v4477, %v4580
        %v4707 = vadd.f32 %v4480, %v4580
        %v4708 = vadd.f32 %v4483, %v4580
        %v4709 = vadd.f32 %v4486, %v4580
        %v4710 = vadd.f32 %v4489, %v4580
        %v4711 = vadd.f32 %v4492, %v4580
        %v4712 = vadd.f32 %v4495, %v4580
        %v4713 = vadd.f32 %v4498, %v4580
        %v4714 = vadd.f32 %v4501, %v4580
        %v4715 = vadd.f32 %v4504, %v4580
        %v4716 = vadd.f32 %v4507, %v4580
        %v4717 = vadd.f32 %v4510, %v4580
        %v4718 = vadd.f32 %v4513, %v4580
        %v4719 = vadd.f32 %v4516, %v4580
        %v4720 = vadd.f32 %v4519, %v4580
        %v4721 = vadd.f32 %v4522, %v4580
        %v4722 = vadd.f32 %v4525, %v4580
        %v4723 = vadd.f32 %v4528, %v4580
        %v4724 = vadd.f32 %v4531, %v4580
        %v4725 = vadd.f32 %v4534, %v4580
        %v4726 = vadd.f32 %v4537, %v4580
        %v4727 = vadd.f32 %v4540, %v4580
        %v4728 = vadd.f32 %v4543, %v4580
        %v4729 = vadd.f32 %v4546, %v4580
        %v4730 = vadd.f32 %v4549, %v4580
        %v4731 = vadd.f32 %v4552, %v4580
        %v4732 = vadd.f32 %v4555, %v4580
        %v4733 = vadd.f32 %v4558, %v4580
        %v4734 = vadd.f32 %v4561, %v4580
        %v4735 = vadd.f32 %v4564, %v4580
        %v4736 = vadd.f32 %v4567, %v4580
        %v4737 = vadd.f32 %v4570, %v4580
        %v4738 = vadd.f32 %v4573, %v4580
        %v4739 = vadd.f32 %v4576, %v4580
        %v4740 = vadd.f32 %v4579, %v4580
        %v4741 = vunpack.c.l.bf16 %v1076
        %v4742 = vunpack.c.l.bf16 %v1077
        %v4743 = vunpack.c.l.bf16 %v1078
        %v4744 = vunpack.c.l.bf16 %v1079
        %v4745 = vunpack.c.l.bf16 %v1080
        %v4746 = vunpack.c.l.bf16 %v1081
        %v4747 = vunpack.c.l.bf16 %v1082
        %v4748 = vunpack.c.l.bf16 %v1083
        %v4749 = vunpack.c.l.bf16 %v1084
        %v4750 = vunpack.c.l.bf16 %v1085
        %v4751 = vunpack.c.l.bf16 %v1086
        %v4752 = vunpack.c.l.bf16 %v1087
        %v4753 = vunpack.c.l.bf16 %v1088
        %v4754 = vunpack.c.l.bf16 %v1089
        %v4755 = vunpack.c.l.bf16 %v1090
        %v4756 = vunpack.c.l.bf16 %v1091
        %v4757 = vunpack.c.l.bf16 %v1092
        %v4758 = vunpack.c.l.bf16 %v1093
        %v4759 = vunpack.c.l.bf16 %v1094
        %v4760 = vunpack.c.l.bf16 %v1095
        %v4761 = vunpack.c.l.bf16 %v1096
        %v4762 = vunpack.c.l.bf16 %v1097
        %v4763 = vunpack.c.l.bf16 %v1098
        %v4764 = vunpack.c.l.bf16 %v1099
        %v4765 = vunpack.c.l.bf16 %v1100
        %v4766 = vunpack.c.l.bf16 %v1101
        %v4767 = vunpack.c.l.bf16 %v1102
        %v4768 = vunpack.c.l.bf16 %v1103
        %v4769 = vunpack.c.l.bf16 %v1104
        %v4770 = vunpack.c.l.bf16 %v1105
        %v4771 = vunpack.c.l.bf16 %v1106
        %v4772 = vunpack.c.l.bf16 %v1107
        %v4773 = vunpack.c.l.bf16 %v1108
        %v4774 = vunpack.c.l.bf16 %v1109
        %v4775 = vunpack.c.l.bf16 %v1110
        %v4776 = vunpack.c.l.bf16 %v1111
        %v4777 = vunpack.c.l.bf16 %v1112
        %v4778 = vunpack.c.l.bf16 %v1113
        %v4779 = vunpack.c.l.bf16 %v1114
        %v4780 = vunpack.c.l.bf16 %v1115
        %v4781 = vunpack.c.l.bf16 %v1116
        %v4782 = vunpack.c.l.bf16 %v1117
        %v4783 = vunpack.c.l.bf16 %v1118
        %v4784 = vunpack.c.l.bf16 %v1119
        %v4785 = vunpack.c.l.bf16 %v1120
        %v4786 = vunpack.c.l.bf16 %v1121
        %v4787 = vunpack.c.l.bf16 %v1122
        %v4788 = vunpack.c.l.bf16 %v1123
        %v4789 = vunpack.c.l.bf16 %v1124
        %v4790 = vunpack.c.l.bf16 %v1125
        %v4791 = vunpack.c.l.bf16 %v1126
        %v4792 = vunpack.c.l.bf16 %v1127
        %v4793 = vunpack.c.l.bf16 %v1128
        %v4794 = vunpack.c.l.bf16 %v1129
        %v4795 = vunpack.c.l.bf16 %v1130
        %v4796 = vunpack.c.l.bf16 %v1131
        %v4797 = vunpack.c.l.bf16 %v1132
        %v4798 = vunpack.c.l.bf16 %v1133
        %v4799 = vunpack.c.l.bf16 %v1134
        %v4800 = vunpack.c.l.bf16 %v1135
        %v4801 = vunpack.c.l.bf16 %v1136
        %v4802 = vunpack.c.l.bf16 %v1137
        %v4803 = vunpack.c.l.bf16 %v1138
        %v4804 = vunpack.c.l.bf16 %v1139
        %v4805 = vunpack.c.l.bf16 %v1140
        %v4806 = vunpack.c.l.bf16 %v1141
        %v4807 = vunpack.c.l.bf16 %v1142
        %v4808 = vunpack.c.l.bf16 %v1143
        %v4809 = vunpack.c.l.bf16 %v1144
        %v4810 = vunpack.c.l.bf16 %v1145
        %v4811 = vunpack.c.l.bf16 %v1146
        %v4812 = vunpack.c.l.bf16 %v1147
        %v4813 = vunpack.c.l.bf16 %v1148
        %v4814 = vunpack.c.l.bf16 %v1149
        %v4815 = vunpack.c.l.bf16 %v1150
        %v4816 = vunpack.c.l.bf16 %v1151
        %v4817 = vunpack.c.l.bf16 %v1152
        %v4818 = vunpack.c.l.bf16 %v1153
        %v4819 = vunpack.c.l.bf16 %v1154
        %v4820 = vunpack.c.l.bf16 %v1155
        %v4821 = vunpack.c.l.bf16 %v1156
        %v4822 = vunpack.c.l.bf16 %v1157
        %v4823 = vunpack.c.l.bf16 %v1158
        %v4824 = vunpack.c.l.bf16 %v1159
        %v4825 = vunpack.c.l.bf16 %v1160
        %v4826 = vunpack.c.l.bf16 %v1161
        %v4827 = vunpack.c.l.bf16 %v1162
        %v4828 = vunpack.c.l.bf16 %v1163
        %v4829 = vunpack.c.l.bf16 %v1164
        %v4830 = vunpack.c.l.bf16 %v1165
        %v4831 = vunpack.c.l.bf16 %v1166
        %v4832 = vunpack.c.l.bf16 %v1167
        %v4833 = vunpack.c.l.bf16 %v1168
        %v4834 = vunpack.c.l.bf16 %v1169
        %v4835 = vunpack.c.l.bf16 %v1170
        %v4836 = vunpack.c.l.bf16 %v1171
        %v4837 = vunpack.c.l.bf16 %v1172
        %v4838 = vunpack.c.l.bf16 %v1173
        %v4839 = vunpack.c.l.bf16 %v1174
        %v4840 = vunpack.c.l.bf16 %v1175
        %v4841 = vunpack.c.l.bf16 %v1176
        %v4842 = vunpack.c.l.bf16 %v1177
        %v4843 = vunpack.c.l.bf16 %v1178
        %v4844 = vunpack.c.l.bf16 %v1179
        %v4845 = vunpack.c.l.bf16 %v1180
        %v4846 = vunpack.c.l.bf16 %v1181
        %v4847 = vunpack.c.l.bf16 %v1182
        %v4848 = vunpack.c.l.bf16 %v1183
        %v4849 = vunpack.c.l.bf16 %v1184
        %v4850 = vunpack.c.l.bf16 %v1185
        %v4851 = vunpack.c.l.bf16 %v1186
        %v4852 = vunpack.c.l.bf16 %v1187
        %v4853 = vunpack.c.l.bf16 %v1188
        %v4854 = vunpack.c.l.bf16 %v1189
        %v4855 = vunpack.c.l.bf16 %v1190
        %v4856 = vunpack.c.l.bf16 %v1191
        %v4857 = vunpack.c.l.bf16 %v1192
        %v4858 = vunpack.c.l.bf16 %v1193
        %v4859 = vunpack.c.l.bf16 %v1194
        %v4860 = vunpack.c.l.bf16 %v1195
        %v4861 = vunpack.c.l.bf16 %v1196
        %v4862 = vunpack.c.l.bf16 %v1197
        %v4863 = vunpack.c.l.bf16 %v1198
        %v4864 = vunpack.c.l.bf16 %v1199
        %v4865 = vunpack.c.l.bf16 %v1200
        %v4866 = vunpack.c.l.bf16 %v1201
        %v4867 = vunpack.c.l.bf16 %v1202
        %v4868 = vunpack.c.l.bf16 %v1203
        %v4869 = vunpack.c.l.bf16 %v1204
        %v4870 = vunpack.c.l.bf16 %v1205
        %v4871 = vunpack.c.l.bf16 %v1206
        %v4872 = vunpack.c.l.bf16 %v1207
        %v4873 = vunpack.c.l.bf16 %v1208
        %v4874 = vunpack.c.l.bf16 %v1209
        %v4875 = vunpack.c.l.bf16 %v1210
        %v4876 = vunpack.c.l.bf16 %v1211
        %v4877 = vunpack.c.l.bf16 %v1212
        %v4878 = vunpack.c.l.bf16 %v1213
        %v4879 = vunpack.c.l.bf16 %v1214
        %v4880 = vunpack.c.l.bf16 %v1215
        %v4881 = vunpack.c.l.bf16 %v1216
        %v4882 = vunpack.c.l.bf16 %v1217
        %v4883 = vunpack.c.l.bf16 %v1218
        %v4884 = vunpack.c.l.bf16 %v1219
        %v4885 = vunpack.c.l.bf16 %v1220
        %v4886 = vunpack.c.l.bf16 %v1221
        %v4887 = vunpack.c.l.bf16 %v1222
        %v4888 = vunpack.c.l.bf16 %v1223
        %v4889 = vunpack.c.l.bf16 %v1224
        %v4890 = vunpack.c.l.bf16 %v1225
        %v4891 = vunpack.c.l.bf16 %v1226
        %v4892 = vunpack.c.l.bf16 %v1227
        %v4893 = vunpack.c.l.bf16 %v1228
        %v4894 = vunpack.c.l.bf16 %v1229
        %v4895 = vunpack.c.l.bf16 %v1230
        %v4896 = vunpack.c.l.bf16 %v1231
        %v4897 = vunpack.c.l.bf16 %v1232
        %v4898 = vunpack.c.l.bf16 %v1233
        %v4899 = vunpack.c.l.bf16 %v1234
        %v4900 = vunpack.c.l.bf16 %v1235
        %v4901 = vmul.f32 %v4741, %v4741
        %v4902 = vmul.f32 %v4742, %v4742
        %v4903 = vmul.f32 %v4743, %v4743
        %v4904 = vmul.f32 %v4744, %v4744
        %v4905 = vmul.f32 %v4745, %v4745
        %v4906 = vmul.f32 %v4746, %v4746
        %v4907 = vmul.f32 %v4747, %v4747
        %v4908 = vmul.f32 %v4748, %v4748
        %v4909 = vmul.f32 %v4749, %v4749
        %v4910 = vmul.f32 %v4750, %v4750
        %v4911 = vmul.f32 %v4751, %v4751
        %v4912 = vmul.f32 %v4752, %v4752
        %v4913 = vmul.f32 %v4753, %v4753
        %v4914 = vmul.f32 %v4754, %v4754
        %v4915 = vmul.f32 %v4755, %v4755
        %v4916 = vmul.f32 %v4756, %v4756
        %v4917 = vmul.f32 %v4757, %v4757
        %v4918 = vmul.f32 %v4758, %v4758
        %v4919 = vmul.f32 %v4759, %v4759
        %v4920 = vmul.f32 %v4760, %v4760
        %v4921 = vmul.f32 %v4761, %v4761
        %v4922 = vmul.f32 %v4762, %v4762
        %v4923 = vmul.f32 %v4763, %v4763
        %v4924 = vmul.f32 %v4764, %v4764
        %v4925 = vmul.f32 %v4765, %v4765
        %v4926 = vmul.f32 %v4766, %v4766
        %v4927 = vmul.f32 %v4767, %v4767
        %v4928 = vmul.f32 %v4768, %v4768
        %v4929 = vmul.f32 %v4769, %v4769
        %v4930 = vmul.f32 %v4770, %v4770
        %v4931 = vmul.f32 %v4771, %v4771
        %v4932 = vmul.f32 %v4772, %v4772
        %v4933 = vmul.f32 %v4773, %v4773
        %v4934 = vmul.f32 %v4774, %v4774
        %v4935 = vmul.f32 %v4775, %v4775
        %v4936 = vmul.f32 %v4776, %v4776
        %v4937 = vmul.f32 %v4777, %v4777
        %v4938 = vmul.f32 %v4778, %v4778
        %v4939 = vmul.f32 %v4779, %v4779
        %v4940 = vmul.f32 %v4780, %v4780
        %v4941 = vmul.f32 %v4781, %v4781
        %v4942 = vmul.f32 %v4782, %v4782
        %v4943 = vmul.f32 %v4783, %v4783
        %v4944 = vmul.f32 %v4784, %v4784
        %v4945 = vmul.f32 %v4785, %v4785
        %v4946 = vmul.f32 %v4786, %v4786
        %v4947 = vmul.f32 %v4787, %v4787
        %v4948 = vmul.f32 %v4788, %v4788
        %v4949 = vmul.f32 %v4789, %v4789
        %v4950 = vmul.f32 %v4790, %v4790
        %v4951 = vmul.f32 %v4791, %v4791
        %v4952 = vmul.f32 %v4792, %v4792
        %v4953 = vmul.f32 %v4793, %v4793
        %v4954 = vmul.f32 %v4794, %v4794
        %v4955 = vmul.f32 %v4795, %v4795
        %v4956 = vmul.f32 %v4796, %v4796
        %v4957 = vmul.f32 %v4797, %v4797
        %v4958 = vmul.f32 %v4798, %v4798
        %v4959 = vmul.f32 %v4799, %v4799
        %v4960 = vmul.f32 %v4800, %v4800
        %v4961 = vmul.f32 %v4801, %v4801
        %v4962 = vmul.f32 %v4802, %v4802
        %v4963 = vmul.f32 %v4803, %v4803
        %v4964 = vmul.f32 %v4804, %v4804
        %v4965 = vmul.f32 %v4805, %v4805
        %v4966 = vmul.f32 %v4806, %v4806
        %v4967 = vmul.f32 %v4807, %v4807
        %v4968 = vmul.f32 %v4808, %v4808
        %v4969 = vmul.f32 %v4809, %v4809
        %v4970 = vmul.f32 %v4810, %v4810
        %v4971 = vmul.f32 %v4811, %v4811
        %v4972 = vmul.f32 %v4812, %v4812
        %v4973 = vmul.f32 %v4813, %v4813
        %v4974 = vmul.f32 %v4814, %v4814
        %v4975 = vmul.f32 %v4815, %v4815
        %v4976 = vmul.f32 %v4816, %v4816
        %v4977 = vmul.f32 %v4817, %v4817
        %v4978 = vmul.f32 %v4818, %v4818
        %v4979 = vmul.f32 %v4819, %v4819
        %v4980 = vmul.f32 %v4820, %v4820
        %v4981 = vmul.f32 %v4821, %v4821
        %v4982 = vmul.f32 %v4822, %v4822
        %v4983 = vmul.f32 %v4823, %v4823
        %v4984 = vmul.f32 %v4824, %v4824
        %v4985 = vmul.f32 %v4825, %v4825
        %v4986 = vmul.f32 %v4826, %v4826
        %v4987 = vmul.f32 %v4827, %v4827
        %v4988 = vmul.f32 %v4828, %v4828
        %v4989 = vmul.f32 %v4829, %v4829
        %v4990 = vmul.f32 %v4830, %v4830
        %v4991 = vmul.f32 %v4831, %v4831
        %v4992 = vmul.f32 %v4832, %v4832
        %v4993 = vmul.f32 %v4833, %v4833
        %v4994 = vmul.f32 %v4834, %v4834
        %v4995 = vmul.f32 %v4835, %v4835
        %v4996 = vmul.f32 %v4836, %v4836
        %v4997 = vmul.f32 %v4837, %v4837
        %v4998 = vmul.f32 %v4838, %v4838
        %v4999 = vmul.f32 %v4839, %v4839
        %v5000 = vmul.f32 %v4840, %v4840
        %v5001 = vmul.f32 %v4841, %v4841
        %v5002 = vmul.f32 %v4842, %v4842
        %v5003 = vmul.f32 %v4843, %v4843
        %v5004 = vmul.f32 %v4844, %v4844
        %v5005 = vmul.f32 %v4845, %v4845
        %v5006 = vmul.f32 %v4846, %v4846
        %v5007 = vmul.f32 %v4847, %v4847
        %v5008 = vmul.f32 %v4848, %v4848
        %v5009 = vmul.f32 %v4849, %v4849
        %v5010 = vmul.f32 %v4850, %v4850
        %v5011 = vmul.f32 %v4851, %v4851
        %v5012 = vmul.f32 %v4852, %v4852
        %v5013 = vmul.f32 %v4853, %v4853
        %v5014 = vmul.f32 %v4854, %v4854
        %v5015 = vmul.f32 %v4855, %v4855
        %v5016 = vmul.f32 %v4856, %v4856
        %v5017 = vmul.f32 %v4857, %v4857
        %v5018 = vmul.f32 %v4858, %v4858
        %v5019 = vmul.f32 %v4859, %v4859
        %v5020 = vmul.f32 %v4860, %v4860
        %v5021 = vmul.f32 %v4861, %v4861
        %v5022 = vmul.f32 %v4862, %v4862
        %v5023 = vmul.f32 %v4863, %v4863
        %v5024 = vmul.f32 %v4864, %v4864
        %v5025 = vmul.f32 %v4865, %v4865
        %v5026 = vmul.f32 %v4866, %v4866
        %v5027 = vmul.f32 %v4867, %v4867
        %v5028 = vmul.f32 %v4868, %v4868
        %v5029 = vmul.f32 %v4869, %v4869
        %v5030 = vmul.f32 %v4870, %v4870
        %v5031 = vmul.f32 %v4871, %v4871
        %v5032 = vmul.f32 %v4872, %v4872
        %v5033 = vmul.f32 %v4873, %v4873
        %v5034 = vmul.f32 %v4874, %v4874
        %v5035 = vmul.f32 %v4875, %v4875
        %v5036 = vmul.f32 %v4876, %v4876
        %v5037 = vmul.f32 %v4877, %v4877
        %v5038 = vmul.f32 %v4878, %v4878
        %v5039 = vmul.f32 %v4879, %v4879
        %v5040 = vmul.f32 %v4880, %v4880
        %v5041 = vmul.f32 %v4881, %v4881
        %v5042 = vmul.f32 %v4882, %v4882
        %v5043 = vmul.f32 %v4883, %v4883
        %v5044 = vmul.f32 %v4884, %v4884
        %v5045 = vmul.f32 %v4885, %v4885
        %v5046 = vmul.f32 %v4886, %v4886
        %v5047 = vmul.f32 %v4887, %v4887
        %v5048 = vmul.f32 %v4888, %v4888
        %v5049 = vmul.f32 %v4889, %v4889
        %v5050 = vmul.f32 %v4890, %v4890
        %v5051 = vmul.f32 %v4891, %v4891
        %v5052 = vmul.f32 %v4892, %v4892
        %v5053 = vmul.f32 %v4893, %v4893
        %v5054 = vmul.f32 %v4894, %v4894
        %v5055 = vmul.f32 %v4895, %v4895
        %v5056 = vmul.f32 %v4896, %v4896
        %v5057 = vmul.f32 %v4897, %v4897
        %v5058 = vmul.f32 %v4898, %v4898
        %v5059 = vmul.f32 %v4899, %v4899
        %v5060 = vmul.f32 %v4900, %v4900
        %5062 = vset.pattern.permute.xlu0 0
        %5063 = vperm.xlu0 %5062, %v4581
        %v5064 = vpop.permute.xlu0 %5063
        %5067 = vset.pattern.permute.xlu0 0
        %5068 = vperm.xlu0 %5067, %v4582
        %v5069 = vpop.permute.xlu0 %5068
        %5072 = vset.pattern.permute.xlu0 0
        %5073 = vperm.xlu0 %5072, %v4583
        %v5074 = vpop.permute.xlu0 %5073
        %5077 = vset.pattern.permute.xlu0 0
        %5078 = vperm.xlu0 %5077, %v4584
        %v5079 = vpop.permute.xlu0 %5078
        %5082 = vset.pattern.permute.xlu0 0
        %5083 = vperm.xlu0 %5082, %v4585
        %v5084 = vpop.permute.xlu0 %5083
        %5087 = vset.pattern.permute.xlu0 0
        %5088 = vperm.xlu0 %5087, %v4586
        %v5089 = vpop.permute.xlu0 %5088
        %5092 = vset.pattern.permute.xlu0 0
        %5093 = vperm.xlu0 %5092, %v4587
        %v5094 = vpop.permute.xlu0 %5093
        %5097 = vset.pattern.permute.xlu0 0
        %5098 = vperm.xlu0 %5097, %v4588
        %v5099 = vpop.permute.xlu0 %5098
        %5102 = vset.pattern.permute.xlu0 0
        %5103 = vperm.xlu0 %5102, %v4589
        %v5104 = vpop.permute.xlu0 %5103
        %5107 = vset.pattern.permute.xlu0 0
        %5108 = vperm.xlu0 %5107, %v4590
        %v5109 = vpop.permute.xlu0 %5108
        %5112 = vset.pattern.permute.xlu0 0
        %5113 = vperm.xlu0 %5112, %v4591
        %v5114 = vpop.permute.xlu0 %5113
        %5117 = vset.pattern.permute.xlu0 0
        %5118 = vperm.xlu0 %5117, %v4592
        %v5119 = vpop.permute.xlu0 %5118
        %5122 = vset.pattern.permute.xlu0 0
        %5123 = vperm.xlu0 %5122, %v4593
        %v5124 = vpop.permute.xlu0 %5123
        %5127 = vset.pattern.permute.xlu0 0
        %5128 = vperm.xlu0 %5127, %v4594
        %v5129 = vpop.permute.xlu0 %5128
        %5132 = vset.pattern.permute.xlu0 0
        %5133 = vperm.xlu0 %5132, %v4595
        %v5134 = vpop.permute.xlu0 %5133
        %5137 = vset.pattern.permute.xlu0 0
        %5138 = vperm.xlu0 %5137, %v4596
        %v5139 = vpop.permute.xlu0 %5138
        %5142 = vset.pattern.permute.xlu0 0
        %5143 = vperm.xlu0 %5142, %v4597
        %v5144 = vpop.permute.xlu0 %5143
        %5147 = vset.pattern.permute.xlu0 0
        %5148 = vperm.xlu0 %5147, %v4598
        %v5149 = vpop.permute.xlu0 %5148
        %5152 = vset.pattern.permute.xlu0 0
        %5153 = vperm.xlu0 %5152, %v4599
        %v5154 = vpop.permute.xlu0 %5153
        %5157 = vset.pattern.permute.xlu0 0
        %5158 = vperm.xlu0 %5157, %v4600
        %v5159 = vpop.permute.xlu0 %5158
        %5162 = vset.pattern.permute.xlu0 0
        %5163 = vperm.xlu0 %5162, %v4601
        %v5164 = vpop.permute.xlu0 %5163
        %5167 = vset.pattern.permute.xlu0 0
        %5168 = vperm.xlu0 %5167, %v4602
        %v5169 = vpop.permute.xlu0 %5168
        %5172 = vset.pattern.permute.xlu0 0
        %5173 = vperm.xlu0 %5172, %v4603
        %v5174 = vpop.permute.xlu0 %5173
        %5177 = vset.pattern.permute.xlu0 0
        %5178 = vperm.xlu0 %5177, %v4604
        %v5179 = vpop.permute.xlu0 %5178
        %5182 = vset.pattern.permute.xlu0 0
        %5183 = vperm.xlu0 %5182, %v4605
        %v5184 = vpop.permute.xlu0 %5183
        %5187 = vset.pattern.permute.xlu0 0
        %5188 = vperm.xlu0 %5187, %v4606
        %v5189 = vpop.permute.xlu0 %5188
        %5192 = vset.pattern.permute.xlu0 0
        %5193 = vperm.xlu0 %5192, %v4607
        %v5194 = vpop.permute.xlu0 %5193
        %5197 = vset.pattern.permute.xlu0 0
        %5198 = vperm.xlu0 %5197, %v4608
        %v5199 = vpop.permute.xlu0 %5198
        %5202 = vset.pattern.permute.xlu0 0
        %5203 = vperm.xlu0 %5202, %v4609
        %v5204 = vpop.permute.xlu0 %5203
        %5207 = vset.pattern.permute.xlu0 0
        %5208 = vperm.xlu0 %5207, %v4610
        %v5209 = vpop.permute.xlu0 %5208
        %5212 = vset.pattern.permute.xlu0 0
        %5213 = vperm.xlu0 %5212, %v4611
        %v5214 = vpop.permute.xlu0 %5213
        %5217 = vset.pattern.permute.xlu0 0
        %5218 = vperm.xlu0 %5217, %v4612
        %v5219 = vpop.permute.xlu0 %5218
        %5222 = vset.pattern.permute.xlu0 0
        %5223 = vperm.xlu0 %5222, %v4613
        %v5224 = vpop.permute.xlu0 %5223
        %5227 = vset.pattern.permute.xlu0 0
        %5228 = vperm.xlu0 %5227, %v4614
        %v5229 = vpop.permute.xlu0 %5228
        %5232 = vset.pattern.permute.xlu0 0
        %5233 = vperm.xlu0 %5232, %v4615
        %v5234 = vpop.permute.xlu0 %5233
        %5237 = vset.pattern.permute.xlu0 0
        %5238 = vperm.xlu0 %5237, %v4616
        %v5239 = vpop.permute.xlu0 %5238
        %5242 = vset.pattern.permute.xlu0 0
        %5243 = vperm.xlu0 %5242, %v4617
        %v5244 = vpop.permute.xlu0 %5243
        %5247 = vset.pattern.permute.xlu0 0
        %5248 = vperm.xlu0 %5247, %v4618
        %v5249 = vpop.permute.xlu0 %5248
        %5252 = vset.pattern.permute.xlu0 0
        %5253 = vperm.xlu0 %5252, %v4619
        %v5254 = vpop.permute.xlu0 %5253
        %5257 = vset.pattern.permute.xlu0 0
        %5258 = vperm.xlu0 %5257, %v4620
        %v5259 = vpop.permute.xlu0 %5258
        %5262 = vset.pattern.permute.xlu0 0
        %5263 = vperm.xlu0 %5262, %v4621
        %v5264 = vpop.permute.xlu0 %5263
        %5267 = vset.pattern.permute.xlu0 0
        %5268 = vperm.xlu0 %5267, %v4622
        %v5269 = vpop.permute.xlu0 %5268
        %5272 = vset.pattern.permute.xlu0 0
        %5273 = vperm.xlu0 %5272, %v4623
        %v5274 = vpop.permute.xlu0 %5273
        %5277 = vset.pattern.permute.xlu0 0
        %5278 = vperm.xlu0 %5277, %v4624
        %v5279 = vpop.permute.xlu0 %5278
        %5282 = vset.pattern.permute.xlu0 0
        %5283 = vperm.xlu0 %5282, %v4625
        %v5284 = vpop.permute.xlu0 %5283
        %5287 = vset.pattern.permute.xlu0 0
        %5288 = vperm.xlu0 %5287, %v4626
        %v5289 = vpop.permute.xlu0 %5288
        %5292 = vset.pattern.permute.xlu0 0
        %5293 = vperm.xlu0 %5292, %v4627
        %v5294 = vpop.permute.xlu0 %5293
        %5297 = vset.pattern.permute.xlu0 0
        %5298 = vperm.xlu0 %5297, %v4628
        %v5299 = vpop.permute.xlu0 %5298
        %5302 = vset.pattern.permute.xlu0 0
        %5303 = vperm.xlu0 %5302, %v4629
        %v5304 = vpop.permute.xlu0 %5303
        %5307 = vset.pattern.permute.xlu0 0
        %5308 = vperm.xlu0 %5307, %v4630
        %v5309 = vpop.permute.xlu0 %5308
        %5312 = vset.pattern.permute.xlu0 0
        %5313 = vperm.xlu0 %5312, %v4631
        %v5314 = vpop.permute.xlu0 %5313
        %5317 = vset.pattern.permute.xlu0 0
        %5318 = vperm.xlu0 %5317, %v4632
        %v5319 = vpop.permute.xlu0 %5318
        %5322 = vset.pattern.permute.xlu0 0
        %5323 = vperm.xlu0 %5322, %v4633
        %v5324 = vpop.permute.xlu0 %5323
        %5327 = vset.pattern.permute.xlu0 0
        %5328 = vperm.xlu0 %5327, %v4634
        %v5329 = vpop.permute.xlu0 %5328
        %5332 = vset.pattern.permute.xlu0 0
        %5333 = vperm.xlu0 %5332, %v4635
        %v5334 = vpop.permute.xlu0 %5333
        %5337 = vset.pattern.permute.xlu0 0
        %5338 = vperm.xlu0 %5337, %v4636
        %v5339 = vpop.permute.xlu0 %5338
        %5342 = vset.pattern.permute.xlu0 0
        %5343 = vperm.xlu0 %5342, %v4637
        %v5344 = vpop.permute.xlu0 %5343
        %5347 = vset.pattern.permute.xlu0 0
        %5348 = vperm.xlu0 %5347, %v4638
        %v5349 = vpop.permute.xlu0 %5348
        %5352 = vset.pattern.permute.xlu0 0
        %5353 = vperm.xlu0 %5352, %v4639
        %v5354 = vpop.permute.xlu0 %5353
        %5357 = vset.pattern.permute.xlu0 0
        %5358 = vperm.xlu0 %5357, %v4640
        %v5359 = vpop.permute.xlu0 %5358
        %5362 = vset.pattern.permute.xlu0 0
        %5363 = vperm.xlu0 %5362, %v4641
        %v5364 = vpop.permute.xlu0 %5363
        %5367 = vset.pattern.permute.xlu0 0
        %5368 = vperm.xlu0 %5367, %v4642
        %v5369 = vpop.permute.xlu0 %5368
        %5372 = vset.pattern.permute.xlu0 0
        %5373 = vperm.xlu0 %5372, %v4643
        %v5374 = vpop.permute.xlu0 %5373
        %5377 = vset.pattern.permute.xlu0 0
        %5378 = vperm.xlu0 %5377, %v4644
        %v5379 = vpop.permute.xlu0 %5378
        %5382 = vset.pattern.permute.xlu0 0
        %5383 = vperm.xlu0 %5382, %v4645
        %v5384 = vpop.permute.xlu0 %5383
        %5387 = vset.pattern.permute.xlu0 0
        %5388 = vperm.xlu0 %5387, %v4646
        %v5389 = vpop.permute.xlu0 %5388
        %5392 = vset.pattern.permute.xlu0 0
        %5393 = vperm.xlu0 %5392, %v4647
        %v5394 = vpop.permute.xlu0 %5393
        %5397 = vset.pattern.permute.xlu0 0
        %5398 = vperm.xlu0 %5397, %v4648
        %v5399 = vpop.permute.xlu0 %5398
        %5402 = vset.pattern.permute.xlu0 0
        %5403 = vperm.xlu0 %5402, %v4649
        %v5404 = vpop.permute.xlu0 %5403
        %5407 = vset.pattern.permute.xlu0 0
        %5408 = vperm.xlu0 %5407, %v4650
        %v5409 = vpop.permute.xlu0 %5408
        %5412 = vset.pattern.permute.xlu0 0
        %5413 = vperm.xlu0 %5412, %v4651
        %v5414 = vpop.permute.xlu0 %5413
        %5417 = vset.pattern.permute.xlu0 0
        %5418 = vperm.xlu0 %5417, %v4652
        %v5419 = vpop.permute.xlu0 %5418
        %5422 = vset.pattern.permute.xlu0 0
        %5423 = vperm.xlu0 %5422, %v4653
        %v5424 = vpop.permute.xlu0 %5423
        %5427 = vset.pattern.permute.xlu0 0
        %5428 = vperm.xlu0 %5427, %v4654
        %v5429 = vpop.permute.xlu0 %5428
        %5432 = vset.pattern.permute.xlu0 0
        %5433 = vperm.xlu0 %5432, %v4655
        %v5434 = vpop.permute.xlu0 %5433
        %5437 = vset.pattern.permute.xlu0 0
        %5438 = vperm.xlu0 %5437, %v4656
        %v5439 = vpop.permute.xlu0 %5438
        %5442 = vset.pattern.permute.xlu0 0
        %5443 = vperm.xlu0 %5442, %v4657
        %v5444 = vpop.permute.xlu0 %5443
        %5447 = vset.pattern.permute.xlu0 0
        %5448 = vperm.xlu0 %5447, %v4658
        %v5449 = vpop.permute.xlu0 %5448
        %5452 = vset.pattern.permute.xlu0 0
        %5453 = vperm.xlu0 %5452, %v4659
        %v5454 = vpop.permute.xlu0 %5453
        %5457 = vset.pattern.permute.xlu0 0
        %5458 = vperm.xlu0 %5457, %v4660
        %v5459 = vpop.permute.xlu0 %5458
        %5462 = vset.pattern.permute.xlu0 0
        %5463 = vperm.xlu0 %5462, %v4661
        %v5464 = vpop.permute.xlu0 %5463
        %5467 = vset.pattern.permute.xlu0 0
        %5468 = vperm.xlu0 %5467, %v4662
        %v5469 = vpop.permute.xlu0 %5468
        %5472 = vset.pattern.permute.xlu0 0
        %5473 = vperm.xlu0 %5472, %v4663
        %v5474 = vpop.permute.xlu0 %5473
        %5477 = vset.pattern.permute.xlu0 0
        %5478 = vperm.xlu0 %5477, %v4664
        %v5479 = vpop.permute.xlu0 %5478
        %5482 = vset.pattern.permute.xlu0 0
        %5483 = vperm.xlu0 %5482, %v4665
        %v5484 = vpop.permute.xlu0 %5483
        %5487 = vset.pattern.permute.xlu0 0
        %5488 = vperm.xlu0 %5487, %v4666
        %v5489 = vpop.permute.xlu0 %5488
        %5492 = vset.pattern.permute.xlu0 0
        %5493 = vperm.xlu0 %5492, %v4667
        %v5494 = vpop.permute.xlu0 %5493
        %5497 = vset.pattern.permute.xlu0 0
        %5498 = vperm.xlu0 %5497, %v4668
        %v5499 = vpop.permute.xlu0 %5498
        %5502 = vset.pattern.permute.xlu0 0
        %5503 = vperm.xlu0 %5502, %v4669
        %v5504 = vpop.permute.xlu0 %5503
        %5507 = vset.pattern.permute.xlu0 0
        %5508 = vperm.xlu0 %5507, %v4670
        %v5509 = vpop.permute.xlu0 %5508
        %5512 = vset.pattern.permute.xlu0 0
        %5513 = vperm.xlu0 %5512, %v4671
        %v5514 = vpop.permute.xlu0 %5513
        %5517 = vset.pattern.permute.xlu0 0
        %5518 = vperm.xlu0 %5517, %v4672
        %v5519 = vpop.permute.xlu0 %5518
        %5522 = vset.pattern.permute.xlu0 0
        %5523 = vperm.xlu0 %5522, %v4673
        %v5524 = vpop.permute.xlu0 %5523
        %5527 = vset.pattern.permute.xlu0 0
        %5528 = vperm.xlu0 %5527, %v4674
        %v5529 = vpop.permute.xlu0 %5528
        %5532 = vset.pattern.permute.xlu0 0
        %5533 = vperm.xlu0 %5532, %v4675
        %v5534 = vpop.permute.xlu0 %5533
        %5537 = vset.pattern.permute.xlu0 0
        %5538 = vperm.xlu0 %5537, %v4676
        %v5539 = vpop.permute.xlu0 %5538
        %5542 = vset.pattern.permute.xlu0 0
        %5543 = vperm.xlu0 %5542, %v4677
        %v5544 = vpop.permute.xlu0 %5543
        %5547 = vset.pattern.permute.xlu0 0
        %5548 = vperm.xlu0 %5547, %v4678
        %v5549 = vpop.permute.xlu0 %5548
        %5552 = vset.pattern.permute.xlu0 0
        %5553 = vperm.xlu0 %5552, %v4679
        %v5554 = vpop.permute.xlu0 %5553
        %5557 = vset.pattern.permute.xlu0 0
        %5558 = vperm.xlu0 %5557, %v4680
        %v5559 = vpop.permute.xlu0 %5558
        %5562 = vset.pattern.permute.xlu0 0
        %5563 = vperm.xlu0 %5562, %v4681
        %v5564 = vpop.permute.xlu0 %5563
        %5567 = vset.pattern.permute.xlu0 0
        %5568 = vperm.xlu0 %5567, %v4682
        %v5569 = vpop.permute.xlu0 %5568
        %5572 = vset.pattern.permute.xlu0 0
        %5573 = vperm.xlu0 %5572, %v4683
        %v5574 = vpop.permute.xlu0 %5573
        %5577 = vset.pattern.permute.xlu0 0
        %5578 = vperm.xlu0 %5577, %v4684
        %v5579 = vpop.permute.xlu0 %5578
        %5582 = vset.pattern.permute.xlu0 0
        %5583 = vperm.xlu0 %5582, %v4685
        %v5584 = vpop.permute.xlu0 %5583
        %5587 = vset.pattern.permute.xlu0 0
        %5588 = vperm.xlu0 %5587, %v4686
        %v5589 = vpop.permute.xlu0 %5588
        %5592 = vset.pattern.permute.xlu0 0
        %5593 = vperm.xlu0 %5592, %v4687
        %v5594 = vpop.permute.xlu0 %5593
        %5597 = vset.pattern.permute.xlu0 0
        %5598 = vperm.xlu0 %5597, %v4688
        %v5599 = vpop.permute.xlu0 %5598
        %5602 = vset.pattern.permute.xlu0 0
        %5603 = vperm.xlu0 %5602, %v4689
        %v5604 = vpop.permute.xlu0 %5603
        %5607 = vset.pattern.permute.xlu0 0
        %5608 = vperm.xlu0 %5607, %v4690
        %v5609 = vpop.permute.xlu0 %5608
        %5612 = vset.pattern.permute.xlu0 0
        %5613 = vperm.xlu0 %5612, %v4691
        %v5614 = vpop.permute.xlu0 %5613
        %5617 = vset.pattern.permute.xlu0 0
        %5618 = vperm.xlu0 %5617, %v4692
        %v5619 = vpop.permute.xlu0 %5618
        %5622 = vset.pattern.permute.xlu0 0
        %5623 = vperm.xlu0 %5622, %v4693
        %v5624 = vpop.permute.xlu0 %5623
        %5627 = vset.pattern.permute.xlu0 0
        %5628 = vperm.xlu0 %5627, %v4694
        %v5629 = vpop.permute.xlu0 %5628
        %5632 = vset.pattern.permute.xlu0 0
        %5633 = vperm.xlu0 %5632, %v4695
        %v5634 = vpop.permute.xlu0 %5633
        %5637 = vset.pattern.permute.xlu0 0
        %5638 = vperm.xlu0 %5637, %v4696
        %v5639 = vpop.permute.xlu0 %5638
        %5642 = vset.pattern.permute.xlu0 0
        %5643 = vperm.xlu0 %5642, %v4697
        %v5644 = vpop.permute.xlu0 %5643
        %5647 = vset.pattern.permute.xlu0 0
        %5648 = vperm.xlu0 %5647, %v4698
        %v5649 = vpop.permute.xlu0 %5648
        %5652 = vset.pattern.permute.xlu0 0
        %5653 = vperm.xlu0 %5652, %v4699
        %v5654 = vpop.permute.xlu0 %5653
        %5657 = vset.pattern.permute.xlu0 0
        %5658 = vperm.xlu0 %5657, %v4700
        %v5659 = vpop.permute.xlu0 %5658
        %5662 = vset.pattern.permute.xlu0 0
        %5663 = vperm.xlu0 %5662, %v4701
        %v5664 = vpop.permute.xlu0 %5663
        %5667 = vset.pattern.permute.xlu0 0
        %5668 = vperm.xlu0 %5667, %v4702
        %v5669 = vpop.permute.xlu0 %5668
        %5672 = vset.pattern.permute.xlu0 0
        %5673 = vperm.xlu0 %5672, %v4703
        %v5674 = vpop.permute.xlu0 %5673
        %5677 = vset.pattern.permute.xlu0 0
        %5678 = vperm.xlu0 %5677, %v4704
        %v5679 = vpop.permute.xlu0 %5678
        %5682 = vset.pattern.permute.xlu0 0
        %5683 = vperm.xlu0 %5682, %v4705
        %v5684 = vpop.permute.xlu0 %5683
        %5687 = vset.pattern.permute.xlu0 0
        %5688 = vperm.xlu0 %5687, %v4706
        %v5689 = vpop.permute.xlu0 %5688
        %5692 = vset.pattern.permute.xlu0 0
        %5693 = vperm.xlu0 %5692, %v4707
        %v5694 = vpop.permute.xlu0 %5693
        %5697 = vset.pattern.permute.xlu0 0
        %5698 = vperm.xlu0 %5697, %v4708
        %v5699 = vpop.permute.xlu0 %5698
        %5702 = vset.pattern.permute.xlu0 0
        %5703 = vperm.xlu0 %5702, %v4709
        %v5704 = vpop.permute.xlu0 %5703
        %5707 = vset.pattern.permute.xlu0 0
        %5708 = vperm.xlu0 %5707, %v4710
        %v5709 = vpop.permute.xlu0 %5708
        %5712 = vset.pattern.permute.xlu0 0
        %5713 = vperm.xlu0 %5712, %v4711
        %v5714 = vpop.permute.xlu0 %5713
        %5717 = vset.pattern.permute.xlu0 0
        %5718 = vperm.xlu0 %5717, %v4712
        %v5719 = vpop.permute.xlu0 %5718
        %5722 = vset.pattern.permute.xlu0 0
        %5723 = vperm.xlu0 %5722, %v4713
        %v5724 = vpop.permute.xlu0 %5723
        %5727 = vset.pattern.permute.xlu0 0
        %5728 = vperm.xlu0 %5727, %v4714
        %v5729 = vpop.permute.xlu0 %5728
        %5732 = vset.pattern.permute.xlu0 0
        %5733 = vperm.xlu0 %5732, %v4715
        %v5734 = vpop.permute.xlu0 %5733
        %5737 = vset.pattern.permute.xlu0 0
        %5738 = vperm.xlu0 %5737, %v4716
        %v5739 = vpop.permute.xlu0 %5738
        %5742 = vset.pattern.permute.xlu0 0
        %5743 = vperm.xlu0 %5742, %v4717
        %v5744 = vpop.permute.xlu0 %5743
        %5747 = vset.pattern.permute.xlu0 0
        %5748 = vperm.xlu0 %5747, %v4718
        %v5749 = vpop.permute.xlu0 %5748
        %5752 = vset.pattern.permute.xlu0 0
        %5753 = vperm.xlu0 %5752, %v4719
        %v5754 = vpop.permute.xlu0 %5753
        %5757 = vset.pattern.permute.xlu0 0
        %5758 = vperm.xlu0 %5757, %v4720
        %v5759 = vpop.permute.xlu0 %5758
        %5762 = vset.pattern.permute.xlu0 0
        %5763 = vperm.xlu0 %5762, %v4721
        %v5764 = vpop.permute.xlu0 %5763
        %5767 = vset.pattern.permute.xlu0 0
        %5768 = vperm.xlu0 %5767, %v4722
        %v5769 = vpop.permute.xlu0 %5768
        %5772 = vset.pattern.permute.xlu0 0
        %5773 = vperm.xlu0 %5772, %v4723
        %v5774 = vpop.permute.xlu0 %5773
        %5777 = vset.pattern.permute.xlu0 0
        %5778 = vperm.xlu0 %5777, %v4724
        %v5779 = vpop.permute.xlu0 %5778
        %5782 = vset.pattern.permute.xlu0 0
        %5783 = vperm.xlu0 %5782, %v4725
        %v5784 = vpop.permute.xlu0 %5783
        %5787 = vset.pattern.permute.xlu0 0
        %5788 = vperm.xlu0 %5787, %v4726
        %v5789 = vpop.permute.xlu0 %5788
        %5792 = vset.pattern.permute.xlu0 0
        %5793 = vperm.xlu0 %5792, %v4727
        %v5794 = vpop.permute.xlu0 %5793
        %5797 = vset.pattern.permute.xlu0 0
        %5798 = vperm.xlu0 %5797, %v4728
        %v5799 = vpop.permute.xlu0 %5798
        %5802 = vset.pattern.permute.xlu0 0
        %5803 = vperm.xlu0 %5802, %v4729
        %v5804 = vpop.permute.xlu0 %5803
        %5807 = vset.pattern.permute.xlu0 0
        %5808 = vperm.xlu0 %5807, %v4730
        %v5809 = vpop.permute.xlu0 %5808
        %5812 = vset.pattern.permute.xlu0 0
        %5813 = vperm.xlu0 %5812, %v4731
        %v5814 = vpop.permute.xlu0 %5813
        %5817 = vset.pattern.permute.xlu0 0
        %5818 = vperm.xlu0 %5817, %v4732
        %v5819 = vpop.permute.xlu0 %5818
        %5822 = vset.pattern.permute.xlu0 0
        %5823 = vperm.xlu0 %5822, %v4733
        %v5824 = vpop.permute.xlu0 %5823
        %5827 = vset.pattern.permute.xlu0 0
        %5828 = vperm.xlu0 %5827, %v4734
        %v5829 = vpop.permute.xlu0 %5828
        %5832 = vset.pattern.permute.xlu0 0
        %5833 = vperm.xlu0 %5832, %v4735
        %v5834 = vpop.permute.xlu0 %5833
        %5837 = vset.pattern.permute.xlu0 0
        %5838 = vperm.xlu0 %5837, %v4736
        %v5839 = vpop.permute.xlu0 %5838
        %5842 = vset.pattern.permute.xlu0 0
        %5843 = vperm.xlu0 %5842, %v4737
        %v5844 = vpop.permute.xlu0 %5843
        %5847 = vset.pattern.permute.xlu0 0
        %5848 = vperm.xlu0 %5847, %v4738
        %v5849 = vpop.permute.xlu0 %5848
        %5852 = vset.pattern.permute.xlu0 0
        %5853 = vperm.xlu0 %5852, %v4739
        %v5854 = vpop.permute.xlu0 %5853
        %5857 = vset.pattern.permute.xlu0 0
        %5858 = vperm.xlu0 %5857, %v4740
        %v5859 = vpop.permute.xlu0 %5858
        %v5861 = vmul.f32 %v4901, %v5064
        %v5862 = vmul.f32 %v4902, %v5069
        %v5863 = vmul.f32 %v4903, %v5074
        %v5864 = vmul.f32 %v4904, %v5079
        %v5865 = vmul.f32 %v4905, %v5084
        %v5866 = vmul.f32 %v4906, %v5089
        %v5867 = vmul.f32 %v4907, %v5094
        %v5868 = vmul.f32 %v4908, %v5099
        %v5869 = vmul.f32 %v4909, %v5104
        %v5870 = vmul.f32 %v4910, %v5109
        %v5871 = vmul.f32 %v4911, %v5114
        %v5872 = vmul.f32 %v4912, %v5119
        %v5873 = vmul.f32 %v4913, %v5124
        %v5874 = vmul.f32 %v4914, %v5129
        %v5875 = vmul.f32 %v4915, %v5134
        %v5876 = vmul.f32 %v4916, %v5139
        %v5877 = vmul.f32 %v4917, %v5144
        %v5878 = vmul.f32 %v4918, %v5149
        %v5879 = vmul.f32 %v4919, %v5154
        %v5880 = vmul.f32 %v4920, %v5159
        %v5881 = vmul.f32 %v4921, %v5164
        %v5882 = vmul.f32 %v4922, %v5169
        %v5883 = vmul.f32 %v4923, %v5174
        %v5884 = vmul.f32 %v4924, %v5179
        %v5885 = vmul.f32 %v4925, %v5184
        %v5886 = vmul.f32 %v4926, %v5189
        %v5887 = vmul.f32 %v4927, %v5194
        %v5888 = vmul.f32 %v4928, %v5199
        %v5889 = vmul.f32 %v4929, %v5204
        %v5890 = vmul.f32 %v4930, %v5209
        %v5891 = vmul.f32 %v4931, %v5214
        %v5892 = vmul.f32 %v4932, %v5219
        %v5893 = vmul.f32 %v4933, %v5224
        %v5894 = vmul.f32 %v4934, %v5229
        %v5895 = vmul.f32 %v4935, %v5234
        %v5896 = vmul.f32 %v4936, %v5239
        %v5897 = vmul.f32 %v4937, %v5244
        %v5898 = vmul.f32 %v4938, %v5249
        %v5899 = vmul.f32 %v4939, %v5254
        %v5900 = vmul.f32 %v4940, %v5259
        %v5901 = vmul.f32 %v4941, %v5264
        %v5902 = vmul.f32 %v4942, %v5269
        %v5903 = vmul.f32 %v4943, %v5274
        %v5904 = vmul.f32 %v4944, %v5279
        %v5905 = vmul.f32 %v4945, %v5284
        %v5906 = vmul.f32 %v4946, %v5289
        %v5907 = vmul.f32 %v4947, %v5294
        %v5908 = vmul.f32 %v4948, %v5299
        %v5909 = vmul.f32 %v4949, %v5304
        %v5910 = vmul.f32 %v4950, %v5309
        %v5911 = vmul.f32 %v4951, %v5314
        %v5912 = vmul.f32 %v4952, %v5319
        %v5913 = vmul.f32 %v4953, %v5324
        %v5914 = vmul.f32 %v4954, %v5329
        %v5915 = vmul.f32 %v4955, %v5334
        %v5916 = vmul.f32 %v4956, %v5339
        %v5917 = vmul.f32 %v4957, %v5344
        %v5918 = vmul.f32 %v4958, %v5349
        %v5919 = vmul.f32 %v4959, %v5354
        %v5920 = vmul.f32 %v4960, %v5359
        %v5921 = vmul.f32 %v4961, %v5364
        %v5922 = vmul.f32 %v4962, %v5369
        %v5923 = vmul.f32 %v4963, %v5374
        %v5924 = vmul.f32 %v4964, %v5379
        %v5925 = vmul.f32 %v4965, %v5384
        %v5926 = vmul.f32 %v4966, %v5389
        %v5927 = vmul.f32 %v4967, %v5394
        %v5928 = vmul.f32 %v4968, %v5399
        %v5929 = vmul.f32 %v4969, %v5404
        %v5930 = vmul.f32 %v4970, %v5409
        %v5931 = vmul.f32 %v4971, %v5414
        %v5932 = vmul.f32 %v4972, %v5419
        %v5933 = vmul.f32 %v4973, %v5424
        %v5934 = vmul.f32 %v4974, %v5429
        %v5935 = vmul.f32 %v4975, %v5434
        %v5936 = vmul.f32 %v4976, %v5439
        %v5937 = vmul.f32 %v4977, %v5444
        %v5938 = vmul.f32 %v4978, %v5449
        %v5939 = vmul.f32 %v4979, %v5454
        %v5940 = vmul.f32 %v4980, %v5459
        %v5941 = vmul.f32 %v4981, %v5464
        %v5942 = vmul.f32 %v4982, %v5469
        %v5943 = vmul.f32 %v4983, %v5474
        %v5944 = vmul.f32 %v4984, %v5479
        %v5945 = vmul.f32 %v4985, %v5484
        %v5946 = vmul.f32 %v4986, %v5489
        %v5947 = vmul.f32 %v4987, %v5494
        %v5948 = vmul.f32 %v4988, %v5499
        %v5949 = vmul.f32 %v4989, %v5504
        %v5950 = vmul.f32 %v4990, %v5509
        %v5951 = vmul.f32 %v4991, %v5514
        %v5952 = vmul.f32 %v4992, %v5519
        %v5953 = vmul.f32 %v4993, %v5524
        %v5954 = vmul.f32 %v4994, %v5529
        %v5955 = vmul.f32 %v4995, %v5534
        %v5956 = vmul.f32 %v4996, %v5539
        %v5957 = vmul.f32 %v4997, %v5544
        %v5958 = vmul.f32 %v4998, %v5549
        %v5959 = vmul.f32 %v4999, %v5554
        %v5960 = vmul.f32 %v5000, %v5559
        %v5961 = vmul.f32 %v5001, %v5564
        %v5962 = vmul.f32 %v5002, %v5569
        %v5963 = vmul.f32 %v5003, %v5574
        %v5964 = vmul.f32 %v5004, %v5579
        %v5965 = vmul.f32 %v5005, %v5584
        %v5966 = vmul.f32 %v5006, %v5589
        %v5967 = vmul.f32 %v5007, %v5594
        %v5968 = vmul.f32 %v5008, %v5599
        %v5969 = vmul.f32 %v5009, %v5604
        %v5970 = vmul.f32 %v5010, %v5609
        %v5971 = vmul.f32 %v5011, %v5614
        %v5972 = vmul.f32 %v5012, %v5619
        %v5973 = vmul.f32 %v5013, %v5624
        %v5974 = vmul.f32 %v5014, %v5629
        %v5975 = vmul.f32 %v5015, %v5634
        %v5976 = vmul.f32 %v5016, %v5639
        %v5977 = vmul.f32 %v5017, %v5644
        %v5978 = vmul.f32 %v5018, %v5649
        %v5979 = vmul.f32 %v5019, %v5654
        %v5980 = vmul.f32 %v5020, %v5659
        %v5981 = vmul.f32 %v5021, %v5664
        %v5982 = vmul.f32 %v5022, %v5669
        %v5983 = vmul.f32 %v5023, %v5674
        %v5984 = vmul.f32 %v5024, %v5679
        %v5985 = vmul.f32 %v5025, %v5684
        %v5986 = vmul.f32 %v5026, %v5689
        %v5987 = vmul.f32 %v5027, %v5694
        %v5988 = vmul.f32 %v5028, %v5699
        %v5989 = vmul.f32 %v5029, %v5704
        %v5990 = vmul.f32 %v5030, %v5709
        %v5991 = vmul.f32 %v5031, %v5714
        %v5992 = vmul.f32 %v5032, %v5719
        %v5993 = vmul.f32 %v5033, %v5724
        %v5994 = vmul.f32 %v5034, %v5729
        %v5995 = vmul.f32 %v5035, %v5734
        %v5996 = vmul.f32 %v5036, %v5739
        %v5997 = vmul.f32 %v5037, %v5744
        %v5998 = vmul.f32 %v5038, %v5749
        %v5999 = vmul.f32 %v5039, %v5754
        %v6000 = vmul.f32 %v5040, %v5759
        %v6001 = vmul.f32 %v5041, %v5764
        %v6002 = vmul.f32 %v5042, %v5769
        %v6003 = vmul.f32 %v5043, %v5774
        %v6004 = vmul.f32 %v5044, %v5779
        %v6005 = vmul.f32 %v5045, %v5784
        %v6006 = vmul.f32 %v5046, %v5789
        %v6007 = vmul.f32 %v5047, %v5794
        %v6008 = vmul.f32 %v5048, %v5799
        %v6009 = vmul.f32 %v5049, %v5804
        %v6010 = vmul.f32 %v5050, %v5809
        %v6011 = vmul.f32 %v5051, %v5814
        %v6012 = vmul.f32 %v5052, %v5819
        %v6013 = vmul.f32 %v5053, %v5824
        %v6014 = vmul.f32 %v5054, %v5829
        %v6015 = vmul.f32 %v5055, %v5834
        %v6016 = vmul.f32 %v5056, %v5839
        %v6017 = vmul.f32 %v5057, %v5844
        %v6018 = vmul.f32 %v5058, %v5849
        %v6019 = vmul.f32 %v5059, %v5854
        %v6020 = vmul.f32 %v5060, %v5859
        %v6021 = vsel %vm1467, %v5861, 0.0
        %v6022 = vsel %vm1467, %v5893, 0.0
        %v6023 = vadd.f32 %v6021, %v6022
        %v6024 = vsel %vm1467, %v5925, 0.0
        %v6025 = vadd.f32 %v6023, %v6024
        %v6026 = vsel %vm1467, %v5957, 0.0
        %v6027 = vadd.f32 %v6025, %v6026
        %v6028 = vsel %vm1467, %v5989, 0.0
        %v6029 = vadd.f32 %v6027, %v6028
        %v6030 = vsel %vm1467, %v5862, 0.0
        %v6031 = vsel %vm1467, %v5894, 0.0
        %v6032 = vadd.f32 %v6030, %v6031
        %v6033 = vsel %vm1467, %v5926, 0.0
        %v6034 = vadd.f32 %v6032, %v6033
        %v6035 = vsel %vm1467, %v5958, 0.0
        %v6036 = vadd.f32 %v6034, %v6035
        %v6037 = vsel %vm1467, %v5990, 0.0
        %v6038 = vadd.f32 %v6036, %v6037
        %v6039 = vsel %vm1467, %v5863, 0.0
        %v6040 = vsel %vm1467, %v5895, 0.0
        %v6041 = vadd.f32 %v6039, %v6040
        %v6042 = vsel %vm1467, %v5927, 0.0
        %v6043 = vadd.f32 %v6041, %v6042
        %v6044 = vsel %vm1467, %v5959, 0.0
        %v6045 = vadd.f32 %v6043, %v6044
        %v6046 = vsel %vm1467, %v5991, 0.0
        %v6047 = vadd.f32 %v6045, %v6046
        %v6048 = vsel %vm1467, %v5864, 0.0
        %v6049 = vsel %vm1467, %v5896, 0.0
        %v6050 = vadd.f32 %v6048, %v6049
        %v6051 = vsel %vm1467, %v5928, 0.0
        %v6052 = vadd.f32 %v6050, %v6051
        %v6053 = vsel %vm1467, %v5960, 0.0
        %v6054 = vadd.f32 %v6052, %v6053
        %v6055 = vsel %vm1467, %v5992, 0.0
        %v6056 = vadd.f32 %v6054, %v6055
        %v6057 = vsel %vm1467, %v5865, 0.0
        %v6058 = vsel %vm1467, %v5897, 0.0
        %v6059 = vadd.f32 %v6057, %v6058
        %v6060 = vsel %vm1467, %v5929, 0.0
        %v6061 = vadd.f32 %v6059, %v6060
        %v6062 = vsel %vm1467, %v5961, 0.0
        %v6063 = vadd.f32 %v6061, %v6062
        %v6064 = vsel %vm1467, %v5993, 0.0
        %v6065 = vadd.f32 %v6063, %v6064
        %v6066 = vsel %vm1467, %v5866, 0.0
        %v6067 = vsel %vm1467, %v5898, 0.0
        %v6068 = vadd.f32 %v6066, %v6067
        %v6069 = vsel %vm1467, %v5930, 0.0
        %v6070 = vadd.f32 %v6068, %v6069
        %v6071 = vsel %vm1467, %v5962, 0.0
        %v6072 = vadd.f32 %v6070, %v6071
        %v6073 = vsel %vm1467, %v5994, 0.0
        %v6074 = vadd.f32 %v6072, %v6073
        %v6075 = vsel %vm1467, %v5867, 0.0
        %v6076 = vsel %vm1467, %v5899, 0.0
        %v6077 = vadd.f32 %v6075, %v6076
        %v6078 = vsel %vm1467, %v5931, 0.0
        %v6079 = vadd.f32 %v6077, %v6078
        %v6080 = vsel %vm1467, %v5963, 0.0
        %v6081 = vadd.f32 %v6079, %v6080
        %v6082 = vsel %vm1467, %v5995, 0.0
        %v6083 = vadd.f32 %v6081, %v6082
        %v6084 = vsel %vm1467, %v5868, 0.0
        %v6085 = vsel %vm1467, %v5900, 0.0
        %v6086 = vadd.f32 %v6084, %v6085
        %v6087 = vsel %vm1467, %v5932, 0.0
        %v6088 = vadd.f32 %v6086, %v6087
        %v6089 = vsel %vm1467, %v5964, 0.0
        %v6090 = vadd.f32 %v6088, %v6089
        %v6091 = vsel %vm1467, %v5996, 0.0
        %v6092 = vadd.f32 %v6090, %v6091
        %v6093 = vsel %vm1467, %v5869, 0.0
        %v6094 = vsel %vm1467, %v5901, 0.0
        %v6095 = vadd.f32 %v6093, %v6094
        %v6096 = vsel %vm1467, %v5933, 0.0
        %v6097 = vadd.f32 %v6095, %v6096
        %v6098 = vsel %vm1467, %v5965, 0.0
        %v6099 = vadd.f32 %v6097, %v6098
        %v6100 = vsel %vm1467, %v5997, 0.0
        %v6101 = vadd.f32 %v6099, %v6100
        %v6102 = vsel %vm1467, %v5870, 0.0
        %v6103 = vsel %vm1467, %v5902, 0.0
        %v6104 = vadd.f32 %v6102, %v6103
        %v6105 = vsel %vm1467, %v5934, 0.0
        %v6106 = vadd.f32 %v6104, %v6105
        %v6107 = vsel %vm1467, %v5966, 0.0
        %v6108 = vadd.f32 %v6106, %v6107
        %v6109 = vsel %vm1467, %v5998, 0.0
        %v6110 = vadd.f32 %v6108, %v6109
        %v6111 = vsel %vm1467, %v5871, 0.0
        %v6112 = vsel %vm1467, %v5903, 0.0
        %v6113 = vadd.f32 %v6111, %v6112
        %v6114 = vsel %vm1467, %v5935, 0.0
        %v6115 = vadd.f32 %v6113, %v6114
        %v6116 = vsel %vm1467, %v5967, 0.0
        %v6117 = vadd.f32 %v6115, %v6116
        %v6118 = vsel %vm1467, %v5999, 0.0
        %v6119 = vadd.f32 %v6117, %v6118
        %v6120 = vsel %vm1467, %v5872, 0.0
        %v6121 = vsel %vm1467, %v5904, 0.0
        %v6122 = vadd.f32 %v6120, %v6121
        %v6123 = vsel %vm1467, %v5936, 0.0
        %v6124 = vadd.f32 %v6122, %v6123
        %v6125 = vsel %vm1467, %v5968, 0.0
        %v6126 = vadd.f32 %v6124, %v6125
        %v6127 = vsel %vm1467, %v6000, 0.0
        %v6128 = vadd.f32 %v6126, %v6127
        %v6129 = vsel %vm1467, %v5873, 0.0
        %v6130 = vsel %vm1467, %v5905, 0.0
        %v6131 = vadd.f32 %v6129, %v6130
        %v6132 = vsel %vm1467, %v5937, 0.0
        %v6133 = vadd.f32 %v6131, %v6132
        %v6134 = vsel %vm1467, %v5969, 0.0
        %v6135 = vadd.f32 %v6133, %v6134
        %v6136 = vsel %vm1467, %v6001, 0.0
        %v6137 = vadd.f32 %v6135, %v6136
        %v6138 = vsel %vm1467, %v5874, 0.0
        %v6139 = vsel %vm1467, %v5906, 0.0
        %v6140 = vadd.f32 %v6138, %v6139
        %v6141 = vsel %vm1467, %v5938, 0.0
        %v6142 = vadd.f32 %v6140, %v6141
        %v6143 = vsel %vm1467, %v5970, 0.0
        %v6144 = vadd.f32 %v6142, %v6143
        %v6145 = vsel %vm1467, %v6002, 0.0
        %v6146 = vadd.f32 %v6144, %v6145
        %v6147 = vsel %vm1467, %v5875, 0.0
        %v6148 = vsel %vm1467, %v5907, 0.0
        %v6149 = vadd.f32 %v6147, %v6148
        %v6150 = vsel %vm1467, %v5939, 0.0
        %v6151 = vadd.f32 %v6149, %v6150
        %v6152 = vsel %vm1467, %v5971, 0.0
        %v6153 = vadd.f32 %v6151, %v6152
        %v6154 = vsel %vm1467, %v6003, 0.0
        %v6155 = vadd.f32 %v6153, %v6154
        %v6156 = vsel %vm1467, %v5876, 0.0
        %v6157 = vsel %vm1467, %v5908, 0.0
        %v6158 = vadd.f32 %v6156, %v6157
        %v6159 = vsel %vm1467, %v5940, 0.0
        %v6160 = vadd.f32 %v6158, %v6159
        %v6161 = vsel %vm1467, %v5972, 0.0
        %v6162 = vadd.f32 %v6160, %v6161
        %v6163 = vsel %vm1467, %v6004, 0.0
        %v6164 = vadd.f32 %v6162, %v6163
        %v6165 = vsel %vm1467, %v5877, 0.0
        %v6166 = vsel %vm1467, %v5909, 0.0
        %v6167 = vadd.f32 %v6165, %v6166
        %v6168 = vsel %vm1467, %v5941, 0.0
        %v6169 = vadd.f32 %v6167, %v6168
        %v6170 = vsel %vm1467, %v5973, 0.0
        %v6171 = vadd.f32 %v6169, %v6170
        %v6172 = vsel %vm1467, %v6005, 0.0
        %v6173 = vadd.f32 %v6171, %v6172
        %v6174 = vsel %vm1467, %v5878, 0.0
        %v6175 = vsel %vm1467, %v5910, 0.0
        %v6176 = vadd.f32 %v6174, %v6175
        %v6177 = vsel %vm1467, %v5942, 0.0
        %v6178 = vadd.f32 %v6176, %v6177
        %v6179 = vsel %vm1467, %v5974, 0.0
        %v6180 = vadd.f32 %v6178, %v6179
        %v6181 = vsel %vm1467, %v6006, 0.0
        %v6182 = vadd.f32 %v6180, %v6181
        %v6183 = vsel %vm1467, %v5879, 0.0
        %v6184 = vsel %vm1467, %v5911, 0.0
        %v6185 = vadd.f32 %v6183, %v6184
        %v6186 = vsel %vm1467, %v5943, 0.0
        %v6187 = vadd.f32 %v6185, %v6186
        %v6188 = vsel %vm1467, %v5975, 0.0
        %v6189 = vadd.f32 %v6187, %v6188
        %v6190 = vsel %vm1467, %v6007, 0.0
        %v6191 = vadd.f32 %v6189, %v6190
        %v6192 = vsel %vm1467, %v5880, 0.0
        %v6193 = vsel %vm1467, %v5912, 0.0
        %v6194 = vadd.f32 %v6192, %v6193
        %v6195 = vsel %vm1467, %v5944, 0.0
        %v6196 = vadd.f32 %v6194, %v6195
        %v6197 = vsel %vm1467, %v5976, 0.0
        %v6198 = vadd.f32 %v6196, %v6197
        %v6199 = vsel %vm1467, %v6008, 0.0
        %v6200 = vadd.f32 %v6198, %v6199
        %v6201 = vsel %vm1467, %v5881, 0.0
        %v6202 = vsel %vm1467, %v5913, 0.0
        %v6203 = vadd.f32 %v6201, %v6202
        %v6204 = vsel %vm1467, %v5945, 0.0
        %v6205 = vadd.f32 %v6203, %v6204
        %v6206 = vsel %vm1467, %v5977, 0.0
        %v6207 = vadd.f32 %v6205, %v6206
        %v6208 = vsel %vm1467, %v6009, 0.0
        %v6209 = vadd.f32 %v6207, %v6208
        %v6210 = vsel %vm1467, %v5882, 0.0
        %v6211 = vsel %vm1467, %v5914, 0.0
        %v6212 = vadd.f32 %v6210, %v6211
        %v6213 = vsel %vm1467, %v5946, 0.0
        %v6214 = vadd.f32 %v6212, %v6213
        %v6215 = vsel %vm1467, %v5978, 0.0
        %v6216 = vadd.f32 %v6214, %v6215
        %v6217 = vsel %vm1467, %v6010, 0.0
        %v6218 = vadd.f32 %v6216, %v6217
        %v6219 = vsel %vm1467, %v5883, 0.0
        %v6220 = vsel %vm1467, %v5915, 0.0
        %v6221 = vadd.f32 %v6219, %v6220
        %v6222 = vsel %vm1467, %v5947, 0.0
        %v6223 = vadd.f32 %v6221, %v6222
        %v6224 = vsel %vm1467, %v5979, 0.0
        %v6225 = vadd.f32 %v6223, %v6224
        %v6226 = vsel %vm1467, %v6011, 0.0
        %v6227 = vadd.f32 %v6225, %v6226
        %v6228 = vsel %vm1467, %v5884, 0.0
        %v6229 = vsel %vm1467, %v5916, 0.0
        %v6230 = vadd.f32 %v6228, %v6229
        %v6231 = vsel %vm1467, %v5948, 0.0
        %v6232 = vadd.f32 %v6230, %v6231
        %v6233 = vsel %vm1467, %v5980, 0.0
        %v6234 = vadd.f32 %v6232, %v6233
        %v6235 = vsel %vm1467, %v6012, 0.0
        %v6236 = vadd.f32 %v6234, %v6235
        %v6237 = vsel %vm1467, %v5885, 0.0
        %v6238 = vsel %vm1467, %v5917, 0.0
        %v6239 = vadd.f32 %v6237, %v6238
        %v6240 = vsel %vm1467, %v5949, 0.0
        %v6241 = vadd.f32 %v6239, %v6240
        %v6242 = vsel %vm1467, %v5981, 0.0
        %v6243 = vadd.f32 %v6241, %v6242
        %v6244 = vsel %vm1467, %v6013, 0.0
        %v6245 = vadd.f32 %v6243, %v6244
        %v6246 = vsel %vm1467, %v5886, 0.0
        %v6247 = vsel %vm1467, %v5918, 0.0
        %v6248 = vadd.f32 %v6246, %v6247
        %v6249 = vsel %vm1467, %v5950, 0.0
        %v6250 = vadd.f32 %v6248, %v6249
        %v6251 = vsel %vm1467, %v5982, 0.0
        %v6252 = vadd.f32 %v6250, %v6251
        %v6253 = vsel %vm1467, %v6014, 0.0
        %v6254 = vadd.f32 %v6252, %v6253
        %v6255 = vsel %vm1467, %v5887, 0.0
        %v6256 = vsel %vm1467, %v5919, 0.0
        %v6257 = vadd.f32 %v6255, %v6256
        %v6258 = vsel %vm1467, %v5951, 0.0
        %v6259 = vadd.f32 %v6257, %v6258
        %v6260 = vsel %vm1467, %v5983, 0.0
        %v6261 = vadd.f32 %v6259, %v6260
        %v6262 = vsel %vm1467, %v6015, 0.0
        %v6263 = vadd.f32 %v6261, %v6262
        %v6264 = vsel %vm1467, %v5888, 0.0
        %v6265 = vsel %vm1467, %v5920, 0.0
        %v6266 = vadd.f32 %v6264, %v6265
        %v6267 = vsel %vm1467, %v5952, 0.0
        %v6268 = vadd.f32 %v6266, %v6267
        %v6269 = vsel %vm1467, %v5984, 0.0
        %v6270 = vadd.f32 %v6268, %v6269
        %v6271 = vsel %vm1467, %v6016, 0.0
        %v6272 = vadd.f32 %v6270, %v6271
        %v6273 = vsel %vm1467, %v5889, 0.0
        %v6274 = vsel %vm1467, %v5921, 0.0
        %v6275 = vadd.f32 %v6273, %v6274
        %v6276 = vsel %vm1467, %v5953, 0.0
        %v6277 = vadd.f32 %v6275, %v6276
        %v6278 = vsel %vm1467, %v5985, 0.0
        %v6279 = vadd.f32 %v6277, %v6278
        %v6280 = vsel %vm1467, %v6017, 0.0
        %v6281 = vadd.f32 %v6279, %v6280
        %v6282 = vsel %vm1467, %v5890, 0.0
        %v6283 = vsel %vm1467, %v5922, 0.0
        %v6284 = vadd.f32 %v6282, %v6283
        %v6285 = vsel %vm1467, %v5954, 0.0
        %v6286 = vadd.f32 %v6284, %v6285
        %v6287 = vsel %vm1467, %v5986, 0.0
        %v6288 = vadd.f32 %v6286, %v6287
        %v6289 = vsel %vm1467, %v6018, 0.0
        %v6290 = vadd.f32 %v6288, %v6289
        %v6291 = vsel %vm1467, %v5891, 0.0
        %v6292 = vsel %vm1467, %v5923, 0.0
        %v6293 = vadd.f32 %v6291, %v6292
        %v6294 = vsel %vm1467, %v5955, 0.0
        %v6295 = vadd.f32 %v6293, %v6294
        %v6296 = vsel %vm1467, %v5987, 0.0
        %v6297 = vadd.f32 %v6295, %v6296
        %v6298 = vsel %vm1467, %v6019, 0.0
        %v6299 = vadd.f32 %v6297, %v6298
        %v6300 = vsel %vm1467, %v5892, 0.0
        %v6301 = vsel %vm1467, %v5924, 0.0
        %v6302 = vadd.f32 %v6300, %v6301
        %v6303 = vsel %vm1467, %v5956, 0.0
        %v6304 = vadd.f32 %v6302, %v6303
        %v6305 = vsel %vm1467, %v5988, 0.0
        %v6306 = vadd.f32 %v6304, %v6305
        %v6307 = vsel %vm1467, %v6020, 0.0
        %v6308 = vadd.f32 %v6306, %v6307
        %v6309 = vld [vmem:[%s5] sm:$0xf]
        %v6310 = vld [vmem:[%s5 + $0x4] sm:$0xf]
        %v6311 = vld [vmem:[%s5 + $0x8] sm:$0xf]
        %v6312 = vld [vmem:[%s5 + $0xc] sm:$0xf]
        %v6313 = vld [vmem:[%s5 + $0x10] sm:$0xf]
        %v6314 = vld [vmem:[%s5 + $0x14] sm:$0xf]
        %v6315 = vld [vmem:[%s5 + $0x18] sm:$0xf]
        %v6316 = vld [vmem:[%s5 + $0x1c] sm:$0xf]
        %v6317 = vld [vmem:[%s5 + $0x20] sm:$0xf]
        %v6318 = vld [vmem:[%s5 + $0x24] sm:$0xf]
        %v6319 = vld [vmem:[%s5 + $0x28] sm:$0xf]
        %v6320 = vld [vmem:[%s5 + $0x2c] sm:$0xf]
        %v6321 = vld [vmem:[%s5 + $0x30] sm:$0xf]
        %v6322 = vld [vmem:[%s5 + $0x34] sm:$0xf]
        %v6323 = vld [vmem:[%s5 + $0x38] sm:$0xf]
        %v6324 = vpack.c.bf16 %v6038, %v6029
        %v6325 = vpack.c.bf16 %v6056, %v6047
        %v6326 = vpack.c.bf16 %v6074, %v6065
        %v6327 = vpack.c.bf16 %v6092, %v6083
        %v6328 = vpack.c.bf16 %v6110, %v6101
        %v6329 = vpack.c.bf16 %v6128, %v6119
        %v6330 = vpack.c.bf16 %v6146, %v6137
        %v6331 = vpack.c.bf16 %v6164, %v6155
        %v6332 = vpack.c.bf16 %v6182, %v6173
        %v6333 = vpack.c.bf16 %v6200, %v6191
        %v6334 = vpack.c.bf16 %v6218, %v6209
        %v6335 = vpack.c.bf16 %v6236, %v6227
        %v6336 = vpack.c.bf16 %v6254, %v6245
        %v6337 = vpack.c.bf16 %v6272, %v6263
        %v6338 = vpack.c.bf16 %v6290, %v6281
        %v6339 = vpack.c.bf16 %v6308, %v6299
        %v6340 = vld [vmem:[%s6] sm:$0xf]
        %v6341 = vld [vmem:[%s6 + $0x4] sm:$0xf]
        %v6342 = vld [vmem:[%s6 + $0x8] sm:$0xf]
        %v6343 = vld [vmem:[%s6 + $0xc] sm:$0xf]
        %v6344 = vld [vmem:[%s6 + $0x10] sm:$0xf]
        %v6345 = vld [vmem:[%s6 + $0x14] sm:$0xf]
        %v6346 = vld [vmem:[%s6 + $0x18] sm:$0xf]
        %v6347 = vld [vmem:[%s6 + $0x1c] sm:$0xf]
        %v6348 = vld [vmem:[%s6 + $0x20] sm:$0xf]
        %v6349 = vld [vmem:[%s6 + $0x24] sm:$0xf]
        %v6350 = vld [vmem:[%s6 + $0x28] sm:$0xf]
        %v6362 = vunpack.c.l.b16 %v6340
        %v6363 = vunpack.c.l.b16 %v6341
        %v6364 = vunpack.c.l.b16 %v6342
        %v6365 = vunpack.c.l.b16 %v6343
        %v6366 = vunpack.c.l.b16 %v6344
        %v6367 = vunpack.c.l.b16 %v6345
        %v6368 = vunpack.c.l.b16 %v6346
        %v6369 = vunpack.c.l.b16 %v6347
        %v6370 = vunpack.c.l.b16 %v6348
        %v6371 = vunpack.c.l.b16 %v6349
        %v6372 = vunpack.c.l.b16 %v6350
        %v6373 = vpack.c.b16 %v6363, %v6362
        %v6374 = vpack.c.b16 %v6365, %v6364
        %v6375 = vpack.c.b16 %v6367, %v6366
        %v6376 = vpack.c.b16 %v6369, %v6368
        %v6377 = vpack.c.b16 %v6371, %v6370
        %v6378 = vpack.c.b16 %v6372, %v6372
        %v6385 = vsel %vm1467, %v6324, 0
        %v6388 = vsel %vm1467, %v6325, 0
        %v6391 = vsel %vm1467, %v6326, 0
        %v6394 = vsel %vm1467, %v6327, 0
        %v6397 = vsel %vm1467, %v6328, 0
        %v6400 = vsel %vm1467, %v6329, 0
        %v6403 = vsel %vm1467, %v6330, 0
        %v6406 = vsel %vm1467, %v6331, 0
        %v6409 = vsel %vm1467, %v6332, 0
        %v6412 = vsel %vm1467, %v6333, 0
        %v6415 = vsel %vm1467, %v6334, 0
        %v6418 = vsel %vm1467, %v6335, 0
        %v6421 = vsel %vm1467, %v6336, 0
        %v6424 = vsel %vm1467, %v6337, 0
        %v6427 = vsel %vm1467, %v6338, 0
        %v6430 = vsel %vm1467, %v6339, 0
        %v6433 = vsel %vm1516, %v6378, 0
        %6435 = vmatpush.bf16.msra.mxu0 0
        %6436 = vmatpush.bf16.msra.mxu0 0
        %6437 = vmatpush.bf16.msra.mxu0 %v6433
        %6438 = vmatpush.bf16.msra.mxu0 %v6377
        %6439 = vmatpush.bf16.msra.mxu0 %v6376
        %6440 = vmatpush.bf16.msra.mxu0 %v6375
        %6441 = vmatpush.bf16.msra.mxu0 %v6374
        %6442 = vmatpush.bf16.msra.mxu0 %v6373
        %6443 = vmatmul.bf16.gmra.mxu0 %v6385
        %v6444 = vpop.f32.mrf.mxu0
        %v6445 = vadd.f32 0.0, %v6444
        %v6446 = vpop.f32.mrf.mxu0
        %v6447 = vadd.f32 0.0, %v6446
        %6448 = vmatmul.bf16.gmra.mxu0 %v6388
        %v6449 = vpop.f32.mrf.mxu0
        %v6450 = vadd.f32 0.0, %v6449
        %v6451 = vpop.f32.mrf.mxu0
        %v6452 = vadd.f32 0.0, %v6451
        %6453 = vmatmul.bf16.gmra.mxu0 %v6391
        %v6454 = vpop.f32.mrf.mxu0
        %v6455 = vadd.f32 0.0, %v6454
        %v6456 = vpop.f32.mrf.mxu0
        %v6457 = vadd.f32 0.0, %v6456
        %6458 = vmatmul.bf16.gmra.mxu0 %v6394
        %v6459 = vpop.f32.mrf.mxu0
        %v6460 = vadd.f32 0.0, %v6459
        %v6461 = vpop.f32.mrf.mxu0
        %v6462 = vadd.f32 0.0, %v6461
        %6463 = vmatmul.bf16.gmra.mxu0 %v6397
        %v6464 = vpop.f32.mrf.mxu0
        %v6465 = vadd.f32 0.0, %v6464
        %v6466 = vpop.f32.mrf.mxu0
        %v6467 = vadd.f32 0.0, %v6466
        %6468 = vmatmul.bf16.gmra.mxu0 %v6400
        %v6469 = vpop.f32.mrf.mxu0
        %v6470 = vadd.f32 0.0, %v6469
        %v6471 = vpop.f32.mrf.mxu0
        %v6472 = vadd.f32 0.0, %v6471
        %6473 = vmatmul.bf16.gmra.mxu0 %v6403
        %v6474 = vpop.f32.mrf.mxu0
        %v6475 = vadd.f32 0.0, %v6474
        %v6476 = vpop.f32.mrf.mxu0
        %v6477 = vadd.f32 0.0, %v6476
        %6478 = vmatmul.bf16.gmra.mxu0 %v6406
        %v6479 = vpop.f32.mrf.mxu0
        %v6480 = vadd.f32 0.0, %v6479
        %v6481 = vpop.f32.mrf.mxu0
        %v6482 = vadd.f32 0.0, %v6481
        %6483 = vmatmul.bf16.gmra.mxu0 %v6409
        %v6484 = vpop.f32.mrf.mxu0
        %v6485 = vadd.f32 0.0, %v6484
        %v6486 = vpop.f32.mrf.mxu0
        %v6487 = vadd.f32 0.0, %v6486
        %6488 = vmatmul.bf16.gmra.mxu0 %v6412
        %v6489 = vpop.f32.mrf.mxu0
        %v6490 = vadd.f32 0.0, %v6489
        %v6491 = vpop.f32.mrf.mxu0
        %v6492 = vadd.f32 0.0, %v6491
        %6493 = vmatmul.bf16.gmra.mxu0 %v6415
        %v6494 = vpop.f32.mrf.mxu0
        %v6495 = vadd.f32 0.0, %v6494
        %v6496 = vpop.f32.mrf.mxu0
        %v6497 = vadd.f32 0.0, %v6496
        %6498 = vmatmul.bf16.gmra.mxu0 %v6418
        %v6499 = vpop.f32.mrf.mxu0
        %v6500 = vadd.f32 0.0, %v6499
        %v6501 = vpop.f32.mrf.mxu0
        %v6502 = vadd.f32 0.0, %v6501
        %6503 = vmatmul.bf16.gmra.mxu0 %v6421
        %v6504 = vpop.f32.mrf.mxu0
        %v6505 = vadd.f32 0.0, %v6504
        %v6506 = vpop.f32.mrf.mxu0
        %v6507 = vadd.f32 0.0, %v6506
        %6508 = vmatmul.bf16.gmra.mxu0 %v6424
        %v6509 = vpop.f32.mrf.mxu0
        %v6510 = vadd.f32 0.0, %v6509
        %v6511 = vpop.f32.mrf.mxu0
        %v6512 = vadd.f32 0.0, %v6511
        %6513 = vmatmul.bf16.gmra.mxu0 %v6427
        %v6514 = vpop.f32.mrf.mxu0
        %v6515 = vadd.f32 0.0, %v6514
        %v6516 = vpop.f32.mrf.mxu0
        %v6517 = vadd.f32 0.0, %v6516
        %6518 = vmatmul.bf16.gmra.mxu0 %v6430
        %v6519 = vpop.f32.mrf.mxu0
        %v6520 = vadd.f32 0.0, %v6519
        %v6521 = vpop.f32.mrf.mxu0
        %v6522 = vadd.f32 0.0, %v6521
        %6523 = vdwg.mxu0
        %v6556 = vunpack.c.l.b16 %v1268
        %v6557 = vunpack.c.l.b16 %v1269
        %v6558 = vunpack.c.l.b16 %v1270
        %v6559 = vunpack.c.l.b16 %v1271
        %v6560 = vunpack.c.l.b16 %v1272
        %v6561 = vunpack.c.l.b16 %v1273
        %v6562 = vunpack.c.l.b16 %v1274
        %v6563 = vunpack.c.l.b16 %v1275
        %v6564 = vunpack.c.l.b16 %v1276
        %v6565 = vunpack.c.l.b16 %v1277
        %v6566 = vunpack.c.l.b16 %v1278
        %v6567 = vunpack.c.l.b16 %v1279
        %v6568 = vunpack.c.l.b16 %v1280
        %v6569 = vunpack.c.l.b16 %v1281
        %v6570 = vunpack.c.l.b16 %v1282
        %v6571 = vunpack.c.l.b16 %v1283
        %v6572 = vunpack.c.l.b16 %v1284
        %v6573 = vunpack.c.l.b16 %v1285
        %v6574 = vunpack.c.l.b16 %v1286
        %v6575 = vunpack.c.l.b16 %v1287
        %v6576 = vunpack.c.l.b16 %v1288
        %v6577 = vunpack.c.l.b16 %v1289
        %v6578 = vunpack.c.l.b16 %v1290
        %v6579 = vunpack.c.l.b16 %v1291
        %v6580 = vunpack.c.l.b16 %v1292
        %v6581 = vunpack.c.l.b16 %v1293
        %v6582 = vunpack.c.l.b16 %v1294
        %v6583 = vunpack.c.l.b16 %v1295
        %v6584 = vunpack.c.l.b16 %v1296
        %v6585 = vunpack.c.l.b16 %v1297
        %v6586 = vunpack.c.l.b16 %v1298
        %v6587 = vunpack.c.l.b16 %v1299
        %v6588 = vpack.c.b16 %v6557, %v6556
        %v6589 = vpack.c.b16 %v6559, %v6558
        %v6590 = vpack.c.b16 %v6561, %v6560
        %v6591 = vpack.c.b16 %v6563, %v6562
        %v6592 = vpack.c.b16 %v6565, %v6564
        %v6593 = vpack.c.b16 %v6567, %v6566
        %v6594 = vpack.c.b16 %v6569, %v6568
        %v6595 = vpack.c.b16 %v6571, %v6570
        %v6596 = vpack.c.b16 %v6573, %v6572
        %v6597 = vpack.c.b16 %v6575, %v6574
        %v6598 = vpack.c.b16 %v6577, %v6576
        %v6599 = vpack.c.b16 %v6579, %v6578
        %v6600 = vpack.c.b16 %v6581, %v6580
        %v6601 = vpack.c.b16 %v6583, %v6582
        %v6602 = vpack.c.b16 %v6585, %v6584
        %v6603 = vpack.c.b16 %v6587, %v6586
        %v6619 = vunpack.c.l.b16 %v6309
        %v6620 = vunpack.c.l.b16 %v6310
        %v6621 = vunpack.c.l.b16 %v6311
        %v6622 = vunpack.c.l.b16 %v6312
        %v6623 = vunpack.c.l.b16 %v6313
        %v6624 = vunpack.c.l.b16 %v6314
        %v6625 = vunpack.c.l.b16 %v6315
        %v6626 = vunpack.c.l.b16 %v6316
        %v6627 = vunpack.c.l.b16 %v6317
        %v6628 = vunpack.c.l.b16 %v6318
        %v6629 = vunpack.c.l.b16 %v6319
        %v6630 = vunpack.c.l.b16 %v6320
        %v6631 = vunpack.c.l.b16 %v6321
        %v6632 = vunpack.c.l.b16 %v6322
        %v6633 = vunpack.c.l.b16 %v6323
        %v6634 = vpack.c.b16 %v6620, %v6619
        %v6635 = vpack.c.b16 %v6622, %v6621
        %v6636 = vpack.c.b16 %v6624, %v6623
        %v6637 = vpack.c.b16 %v6626, %v6625
        %v6638 = vpack.c.b16 %v6628, %v6627
        %v6639 = vpack.c.b16 %v6630, %v6629
        %v6640 = vpack.c.b16 %v6632, %v6631
        %v6641 = vpack.c.b16 %v6633, %v6633
        %vm6649 = vcmask 982016
        %v6651 = vsel %vm6649, %v6588, 0
        %v6654 = vsel %vm6649, %v6589, 0
        %v6657 = vsel %vm6649, %v6590, 0
        %v6660 = vsel %vm6649, %v6591, 0
        %v6663 = vsel %vm6649, %v6592, 0
        %v6666 = vsel %vm6649, %v6593, 0
        %v6669 = vsel %vm6649, %v6594, 0
        %v6672 = vsel %vm6649, %v6595, 0
        %v6675 = vsel %vm6649, %v6596, 0
        %v6678 = vsel %vm6649, %v6597, 0
        %v6681 = vsel %vm6649, %v6598, 0
        %v6684 = vsel %vm6649, %v6599, 0
        %v6687 = vsel %vm6649, %v6600, 0
        %v6690 = vsel %vm6649, %v6601, 0
        %v6693 = vsel %vm6649, %v6602, 0
        %v6696 = vsel %vm6649, %v6603, 0
        %v6699 = vsel %vm1516, %v6641, 0
        %6701 = vmatpush.bf16.msra.mxu0 %v6699
        %6702 = vmatpush.bf16.msra.mxu0 %v6640
        %6703 = vmatpush.bf16.msra.mxu0 %v6639
        %6704 = vmatpush.bf16.msra.mxu0 %v6638
        %6705 = vmatpush.bf16.msra.mxu0 %v6637
        %6706 = vmatpush.bf16.msra.mxu0 %v6636
        %6707 = vmatpush.bf16.msra.mxu0 %v6635
        %6708 = vmatpush.bf16.msra.mxu0 %v6634
        %6709 = vmatmul.bf16.gmra.mxu0 %v6651
        %v6710 = vpop.f32.mrf.mxu0
        %v6711 = vadd.f32 %v6445, %v6710
        %v6712 = vpop.f32.mrf.mxu0
        %v6713 = vadd.f32 %v6447, %v6712
        %6714 = vmatmul.bf16.gmra.mxu0 %v6654
        %v6715 = vpop.f32.mrf.mxu0
        %v6716 = vadd.f32 %v6450, %v6715
        %v6717 = vpop.f32.mrf.mxu0
        %v6718 = vadd.f32 %v6452, %v6717
        %6719 = vmatmul.bf16.gmra.mxu0 %v6657
        %v6720 = vpop.f32.mrf.mxu0
        %v6721 = vadd.f32 %v6455, %v6720
        %v6722 = vpop.f32.mrf.mxu0
        %v6723 = vadd.f32 %v6457, %v6722
        %6724 = vmatmul.bf16.gmra.mxu0 %v6660
        %v6725 = vpop.f32.mrf.mxu0
        %v6726 = vadd.f32 %v6460, %v6725
        %v6727 = vpop.f32.mrf.mxu0
        %v6728 = vadd.f32 %v6462, %v6727
        %6729 = vmatmul.bf16.gmra.mxu0 %v6663
        %v6730 = vpop.f32.mrf.mxu0
        %v6731 = vadd.f32 %v6465, %v6730
        %v6732 = vpop.f32.mrf.mxu0
        %v6733 = vadd.f32 %v6467, %v6732
        %6734 = vmatmul.bf16.gmra.mxu0 %v6666
        %v6735 = vpop.f32.mrf.mxu0
        %v6736 = vadd.f32 %v6470, %v6735
        %v6737 = vpop.f32.mrf.mxu0
        %v6738 = vadd.f32 %v6472, %v6737
        %6739 = vmatmul.bf16.gmra.mxu0 %v6669
        %v6740 = vpop.f32.mrf.mxu0
        %v6741 = vadd.f32 %v6475, %v6740
        %v6742 = vpop.f32.mrf.mxu0
        %v6743 = vadd.f32 %v6477, %v6742
        %6744 = vmatmul.bf16.gmra.mxu0 %v6672
        %v6745 = vpop.f32.mrf.mxu0
        %v6746 = vadd.f32 %v6480, %v6745
        %v6747 = vpop.f32.mrf.mxu0
        %v6748 = vadd.f32 %v6482, %v6747
        %6749 = vmatmul.bf16.gmra.mxu0 %v6675
        %v6750 = vpop.f32.mrf.mxu0
        %v6751 = vadd.f32 %v6485, %v6750
        %v6752 = vpop.f32.mrf.mxu0
        %v6753 = vadd.f32 %v6487, %v6752
        %6754 = vmatmul.bf16.gmra.mxu0 %v6678
        %v6755 = vpop.f32.mrf.mxu0
        %v6756 = vadd.f32 %v6490, %v6755
        %v6757 = vpop.f32.mrf.mxu0
        %v6758 = vadd.f32 %v6492, %v6757
        %6759 = vmatmul.bf16.gmra.mxu0 %v6681
        %v6760 = vpop.f32.mrf.mxu0
        %v6761 = vadd.f32 %v6495, %v6760
        %v6762 = vpop.f32.mrf.mxu0
        %v6763 = vadd.f32 %v6497, %v6762
        %6764 = vmatmul.bf16.gmra.mxu0 %v6684
        %v6765 = vpop.f32.mrf.mxu0
        %v6766 = vadd.f32 %v6500, %v6765
        %v6767 = vpop.f32.mrf.mxu0
        %v6768 = vadd.f32 %v6502, %v6767
        %6769 = vmatmul.bf16.gmra.mxu0 %v6687
        %v6770 = vpop.f32.mrf.mxu0
        %v6771 = vadd.f32 %v6505, %v6770
        %v6772 = vpop.f32.mrf.mxu0
        %v6773 = vadd.f32 %v6507, %v6772
        %6774 = vmatmul.bf16.gmra.mxu0 %v6690
        %v6775 = vpop.f32.mrf.mxu0
        %v6776 = vadd.f32 %v6510, %v6775
        %v6777 = vpop.f32.mrf.mxu0
        %v6778 = vadd.f32 %v6512, %v6777
        %6779 = vmatmul.bf16.gmra.mxu0 %v6693
        %v6780 = vpop.f32.mrf.mxu0
        %v6781 = vadd.f32 %v6515, %v6780
        %v6782 = vpop.f32.mrf.mxu0
        %v6783 = vadd.f32 %v6517, %v6782
        %6784 = vmatmul.bf16.gmra.mxu0 %v6696
        %v6785 = vpop.f32.mrf.mxu0
        %v6786 = vadd.f32 %v6520, %v6785
        %v6787 = vpop.f32.mrf.mxu0
        %v6788 = vadd.f32 %v6522, %v6787
        %6789 = vdwg.mxu0
        %v6790 = vperm.slane %v1070, 0
        %v6791 = vadd.f32 %v6711, %v6790
        %v6792 = vadd.f32 %v6713, %v6790
        %v6793 = vadd.f32 %v6716, %v6790
        %v6794 = vadd.f32 %v6718, %v6790
        %v6795 = vadd.f32 %v6721, %v6790
        %v6796 = vadd.f32 %v6723, %v6790
        %v6797 = vadd.f32 %v6726, %v6790
        %v6798 = vadd.f32 %v6728, %v6790
        %v6799 = vadd.f32 %v6731, %v6790
        %v6800 = vadd.f32 %v6733, %v6790
        %v6801 = vadd.f32 %v6736, %v6790
        %v6802 = vadd.f32 %v6738, %v6790
        %v6803 = vadd.f32 %v6741, %v6790
        %v6804 = vadd.f32 %v6743, %v6790
        %v6805 = vadd.f32 %v6746, %v6790
        %v6806 = vadd.f32 %v6748, %v6790
        %v6807 = vadd.f32 %v6751, %v6790
        %v6808 = vadd.f32 %v6753, %v6790
        %v6809 = vadd.f32 %v6756, %v6790
        %v6810 = vadd.f32 %v6758, %v6790
        %v6811 = vadd.f32 %v6761, %v6790
        %v6812 = vadd.f32 %v6763, %v6790
        %v6813 = vadd.f32 %v6766, %v6790
        %v6814 = vadd.f32 %v6768, %v6790
        %v6815 = vadd.f32 %v6771, %v6790
        %v6816 = vadd.f32 %v6773, %v6790
        %v6817 = vadd.f32 %v6776, %v6790
        %v6818 = vadd.f32 %v6778, %v6790
        %v6819 = vadd.f32 %v6781, %v6790
        %v6820 = vadd.f32 %v6783, %v6790
        %v6821 = vadd.f32 %v6786, %v6790
        %v6822 = vadd.f32 %v6788, %v6790
        %v6823 = vmax.f32 %v6791, 0.0
        %v6824 = vmax.f32 %v6792, 0.0
        %v6825 = vmax.f32 %v6793, 0.0
        %v6826 = vmax.f32 %v6794, 0.0
        %v6827 = vmax.f32 %v6795, 0.0
        %v6828 = vmax.f32 %v6796, 0.0
        %v6829 = vmax.f32 %v6797, 0.0
        %v6830 = vmax.f32 %v6798, 0.0
        %v6831 = vmax.f32 %v6799, 0.0
        %v6832 = vmax.f32 %v6800, 0.0
        %v6833 = vmax.f32 %v6801, 0.0
        %v6834 = vmax.f32 %v6802, 0.0
        %v6835 = vmax.f32 %v6803, 0.0
        %v6836 = vmax.f32 %v6804, 0.0
        %v6837 = vmax.f32 %v6805, 0.0
        %v6838 = vmax.f32 %v6806, 0.0
        %v6839 = vmax.f32 %v6807, 0.0
        %v6840 = vmax.f32 %v6808, 0.0
        %v6841 = vmax.f32 %v6809, 0.0
        %v6842 = vmax.f32 %v6810, 0.0
        %v6843 = vmax.f32 %v6811, 0.0
        %v6844 = vmax.f32 %v6812, 0.0
        %v6845 = vmax.f32 %v6813, 0.0
        %v6846 = vmax.f32 %v6814, 0.0
        %v6847 = vmax.f32 %v6815, 0.0
        %v6848 = vmax.f32 %v6816, 0.0
        %v6849 = vmax.f32 %v6817, 0.0
        %v6850 = vmax.f32 %v6818, 0.0
        %v6851 = vmax.f32 %v6819, 0.0
        %v6852 = vmax.f32 %v6820, 0.0
        %v6853 = vmax.f32 %v6821, 0.0
        %v6854 = vmax.f32 %v6822, 0.0
        %v6855 = vpack.c.bf16 %v6824, %v6823
        %v6856 = vpack.c.bf16 %v6826, %v6825
        %v6857 = vpack.c.bf16 %v6828, %v6827
        %v6858 = vpack.c.bf16 %v6830, %v6829
        %v6859 = vpack.c.bf16 %v6832, %v6831
        %v6860 = vpack.c.bf16 %v6834, %v6833
        %v6861 = vpack.c.bf16 %v6836, %v6835
        %v6862 = vpack.c.bf16 %v6838, %v6837
        %v6863 = vpack.c.bf16 %v6840, %v6839
        %v6864 = vpack.c.bf16 %v6842, %v6841
        %v6865 = vpack.c.bf16 %v6844, %v6843
        %v6866 = vpack.c.bf16 %v6846, %v6845
        %v6867 = vpack.c.bf16 %v6848, %v6847
        %v6868 = vpack.c.bf16 %v6850, %v6849
        %v6869 = vpack.c.bf16 %v6852, %v6851
        %v6870 = vpack.c.bf16 %v6854, %v6853
        %v6871 = vld [vmem:[%s7] sm:$0xf]
        %v6872 = vld [vmem:[%s7 + $0x4] sm:$0xf]
        %v6873 = vld [vmem:[%s7 + $0x8] sm:$0xf]
        %v6874 = vld [vmem:[%s7 + $0xc] sm:$0xf]
        %v6875 = vld [vmem:[%s7 + $0x10] sm:$0xf]
        %v6876 = vld [vmem:[%s7 + $0x14] sm:$0xf]
        %v6877 = vld [vmem:[%s7 + $0x18] sm:$0xf]
        %v6878 = vld [vmem:[%s7 + $0x1c] sm:$0xf]
        %v6879 = vld [vmem:[%s7 + $0x20] sm:$0xf]
        %v6880 = vld [vmem:[%s7 + $0x24] sm:$0xf]
        %v6881 = vld [vmem:[%s7 + $0x28] sm:$0xf]
        %v6882 = vld [vmem:[%s7 + $0x2c] sm:$0xf]
        %v6883 = vld [vmem:[%s7 + $0x30] sm:$0xf]
        %v6884 = vld [vmem:[%s7 + $0x34] sm:$0xf]
        %v6885 = vld [vmem:[%s7 + $0x38] sm:$0xf]
        %v6886 = vld [vmem:[%s7 + $0x3c] sm:$0xf]
        %v6887 = vperm.slane %v1071, 0
        %v6904 = vunpack.c.l.b16 %v6871
        %v6905 = vunpack.c.l.b16 %v6872
        %v6906 = vunpack.c.l.b16 %v6873
        %v6907 = vunpack.c.l.b16 %v6874
        %v6908 = vunpack.c.l.b16 %v6875
        %v6909 = vunpack.c.l.b16 %v6876
        %v6910 = vunpack.c.l.b16 %v6877
        %v6911 = vunpack.c.l.b16 %v6878
        %v6912 = vunpack.c.l.b16 %v6879
        %v6913 = vunpack.c.l.b16 %v6880
        %v6914 = vunpack.c.l.b16 %v6881
        %v6915 = vunpack.c.l.b16 %v6882
        %v6916 = vunpack.c.l.b16 %v6883
        %v6917 = vunpack.c.l.b16 %v6884
        %v6918 = vunpack.c.l.b16 %v6885
        %v6919 = vunpack.c.l.b16 %v6886
        %v6920 = vpack.c.b16 %v6905, %v6904
        %v6921 = vpack.c.b16 %v6907, %v6906
        %v6922 = vpack.c.b16 %v6909, %v6908
        %v6923 = vpack.c.b16 %v6911, %v6910
        %v6924 = vpack.c.b16 %v6913, %v6912
        %v6925 = vpack.c.b16 %v6915, %v6914
        %v6926 = vpack.c.b16 %v6917, %v6916
        %v6927 = vpack.c.b16 %v6919, %v6918
        %6936 = vmatpush.bf16.msra.mxu0 %v6927
        %6937 = vmatpush.bf16.msra.mxu0 %v6926
        %6938 = vmatpush.bf16.msra.mxu0 %v6925
        %6939 = vmatpush.bf16.msra.mxu0 %v6924
        %6940 = vmatpush.bf16.msra.mxu0 %v6923
        %6941 = vmatpush.bf16.msra.mxu0 %v6922
        %6942 = vmatpush.bf16.msra.mxu0 %v6921
        %6943 = vmatpush.bf16.msra.mxu0 %v6920
        %6944 = vmatmul.bf16.gmra.mxu0 %v6855
        %v6945 = vpop.f32.mrf.mxu0
        %v6946 = vadd.f32 %v6887, %v6945
        %v6947 = vpop.f32.mrf.mxu0
        %v6948 = vadd.f32 %v6887, %v6947
        %6949 = vmatmul.bf16.gmra.mxu0 %v6856
        %v6950 = vpop.f32.mrf.mxu0
        %v6951 = vadd.f32 %v6887, %v6950
        %v6952 = vpop.f32.mrf.mxu0
        %v6953 = vadd.f32 %v6887, %v6952
        %6954 = vmatmul.bf16.gmra.mxu0 %v6857
        %v6955 = vpop.f32.mrf.mxu0
        %v6956 = vadd.f32 %v6887, %v6955
        %v6957 = vpop.f32.mrf.mxu0
        %v6958 = vadd.f32 %v6887, %v6957
        %6959 = vmatmul.bf16.gmra.mxu0 %v6858
        %v6960 = vpop.f32.mrf.mxu0
        %v6961 = vadd.f32 %v6887, %v6960
        %v6962 = vpop.f32.mrf.mxu0
        %v6963 = vadd.f32 %v6887, %v6962
        %6964 = vmatmul.bf16.gmra.mxu0 %v6859
        %v6965 = vpop.f32.mrf.mxu0
        %v6966 = vadd.f32 %v6887, %v6965
        %v6967 = vpop.f32.mrf.mxu0
        %v6968 = vadd.f32 %v6887, %v6967
        %6969 = vmatmul.bf16.gmra.mxu0 %v6860
        %v6970 = vpop.f32.mrf.mxu0
        %v6971 = vadd.f32 %v6887, %v6970
        %v6972 = vpop.f32.mrf.mxu0
        %v6973 = vadd.f32 %v6887, %v6972
        %6974 = vmatmul.bf16.gmra.mxu0 %v6861
        %v6975 = vpop.f32.mrf.mxu0
        %v6976 = vadd.f32 %v6887, %v6975
        %v6977 = vpop.f32.mrf.mxu0
        %v6978 = vadd.f32 %v6887, %v6977
        %6979 = vmatmul.bf16.gmra.mxu0 %v6862
        %v6980 = vpop.f32.mrf.mxu0
        %v6981 = vadd.f32 %v6887, %v6980
        %v6982 = vpop.f32.mrf.mxu0
        %v6983 = vadd.f32 %v6887, %v6982
        %6984 = vmatmul.bf16.gmra.mxu0 %v6863
        %v6985 = vpop.f32.mrf.mxu0
        %v6986 = vadd.f32 %v6887, %v6985
        %v6987 = vpop.f32.mrf.mxu0
        %v6988 = vadd.f32 %v6887, %v6987
        %6989 = vmatmul.bf16.gmra.mxu0 %v6864
        %v6990 = vpop.f32.mrf.mxu0
        %v6991 = vadd.f32 %v6887, %v6990
        %v6992 = vpop.f32.mrf.mxu0
        %v6993 = vadd.f32 %v6887, %v6992
        %6994 = vmatmul.bf16.gmra.mxu0 %v6865
        %v6995 = vpop.f32.mrf.mxu0
        %v6996 = vadd.f32 %v6887, %v6995
        %v6997 = vpop.f32.mrf.mxu0
        %v6998 = vadd.f32 %v6887, %v6997
        %6999 = vmatmul.bf16.gmra.mxu0 %v6866
        %v7000 = vpop.f32.mrf.mxu0
        %v7001 = vadd.f32 %v6887, %v7000
        %v7002 = vpop.f32.mrf.mxu0
        %v7003 = vadd.f32 %v6887, %v7002
        %7004 = vmatmul.bf16.gmra.mxu0 %v6867
        %v7005 = vpop.f32.mrf.mxu0
        %v7006 = vadd.f32 %v6887, %v7005
        %v7007 = vpop.f32.mrf.mxu0
        %v7008 = vadd.f32 %v6887, %v7007
        %7009 = vmatmul.bf16.gmra.mxu0 %v6868
        %v7010 = vpop.f32.mrf.mxu0
        %v7011 = vadd.f32 %v6887, %v7010
        %v7012 = vpop.f32.mrf.mxu0
        %v7013 = vadd.f32 %v6887, %v7012
        %7014 = vmatmul.bf16.gmra.mxu0 %v6869
        %v7015 = vpop.f32.mrf.mxu0
        %v7016 = vadd.f32 %v6887, %v7015
        %v7017 = vpop.f32.mrf.mxu0
        %v7018 = vadd.f32 %v6887, %v7017
        %7019 = vmatmul.bf16.gmra.mxu0 %v6870
        %v7020 = vpop.f32.mrf.mxu0
        %v7021 = vadd.f32 %v6887, %v7020
        %v7022 = vpop.f32.mrf.mxu0
        %v7023 = vadd.f32 %v6887, %v7022
        %7024 = vdwg.mxu0
        %v7025 = vmax.f32 %v6946, 0.0
        %v7026 = vmax.f32 %v6948, 0.0
        %v7027 = vmax.f32 %v6951, 0.0
        %v7028 = vmax.f32 %v6953, 0.0
        %v7029 = vmax.f32 %v6956, 0.0
        %v7030 = vmax.f32 %v6958, 0.0
        %v7031 = vmax.f32 %v6961, 0.0
        %v7032 = vmax.f32 %v6963, 0.0
        %v7033 = vmax.f32 %v6966, 0.0
        %v7034 = vmax.f32 %v6968, 0.0
        %v7035 = vmax.f32 %v6971, 0.0
        %v7036 = vmax.f32 %v6973, 0.0
        %v7037 = vmax.f32 %v6976, 0.0
        %v7038 = vmax.f32 %v6978, 0.0
        %v7039 = vmax.f32 %v6981, 0.0
        %v7040 = vmax.f32 %v6983, 0.0
        %v7041 = vmax.f32 %v6986, 0.0
        %v7042 = vmax.f32 %v6988, 0.0
        %v7043 = vmax.f32 %v6991, 0.0
        %v7044 = vmax.f32 %v6993, 0.0
        %v7045 = vmax.f32 %v6996, 0.0
        %v7046 = vmax.f32 %v6998, 0.0
        %v7047 = vmax.f32 %v7001, 0.0
        %v7048 = vmax.f32 %v7003, 0.0
        %v7049 = vmax.f32 %v7006, 0.0
        %v7050 = vmax.f32 %v7008, 0.0
        %v7051 = vmax.f32 %v7011, 0.0
        %v7052 = vmax.f32 %v7013, 0.0
        %v7053 = vmax.f32 %v7016, 0.0
        %v7054 = vmax.f32 %v7018, 0.0
        %v7055 = vmax.f32 %v7021, 0.0
        %v7056 = vmax.f32 %v7023, 0.0
        %v7057 = vpack.c.bf16 %v7026, %v7025
        %v7058 = vpack.c.bf16 %v7028, %v7027
        %v7059 = vpack.c.bf16 %v7030, %v7029
        %v7060 = vpack.c.bf16 %v7032, %v7031
        %v7061 = vpack.c.bf16 %v7034, %v7033
        %v7062 = vpack.c.bf16 %v7036, %v7035
        %v7063 = vpack.c.bf16 %v7038, %v7037
        %v7064 = vpack.c.bf16 %v7040, %v7039
        %v7065 = vpack.c.bf16 %v7042, %v7041
        %v7066 = vpack.c.bf16 %v7044, %v7043
        %v7067 = vpack.c.bf16 %v7046, %v7045
        %v7068 = vpack.c.bf16 %v7048, %v7047
        %v7069 = vpack.c.bf16 %v7050, %v7049
        %v7070 = vpack.c.bf16 %v7052, %v7051
        %v7071 = vpack.c.bf16 %v7054, %v7053
        %v7072 = vpack.c.bf16 %v7056, %v7055
        %v7073 = vld [vmem:[%s8] sm:$0xf]
        %v7074 = vld [vmem:[%s8 + $0x4] sm:$0xf]
        %v7075 = vld [vmem:[%s8 + $0x8] sm:$0xf]
        %v7076 = vld [vmem:[%s8 + $0xc] sm:$0xf]
        %v7077 = vld [vmem:[%s8 + $0x10] sm:$0xf]
        %v7078 = vld [vmem:[%s8 + $0x14] sm:$0xf]
        %v7079 = vld [vmem:[%s8 + $0x18] sm:$0xf]
        %v7080 = vld [vmem:[%s8 + $0x1c] sm:$0xf]
        %v7081 = vperm.slane %v1072, 0
        %v7090 = vunpack.c.l.b16 %v7073
        %v7091 = vunpack.c.l.b16 %v7074
        %v7092 = vunpack.c.l.b16 %v7075
        %v7093 = vunpack.c.l.b16 %v7076
        %v7094 = vunpack.c.l.b16 %v7077
        %v7095 = vunpack.c.l.b16 %v7078
        %v7096 = vunpack.c.l.b16 %v7079
        %v7097 = vunpack.c.l.b16 %v7080
        %v7098 = vpack.c.b16 %v7091, %v7090
        %v7099 = vpack.c.b16 %v7093, %v7092
        %v7100 = vpack.c.b16 %v7095, %v7094
        %v7101 = vpack.c.b16 %v7097, %v7096
        %v7107 = vsel %vm3128, %v7057, 0
        %v7110 = vsel %vm3128, %v7058, 0
        %v7113 = vsel %vm3128, %v7059, 0
        %v7116 = vsel %vm3128, %v7060, 0
        %v7119 = vsel %vm3128, %v7061, 0
        %v7122 = vsel %vm3128, %v7062, 0
        %v7125 = vsel %vm3128, %v7063, 0
        %v7128 = vsel %vm3128, %v7064, 0
        %v7131 = vsel %vm3128, %v7065, 0
        %v7134 = vsel %vm3128, %v7066, 0
        %v7137 = vsel %vm3128, %v7067, 0
        %v7140 = vsel %vm3128, %v7068, 0
        %v7143 = vsel %vm3128, %v7069, 0
        %v7146 = vsel %vm3128, %v7070, 0
        %v7149 = vsel %vm3128, %v7071, 0
        %v7152 = vsel %vm3128, %v7072, 0
        %7154 = vmatpush.bf16.msra.mxu0 0
        %7155 = vmatpush.bf16.msra.mxu0 0
        %7156 = vmatpush.bf16.msra.mxu0 0
        %7157 = vmatpush.bf16.msra.mxu0 0
        %7158 = vmatpush.bf16.msra.mxu0 %v7101
        %7159 = vmatpush.bf16.msra.mxu0 %v7100
        %7160 = vmatpush.bf16.msra.mxu0 %v7099
        %7161 = vmatpush.bf16.msra.mxu0 %v7098
        %7162 = vmatmul.bf16.gmra.mxu0 %v7107
        %v7163 = vpop.f32.mrf.mxu0
        %v7164 = vadd.f32 %v7081, %v7163
        %v7165 = vpop.f32.mrf.mxu0
        %v7166 = vadd.f32 %v7081, %v7165
        %7167 = vmatmul.bf16.gmra.mxu0 %v7110
        %v7168 = vpop.f32.mrf.mxu0
        %v7169 = vadd.f32 %v7081, %v7168
        %v7170 = vpop.f32.mrf.mxu0
        %v7171 = vadd.f32 %v7081, %v7170
        %7172 = vmatmul.bf16.gmra.mxu0 %v7113
        %v7173 = vpop.f32.mrf.mxu0
        %v7174 = vadd.f32 %v7081, %v7173
        %v7175 = vpop.f32.mrf.mxu0
        %v7176 = vadd.f32 %v7081, %v7175
        %7177 = vmatmul.bf16.gmra.mxu0 %v7116
        %v7178 = vpop.f32.mrf.mxu0
        %v7179 = vadd.f32 %v7081, %v7178
        %v7180 = vpop.f32.mrf.mxu0
        %v7181 = vadd.f32 %v7081, %v7180
        %7182 = vmatmul.bf16.gmra.mxu0 %v7119
        %v7183 = vpop.f32.mrf.mxu0
        %v7184 = vadd.f32 %v7081, %v7183
        %v7185 = vpop.f32.mrf.mxu0
        %v7186 = vadd.f32 %v7081, %v7185
        %7187 = vmatmul.bf16.gmra.mxu0 %v7122
        %v7188 = vpop.f32.mrf.mxu0
        %v7189 = vadd.f32 %v7081, %v7188
        %v7190 = vpop.f32.mrf.mxu0
        %v7191 = vadd.f32 %v7081, %v7190
        %7192 = vmatmul.bf16.gmra.mxu0 %v7125
        %v7193 = vpop.f32.mrf.mxu0
        %v7194 = vadd.f32 %v7081, %v7193
        %v7195 = vpop.f32.mrf.mxu0
        %v7196 = vadd.f32 %v7081, %v7195
        %7197 = vmatmul.bf16.gmra.mxu0 %v7128
        %v7198 = vpop.f32.mrf.mxu0
        %v7199 = vadd.f32 %v7081, %v7198
        %v7200 = vpop.f32.mrf.mxu0
        %v7201 = vadd.f32 %v7081, %v7200
        %7202 = vmatmul.bf16.gmra.mxu0 %v7131
        %v7203 = vpop.f32.mrf.mxu0
        %v7204 = vadd.f32 %v7081, %v7203
        %v7205 = vpop.f32.mrf.mxu0
        %v7206 = vadd.f32 %v7081, %v7205
        %7207 = vmatmul.bf16.gmra.mxu0 %v7134
        %v7208 = vpop.f32.mrf.mxu0
        %v7209 = vadd.f32 %v7081, %v7208
        %v7210 = vpop.f32.mrf.mxu0
        %v7211 = vadd.f32 %v7081, %v7210
        %7212 = vmatmul.bf16.gmra.mxu0 %v7137
        %v7213 = vpop.f32.mrf.mxu0
        %v7214 = vadd.f32 %v7081, %v7213
        %v7215 = vpop.f32.mrf.mxu0
        %v7216 = vadd.f32 %v7081, %v7215
        %7217 = vmatmul.bf16.gmra.mxu0 %v7140
        %v7218 = vpop.f32.mrf.mxu0
        %v7219 = vadd.f32 %v7081, %v7218
        %v7220 = vpop.f32.mrf.mxu0
        %v7221 = vadd.f32 %v7081, %v7220
        %7222 = vmatmul.bf16.gmra.mxu0 %v7143
        %v7223 = vpop.f32.mrf.mxu0
        %v7224 = vadd.f32 %v7081, %v7223
        %v7225 = vpop.f32.mrf.mxu0
        %v7226 = vadd.f32 %v7081, %v7225
        %7227 = vmatmul.bf16.gmra.mxu0 %v7146
        %v7228 = vpop.f32.mrf.mxu0
        %v7229 = vadd.f32 %v7081, %v7228
        %v7230 = vpop.f32.mrf.mxu0
        %v7231 = vadd.f32 %v7081, %v7230
        %7232 = vmatmul.bf16.gmra.mxu0 %v7149
        %v7233 = vpop.f32.mrf.mxu0
        %v7234 = vadd.f32 %v7081, %v7233
        %v7235 = vpop.f32.mrf.mxu0
        %v7236 = vadd.f32 %v7081, %v7235
        %7237 = vmatmul.bf16.gmra.mxu0 %v7152
        %v7238 = vpop.f32.mrf.mxu0
        %v7239 = vadd.f32 %v7081, %v7238
        %v7240 = vpop.f32.mrf.mxu0
        %v7241 = vadd.f32 %v7081, %v7240
        %7242 = vdwg.mxu0
        %v7243 = vmax.f32 %v7164, 0.0
        %v7244 = vmax.f32 %v7166, 0.0
        %v7245 = vmax.f32 %v7169, 0.0
        %v7246 = vmax.f32 %v7171, 0.0
        %v7247 = vmax.f32 %v7174, 0.0
        %v7248 = vmax.f32 %v7176, 0.0
        %v7249 = vmax.f32 %v7179, 0.0
        %v7250 = vmax.f32 %v7181, 0.0
        %v7251 = vmax.f32 %v7184, 0.0
        %v7252 = vmax.f32 %v7186, 0.0
        %v7253 = vmax.f32 %v7189, 0.0
        %v7254 = vmax.f32 %v7191, 0.0
        %v7255 = vmax.f32 %v7194, 0.0
        %v7256 = vmax.f32 %v7196, 0.0
        %v7257 = vmax.f32 %v7199, 0.0
        %v7258 = vmax.f32 %v7201, 0.0
        %v7259 = vmax.f32 %v7204, 0.0
        %v7260 = vmax.f32 %v7206, 0.0
        %v7261 = vmax.f32 %v7209, 0.0
        %v7262 = vmax.f32 %v7211, 0.0
        %v7263 = vmax.f32 %v7214, 0.0
        %v7264 = vmax.f32 %v7216, 0.0
        %v7265 = vmax.f32 %v7219, 0.0
        %v7266 = vmax.f32 %v7221, 0.0
        %v7267 = vmax.f32 %v7224, 0.0
        %v7268 = vmax.f32 %v7226, 0.0
        %v7269 = vmax.f32 %v7229, 0.0
        %v7270 = vmax.f32 %v7231, 0.0
        %v7271 = vmax.f32 %v7234, 0.0
        %v7272 = vmax.f32 %v7236, 0.0
        %v7273 = vmax.f32 %v7239, 0.0
        %v7274 = vmax.f32 %v7241, 0.0
        %v7275 = vperm.slane %v1075, 0
        %v7276 = vmul.f32 %v7243, %v7275
        %v7277 = vmul.f32 %v7244, %v7275
        %v7278 = vmul.f32 %v7245, %v7275
        %v7279 = vmul.f32 %v7246, %v7275
        %v7280 = vmul.f32 %v7247, %v7275
        %v7281 = vmul.f32 %v7248, %v7275
        %v7282 = vmul.f32 %v7249, %v7275
        %v7283 = vmul.f32 %v7250, %v7275
        %v7284 = vmul.f32 %v7251, %v7275
        %v7285 = vmul.f32 %v7252, %v7275
        %v7286 = vmul.f32 %v7253, %v7275
        %v7287 = vmul.f32 %v7254, %v7275
        %v7288 = vmul.f32 %v7255, %v7275
        %v7289 = vmul.f32 %v7256, %v7275
        %v7290 = vmul.f32 %v7257, %v7275
        %v7291 = vmul.f32 %v7258, %v7275
        %v7292 = vmul.f32 %v7259, %v7275
        %v7293 = vmul.f32 %v7260, %v7275
        %v7294 = vmul.f32 %v7261, %v7275
        %v7295 = vmul.f32 %v7262, %v7275
        %v7296 = vmul.f32 %v7263, %v7275
        %v7297 = vmul.f32 %v7264, %v7275
        %v7298 = vmul.f32 %v7265, %v7275
        %v7299 = vmul.f32 %v7266, %v7275
        %v7300 = vmul.f32 %v7267, %v7275
        %v7301 = vmul.f32 %v7268, %v7275
        %v7302 = vmul.f32 %v7269, %v7275
        %v7303 = vmul.f32 %v7270, %v7275
        %v7304 = vmul.f32 %v7271, %v7275
        %v7305 = vmul.f32 %v7272, %v7275
        %v7306 = vmul.f32 %v7273, %v7275
        %v7307 = vmul.f32 %v7274, %v7275
        %v7308 = vsel %vm4099, %v7276, 0.0
        %7309 = vadd.xlane.f32.xlu0 %v7308
        %v7310 = vpop.xlane.xlu0 %7309
        %v7311 = vsel %vm4099, %v7277, 0.0
        %7312 = vadd.xlane.f32.xlu0 %v7311
        %v7313 = vpop.xlane.xlu0 %7312
        %v7314 = vsel %vm4099, %v7278, 0.0
        %7315 = vadd.xlane.f32.xlu0 %v7314
        %v7316 = vpop.xlane.xlu0 %7315
        %v7317 = vsel %vm4099, %v7279, 0.0
        %7318 = vadd.xlane.f32.xlu0 %v7317
        %v7319 = vpop.xlane.xlu0 %7318
        %v7320 = vsel %vm4099, %v7280, 0.0
        %7321 = vadd.xlane.f32.xlu0 %v7320
        %v7322 = vpop.xlane.xlu0 %7321
        %v7323 = vsel %vm4099, %v7281, 0.0
        %7324 = vadd.xlane.f32.xlu0 %v7323
        %v7325 = vpop.xlane.xlu0 %7324
        %v7326 = vsel %vm4099, %v7282, 0.0
        %7327 = vadd.xlane.f32.xlu0 %v7326
        %v7328 = vpop.xlane.xlu0 %7327
        %v7329 = vsel %vm4099, %v7283, 0.0
        %7330 = vadd.xlane.f32.xlu0 %v7329
        %v7331 = vpop.xlane.xlu0 %7330
        %v7332 = vsel %vm4099, %v7284, 0.0
        %7333 = vadd.xlane.f32.xlu0 %v7332
        %v7334 = vpop.xlane.xlu0 %7333
        %v7335 = vsel %vm4099, %v7285, 0.0
        %7336 = vadd.xlane.f32.xlu0 %v7335
        %v7337 = vpop.xlane.xlu0 %7336
        %v7338 = vsel %vm4099, %v7286, 0.0
        %7339 = vadd.xlane.f32.xlu0 %v7338
        %v7340 = vpop.xlane.xlu0 %7339
        %v7341 = vsel %vm4099, %v7287, 0.0
        %7342 = vadd.xlane.f32.xlu0 %v7341
        %v7343 = vpop.xlane.xlu0 %7342
        %v7344 = vsel %vm4099, %v7288, 0.0
        %7345 = vadd.xlane.f32.xlu0 %v7344
        %v7346 = vpop.xlane.xlu0 %7345
        %v7347 = vsel %vm4099, %v7289, 0.0
        %7348 = vadd.xlane.f32.xlu0 %v7347
        %v7349 = vpop.xlane.xlu0 %7348
        %v7350 = vsel %vm4099, %v7290, 0.0
        %7351 = vadd.xlane.f32.xlu0 %v7350
        %v7352 = vpop.xlane.xlu0 %7351
        %v7353 = vsel %vm4099, %v7291, 0.0
        %7354 = vadd.xlane.f32.xlu0 %v7353
        %v7355 = vpop.xlane.xlu0 %7354
        %v7356 = vsel %vm4099, %v7292, 0.0
        %7357 = vadd.xlane.f32.xlu0 %v7356
        %v7358 = vpop.xlane.xlu0 %7357
        %v7359 = vsel %vm4099, %v7293, 0.0
        %7360 = vadd.xlane.f32.xlu0 %v7359
        %v7361 = vpop.xlane.xlu0 %7360
        %v7362 = vsel %vm4099, %v7294, 0.0
        %7363 = vadd.xlane.f32.xlu0 %v7362
        %v7364 = vpop.xlane.xlu0 %7363
        %v7365 = vsel %vm4099, %v7295, 0.0
        %7366 = vadd.xlane.f32.xlu0 %v7365
        %v7367 = vpop.xlane.xlu0 %7366
        %v7368 = vsel %vm4099, %v7296, 0.0
        %7369 = vadd.xlane.f32.xlu0 %v7368
        %v7370 = vpop.xlane.xlu0 %7369
        %v7371 = vsel %vm4099, %v7297, 0.0
        %7372 = vadd.xlane.f32.xlu0 %v7371
        %v7373 = vpop.xlane.xlu0 %7372
        %v7374 = vsel %vm4099, %v7298, 0.0
        %7375 = vadd.xlane.f32.xlu0 %v7374
        %v7376 = vpop.xlane.xlu0 %7375
        %v7377 = vsel %vm4099, %v7299, 0.0
        %7378 = vadd.xlane.f32.xlu0 %v7377
        %v7379 = vpop.xlane.xlu0 %7378
        %v7380 = vsel %vm4099, %v7300, 0.0
        %7381 = vadd.xlane.f32.xlu0 %v7380
        %v7382 = vpop.xlane.xlu0 %7381
        %v7383 = vsel %vm4099, %v7301, 0.0
        %7384 = vadd.xlane.f32.xlu0 %v7383
        %v7385 = vpop.xlane.xlu0 %7384
        %v7386 = vsel %vm4099, %v7302, 0.0
        %7387 = vadd.xlane.f32.xlu0 %v7386
        %v7388 = vpop.xlane.xlu0 %7387
        %v7389 = vsel %vm4099, %v7303, 0.0
        %7390 = vadd.xlane.f32.xlu0 %v7389
        %v7391 = vpop.xlane.xlu0 %7390
        %v7392 = vsel %vm4099, %v7304, 0.0
        %7393 = vadd.xlane.f32.xlu0 %v7392
        %v7394 = vpop.xlane.xlu0 %7393
        %v7395 = vsel %vm4099, %v7305, 0.0
        %7396 = vadd.xlane.f32.xlu0 %v7395
        %v7397 = vpop.xlane.xlu0 %7396
        %v7398 = vsel %vm4099, %v7306, 0.0
        %7399 = vadd.xlane.f32.xlu0 %v7398
        %v7400 = vpop.xlane.xlu0 %7399
        %v7401 = vsel %vm4099, %v7307, 0.0
        %7402 = vadd.xlane.f32.xlu0 %v7401
        %v7403 = vpop.xlane.xlu0 %7402
        %v7404 = vadd.f32 %v7310, %v4580
        %v7405 = vadd.f32 %v7313, %v4580
        %v7406 = vadd.f32 %v7316, %v4580
        %v7407 = vadd.f32 %v7319, %v4580
        %v7408 = vadd.f32 %v7322, %v4580
        %v7409 = vadd.f32 %v7325, %v4580
        %v7410 = vadd.f32 %v7328, %v4580
        %v7411 = vadd.f32 %v7331, %v4580
        %v7412 = vadd.f32 %v7334, %v4580
        %v7413 = vadd.f32 %v7337, %v4580
        %v7414 = vadd.f32 %v7340, %v4580
        %v7415 = vadd.f32 %v7343, %v4580
        %v7416 = vadd.f32 %v7346, %v4580
        %v7417 = vadd.f32 %v7349, %v4580
        %v7418 = vadd.f32 %v7352, %v4580
        %v7419 = vadd.f32 %v7355, %v4580
        %v7420 = vadd.f32 %v7358, %v4580
        %v7421 = vadd.f32 %v7361, %v4580
        %v7422 = vadd.f32 %v7364, %v4580
        %v7423 = vadd.f32 %v7367, %v4580
        %v7424 = vadd.f32 %v7370, %v4580
        %v7425 = vadd.f32 %v7373, %v4580
        %v7426 = vadd.f32 %v7376, %v4580
        %v7427 = vadd.f32 %v7379, %v4580
        %v7428 = vadd.f32 %v7382, %v4580
        %v7429 = vadd.f32 %v7385, %v4580
        %v7430 = vadd.f32 %v7388, %v4580
        %v7431 = vadd.f32 %v7391, %v4580
        %v7432 = vadd.f32 %v7394, %v4580
        %v7433 = vadd.f32 %v7397, %v4580
        %v7434 = vadd.f32 %v7400, %v4580
        %v7435 = vadd.f32 %v7403, %v4580
        %v7436 = vand.u32 2147483647, %v7404
        %v7437 = vand.u32 2147483647, %v7405
        %v7438 = vand.u32 2147483647, %v7406
        %v7439 = vand.u32 2147483647, %v7407
        %v7440 = vand.u32 2147483647, %v7408
        %v7441 = vand.u32 2147483647, %v7409
        %v7442 = vand.u32 2147483647, %v7410
        %v7443 = vand.u32 2147483647, %v7411
        %v7444 = vand.u32 2147483647, %v7412
        %v7445 = vand.u32 2147483647, %v7413
        %v7446 = vand.u32 2147483647, %v7414
        %v7447 = vand.u32 2147483647, %v7415
        %v7448 = vand.u32 2147483647, %v7416
        %v7449 = vand.u32 2147483647, %v7417
        %v7450 = vand.u32 2147483647, %v7418
        %v7451 = vand.u32 2147483647, %v7419
        %v7452 = vand.u32 2147483647, %v7420
        %v7453 = vand.u32 2147483647, %v7421
        %v7454 = vand.u32 2147483647, %v7422
        %v7455 = vand.u32 2147483647, %v7423
        %v7456 = vand.u32 2147483647, %v7424
        %v7457 = vand.u32 2147483647, %v7425
        %v7458 = vand.u32 2147483647, %v7426
        %v7459 = vand.u32 2147483647, %v7427
        %v7460 = vand.u32 2147483647, %v7428
        %v7461 = vand.u32 2147483647, %v7429
        %v7462 = vand.u32 2147483647, %v7430
        %v7463 = vand.u32 2147483647, %v7431
        %v7464 = vand.u32 2147483647, %v7432
        %v7465 = vand.u32 2147483647, %v7433
        %v7466 = vand.u32 2147483647, %v7434
        %v7467 = vand.u32 2147483647, %v7435
        %v7468 = vsub.f32 0.0, %v7436
        %v7469 = vsub.f32 0.0, %v7437
        %v7470 = vsub.f32 0.0, %v7438
        %v7471 = vsub.f32 0.0, %v7439
        %v7472 = vsub.f32 0.0, %v7440
        %v7473 = vsub.f32 0.0, %v7441
        %v7474 = vsub.f32 0.0, %v7442
        %v7475 = vsub.f32 0.0, %v7443
        %v7476 = vsub.f32 0.0, %v7444
        %v7477 = vsub.f32 0.0, %v7445
        %v7478 = vsub.f32 0.0, %v7446
        %v7479 = vsub.f32 0.0, %v7447
        %v7480 = vsub.f32 0.0, %v7448
        %v7481 = vsub.f32 0.0, %v7449
        %v7482 = vsub.f32 0.0, %v7450
        %v7483 = vsub.f32 0.0, %v7451
        %v7484 = vsub.f32 0.0, %v7452
        %v7485 = vsub.f32 0.0, %v7453
        %v7486 = vsub.f32 0.0, %v7454
        %v7487 = vsub.f32 0.0, %v7455
        %v7488 = vsub.f32 0.0, %v7456
        %v7489 = vsub.f32 0.0, %v7457
        %v7490 = vsub.f32 0.0, %v7458
        %v7491 = vsub.f32 0.0, %v7459
        %v7492 = vsub.f32 0.0, %v7460
        %v7493 = vsub.f32 0.0, %v7461
        %v7494 = vsub.f32 0.0, %v7462
        %v7495 = vsub.f32 0.0, %v7463
        %v7496 = vsub.f32 0.0, %v7464
        %v7497 = vsub.f32 0.0, %v7465
        %v7498 = vsub.f32 0.0, %v7466
        %v7499 = vsub.f32 0.0, %v7467
        %v7500 = vmul.f32 %v7468, 1.442695
        %v7501 = vpow.pop %v7500
        %v7502 = vmul.f32 %v7469, 1.442695
        %v7503 = vpow.pop %v7502
        %v7504 = vmul.f32 %v7470, 1.442695
        %v7505 = vpow.pop %v7504
        %v7506 = vmul.f32 %v7471, 1.442695
        %v7507 = vpow.pop %v7506
        %v7508 = vmul.f32 %v7472, 1.442695
        %v7509 = vpow.pop %v7508
        %v7510 = vmul.f32 %v7473, 1.442695
        %v7511 = vpow.pop %v7510
        %v7512 = vmul.f32 %v7474, 1.442695
        %v7513 = vpow.pop %v7512
        %v7514 = vmul.f32 %v7475, 1.442695
        %v7515 = vpow.pop %v7514
        %v7516 = vmul.f32 %v7476, 1.442695
        %v7517 = vpow.pop %v7516
        %v7518 = vmul.f32 %v7477, 1.442695
        %v7519 = vpow.pop %v7518
        %v7520 = vmul.f32 %v7478, 1.442695
        %v7521 = vpow.pop %v7520
        %v7522 = vmul.f32 %v7479, 1.442695
        %v7523 = vpow.pop %v7522
        %v7524 = vmul.f32 %v7480, 1.442695
        %v7525 = vpow.pop %v7524
        %v7526 = vmul.f32 %v7481, 1.442695
        %v7527 = vpow.pop %v7526
        %v7528 = vmul.f32 %v7482, 1.442695
        %v7529 = vpow.pop %v7528
        %v7530 = vmul.f32 %v7483, 1.442695
        %v7531 = vpow.pop %v7530
        %v7532 = vmul.f32 %v7484, 1.442695
        %v7533 = vpow.pop %v7532
        %v7534 = vmul.f32 %v7485, 1.442695
        %v7535 = vpow.pop %v7534
        %v7536 = vmul.f32 %v7486, 1.442695
        %v7537 = vpow.pop %v7536
        %v7538 = vmul.f32 %v7487, 1.442695
        %v7539 = vpow.pop %v7538
        %v7540 = vmul.f32 %v7488, 1.442695
        %v7541 = vpow.pop %v7540
        %v7542 = vmul.f32 %v7489, 1.442695
        %v7543 = vpow.pop %v7542
        %v7544 = vmul.f32 %v7490, 1.442695
        %v7545 = vpow.pop %v7544
        %v7546 = vmul.f32 %v7491, 1.442695
        %v7547 = vpow.pop %v7546
        %v7548 = vmul.f32 %v7492, 1.442695
        %v7549 = vpow.pop %v7548
        %v7550 = vmul.f32 %v7493, 1.442695
        %v7551 = vpow.pop %v7550
        %v7552 = vmul.f32 %v7494, 1.442695
        %v7553 = vpow.pop %v7552
        %v7554 = vmul.f32 %v7495, 1.442695
        %v7555 = vpow.pop %v7554
        %v7556 = vmul.f32 %v7496, 1.442695
        %v7557 = vpow.pop %v7556
        %v7558 = vmul.f32 %v7497, 1.442695
        %v7559 = vpow.pop %v7558
        %v7560 = vmul.f32 %v7498, 1.442695
        %v7561 = vpow.pop %v7560
        %v7562 = vmul.f32 %v7499, 1.442695
        %v7563 = vpow.pop %v7562
        %vm7564 = vcmp.ge.f32.partialorder %v7404, 0.0
        %vm7565 = vcmp.ge.f32.partialorder %v7405, 0.0
        %vm7566 = vcmp.ge.f32.partialorder %v7406, 0.0
        %vm7567 = vcmp.ge.f32.partialorder %v7407, 0.0
        %vm7568 = vcmp.ge.f32.partialorder %v7408, 0.0
        %vm7569 = vcmp.ge.f32.partialorder %v7409, 0.0
        %vm7570 = vcmp.ge.f32.partialorder %v7410, 0.0
        %vm7571 = vcmp.ge.f32.partialorder %v7411, 0.0
        %vm7572 = vcmp.ge.f32.partialorder %v7412, 0.0
        %vm7573 = vcmp.ge.f32.partialorder %v7413, 0.0
        %vm7574 = vcmp.ge.f32.partialorder %v7414, 0.0
        %vm7575 = vcmp.ge.f32.partialorder %v7415, 0.0
        %vm7576 = vcmp.ge.f32.partialorder %v7416, 0.0
        %vm7577 = vcmp.ge.f32.partialorder %v7417, 0.0
        %vm7578 = vcmp.ge.f32.partialorder %v7418, 0.0
        %vm7579 = vcmp.ge.f32.partialorder %v7419, 0.0
        %vm7580 = vcmp.ge.f32.partialorder %v7420, 0.0
        %vm7581 = vcmp.ge.f32.partialorder %v7421, 0.0
        %vm7582 = vcmp.ge.f32.partialorder %v7422, 0.0
        %vm7583 = vcmp.ge.f32.partialorder %v7423, 0.0
        %vm7584 = vcmp.ge.f32.partialorder %v7424, 0.0
        %vm7585 = vcmp.ge.f32.partialorder %v7425, 0.0
        %vm7586 = vcmp.ge.f32.partialorder %v7426, 0.0
        %vm7587 = vcmp.ge.f32.partialorder %v7427, 0.0
        %vm7588 = vcmp.ge.f32.partialorder %v7428, 0.0
        %vm7589 = vcmp.ge.f32.partialorder %v7429, 0.0
        %vm7590 = vcmp.ge.f32.partialorder %v7430, 0.0
        %vm7591 = vcmp.ge.f32.partialorder %v7431, 0.0
        %vm7592 = vcmp.ge.f32.partialorder %v7432, 0.0
        %vm7593 = vcmp.ge.f32.partialorder %v7433, 0.0
        %vm7594 = vcmp.ge.f32.partialorder %v7434, 0.0
        %vm7595 = vcmp.ge.f32.partialorder %v7435, 0.0
        %v7596 = vadd.f32 %v7501, 1.0
        %v7597 = vadd.f32 %v7503, 1.0
        %v7598 = vadd.f32 %v7505, 1.0
        %v7599 = vadd.f32 %v7507, 1.0
        %v7600 = vadd.f32 %v7509, 1.0
        %v7601 = vadd.f32 %v7511, 1.0
        %v7602 = vadd.f32 %v7513, 1.0
        %v7603 = vadd.f32 %v7515, 1.0
        %v7604 = vadd.f32 %v7517, 1.0
        %v7605 = vadd.f32 %v7519, 1.0
        %v7606 = vadd.f32 %v7521, 1.0
        %v7607 = vadd.f32 %v7523, 1.0
        %v7608 = vadd.f32 %v7525, 1.0
        %v7609 = vadd.f32 %v7527, 1.0
        %v7610 = vadd.f32 %v7529, 1.0
        %v7611 = vadd.f32 %v7531, 1.0
        %v7612 = vadd.f32 %v7533, 1.0
        %v7613 = vadd.f32 %v7535, 1.0
        %v7614 = vadd.f32 %v7537, 1.0
        %v7615 = vadd.f32 %v7539, 1.0
        %v7616 = vadd.f32 %v7541, 1.0
        %v7617 = vadd.f32 %v7543, 1.0
        %v7618 = vadd.f32 %v7545, 1.0
        %v7619 = vadd.f32 %v7547, 1.0
        %v7620 = vadd.f32 %v7549, 1.0
        %v7621 = vadd.f32 %v7551, 1.0
        %v7622 = vadd.f32 %v7553, 1.0
        %v7623 = vadd.f32 %v7555, 1.0
        %v7624 = vadd.f32 %v7557, 1.0
        %v7625 = vadd.f32 %v7559, 1.0
        %v7626 = vadd.f32 %v7561, 1.0
        %v7627 = vadd.f32 %v7563, 1.0
        %v7628 = vrcp.pop %v7596
        %v7629 = vmul.f32 %v7596, %v7628
        %v7630 = vsub.f32 1.0, %v7629
        %v7631 = vmul.f32 %v7628, %v7630
        %v7632 = vadd.f32 %v7628, %v7631
        %vm7633 = vweird.f32 %v7596
        %vm7634 = vweird.f32 %v7628
        %vm7635 = vmor %vm7633, %vm7634
        %v7636 = vsel %vm7635, %v7628, %v7632
        %v7637 = vand.u32 2147483647, %v7596
        %vm7638 = vcmp.eq.f32.partialorder %v7637, 8.507059e+37
        %v7639 = vand.u32 %v7596, 2147483648
        %v7640 = vor.u32 1.1754944e-38, %v7639
        %v7641 = vsel %vm7638, %v7640, %v7636
        %v7642 = vmul.f32 1.0, %v7641
        %v7643 = vrcp.pop %v7597
        %v7644 = vmul.f32 %v7597, %v7643
        %v7645 = vsub.f32 1.0, %v7644
        %v7646 = vmul.f32 %v7643, %v7645
        %v7647 = vadd.f32 %v7643, %v7646
        %vm7648 = vweird.f32 %v7597
        %vm7649 = vweird.f32 %v7643
        %vm7650 = vmor %vm7648, %vm7649
        %v7651 = vsel %vm7650, %v7643, %v7647
        %v7652 = vand.u32 2147483647, %v7597
        %vm7653 = vcmp.eq.f32.partialorder %v7652, 8.507059e+37
        %v7654 = vand.u32 %v7597, 2147483648
        %v7655 = vor.u32 1.1754944e-38, %v7654
        %v7656 = vsel %vm7653, %v7655, %v7651
        %v7657 = vmul.f32 1.0, %v7656
        %v7658 = vrcp.pop %v7598
        %v7659 = vmul.f32 %v7598, %v7658
        %v7660 = vsub.f32 1.0, %v7659
        %v7661 = vmul.f32 %v7658, %v7660
        %v7662 = vadd.f32 %v7658, %v7661
        %vm7663 = vweird.f32 %v7598
        %vm7664 = vweird.f32 %v7658
        %vm7665 = vmor %vm7663, %vm7664
        %v7666 = vsel %vm7665, %v7658, %v7662
        %v7667 = vand.u32 2147483647, %v7598
        %vm7668 = vcmp.eq.f32.partialorder %v7667, 8.507059e+37
        %v7669 = vand.u32 %v7598, 2147483648
        %v7670 = vor.u32 1.1754944e-38, %v7669
        %v7671 = vsel %vm7668, %v7670, %v7666
        %v7672 = vmul.f32 1.0, %v7671
        %v7673 = vrcp.pop %v7599
        %v7674 = vmul.f32 %v7599, %v7673
        %v7675 = vsub.f32 1.0, %v7674
        %v7676 = vmul.f32 %v7673, %v7675
        %v7677 = vadd.f32 %v7673, %v7676
        %vm7678 = vweird.f32 %v7599
        %vm7679 = vweird.f32 %v7673
        %vm7680 = vmor %vm7678, %vm7679
        %v7681 = vsel %vm7680, %v7673, %v7677
        %v7682 = vand.u32 2147483647, %v7599
        %vm7683 = vcmp.eq.f32.partialorder %v7682, 8.507059e+37
        %v7684 = vand.u32 %v7599, 2147483648
        %v7685 = vor.u32 1.1754944e-38, %v7684
        %v7686 = vsel %vm7683, %v7685, %v7681
        %v7687 = vmul.f32 1.0, %v7686
        %v7688 = vrcp.pop %v7600
        %v7689 = vmul.f32 %v7600, %v7688
        %v7690 = vsub.f32 1.0, %v7689
        %v7691 = vmul.f32 %v7688, %v7690
        %v7692 = vadd.f32 %v7688, %v7691
        %vm7693 = vweird.f32 %v7600
        %vm7694 = vweird.f32 %v7688
        %vm7695 = vmor %vm7693, %vm7694
        %v7696 = vsel %vm7695, %v7688, %v7692
        %v7697 = vand.u32 2147483647, %v7600
        %vm7698 = vcmp.eq.f32.partialorder %v7697, 8.507059e+37
        %v7699 = vand.u32 %v7600, 2147483648
        %v7700 = vor.u32 1.1754944e-38, %v7699
        %v7701 = vsel %vm7698, %v7700, %v7696
        %v7702 = vmul.f32 1.0, %v7701
        %v7703 = vrcp.pop %v7601
        %v7704 = vmul.f32 %v7601, %v7703
        %v7705 = vsub.f32 1.0, %v7704
        %v7706 = vmul.f32 %v7703, %v7705
        %v7707 = vadd.f32 %v7703, %v7706
        %vm7708 = vweird.f32 %v7601
        %vm7709 = vweird.f32 %v7703
        %vm7710 = vmor %vm7708, %vm7709
        %v7711 = vsel %vm7710, %v7703, %v7707
        %v7712 = vand.u32 2147483647, %v7601
        %vm7713 = vcmp.eq.f32.partialorder %v7712, 8.507059e+37
        %v7714 = vand.u32 %v7601, 2147483648
        %v7715 = vor.u32 1.1754944e-38, %v7714
        %v7716 = vsel %vm7713, %v7715, %v7711
        %v7717 = vmul.f32 1.0, %v7716
        %v7718 = vrcp.pop %v7602
        %v7719 = vmul.f32 %v7602, %v7718
        %v7720 = vsub.f32 1.0, %v7719
        %v7721 = vmul.f32 %v7718, %v7720
        %v7722 = vadd.f32 %v7718, %v7721
        %vm7723 = vweird.f32 %v7602
        %vm7724 = vweird.f32 %v7718
        %vm7725 = vmor %vm7723, %vm7724
        %v7726 = vsel %vm7725, %v7718, %v7722
        %v7727 = vand.u32 2147483647, %v7602
        %vm7728 = vcmp.eq.f32.partialorder %v7727, 8.507059e+37
        %v7729 = vand.u32 %v7602, 2147483648
        %v7730 = vor.u32 1.1754944e-38, %v7729
        %v7731 = vsel %vm7728, %v7730, %v7726
        %v7732 = vmul.f32 1.0, %v7731
        %v7733 = vrcp.pop %v7603
        %v7734 = vmul.f32 %v7603, %v7733
        %v7735 = vsub.f32 1.0, %v7734
        %v7736 = vmul.f32 %v7733, %v7735
        %v7737 = vadd.f32 %v7733, %v7736
        %vm7738 = vweird.f32 %v7603
        %vm7739 = vweird.f32 %v7733
        %vm7740 = vmor %vm7738, %vm7739
        %v7741 = vsel %vm7740, %v7733, %v7737
        %v7742 = vand.u32 2147483647, %v7603
        %vm7743 = vcmp.eq.f32.partialorder %v7742, 8.507059e+37
        %v7744 = vand.u32 %v7603, 2147483648
        %v7745 = vor.u32 1.1754944e-38, %v7744
        %v7746 = vsel %vm7743, %v7745, %v7741
        %v7747 = vmul.f32 1.0, %v7746
        %v7748 = vrcp.pop %v7604
        %v7749 = vmul.f32 %v7604, %v7748
        %v7750 = vsub.f32 1.0, %v7749
        %v7751 = vmul.f32 %v7748, %v7750
        %v7752 = vadd.f32 %v7748, %v7751
        %vm7753 = vweird.f32 %v7604
        %vm7754 = vweird.f32 %v7748
        %vm7755 = vmor %vm7753, %vm7754
        %v7756 = vsel %vm7755, %v7748, %v7752
        %v7757 = vand.u32 2147483647, %v7604
        %vm7758 = vcmp.eq.f32.partialorder %v7757, 8.507059e+37
        %v7759 = vand.u32 %v7604, 2147483648
        %v7760 = vor.u32 1.1754944e-38, %v7759
        %v7761 = vsel %vm7758, %v7760, %v7756
        %v7762 = vmul.f32 1.0, %v7761
        %v7763 = vrcp.pop %v7605
        %v7764 = vmul.f32 %v7605, %v7763
        %v7765 = vsub.f32 1.0, %v7764
        %v7766 = vmul.f32 %v7763, %v7765
        %v7767 = vadd.f32 %v7763, %v7766
        %vm7768 = vweird.f32 %v7605
        %vm7769 = vweird.f32 %v7763
        %vm7770 = vmor %vm7768, %vm7769
        %v7771 = vsel %vm7770, %v7763, %v7767
        %v7772 = vand.u32 2147483647, %v7605
        %vm7773 = vcmp.eq.f32.partialorder %v7772, 8.507059e+37
        %v7774 = vand.u32 %v7605, 2147483648
        %v7775 = vor.u32 1.1754944e-38, %v7774
        %v7776 = vsel %vm7773, %v7775, %v7771
        %v7777 = vmul.f32 1.0, %v7776
        %v7778 = vrcp.pop %v7606
        %v7779 = vmul.f32 %v7606, %v7778
        %v7780 = vsub.f32 1.0, %v7779
        %v7781 = vmul.f32 %v7778, %v7780
        %v7782 = vadd.f32 %v7778, %v7781
        %vm7783 = vweird.f32 %v7606
        %vm7784 = vweird.f32 %v7778
        %vm7785 = vmor %vm7783, %vm7784
        %v7786 = vsel %vm7785, %v7778, %v7782
        %v7787 = vand.u32 2147483647, %v7606
        %vm7788 = vcmp.eq.f32.partialorder %v7787, 8.507059e+37
        %v7789 = vand.u32 %v7606, 2147483648
        %v7790 = vor.u32 1.1754944e-38, %v7789
        %v7791 = vsel %vm7788, %v7790, %v7786
        %v7792 = vmul.f32 1.0, %v7791
        %v7793 = vrcp.pop %v7607
        %v7794 = vmul.f32 %v7607, %v7793
        %v7795 = vsub.f32 1.0, %v7794
        %v7796 = vmul.f32 %v7793, %v7795
        %v7797 = vadd.f32 %v7793, %v7796
        %vm7798 = vweird.f32 %v7607
        %vm7799 = vweird.f32 %v7793
        %vm7800 = vmor %vm7798, %vm7799
        %v7801 = vsel %vm7800, %v7793, %v7797
        %v7802 = vand.u32 2147483647, %v7607
        %vm7803 = vcmp.eq.f32.partialorder %v7802, 8.507059e+37
        %v7804 = vand.u32 %v7607, 2147483648
        %v7805 = vor.u32 1.1754944e-38, %v7804
        %v7806 = vsel %vm7803, %v7805, %v7801
        %v7807 = vmul.f32 1.0, %v7806
        %v7808 = vrcp.pop %v7608
        %v7809 = vmul.f32 %v7608, %v7808
        %v7810 = vsub.f32 1.0, %v7809
        %v7811 = vmul.f32 %v7808, %v7810
        %v7812 = vadd.f32 %v7808, %v7811
        %vm7813 = vweird.f32 %v7608
        %vm7814 = vweird.f32 %v7808
        %vm7815 = vmor %vm7813, %vm7814
        %v7816 = vsel %vm7815, %v7808, %v7812
        %v7817 = vand.u32 2147483647, %v7608
        %vm7818 = vcmp.eq.f32.partialorder %v7817, 8.507059e+37
        %v7819 = vand.u32 %v7608, 2147483648
        %v7820 = vor.u32 1.1754944e-38, %v7819
        %v7821 = vsel %vm7818, %v7820, %v7816
        %v7822 = vmul.f32 1.0, %v7821
        %v7823 = vrcp.pop %v7609
        %v7824 = vmul.f32 %v7609, %v7823
        %v7825 = vsub.f32 1.0, %v7824
        %v7826 = vmul.f32 %v7823, %v7825
        %v7827 = vadd.f32 %v7823, %v7826
        %vm7828 = vweird.f32 %v7609
        %vm7829 = vweird.f32 %v7823
        %vm7830 = vmor %vm7828, %vm7829
        %v7831 = vsel %vm7830, %v7823, %v7827
        %v7832 = vand.u32 2147483647, %v7609
        %vm7833 = vcmp.eq.f32.partialorder %v7832, 8.507059e+37
        %v7834 = vand.u32 %v7609, 2147483648
        %v7835 = vor.u32 1.1754944e-38, %v7834
        %v7836 = vsel %vm7833, %v7835, %v7831
        %v7837 = vmul.f32 1.0, %v7836
        %v7838 = vrcp.pop %v7610
        %v7839 = vmul.f32 %v7610, %v7838
        %v7840 = vsub.f32 1.0, %v7839
        %v7841 = vmul.f32 %v7838, %v7840
        %v7842 = vadd.f32 %v7838, %v7841
        %vm7843 = vweird.f32 %v7610
        %vm7844 = vweird.f32 %v7838
        %vm7845 = vmor %vm7843, %vm7844
        %v7846 = vsel %vm7845, %v7838, %v7842
        %v7847 = vand.u32 2147483647, %v7610
        %vm7848 = vcmp.eq.f32.partialorder %v7847, 8.507059e+37
        %v7849 = vand.u32 %v7610, 2147483648
        %v7850 = vor.u32 1.1754944e-38, %v7849
        %v7851 = vsel %vm7848, %v7850, %v7846
        %v7852 = vmul.f32 1.0, %v7851
        %v7853 = vrcp.pop %v7611
        %v7854 = vmul.f32 %v7611, %v7853
        %v7855 = vsub.f32 1.0, %v7854
        %v7856 = vmul.f32 %v7853, %v7855
        %v7857 = vadd.f32 %v7853, %v7856
        %vm7858 = vweird.f32 %v7611
        %vm7859 = vweird.f32 %v7853
        %vm7860 = vmor %vm7858, %vm7859
        %v7861 = vsel %vm7860, %v7853, %v7857
        %v7862 = vand.u32 2147483647, %v7611
        %vm7863 = vcmp.eq.f32.partialorder %v7862, 8.507059e+37
        %v7864 = vand.u32 %v7611, 2147483648
        %v7865 = vor.u32 1.1754944e-38, %v7864
        %v7866 = vsel %vm7863, %v7865, %v7861
        %v7867 = vmul.f32 1.0, %v7866
        %v7868 = vrcp.pop %v7612
        %v7869 = vmul.f32 %v7612, %v7868
        %v7870 = vsub.f32 1.0, %v7869
        %v7871 = vmul.f32 %v7868, %v7870
        %v7872 = vadd.f32 %v7868, %v7871
        %vm7873 = vweird.f32 %v7612
        %vm7874 = vweird.f32 %v7868
        %vm7875 = vmor %vm7873, %vm7874
        %v7876 = vsel %vm7875, %v7868, %v7872
        %v7877 = vand.u32 2147483647, %v7612
        %vm7878 = vcmp.eq.f32.partialorder %v7877, 8.507059e+37
        %v7879 = vand.u32 %v7612, 2147483648
        %v7880 = vor.u32 1.1754944e-38, %v7879
        %v7881 = vsel %vm7878, %v7880, %v7876
        %v7882 = vmul.f32 1.0, %v7881
        %v7883 = vrcp.pop %v7613
        %v7884 = vmul.f32 %v7613, %v7883
        %v7885 = vsub.f32 1.0, %v7884
        %v7886 = vmul.f32 %v7883, %v7885
        %v7887 = vadd.f32 %v7883, %v7886
        %vm7888 = vweird.f32 %v7613
        %vm7889 = vweird.f32 %v7883
        %vm7890 = vmor %vm7888, %vm7889
        %v7891 = vsel %vm7890, %v7883, %v7887
        %v7892 = vand.u32 2147483647, %v7613
        %vm7893 = vcmp.eq.f32.partialorder %v7892, 8.507059e+37
        %v7894 = vand.u32 %v7613, 2147483648
        %v7895 = vor.u32 1.1754944e-38, %v7894
        %v7896 = vsel %vm7893, %v7895, %v7891
        %v7897 = vmul.f32 1.0, %v7896
        %v7898 = vrcp.pop %v7614
        %v7899 = vmul.f32 %v7614, %v7898
        %v7900 = vsub.f32 1.0, %v7899
        %v7901 = vmul.f32 %v7898, %v7900
        %v7902 = vadd.f32 %v7898, %v7901
        %vm7903 = vweird.f32 %v7614
        %vm7904 = vweird.f32 %v7898
        %vm7905 = vmor %vm7903, %vm7904
        %v7906 = vsel %vm7905, %v7898, %v7902
        %v7907 = vand.u32 2147483647, %v7614
        %vm7908 = vcmp.eq.f32.partialorder %v7907, 8.507059e+37
        %v7909 = vand.u32 %v7614, 2147483648
        %v7910 = vor.u32 1.1754944e-38, %v7909
        %v7911 = vsel %vm7908, %v7910, %v7906
        %v7912 = vmul.f32 1.0, %v7911
        %v7913 = vrcp.pop %v7615
        %v7914 = vmul.f32 %v7615, %v7913
        %v7915 = vsub.f32 1.0, %v7914
        %v7916 = vmul.f32 %v7913, %v7915
        %v7917 = vadd.f32 %v7913, %v7916
        %vm7918 = vweird.f32 %v7615
        %vm7919 = vweird.f32 %v7913
        %vm7920 = vmor %vm7918, %vm7919
        %v7921 = vsel %vm7920, %v7913, %v7917
        %v7922 = vand.u32 2147483647, %v7615
        %vm7923 = vcmp.eq.f32.partialorder %v7922, 8.507059e+37
        %v7924 = vand.u32 %v7615, 2147483648
        %v7925 = vor.u32 1.1754944e-38, %v7924
        %v7926 = vsel %vm7923, %v7925, %v7921
        %v7927 = vmul.f32 1.0, %v7926
        %v7928 = vrcp.pop %v7616
        %v7929 = vmul.f32 %v7616, %v7928
        %v7930 = vsub.f32 1.0, %v7929
        %v7931 = vmul.f32 %v7928, %v7930
        %v7932 = vadd.f32 %v7928, %v7931
        %vm7933 = vweird.f32 %v7616
        %vm7934 = vweird.f32 %v7928
        %vm7935 = vmor %vm7933, %vm7934
        %v7936 = vsel %vm7935, %v7928, %v7932
        %v7937 = vand.u32 2147483647, %v7616
        %vm7938 = vcmp.eq.f32.partialorder %v7937, 8.507059e+37
        %v7939 = vand.u32 %v7616, 2147483648
        %v7940 = vor.u32 1.1754944e-38, %v7939
        %v7941 = vsel %vm7938, %v7940, %v7936
        %v7942 = vmul.f32 1.0, %v7941
        %v7943 = vrcp.pop %v7617
        %v7944 = vmul.f32 %v7617, %v7943
        %v7945 = vsub.f32 1.0, %v7944
        %v7946 = vmul.f32 %v7943, %v7945
        %v7947 = vadd.f32 %v7943, %v7946
        %vm7948 = vweird.f32 %v7617
        %vm7949 = vweird.f32 %v7943
        %vm7950 = vmor %vm7948, %vm7949
        %v7951 = vsel %vm7950, %v7943, %v7947
        %v7952 = vand.u32 2147483647, %v7617
        %vm7953 = vcmp.eq.f32.partialorder %v7952, 8.507059e+37
        %v7954 = vand.u32 %v7617, 2147483648
        %v7955 = vor.u32 1.1754944e-38, %v7954
        %v7956 = vsel %vm7953, %v7955, %v7951
        %v7957 = vmul.f32 1.0, %v7956
        %v7958 = vrcp.pop %v7618
        %v7959 = vmul.f32 %v7618, %v7958
        %v7960 = vsub.f32 1.0, %v7959
        %v7961 = vmul.f32 %v7958, %v7960
        %v7962 = vadd.f32 %v7958, %v7961
        %vm7963 = vweird.f32 %v7618
        %vm7964 = vweird.f32 %v7958
        %vm7965 = vmor %vm7963, %vm7964
        %v7966 = vsel %vm7965, %v7958, %v7962
        %v7967 = vand.u32 2147483647, %v7618
        %vm7968 = vcmp.eq.f32.partialorder %v7967, 8.507059e+37
        %v7969 = vand.u32 %v7618, 2147483648
        %v7970 = vor.u32 1.1754944e-38, %v7969
        %v7971 = vsel %vm7968, %v7970, %v7966
        %v7972 = vmul.f32 1.0, %v7971
        %v7973 = vrcp.pop %v7619
        %v7974 = vmul.f32 %v7619, %v7973
        %v7975 = vsub.f32 1.0, %v7974
        %v7976 = vmul.f32 %v7973, %v7975
        %v7977 = vadd.f32 %v7973, %v7976
        %vm7978 = vweird.f32 %v7619
        %vm7979 = vweird.f32 %v7973
        %vm7980 = vmor %vm7978, %vm7979
        %v7981 = vsel %vm7980, %v7973, %v7977
        %v7982 = vand.u32 2147483647, %v7619
        %vm7983 = vcmp.eq.f32.partialorder %v7982, 8.507059e+37
        %v7984 = vand.u32 %v7619, 2147483648
        %v7985 = vor.u32 1.1754944e-38, %v7984
        %v7986 = vsel %vm7983, %v7985, %v7981
        %v7987 = vmul.f32 1.0, %v7986
        %v7988 = vrcp.pop %v7620
        %v7989 = vmul.f32 %v7620, %v7988
        %v7990 = vsub.f32 1.0, %v7989
        %v7991 = vmul.f32 %v7988, %v7990
        %v7992 = vadd.f32 %v7988, %v7991
        %vm7993 = vweird.f32 %v7620
        %vm7994 = vweird.f32 %v7988
        %vm7995 = vmor %vm7993, %vm7994
        %v7996 = vsel %vm7995, %v7988, %v7992
        %v7997 = vand.u32 2147483647, %v7620
        %vm7998 = vcmp.eq.f32.partialorder %v7997, 8.507059e+37
        %v7999 = vand.u32 %v7620, 2147483648
        %v8000 = vor.u32 1.1754944e-38, %v7999
        %v8001 = vsel %vm7998, %v8000, %v7996
        %v8002 = vmul.f32 1.0, %v8001
        %v8003 = vrcp.pop %v7621
        %v8004 = vmul.f32 %v7621, %v8003
        %v8005 = vsub.f32 1.0, %v8004
        %v8006 = vmul.f32 %v8003, %v8005
        %v8007 = vadd.f32 %v8003, %v8006
        %vm8008 = vweird.f32 %v7621
        %vm8009 = vweird.f32 %v8003
        %vm8010 = vmor %vm8008, %vm8009
        %v8011 = vsel %vm8010, %v8003, %v8007
        %v8012 = vand.u32 2147483647, %v7621
        %vm8013 = vcmp.eq.f32.partialorder %v8012, 8.507059e+37
        %v8014 = vand.u32 %v7621, 2147483648
        %v8015 = vor.u32 1.1754944e-38, %v8014
        %v8016 = vsel %vm8013, %v8015, %v8011
        %v8017 = vmul.f32 1.0, %v8016
        %v8018 = vrcp.pop %v7622
        %v8019 = vmul.f32 %v7622, %v8018
        %v8020 = vsub.f32 1.0, %v8019
        %v8021 = vmul.f32 %v8018, %v8020
        %v8022 = vadd.f32 %v8018, %v8021
        %vm8023 = vweird.f32 %v7622
        %vm8024 = vweird.f32 %v8018
        %vm8025 = vmor %vm8023, %vm8024
        %v8026 = vsel %vm8025, %v8018, %v8022
        %v8027 = vand.u32 2147483647, %v7622
        %vm8028 = vcmp.eq.f32.partialorder %v8027, 8.507059e+37
        %v8029 = vand.u32 %v7622, 2147483648
        %v8030 = vor.u32 1.1754944e-38, %v8029
        %v8031 = vsel %vm8028, %v8030, %v8026
        %v8032 = vmul.f32 1.0, %v8031
        %v8033 = vrcp.pop %v7623
        %v8034 = vmul.f32 %v7623, %v8033
        %v8035 = vsub.f32 1.0, %v8034
        %v8036 = vmul.f32 %v8033, %v8035
        %v8037 = vadd.f32 %v8033, %v8036
        %vm8038 = vweird.f32 %v7623
        %vm8039 = vweird.f32 %v8033
        %vm8040 = vmor %vm8038, %vm8039
        %v8041 = vsel %vm8040, %v8033, %v8037
        %v8042 = vand.u32 2147483647, %v7623
        %vm8043 = vcmp.eq.f32.partialorder %v8042, 8.507059e+37
        %v8044 = vand.u32 %v7623, 2147483648
        %v8045 = vor.u32 1.1754944e-38, %v8044
        %v8046 = vsel %vm8043, %v8045, %v8041
        %v8047 = vmul.f32 1.0, %v8046
        %v8048 = vrcp.pop %v7624
        %v8049 = vmul.f32 %v7624, %v8048
        %v8050 = vsub.f32 1.0, %v8049
        %v8051 = vmul.f32 %v8048, %v8050
        %v8052 = vadd.f32 %v8048, %v8051
        %vm8053 = vweird.f32 %v7624
        %vm8054 = vweird.f32 %v8048
        %vm8055 = vmor %vm8053, %vm8054
        %v8056 = vsel %vm8055, %v8048, %v8052
        %v8057 = vand.u32 2147483647, %v7624
        %vm8058 = vcmp.eq.f32.partialorder %v8057, 8.507059e+37
        %v8059 = vand.u32 %v7624, 2147483648
        %v8060 = vor.u32 1.1754944e-38, %v8059
        %v8061 = vsel %vm8058, %v8060, %v8056
        %v8062 = vmul.f32 1.0, %v8061
        %v8063 = vrcp.pop %v7625
        %v8064 = vmul.f32 %v7625, %v8063
        %v8065 = vsub.f32 1.0, %v8064
        %v8066 = vmul.f32 %v8063, %v8065
        %v8067 = vadd.f32 %v8063, %v8066
        %vm8068 = vweird.f32 %v7625
        %vm8069 = vweird.f32 %v8063
        %vm8070 = vmor %vm8068, %vm8069
        %v8071 = vsel %vm8070, %v8063, %v8067
        %v8072 = vand.u32 2147483647, %v7625
        %vm8073 = vcmp.eq.f32.partialorder %v8072, 8.507059e+37
        %v8074 = vand.u32 %v7625, 2147483648
        %v8075 = vor.u32 1.1754944e-38, %v8074
        %v8076 = vsel %vm8073, %v8075, %v8071
        %v8077 = vmul.f32 1.0, %v8076
        %v8078 = vrcp.pop %v7626
        %v8079 = vmul.f32 %v7626, %v8078
        %v8080 = vsub.f32 1.0, %v8079
        %v8081 = vmul.f32 %v8078, %v8080
        %v8082 = vadd.f32 %v8078, %v8081
        %vm8083 = vweird.f32 %v7626
        %vm8084 = vweird.f32 %v8078
        %vm8085 = vmor %vm8083, %vm8084
        %v8086 = vsel %vm8085, %v8078, %v8082
        %v8087 = vand.u32 2147483647, %v7626
        %vm8088 = vcmp.eq.f32.partialorder %v8087, 8.507059e+37
        %v8089 = vand.u32 %v7626, 2147483648
        %v8090 = vor.u32 1.1754944e-38, %v8089
        %v8091 = vsel %vm8088, %v8090, %v8086
        %v8092 = vmul.f32 1.0, %v8091
        %v8093 = vrcp.pop %v7627
        %v8094 = vmul.f32 %v7627, %v8093
        %v8095 = vsub.f32 1.0, %v8094
        %v8096 = vmul.f32 %v8093, %v8095
        %v8097 = vadd.f32 %v8093, %v8096
        %vm8098 = vweird.f32 %v7627
        %vm8099 = vweird.f32 %v8093
        %vm8100 = vmor %vm8098, %vm8099
        %v8101 = vsel %vm8100, %v8093, %v8097
        %v8102 = vand.u32 2147483647, %v7627
        %vm8103 = vcmp.eq.f32.partialorder %v8102, 8.507059e+37
        %v8104 = vand.u32 %v7627, 2147483648
        %v8105 = vor.u32 1.1754944e-38, %v8104
        %v8106 = vsel %vm8103, %v8105, %v8101
        %v8107 = vmul.f32 1.0, %v8106
        %v8108 = vmul.f32 %v7501, %v7641
        %v8109 = vmul.f32 %v7503, %v7656
        %v8110 = vmul.f32 %v7505, %v7671
        %v8111 = vmul.f32 %v7507, %v7686
        %v8112 = vmul.f32 %v7509, %v7701
        %v8113 = vmul.f32 %v7511, %v7716
        %v8114 = vmul.f32 %v7513, %v7731
        %v8115 = vmul.f32 %v7515, %v7746
        %v8116 = vmul.f32 %v7517, %v7761
        %v8117 = vmul.f32 %v7519, %v7776
        %v8118 = vmul.f32 %v7521, %v7791
        %v8119 = vmul.f32 %v7523, %v7806
        %v8120 = vmul.f32 %v7525, %v7821
        %v8121 = vmul.f32 %v7527, %v7836
        %v8122 = vmul.f32 %v7529, %v7851
        %v8123 = vmul.f32 %v7531, %v7866
        %v8124 = vmul.f32 %v7533, %v7881
        %v8125 = vmul.f32 %v7535, %v7896
        %v8126 = vmul.f32 %v7537, %v7911
        %v8127 = vmul.f32 %v7539, %v7926
        %v8128 = vmul.f32 %v7541, %v7941
        %v8129 = vmul.f32 %v7543, %v7956
        %v8130 = vmul.f32 %v7545, %v7971
        %v8131 = vmul.f32 %v7547, %v7986
        %v8132 = vmul.f32 %v7549, %v8001
        %v8133 = vmul.f32 %v7551, %v8016
        %v8134 = vmul.f32 %v7553, %v8031
        %v8135 = vmul.f32 %v7555, %v8046
        %v8136 = vmul.f32 %v7557, %v8061
        %v8137 = vmul.f32 %v7559, %v8076
        %v8138 = vmul.f32 %v7561, %v8091
        %v8139 = vmul.f32 %v7563, %v8106
        %v8140 = vsel %vm7564, %v7642, %v8108
        %v8141 = vsel %vm7565, %v7657, %v8109
        %v8142 = vsel %vm7566, %v7672, %v8110
        %v8143 = vsel %vm7567, %v7687, %v8111
        %v8144 = vsel %vm7568, %v7702, %v8112
        %v8145 = vsel %vm7569, %v7717, %v8113
        %v8146 = vsel %vm7570, %v7732, %v8114
        %v8147 = vsel %vm7571, %v7747, %v8115
        %v8148 = vsel %vm7572, %v7762, %v8116
        %v8149 = vsel %vm7573, %v7777, %v8117
        %v8150 = vsel %vm7574, %v7792, %v8118
        %v8151 = vsel %vm7575, %v7807, %v8119
        %v8152 = vsel %vm7576, %v7822, %v8120
        %v8153 = vsel %vm7577, %v7837, %v8121
        %v8154 = vsel %vm7578, %v7852, %v8122
        %v8155 = vsel %vm7579, %v7867, %v8123
        %v8156 = vsel %vm7580, %v7882, %v8124
        %v8157 = vsel %vm7581, %v7897, %v8125
        %v8158 = vsel %vm7582, %v7912, %v8126
        %v8159 = vsel %vm7583, %v7927, %v8127
        %v8160 = vsel %vm7584, %v7942, %v8128
        %v8161 = vsel %vm7585, %v7957, %v8129
        %v8162 = vsel %vm7586, %v7972, %v8130
        %v8163 = vsel %vm7587, %v7987, %v8131
        %v8164 = vsel %vm7588, %v8002, %v8132
        %v8165 = vsel %vm7589, %v8017, %v8133
        %v8166 = vsel %vm7590, %v8032, %v8134
        %v8167 = vsel %vm7591, %v8047, %v8135
        %v8168 = vsel %vm7592, %v8062, %v8136
        %v8169 = vsel %vm7593, %v8077, %v8137
        %v8170 = vsel %vm7594, %v8092, %v8138
        %v8171 = vsel %vm7595, %v8107, %v8139
        %v8172 = vadd.f32 %v8140, 1e-06
        %v8173 = vadd.f32 %v8141, 1e-06
        %v8174 = vadd.f32 %v8142, 1e-06
        %v8175 = vadd.f32 %v8143, 1e-06
        %v8176 = vadd.f32 %v8144, 1e-06
        %v8177 = vadd.f32 %v8145, 1e-06
        %v8178 = vadd.f32 %v8146, 1e-06
        %v8179 = vadd.f32 %v8147, 1e-06
        %v8180 = vadd.f32 %v8148, 1e-06
        %v8181 = vadd.f32 %v8149, 1e-06
        %v8182 = vadd.f32 %v8150, 1e-06
        %v8183 = vadd.f32 %v8151, 1e-06
        %v8184 = vadd.f32 %v8152, 1e-06
        %v8185 = vadd.f32 %v8153, 1e-06
        %v8186 = vadd.f32 %v8154, 1e-06
        %v8187 = vadd.f32 %v8155, 1e-06
        %v8188 = vadd.f32 %v8156, 1e-06
        %v8189 = vadd.f32 %v8157, 1e-06
        %v8190 = vadd.f32 %v8158, 1e-06
        %v8191 = vadd.f32 %v8159, 1e-06
        %v8192 = vadd.f32 %v8160, 1e-06
        %v8193 = vadd.f32 %v8161, 1e-06
        %v8194 = vadd.f32 %v8162, 1e-06
        %v8195 = vadd.f32 %v8163, 1e-06
        %v8196 = vadd.f32 %v8164, 1e-06
        %v8197 = vadd.f32 %v8165, 1e-06
        %v8198 = vadd.f32 %v8166, 1e-06
        %v8199 = vadd.f32 %v8167, 1e-06
        %v8200 = vadd.f32 %v8168, 1e-06
        %v8201 = vadd.f32 %v8169, 1e-06
        %v8202 = vadd.f32 %v8170, 1e-06
        %v8203 = vadd.f32 %v8171, 1e-06
        %v8204 = vlog2.pop %v8172
        %v8205 = vmul.f32 %v8204, 0.6931472
        %v8206 = vlog2.pop %v8173
        %v8207 = vmul.f32 %v8206, 0.6931472
        %v8208 = vlog2.pop %v8174
        %v8209 = vmul.f32 %v8208, 0.6931472
        %v8210 = vlog2.pop %v8175
        %v8211 = vmul.f32 %v8210, 0.6931472
        %v8212 = vlog2.pop %v8176
        %v8213 = vmul.f32 %v8212, 0.6931472
        %v8214 = vlog2.pop %v8177
        %v8215 = vmul.f32 %v8214, 0.6931472
        %v8216 = vlog2.pop %v8178
        %v8217 = vmul.f32 %v8216, 0.6931472
        %v8218 = vlog2.pop %v8179
        %v8219 = vmul.f32 %v8218, 0.6931472
        %v8220 = vlog2.pop %v8180
        %v8221 = vmul.f32 %v8220, 0.6931472
        %v8222 = vlog2.pop %v8181
        %v8223 = vmul.f32 %v8222, 0.6931472
        %v8224 = vlog2.pop %v8182
        %v8225 = vmul.f32 %v8224, 0.6931472
        %v8226 = vlog2.pop %v8183
        %v8227 = vmul.f32 %v8226, 0.6931472
        %v8228 = vlog2.pop %v8184
        %v8229 = vmul.f32 %v8228, 0.6931472
        %v8230 = vlog2.pop %v8185
        %v8231 = vmul.f32 %v8230, 0.6931472
        %v8232 = vlog2.pop %v8186
        %v8233 = vmul.f32 %v8232, 0.6931472
        %v8234 = vlog2.pop %v8187
        %v8235 = vmul.f32 %v8234, 0.6931472
        %v8236 = vlog2.pop %v8188
        %v8237 = vmul.f32 %v8236, 0.6931472
        %v8238 = vlog2.pop %v8189
        %v8239 = vmul.f32 %v8238, 0.6931472
        %v8240 = vlog2.pop %v8190
        %v8241 = vmul.f32 %v8240, 0.6931472
        %v8242 = vlog2.pop %v8191
        %v8243 = vmul.f32 %v8242, 0.6931472
        %v8244 = vlog2.pop %v8192
        %v8245 = vmul.f32 %v8244, 0.6931472
        %v8246 = vlog2.pop %v8193
        %v8247 = vmul.f32 %v8246, 0.6931472
        %v8248 = vlog2.pop %v8194
        %v8249 = vmul.f32 %v8248, 0.6931472
        %v8250 = vlog2.pop %v8195
        %v8251 = vmul.f32 %v8250, 0.6931472
        %v8252 = vlog2.pop %v8196
        %v8253 = vmul.f32 %v8252, 0.6931472
        %v8254 = vlog2.pop %v8197
        %v8255 = vmul.f32 %v8254, 0.6931472
        %v8256 = vlog2.pop %v8198
        %v8257 = vmul.f32 %v8256, 0.6931472
        %v8258 = vlog2.pop %v8199
        %v8259 = vmul.f32 %v8258, 0.6931472
        %v8260 = vlog2.pop %v8200
        %v8261 = vmul.f32 %v8260, 0.6931472
        %v8262 = vlog2.pop %v8201
        %v8263 = vmul.f32 %v8262, 0.6931472
        %v8264 = vlog2.pop %v8202
        %v8265 = vmul.f32 %v8264, 0.6931472
        %v8266 = vlog2.pop %v8203
        %v8267 = vmul.f32 %v8266, 0.6931472
        %8300 = vrot.lane.b32.xlu0 %v8205, 119
        %v8301 = vpop.permute.xlu0 %8300
        %8302 = vrot.lane.b32.xlu0 %v8207, 119
        %v8303 = vpop.permute.xlu0 %8302
        %8304 = vrot.lane.b32.xlu0 %v8209, 119
        %v8305 = vpop.permute.xlu0 %8304
        %8306 = vrot.lane.b32.xlu0 %v8211, 119
        %v8307 = vpop.permute.xlu0 %8306
        %8308 = vrot.lane.b32.xlu0 %v8213, 119
        %v8309 = vpop.permute.xlu0 %8308
        %8310 = vrot.lane.b32.xlu0 %v8215, 119
        %v8311 = vpop.permute.xlu0 %8310
        %8312 = vrot.lane.b32.xlu0 %v8217, 119
        %v8313 = vpop.permute.xlu0 %8312
        %8314 = vrot.lane.b32.xlu0 %v8219, 119
        %v8315 = vpop.permute.xlu0 %8314
        %8316 = vrot.lane.b32.xlu0 %v8221, 119
        %v8317 = vpop.permute.xlu0 %8316
        %8318 = vrot.lane.b32.xlu0 %v8223, 119
        %v8319 = vpop.permute.xlu0 %8318
        %8320 = vrot.lane.b32.xlu0 %v8225, 119
        %v8321 = vpop.permute.xlu0 %8320
        %8322 = vrot.lane.b32.xlu0 %v8227, 119
        %v8323 = vpop.permute.xlu0 %8322
        %8324 = vrot.lane.b32.xlu0 %v8229, 119
        %v8325 = vpop.permute.xlu0 %8324
        %8326 = vrot.lane.b32.xlu0 %v8231, 119
        %v8327 = vpop.permute.xlu0 %8326
        %8328 = vrot.lane.b32.xlu0 %v8233, 119
        %v8329 = vpop.permute.xlu0 %8328
        %8330 = vrot.lane.b32.xlu0 %v8235, 119
        %v8331 = vpop.permute.xlu0 %8330
        %8332 = vrot.lane.b32.xlu0 %v8237, 119
        %v8333 = vpop.permute.xlu0 %8332
        %8334 = vrot.lane.b32.xlu0 %v8239, 119
        %v8335 = vpop.permute.xlu0 %8334
        %8336 = vrot.lane.b32.xlu0 %v8241, 119
        %v8337 = vpop.permute.xlu0 %8336
        %8338 = vrot.lane.b32.xlu0 %v8243, 119
        %v8339 = vpop.permute.xlu0 %8338
        %8340 = vrot.lane.b32.xlu0 %v8245, 119
        %v8341 = vpop.permute.xlu0 %8340
        %8342 = vrot.lane.b32.xlu0 %v8247, 119
        %v8343 = vpop.permute.xlu0 %8342
        %8344 = vrot.lane.b32.xlu0 %v8249, 119
        %v8345 = vpop.permute.xlu0 %8344
        %8346 = vrot.lane.b32.xlu0 %v8251, 119
        %v8347 = vpop.permute.xlu0 %8346
        %8348 = vrot.lane.b32.xlu0 %v8253, 119
        %v8349 = vpop.permute.xlu0 %8348
        %8350 = vrot.lane.b32.xlu0 %v8255, 119
        %v8351 = vpop.permute.xlu0 %8350
        %8352 = vrot.lane.b32.xlu0 %v8257, 119
        %v8353 = vpop.permute.xlu0 %8352
        %8354 = vrot.lane.b32.xlu0 %v8259, 119
        %v8355 = vpop.permute.xlu0 %8354
        %8356 = vrot.lane.b32.xlu0 %v8261, 119
        %v8357 = vpop.permute.xlu0 %8356
        %8358 = vrot.lane.b32.xlu0 %v8263, 119
        %v8359 = vpop.permute.xlu0 %8358
        %8360 = vrot.lane.b32.xlu0 %v8265, 119
        %v8361 = vpop.permute.xlu0 %8360
        %8362 = vrot.lane.b32.xlu0 %v8267, 119
        %v8363 = vpop.permute.xlu0 %8362
        %v8396 = vmul.f32 %v1300, %v8301
        %v8397 = vmul.f32 %v1301, %v8303
        %v8398 = vmul.f32 %v1302, %v8305
        %v8399 = vmul.f32 %v1303, %v8307
        %v8400 = vmul.f32 %v1304, %v8309
        %v8401 = vmul.f32 %v1305, %v8311
        %v8402 = vmul.f32 %v1306, %v8313
        %v8403 = vmul.f32 %v1307, %v8315
        %v8404 = vmul.f32 %v1308, %v8317
        %v8405 = vmul.f32 %v1309, %v8319
        %v8406 = vmul.f32 %v1310, %v8321
        %v8407 = vmul.f32 %v1311, %v8323
        %v8408 = vmul.f32 %v1312, %v8325
        %v8409 = vmul.f32 %v1313, %v8327
        %v8410 = vmul.f32 %v1314, %v8329
        %v8411 = vmul.f32 %v1315, %v8331
        %v8412 = vmul.f32 %v1316, %v8333
        %v8413 = vmul.f32 %v1317, %v8335
        %v8414 = vmul.f32 %v1318, %v8337
        %v8415 = vmul.f32 %v1319, %v8339
        %v8416 = vmul.f32 %v1320, %v8341
        %v8417 = vmul.f32 %v1321, %v8343
        %v8418 = vmul.f32 %v1322, %v8345
        %v8419 = vmul.f32 %v1323, %v8347
        %v8420 = vmul.f32 %v1324, %v8349
        %v8421 = vmul.f32 %v1325, %v8351
        %v8422 = vmul.f32 %v1326, %v8353
        %v8423 = vmul.f32 %v1327, %v8355
        %v8424 = vmul.f32 %v1328, %v8357
        %v8425 = vmul.f32 %v1329, %v8359
        %v8426 = vmul.f32 %v1330, %v8361
        %v8427 = vmul.f32 %v1331, %v8363
        %v8428 = vsub.f32 1.0, %v1300
        %v8429 = vsub.f32 1.0, %v1301
        %v8430 = vsub.f32 1.0, %v1302
        %v8431 = vsub.f32 1.0, %v1303
        %v8432 = vsub.f32 1.0, %v1304
        %v8433 = vsub.f32 1.0, %v1305
        %v8434 = vsub.f32 1.0, %v1306
        %v8435 = vsub.f32 1.0, %v1307
        %v8436 = vsub.f32 1.0, %v1308
        %v8437 = vsub.f32 1.0, %v1309
        %v8438 = vsub.f32 1.0, %v1310
        %v8439 = vsub.f32 1.0, %v1311
        %v8440 = vsub.f32 1.0, %v1312
        %v8441 = vsub.f32 1.0, %v1313
        %v8442 = vsub.f32 1.0, %v1314
        %v8443 = vsub.f32 1.0, %v1315
        %v8444 = vsub.f32 1.0, %v1316
        %v8445 = vsub.f32 1.0, %v1317
        %v8446 = vsub.f32 1.0, %v1318
        %v8447 = vsub.f32 1.0, %v1319
        %v8448 = vsub.f32 1.0, %v1320
        %v8449 = vsub.f32 1.0, %v1321
        %v8450 = vsub.f32 1.0, %v1322
        %v8451 = vsub.f32 1.0, %v1323
        %v8452 = vsub.f32 1.0, %v1324
        %v8453 = vsub.f32 1.0, %v1325
        %v8454 = vsub.f32 1.0, %v1326
        %v8455 = vsub.f32 1.0, %v1327
        %v8456 = vsub.f32 1.0, %v1328
        %v8457 = vsub.f32 1.0, %v1329
        %v8458 = vsub.f32 1.0, %v1330
        %v8459 = vsub.f32 1.0, %v1331
        %v8460 = vsub.f32 1.0, %v8140
        %v8461 = vsub.f32 1.0, %v8141
        %v8462 = vsub.f32 1.0, %v8142
        %v8463 = vsub.f32 1.0, %v8143
        %v8464 = vsub.f32 1.0, %v8144
        %v8465 = vsub.f32 1.0, %v8145
        %v8466 = vsub.f32 1.0, %v8146
        %v8467 = vsub.f32 1.0, %v8147
        %v8468 = vsub.f32 1.0, %v8148
        %v8469 = vsub.f32 1.0, %v8149
        %v8470 = vsub.f32 1.0, %v8150
        %v8471 = vsub.f32 1.0, %v8151
        %v8472 = vsub.f32 1.0, %v8152
        %v8473 = vsub.f32 1.0, %v8153
        %v8474 = vsub.f32 1.0, %v8154
        %v8475 = vsub.f32 1.0, %v8155
        %v8476 = vsub.f32 1.0, %v8156
        %v8477 = vsub.f32 1.0, %v8157
        %v8478 = vsub.f32 1.0, %v8158
        %v8479 = vsub.f32 1.0, %v8159
        %v8480 = vsub.f32 1.0, %v8160
        %v8481 = vsub.f32 1.0, %v8161
        %v8482 = vsub.f32 1.0, %v8162
        %v8483 = vsub.f32 1.0, %v8163
        %v8484 = vsub.f32 1.0, %v8164
        %v8485 = vsub.f32 1.0, %v8165
        %v8486 = vsub.f32 1.0, %v8166
        %v8487 = vsub.f32 1.0, %v8167
        %v8488 = vsub.f32 1.0, %v8168
        %v8489 = vsub.f32 1.0, %v8169
        %v8490 = vsub.f32 1.0, %v8170
        %v8491 = vsub.f32 1.0, %v8171
        %v8492 = vadd.f32 %v8460, 1e-06
        %v8493 = vadd.f32 %v8461, 1e-06
        %v8494 = vadd.f32 %v8462, 1e-06
        %v8495 = vadd.f32 %v8463, 1e-06
        %v8496 = vadd.f32 %v8464, 1e-06
        %v8497 = vadd.f32 %v8465, 1e-06
        %v8498 = vadd.f32 %v8466, 1e-06
        %v8499 = vadd.f32 %v8467, 1e-06
        %v8500 = vadd.f32 %v8468, 1e-06
        %v8501 = vadd.f32 %v8469, 1e-06
        %v8502 = vadd.f32 %v8470, 1e-06
        %v8503 = vadd.f32 %v8471, 1e-06
        %v8504 = vadd.f32 %v8472, 1e-06
        %v8505 = vadd.f32 %v8473, 1e-06
        %v8506 = vadd.f32 %v8474, 1e-06
        %v8507 = vadd.f32 %v8475, 1e-06
        %v8508 = vadd.f32 %v8476, 1e-06
        %v8509 = vadd.f32 %v8477, 1e-06
        %v8510 = vadd.f32 %v8478, 1e-06
        %v8511 = vadd.f32 %v8479, 1e-06
        %v8512 = vadd.f32 %v8480, 1e-06
        %v8513 = vadd.f32 %v8481, 1e-06
        %v8514 = vadd.f32 %v8482, 1e-06
        %v8515 = vadd.f32 %v8483, 1e-06
        %v8516 = vadd.f32 %v8484, 1e-06
        %v8517 = vadd.f32 %v8485, 1e-06
        %v8518 = vadd.f32 %v8486, 1e-06
        %v8519 = vadd.f32 %v8487, 1e-06
        %v8520 = vadd.f32 %v8488, 1e-06
        %v8521 = vadd.f32 %v8489, 1e-06
        %v8522 = vadd.f32 %v8490, 1e-06
        %v8523 = vadd.f32 %v8491, 1e-06
        %v8524 = vlog2.pop %v8492
        %v8525 = vmul.f32 %v8524, 0.6931472
        %v8526 = vlog2.pop %v8493
        %v8527 = vmul.f32 %v8526, 0.6931472
        %v8528 = vlog2.pop %v8494
        %v8529 = vmul.f32 %v8528, 0.6931472
        %v8530 = vlog2.pop %v8495
        %v8531 = vmul.f32 %v8530, 0.6931472
        %v8532 = vlog2.pop %v8496
        %v8533 = vmul.f32 %v8532, 0.6931472
        %v8534 = vlog2.pop %v8497
        %v8535 = vmul.f32 %v8534, 0.6931472
        %v8536 = vlog2.pop %v8498
        %v8537 = vmul.f32 %v8536, 0.6931472
        %v8538 = vlog2.pop %v8499
        %v8539 = vmul.f32 %v8538, 0.6931472
        %v8540 = vlog2.pop %v8500
        %v8541 = vmul.f32 %v8540, 0.6931472
        %v8542 = vlog2.pop %v8501
        %v8543 = vmul.f32 %v8542, 0.6931472
        %v8544 = vlog2.pop %v8502
        %v8545 = vmul.f32 %v8544, 0.6931472
        %v8546 = vlog2.pop %v8503
        %v8547 = vmul.f32 %v8546, 0.6931472
        %v8548 = vlog2.pop %v8504
        %v8549 = vmul.f32 %v8548, 0.6931472
        %v8550 = vlog2.pop %v8505
        %v8551 = vmul.f32 %v8550, 0.6931472
        %v8552 = vlog2.pop %v8506
        %v8553 = vmul.f32 %v8552, 0.6931472
        %v8554 = vlog2.pop %v8507
        %v8555 = vmul.f32 %v8554, 0.6931472
        %v8556 = vlog2.pop %v8508
        %v8557 = vmul.f32 %v8556, 0.6931472
        %v8558 = vlog2.pop %v8509
        %v8559 = vmul.f32 %v8558, 0.6931472
        %v8560 = vlog2.pop %v8510
        %v8561 = vmul.f32 %v8560, 0.6931472
        %v8562 = vlog2.pop %v8511
        %v8563 = vmul.f32 %v8562, 0.6931472
        %v8564 = vlog2.pop %v8512
        %v8565 = vmul.f32 %v8564, 0.6931472
        %v8566 = vlog2.pop %v8513
        %v8567 = vmul.f32 %v8566, 0.6931472
        %v8568 = vlog2.pop %v8514
        %v8569 = vmul.f32 %v8568, 0.6931472
        %v8570 = vlog2.pop %v8515
        %v8571 = vmul.f32 %v8570, 0.6931472
        %v8572 = vlog2.pop %v8516
        %v8573 = vmul.f32 %v8572, 0.6931472
        %v8574 = vlog2.pop %v8517
        %v8575 = vmul.f32 %v8574, 0.6931472
        %v8576 = vlog2.pop %v8518
        %v8577 = vmul.f32 %v8576, 0.6931472
        %v8578 = vlog2.pop %v8519
        %v8579 = vmul.f32 %v8578, 0.6931472
        %v8580 = vlog2.pop %v8520
        %v8581 = vmul.f32 %v8580, 0.6931472
        %v8582 = vlog2.pop %v8521
        %v8583 = vmul.f32 %v8582, 0.6931472
        %v8584 = vlog2.pop %v8522
        %v8585 = vmul.f32 %v8584, 0.6931472
        %v8586 = vlog2.pop %v8523
        %v8587 = vmul.f32 %v8586, 0.6931472
        %8620 = vrot.lane.b32.xlu0 %v8525, 119
        %v8621 = vpop.permute.xlu0 %8620
        %8622 = vrot.lane.b32.xlu0 %v8527, 119
        %v8623 = vpop.permute.xlu0 %8622
        %8624 = vrot.lane.b32.xlu0 %v8529, 119
        %v8625 = vpop.permute.xlu0 %8624
        %8626 = vrot.lane.b32.xlu0 %v8531, 119
        %v8627 = vpop.permute.xlu0 %8626
        %8628 = vrot.lane.b32.xlu0 %v8533, 119
        %v8629 = vpop.permute.xlu0 %8628
        %8630 = vrot.lane.b32.xlu0 %v8535, 119
        %v8631 = vpop.permute.xlu0 %8630
        %8632 = vrot.lane.b32.xlu0 %v8537, 119
        %v8633 = vpop.permute.xlu0 %8632
        %8634 = vrot.lane.b32.xlu0 %v8539, 119
        %v8635 = vpop.permute.xlu0 %8634
        %8636 = vrot.lane.b32.xlu0 %v8541, 119
        %v8637 = vpop.permute.xlu0 %8636
        %8638 = vrot.lane.b32.xlu0 %v8543, 119
        %v8639 = vpop.permute.xlu0 %8638
        %8640 = vrot.lane.b32.xlu0 %v8545, 119
        %v8641 = vpop.permute.xlu0 %8640
        %8642 = vrot.lane.b32.xlu0 %v8547, 119
        %v8643 = vpop.permute.xlu0 %8642
        %8644 = vrot.lane.b32.xlu0 %v8549, 119
        %v8645 = vpop.permute.xlu0 %8644
        %8646 = vrot.lane.b32.xlu0 %v8551, 119
        %v8647 = vpop.permute.xlu0 %8646
        %8648 = vrot.lane.b32.xlu0 %v8553, 119
        %v8649 = vpop.permute.xlu0 %8648
        %8650 = vrot.lane.b32.xlu0 %v8555, 119
        %v8651 = vpop.permute.xlu0 %8650
        %8652 = vrot.lane.b32.xlu0 %v8557, 119
        %v8653 = vpop.permute.xlu0 %8652
        %8654 = vrot.lane.b32.xlu0 %v8559, 119
        %v8655 = vpop.permute.xlu0 %8654
        %8656 = vrot.lane.b32.xlu0 %v8561, 119
        %v8657 = vpop.permute.xlu0 %8656
        %8658 = vrot.lane.b32.xlu0 %v8563, 119
        %v8659 = vpop.permute.xlu0 %8658
        %8660 = vrot.lane.b32.xlu0 %v8565, 119
        %v8661 = vpop.permute.xlu0 %8660
        %8662 = vrot.lane.b32.xlu0 %v8567, 119
        %v8663 = vpop.permute.xlu0 %8662
        %8664 = vrot.lane.b32.xlu0 %v8569, 119
        %v8665 = vpop.permute.xlu0 %8664
        %8666 = vrot.lane.b32.xlu0 %v8571, 119
        %v8667 = vpop.permute.xlu0 %8666
        %8668 = vrot.lane.b32.xlu0 %v8573, 119
        %v8669 = vpop.permute.xlu0 %8668
        %8670 = vrot.lane.b32.xlu0 %v8575, 119
        %v8671 = vpop.permute.xlu0 %8670
        %8672 = vrot.lane.b32.xlu0 %v8577, 119
        %v8673 = vpop.permute.xlu0 %8672
        %8674 = vrot.lane.b32.xlu0 %v8579, 119
        %v8675 = vpop.permute.xlu0 %8674
        %8676 = vrot.lane.b32.xlu0 %v8581, 119
        %v8677 = vpop.permute.xlu0 %8676
        %8678 = vrot.lane.b32.xlu0 %v8583, 119
        %v8679 = vpop.permute.xlu0 %8678
        %8680 = vrot.lane.b32.xlu0 %v8585, 119
        %v8681 = vpop.permute.xlu0 %8680
        %8682 = vrot.lane.b32.xlu0 %v8587, 119
        %v8683 = vpop.permute.xlu0 %8682
        %v8716 = vmul.f32 %v8428, %v8621
        %v8717 = vmul.f32 %v8429, %v8623
        %v8718 = vmul.f32 %v8430, %v8625
        %v8719 = vmul.f32 %v8431, %v8627
        %v8720 = vmul.f32 %v8432, %v8629
        %v8721 = vmul.f32 %v8433, %v8631
        %v8722 = vmul.f32 %v8434, %v8633
        %v8723 = vmul.f32 %v8435, %v8635
        %v8724 = vmul.f32 %v8436, %v8637
        %v8725 = vmul.f32 %v8437, %v8639
        %v8726 = vmul.f32 %v8438, %v8641
        %v8727 = vmul.f32 %v8439, %v8643
        %v8728 = vmul.f32 %v8440, %v8645
        %v8729 = vmul.f32 %v8441, %v8647
        %v8730 = vmul.f32 %v8442, %v8649
        %v8731 = vmul.f32 %v8443, %v8651
        %v8732 = vmul.f32 %v8444, %v8653
        %v8733 = vmul.f32 %v8445, %v8655
        %v8734 = vmul.f32 %v8446, %v8657
        %v8735 = vmul.f32 %v8447, %v8659
        %v8736 = vmul.f32 %v8448, %v8661
        %v8737 = vmul.f32 %v8449, %v8663
        %v8738 = vmul.f32 %v8450, %v8665
        %v8739 = vmul.f32 %v8451, %v8667
        %v8740 = vmul.f32 %v8452, %v8669
        %v8741 = vmul.f32 %v8453, %v8671
        %v8742 = vmul.f32 %v8454, %v8673
        %v8743 = vmul.f32 %v8455, %v8675
        %v8744 = vmul.f32 %v8456, %v8677
        %v8745 = vmul.f32 %v8457, %v8679
        %v8746 = vmul.f32 %v8458, %v8681
        %v8747 = vmul.f32 %v8459, %v8683
        %v8748 = vadd.f32 %v8396, %v8716
        %v8749 = vadd.f32 %v8397, %v8717
        %v8750 = vadd.f32 %v8398, %v8718
        %v8751 = vadd.f32 %v8399, %v8719
        %v8752 = vadd.f32 %v8400, %v8720
        %v8753 = vadd.f32 %v8401, %v8721
        %v8754 = vadd.f32 %v8402, %v8722
        %v8755 = vadd.f32 %v8403, %v8723
        %v8756 = vadd.f32 %v8404, %v8724
        %v8757 = vadd.f32 %v8405, %v8725
        %v8758 = vadd.f32 %v8406, %v8726
        %v8759 = vadd.f32 %v8407, %v8727
        %v8760 = vadd.f32 %v8408, %v8728
        %v8761 = vadd.f32 %v8409, %v8729
        %v8762 = vadd.f32 %v8410, %v8730
        %v8763 = vadd.f32 %v8411, %v8731
        %v8764 = vadd.f32 %v8412, %v8732
        %v8765 = vadd.f32 %v8413, %v8733
        %v8766 = vadd.f32 %v8414, %v8734
        %v8767 = vadd.f32 %v8415, %v8735
        %v8768 = vadd.f32 %v8416, %v8736
        %v8769 = vadd.f32 %v8417, %v8737
        %v8770 = vadd.f32 %v8418, %v8738
        %v8771 = vadd.f32 %v8419, %v8739
        %v8772 = vadd.f32 %v8420, %v8740
        %v8773 = vadd.f32 %v8421, %v8741
        %v8774 = vadd.f32 %v8422, %v8742
        %v8775 = vadd.f32 %v8423, %v8743
        %v8776 = vadd.f32 %v8424, %v8744
        %v8777 = vadd.f32 %v8425, %v8745
        %v8778 = vadd.f32 %v8426, %v8746
        %v8779 = vadd.f32 %v8427, %v8747
        %v8780 = vsub.f32 0.0, %v8748
        %v8781 = vsub.f32 0.0, %v8749
        %v8782 = vsub.f32 0.0, %v8750
        %v8783 = vsub.f32 0.0, %v8751
        %v8784 = vsub.f32 0.0, %v8752
        %v8785 = vsub.f32 0.0, %v8753
        %v8786 = vsub.f32 0.0, %v8754
        %v8787 = vsub.f32 0.0, %v8755
        %v8788 = vsub.f32 0.0, %v8756
        %v8789 = vsub.f32 0.0, %v8757
        %v8790 = vsub.f32 0.0, %v8758
        %v8791 = vsub.f32 0.0, %v8759
        %v8792 = vsub.f32 0.0, %v8760
        %v8793 = vsub.f32 0.0, %v8761
        %v8794 = vsub.f32 0.0, %v8762
        %v8795 = vsub.f32 0.0, %v8763
        %v8796 = vsub.f32 0.0, %v8764
        %v8797 = vsub.f32 0.0, %v8765
        %v8798 = vsub.f32 0.0, %v8766
        %v8799 = vsub.f32 0.0, %v8767
        %v8800 = vsub.f32 0.0, %v8768
        %v8801 = vsub.f32 0.0, %v8769
        %v8802 = vsub.f32 0.0, %v8770
        %v8803 = vsub.f32 0.0, %v8771
        %v8804 = vsub.f32 0.0, %v8772
        %v8805 = vsub.f32 0.0, %v8773
        %v8806 = vsub.f32 0.0, %v8774
        %v8807 = vsub.f32 0.0, %v8775
        %v8808 = vsub.f32 0.0, %v8776
        %v8809 = vsub.f32 0.0, %v8777
        %v8810 = vsub.f32 0.0, %v8778
        %v8811 = vsub.f32 0.0, %v8779
        %8844 = vrot.lane.b32.xlu0 %v8140, 127
        %v8845 = vpop.permute.xlu0 %8844
        %8846 = vrot.lane.b32.xlu0 %v8141, 127
        %v8847 = vpop.permute.xlu0 %8846
        %8848 = vrot.lane.b32.xlu0 %v8142, 127
        %v8849 = vpop.permute.xlu0 %8848
        %8850 = vrot.lane.b32.xlu0 %v8143, 127
        %v8851 = vpop.permute.xlu0 %8850
        %8852 = vrot.lane.b32.xlu0 %v8144, 127
        %v8853 = vpop.permute.xlu0 %8852
        %8854 = vrot.lane.b32.xlu0 %v8145, 127
        %v8855 = vpop.permute.xlu0 %8854
        %8856 = vrot.lane.b32.xlu0 %v8146, 127
        %v8857 = vpop.permute.xlu0 %8856
        %8858 = vrot.lane.b32.xlu0 %v8147, 127
        %v8859 = vpop.permute.xlu0 %8858
        %8860 = vrot.lane.b32.xlu0 %v8148, 127
        %v8861 = vpop.permute.xlu0 %8860
        %8862 = vrot.lane.b32.xlu0 %v8149, 127
        %v8863 = vpop.permute.xlu0 %8862
        %8864 = vrot.lane.b32.xlu0 %v8150, 127
        %v8865 = vpop.permute.xlu0 %8864
        %8866 = vrot.lane.b32.xlu0 %v8151, 127
        %v8867 = vpop.permute.xlu0 %8866
        %8868 = vrot.lane.b32.xlu0 %v8152, 127
        %v8869 = vpop.permute.xlu0 %8868
        %8870 = vrot.lane.b32.xlu0 %v8153, 127
        %v8871 = vpop.permute.xlu0 %8870
        %8872 = vrot.lane.b32.xlu0 %v8154, 127
        %v8873 = vpop.permute.xlu0 %8872
        %8874 = vrot.lane.b32.xlu0 %v8155, 127
        %v8875 = vpop.permute.xlu0 %8874
        %8876 = vrot.lane.b32.xlu0 %v8156, 127
        %v8877 = vpop.permute.xlu0 %8876
        %8878 = vrot.lane.b32.xlu0 %v8157, 127
        %v8879 = vpop.permute.xlu0 %8878
        %8880 = vrot.lane.b32.xlu0 %v8158, 127
        %v8881 = vpop.permute.xlu0 %8880
        %8882 = vrot.lane.b32.xlu0 %v8159, 127
        %v8883 = vpop.permute.xlu0 %8882
        %8884 = vrot.lane.b32.xlu0 %v8160, 127
        %v8885 = vpop.permute.xlu0 %8884
        %8886 = vrot.lane.b32.xlu0 %v8161, 127
        %v8887 = vpop.permute.xlu0 %8886
        %8888 = vrot.lane.b32.xlu0 %v8162, 127
        %v8889 = vpop.permute.xlu0 %8888
        %8890 = vrot.lane.b32.xlu0 %v8163, 127
        %v8891 = vpop.permute.xlu0 %8890
        %8892 = vrot.lane.b32.xlu0 %v8164, 127
        %v8893 = vpop.permute.xlu0 %8892
        %8894 = vrot.lane.b32.xlu0 %v8165, 127
        %v8895 = vpop.permute.xlu0 %8894
        %8896 = vrot.lane.b32.xlu0 %v8166, 127
        %v8897 = vpop.permute.xlu0 %8896
        %8898 = vrot.lane.b32.xlu0 %v8167, 127
        %v8899 = vpop.permute.xlu0 %8898
        %8900 = vrot.lane.b32.xlu0 %v8168, 127
        %v8901 = vpop.permute.xlu0 %8900
        %8902 = vrot.lane.b32.xlu0 %v8169, 127
        %v8903 = vpop.permute.xlu0 %8902
        %8904 = vrot.lane.b32.xlu0 %v8170, 127
        %v8905 = vpop.permute.xlu0 %8904
        %8906 = vrot.lane.b32.xlu0 %v8171, 127
        %v8907 = vpop.permute.xlu0 %8906
        %8972 = vrot.lane.b32.xlu0 %v8780, 9
        %v8973 = vpop.permute.xlu0 %8972
        %8974 = vrot.lane.b32.xlu0 %v8781, 9
        %v8975 = vpop.permute.xlu0 %8974
        %8976 = vrot.lane.b32.xlu0 %v8782, 9
        %v8977 = vpop.permute.xlu0 %8976
        %8978 = vrot.lane.b32.xlu0 %v8783, 9
        %v8979 = vpop.permute.xlu0 %8978
        %8980 = vrot.lane.b32.xlu0 %v8784, 9
        %v8981 = vpop.permute.xlu0 %8980
        %8982 = vrot.lane.b32.xlu0 %v8785, 9
        %v8983 = vpop.permute.xlu0 %8982
        %8984 = vrot.lane.b32.xlu0 %v8786, 9
        %v8985 = vpop.permute.xlu0 %8984
        %8986 = vrot.lane.b32.xlu0 %v8787, 9
        %v8987 = vpop.permute.xlu0 %8986
        %8988 = vrot.lane.b32.xlu0 %v8788, 9
        %v8989 = vpop.permute.xlu0 %8988
        %8990 = vrot.lane.b32.xlu0 %v8789, 9
        %v8991 = vpop.permute.xlu0 %8990
        %8992 = vrot.lane.b32.xlu0 %v8790, 9
        %v8993 = vpop.permute.xlu0 %8992
        %8994 = vrot.lane.b32.xlu0 %v8791, 9
        %v8995 = vpop.permute.xlu0 %8994
        %8996 = vrot.lane.b32.xlu0 %v8792, 9
        %v8997 = vpop.permute.xlu0 %8996
        %8998 = vrot.lane.b32.xlu0 %v8793, 9
        %v8999 = vpop.permute.xlu0 %8998
        %9000 = vrot.lane.b32.xlu0 %v8794, 9
        %v9001 = vpop.permute.xlu0 %9000
        %9002 = vrot.lane.b32.xlu0 %v8795, 9
        %v9003 = vpop.permute.xlu0 %9002
        %9004 = vrot.lane.b32.xlu0 %v8796, 9
        %v9005 = vpop.permute.xlu0 %9004
        %9006 = vrot.lane.b32.xlu0 %v8797, 9
        %v9007 = vpop.permute.xlu0 %9006
        %9008 = vrot.lane.b32.xlu0 %v8798, 9
        %v9009 = vpop.permute.xlu0 %9008
        %9010 = vrot.lane.b32.xlu0 %v8799, 9
        %v9011 = vpop.permute.xlu0 %9010
        %9012 = vrot.lane.b32.xlu0 %v8800, 9
        %v9013 = vpop.permute.xlu0 %9012
        %9014 = vrot.lane.b32.xlu0 %v8801, 9
        %v9015 = vpop.permute.xlu0 %9014
        %9016 = vrot.lane.b32.xlu0 %v8802, 9
        %v9017 = vpop.permute.xlu0 %9016
        %9018 = vrot.lane.b32.xlu0 %v8803, 9
        %v9019 = vpop.permute.xlu0 %9018
        %9020 = vrot.lane.b32.xlu0 %v8804, 9
        %v9021 = vpop.permute.xlu0 %9020
        %9022 = vrot.lane.b32.xlu0 %v8805, 9
        %v9023 = vpop.permute.xlu0 %9022
        %9024 = vrot.lane.b32.xlu0 %v8806, 9
        %v9025 = vpop.permute.xlu0 %9024
        %9026 = vrot.lane.b32.xlu0 %v8807, 9
        %v9027 = vpop.permute.xlu0 %9026
        %9028 = vrot.lane.b32.xlu0 %v8808, 9
        %v9029 = vpop.permute.xlu0 %9028
        %9030 = vrot.lane.b32.xlu0 %v8809, 9
        %v9031 = vpop.permute.xlu0 %9030
        %9032 = vrot.lane.b32.xlu0 %v8810, 9
        %v9033 = vpop.permute.xlu0 %9032
        %9034 = vrot.lane.b32.xlu0 %v8811, 9
        %v9035 = vpop.permute.xlu0 %9034
        %vm9068 = vcmask 7168
        %v9069 = vsel %vm9068, %v8845, %v8973
        %v9070 = vsel %vm9068, %v8847, %v8975
        %v9071 = vsel %vm9068, %v8849, %v8977
        %v9072 = vsel %vm9068, %v8851, %v8979
        %v9073 = vsel %vm9068, %v8853, %v8981
        %v9074 = vsel %vm9068, %v8855, %v8983
        %v9075 = vsel %vm9068, %v8857, %v8985
        %v9076 = vsel %vm9068, %v8859, %v8987
        %v9077 = vsel %vm9068, %v8861, %v8989
        %v9078 = vsel %vm9068, %v8863, %v8991
        %v9079 = vsel %vm9068, %v8865, %v8993
        %v9080 = vsel %vm9068, %v8867, %v8995
        %v9081 = vsel %vm9068, %v8869, %v8997
        %v9082 = vsel %vm9068, %v8871, %v8999
        %v9083 = vsel %vm9068, %v8873, %v9001
        %v9084 = vsel %vm9068, %v8875, %v9003
        %v9085 = vsel %vm9068, %v8877, %v9005
        %v9086 = vsel %vm9068, %v8879, %v9007
        %v9087 = vsel %vm9068, %v8881, %v9009
        %v9088 = vsel %vm9068, %v8883, %v9011
        %v9089 = vsel %vm9068, %v8885, %v9013
        %v9090 = vsel %vm9068, %v8887, %v9015
        %v9091 = vsel %vm9068, %v8889, %v9017
        %v9092 = vsel %vm9068, %v8891, %v9019
        %v9093 = vsel %vm9068, %v8893, %v9021
        %v9094 = vsel %vm9068, %v8895, %v9023
        %v9095 = vsel %vm9068, %v8897, %v9025
        %v9096 = vsel %vm9068, %v8899, %v9027
        %v9097 = vsel %vm9068, %v8901, %v9029
        %v9098 = vsel %vm9068, %v8903, %v9031
        %v9099 = vsel %vm9068, %v8905, %v9033
        %v9100 = vsel %vm9068, %v8907, %v9035
        %vm9101 = vcmask 15360
        %9102 = vst.msk [vmem:[%s1065] sm:$0xff] %vm9101, %v9069
        %9103 = vst.msk [vmem:[%s1065 + $0x8] sm:$0xff] %vm9101, %v9070
        %9104 = vst.msk [vmem:[%s1065 + $0x10] sm:$0xff] %vm9101, %v9071
        %9105 = vst.msk [vmem:[%s1065 + $0x18] sm:$0xff] %vm9101, %v9072
        %9106 = vst.msk [vmem:[%s1065 + $0x20] sm:$0xff] %vm9101, %v9073
        %9107 = vst.msk [vmem:[%s1065 + $0x28] sm:$0xff] %vm9101, %v9074
        %9108 = vst.msk [vmem:[%s1065 + $0x30] sm:$0xff] %vm9101, %v9075
        %9109 = vst.msk [vmem:[%s1065 + $0x38] sm:$0xff] %vm9101, %v9076
        %9110 = vst.msk [vmem:[%s1065 + $0x40] sm:$0xff] %vm9101, %v9077
        %9111 = vst.msk [vmem:[%s1065 + $0x48] sm:$0xff] %vm9101, %v9078
        %9112 = vst.msk [vmem:[%s1065 + $0x50] sm:$0xff] %vm9101, %v9079
        %9113 = vst.msk [vmem:[%s1065 + $0x58] sm:$0xff] %vm9101, %v9080
        %9114 = vst.msk [vmem:[%s1065 + $0x60] sm:$0xff] %vm9101, %v9081
        %9115 = vst.msk [vmem:[%s1065 + $0x68] sm:$0xff] %vm9101, %v9082
        %9116 = vst.msk [vmem:[%s1065 + $0x70] sm:$0xff] %vm9101, %v9083
        %9117 = vst.msk [vmem:[%s1065 + $0x78] sm:$0xff] %vm9101, %v9084
        %9118 = vst.msk [vmem:[%s1065 + $0x80] sm:$0xff] %vm9101, %v9085
        %9119 = vst.msk [vmem:[%s1065 + $0x88] sm:$0xff] %vm9101, %v9086
        %9120 = vst.msk [vmem:[%s1065 + $0x90] sm:$0xff] %vm9101, %v9087
        %9121 = vst.msk [vmem:[%s1065 + $0x98] sm:$0xff] %vm9101, %v9088
        %9122 = vst.msk [vmem:[%s1065 + $0xa0] sm:$0xff] %vm9101, %v9089
        %9123 = vst.msk [vmem:[%s1065 + $0xa8] sm:$0xff] %vm9101, %v9090
        %9124 = vst.msk [vmem:[%s1065 + $0xb0] sm:$0xff] %vm9101, %v9091
        %9125 = vst.msk [vmem:[%s1065 + $0xb8] sm:$0xff] %vm9101, %v9092
        %9126 = vst.msk [vmem:[%s1065 + $0xc0] sm:$0xff] %vm9101, %v9093
        %9127 = vst.msk [vmem:[%s1065 + $0xc8] sm:$0xff] %vm9101, %v9094
        %9128 = vst.msk [vmem:[%s1065 + $0xd0] sm:$0xff] %vm9101, %v9095
        %9129 = vst.msk [vmem:[%s1065 + $0xd8] sm:$0xff] %vm9101, %v9096
        %9130 = vst.msk [vmem:[%s1065 + $0xe0] sm:$0xff] %vm9101, %v9097
        %9131 = vst.msk [vmem:[%s1065 + $0xe8] sm:$0xff] %vm9101, %v9098
        %9132 = vst.msk [vmem:[%s1065 + $0xf0] sm:$0xff] %vm9101, %v9099
        %9133 = vst.msk [vmem:[%s1065 + $0xf8] sm:$0xff] %vm9101, %v9100
        %s9134 = smul.u32 32, %s21
        %p9135 = scmp.lt.s32.totalorder %s9134, 63
        %s9136 = scalar_select %p9135, %s9134, 63
        %s9137 = smul.addr %s9136, 8
        %s9138 = scalar_lea.vmem %s10, %s9137
        // Predicated region
        $region102: #{din_forward.1} parent=96 // pred_check
          %p9139 = pneg %p259
        $region103: #{din_forward.1} parent=96 // pred_check_branch
          %9141 = sbr.rel (%p9139) target = $region105
        $region104: #{din_forward.1} parent=96 // pred_region
          %s9142 = smul.u32 32, %s21
        $region105: #{din_forward.1} parent=96 // pred_fallthru
          _
      $region97: #{din_forward.1} parent=5 // pred_fallthru
        _
      %p9143 = scmp.le.s32.totalorder 2, %s16
      // Predicated region
      $region106: #{din_forward.1} parent=5 // pred_check
        %p9144 = pneg %p9143
      $region107: #{din_forward.1} parent=5 // pred_check_branch
        %9146 = sbr.rel (%p9144) target = $region109
      $region108: #{din_forward.1} parent=5 // pred_region
        %s9147 = ssub.s32 %s16, 2
        // Predicated region
        $region110: #{din_forward.1} parent=108 // pred_check
          %p9148 = pneg %p265
        $region111: #{din_forward.1} parent=108 // pred_check_branch
          %9150 = sbr.rel (%p9148) target = $region113
        $region112: #{din_forward.1} parent=108 // pred_region
          %s9151 = smul.u32 32, %s22
          %p9152 = scmp.lt.s32.totalorder %s9151, 63
          %s9153 = scalar_select %p9152, %s9151, 63
          %s9154 = smul.addr %s9153, 8
          %s9155 = scalar_lea.vmem %s10, %s9154
        $region113: #{din_forward.1} parent=108 // pred_fallthru
          _
      $region109: #{din_forward.1} parent=5 // pred_fallthru
        _
    $region6: #{din_forward.1} parent=1 // loop_footer
      %s20 = sadd.s32 1, %s16
    $region7: #{din_forward.1} parent=1 // loop_footer_branch
      %15 = sbr.rel target = $region3
    $region8: #{din_forward.1} parent=1 // loop_exit
      _

</llo_original>
